<compile_context>
chip_gen: v6e
topology: v6e:2x2x1
jax: 0.10.0
libtpu: 0.0.40
codegen_flags: <defaults>
</compile_context>

<pallas_src>
import functools

import jax
import jax.numpy as jnp
from jax.experimental import pallas as pl
from jax.experimental.pallas import tpu as pltpu


def _layer_norm(t, g, b):
    mu = jnp.mean(t, axis=-1, keepdims=True)
    d = t - mu
    var = jnp.mean(d * d, axis=-1, keepdims=True)
    return d * jax.lax.rsqrt(var + 1e-5) * g + b


# ----------------------------------------------------------------------------
# Fused kernel: emb_proj_st + token/PE prologue + 2x TransformerEncoderLayer
# ----------------------------------------------------------------------------
def trans_encoder_kernel(x_ref, bias_ref, w_emb_ref, pe_tok_ref,
                         wqkv_ref, bqkv_ref, wo_ref, bo_ref,
                         ln1g_ref, ln1b_ref, w1_ref, b1_ref, w2_ref, b2_ref,
                         ln2g_ref, ln2b_ref,
                         o_ref, *, num_heads, num_layers, bt, sp):
    D = pe_tok_ref.shape[1]
    nfeats = x_ref.shape[2]
    H = num_heads
    Dh = D // H

    # ---- emb_proj_st: ReLU -> Linear(nfeats, D) as one matmul on the flat slab.
    # Row 0 of each batch element is zero (global-token slot) -> contributes 0;
    # the Linear bias, global token and positional embedding were pre-folded
    # into pe_tok in the wrapper.
    xin = jnp.maximum(x_ref[...].reshape(bt * sp, nfeats), 0.0)
    emb = jnp.dot(xin, w_emb_ref[...], preferred_element_type=jnp.float32)
    x = (emb.reshape(bt, sp, D) + pe_tok_ref[...][None, :, :]).reshape(bt * sp, D)

    def head_context(q_bh, k_bh, v_bh, bias_b):
        # q_bh: (M, Dh) bf16; k_bh, v_bh: (sp, Dh) bf16; bias_b: (1, sp) f32
        s = jax.lax.dot_general(q_bh, k_bh, (((1,), (1,)), ((), ())),
                                preferred_element_type=jnp.float32) + bias_b
        m = jnp.max(s, axis=-1, keepdims=True)
        e = jnp.exp(s - m)
        inv = pl.reciprocal(jnp.sum(e, axis=-1, keepdims=True), approx=True)
        p = (e * inv).astype(jnp.bfloat16)
        return jnp.dot(p, v_bh, preferred_element_type=jnp.float32)   # (M, Dh)

    for l in range(num_layers):                      # static unroll (L = 2)
        last = (l == num_layers - 1)
        xb = x.astype(jnp.bfloat16)

        if last:
            # Only the global-token row (row 0 of every batch element) is read
            # downstream: project Q for those bt rows only; K/V stay full.
            x0 = jnp.concatenate([x[b * sp:b * sp + 1, :] for b in range(bt)],
                                 axis=0)                               # (bt, D)
            q = (jnp.dot(x0.astype(jnp.bfloat16), wqkv_ref[l][:, 0:D],
                         preferred_element_type=jnp.float32)
                 + bqkv_ref[l][:, 0:D]).astype(jnp.bfloat16)           # (bt, D)
            kv = jnp.dot(xb, wqkv_ref[l][:, D:3 * D],
                         preferred_element_type=jnp.float32) + bqkv_ref[l][:, D:3 * D]
            k = kv[:, 0:D].astype(jnp.bfloat16)
            v = kv[:, D:2 * D].astype(jnp.bfloat16)
        else:
            # Packed QKV: one MXU matmul with M = bt*sp (bf16 in, f32 acc).
            qkv = jnp.dot(xb, wqkv_ref[l],
                          preferred_element_type=jnp.float32) + bqkv_ref[l]
            q = qkv[:, 0:D].astype(jnp.bfloat16)     # 1/sqrt(Dh) pre-folded
            k = qkv[:, D:2 * D].astype(jnp.bfloat16)
            v = qkv[:, 2 * D:3 * D].astype(jnp.bfloat16)

        m_rows = bt if last else bt * sp
        attn = jnp.zeros((m_rows, D), jnp.float32)
        # Static (H, Bt) unroll: each per-(b,h) (sp,sp) temporary dies within
        # its block.  The Wo fold runs once per head on the (m_rows, Dh) slab.
        # NOTE: K=Dh underfills the v6e/v7x 256-deep MXU; a concat + single
        # (.,D)@(D,D) projection is the measured-alternative if this binds.
        for h in range(H):
            hs = slice(h * Dh, (h + 1) * Dh)
            ctx = []
            for b in range(bt):
                rs = slice(b * sp, (b + 1) * sp)
                q_bh = q[b:b + 1, hs] if last else q[rs, hs]
                ctx.append(head_context(q_bh, k[rs, hs], v[rs, hs], bias_ref[b]))
            pv = jnp.concatenate(ctx, axis=0).astype(jnp.bfloat16)  # (m_rows, Dh)
            attn = attn + jnp.dot(pv, wo_ref[l, h],
                                  preferred_element_type=jnp.float32)

        x = (x0 if last else x) + attn + bo_ref[l]   # residual
        x = _layer_norm(x, ln1g_ref[l], ln1b_ref[l]) # post-norm, eps = 1e-5

        # ---- feed-forward (ReLU), bf16 matmuls, f32 accumulation
        h1 = jnp.maximum(
            jnp.dot(x.astype(jnp.bfloat16), w1_ref[l],
                    preferred_element_type=jnp.float32) + b1_ref[l], 0.0)
        ff = jnp.dot(h1.astype(jnp.bfloat16), w2_ref[l],
                     preferred_element_type=jnp.float32) + b2_ref[l]
        x = _layer_norm(x + ff, ln2g_ref[l], ln2b_ref[l])

    # After the shrunk last layer x is (bt, D): one dense store per grid step.
    o_ref[0] = x.astype(o_ref.dtype)


# ----------------------------------------------------------------------------
# Parameter init (deterministic, synthetic) — per-layer weights stacked
# ----------------------------------------------------------------------------
def init_params(key, d_model, num_heads, d_ff, max_len, nfeats=3, num_layers=2):
    ks = iter(jax.random.split(key, 32))

    def w(shape, scale=0.05):
        return (scale * jax.random.normal(next(ks), shape)).astype(jnp.float32)

    dh = d_model // num_heads
    # Fold the 1/sqrt(dh) attention scale into the Q columns of the packed QKV
    # projection (constants -> zero runtime cost; removes a per-layer (S, D)
    # f32 multiply in the kernel).
    qscale = jnp.concatenate(
        [jnp.full((d_model,), 1.0 / dh ** 0.5, jnp.float32),
         jnp.ones((2 * d_model,), jnp.float32)])
    wqkv = w((num_layers, d_model, 3 * d_model)) * qscale
    bqkv = w((num_layers, 1, 3 * d_model)) * qscale

    return {
        "w_emb": w((nfeats, d_model)),
        "b_emb": w((1, d_model)),
        "token": w((1, d_model), scale=1.0),            # global_motion_token ~ randn
        "pe":    w((max_len, d_model)),                 # learned positional embedding
        # matmul operands stored bf16 (MXU path); biases / LN params f32 (VPU).
        "wqkv": wqkv.astype(jnp.bfloat16),
        "bqkv": bqkv,
        "wo":   w((num_layers, num_heads, dh, d_model)).astype(jnp.bfloat16),
        "bo":   w((num_layers, 1, d_model)),
        "ln1_g": jnp.ones((num_layers, 1, d_model), jnp.float32),
        "ln1_b": jnp.zeros((num_layers, 1, d_model), jnp.float32),
        "w1": w((num_layers, d_model, d_ff)).astype(jnp.bfloat16),
        "b1": w((num_layers, 1, d_ff)),
        "w2": w((num_layers, d_ff, d_model)).astype(jnp.bfloat16),
        "b2": w((num_layers, 1, d_model)),
        "ln2_g": jnp.ones((num_layers, 1, d_model), jnp.float32),
        "ln2_b": jnp.zeros((num_layers, 1, d_model), jnp.float32),
    }


# ----------------------------------------------------------------------------
# Full forward (mirrors TransEncoder.forward) — ONE pallas_call
# ----------------------------------------------------------------------------
def trans_encoder_forward(x, lengths, params, num_heads):
    bs, nframes, nfeats = x.shape
    D = params["w_emb"].shape[1]
    L = params["wqkv"].shape[0]
    Fd = params["w1"].shape[2]
    Dh = D // num_heads

    # Sequence length (frames + global token) padded to a lane-dense 128.
    S = nframes + 1
    Sp = ((S + 127) // 128) * 128
    # Batch tile: fill the MXU rows (bt*Sp >= 256 covers v5e/v6e/v7x).
    bt = max(1, min(bs, 256 // Sp))
    n_tiles = -(-bs // bt)
    bs_pad = n_tiles * bt

    # lengths_to_mask + always-valid global-token slot -> additive key bias.
    # Padded key columns (and padded batch rows' frames) get -1e30; column 0 is
    # always valid so every softmax row has a finite max.
    frame_idx = jnp.arange(nframes)
    mask = frame_idx[None, :] < lengths[:, None]                       # (bs, nframes)
    mask = jnp.pad(mask, ((0, bs_pad - bs), (0, 0)))
    aug_mask = jnp.concatenate(
        [jnp.ones((bs_pad, 1), bool), mask,
         jnp.zeros((bs_pad, Sp - S), bool)], axis=1)                   # (bs_pad, Sp)
    bias = jnp.where(aug_mask, 0.0, -1e30).astype(jnp.float32)[:, None, :]

    # Constant folding (once per call, not per-token work):
    #   row 0        = global_motion_token + pe[0]
    #   rows 1..S-1  = pe[i] + emb-Linear bias
    #   rows >= S    = 0 (padding, masked out as keys)
    pe = params["pe"][:S]
    pe_tok = jnp.concatenate(
        [params["token"] + pe[0:1], pe[1:] + params["b_emb"]], axis=0)
    pe_tok = jnp.pad(pe_tok, ((0, Sp - S), (0, 0)))                    # (Sp, D)

    # Row 0 of every batch element is the (zero) slot for the global token, so
    # the in-kernel emb matmul contributes nothing there; rows >= S are zero.
    x_pad = jnp.zeros((bs_pad, Sp, nfeats), jnp.float32)
    x_pad = x_pad.at[:bs, 1:S, :].set(x.astype(jnp.float32))

    def wspec(shape):
        # Constant-index weights: DMA'd once, single-buffered (halves the VMEM
        # they take vs. default double-buffering).
        nd = len(shape)
        return pl.BlockSpec(shape, lambda i, nd=nd: (0,) * nd,
                            pipeline_mode=pl.Buffered(1))

    kernel = functools.partial(trans_encoder_kernel, num_heads=num_heads,
                               num_layers=L, bt=bt, sp=Sp)
    out = pl.pallas_call(
        kernel,
        out_shape=jax.ShapeDtypeStruct((n_tiles, bt, D), jnp.float32),
        grid=(n_tiles,),
        in_specs=[
            pl.BlockSpec((bt, Sp, nfeats), lambda i: (i, 0, 0)),   # x tile
            pl.BlockSpec((bt, 1, Sp), lambda i: (i, 0, 0)),        # key-padding bias
            wspec((nfeats, D)),                                    # W_emb
            wspec((Sp, D)),                                        # token/PE/b_emb fold
            wspec((L, D, 3 * D)), wspec((L, 1, 3 * D)),            # Wqkv, bqkv (packed, scaled)
            wspec((L, num_heads, Dh, D)), wspec((L, 1, D)),        # Wo (head-major), bo
            wspec((L, 1, D)), wspec((L, 1, D)),                    # LN1 gamma, beta
            wspec((L, D, Fd)), wspec((L, 1, Fd)),                  # W1, b1
            wspec((L, Fd, D)), wspec((L, 1, D)),                   # W2, b2
            wspec((L, 1, D)), wspec((L, 1, D)),                    # LN2 gamma, beta
        ],
        out_specs=pl.BlockSpec((1, bt, D), lambda i: (i, 0, 0)),
        compiler_params=pltpu.CompilerParams(
            # Batch-tile axis is embarrassingly parallel (megacore / v7x 2 TCs);
            # if profiling shows no 2-TC sharding on v7x, switch to CORE_PARALLEL.
            dimension_semantics=("parallel",),
            # Raises v5e's 16 MiB scoped default; fits single-buffered weights +
            # the bt*Sp activation slabs with headroom.  Re-derive (keep well
            # under 64 MiB physical) on v7x if bt is grown at production sizes.
            vmem_limit_bytes=32 * 1024 * 1024,
        ),
    )(x_pad, bias, params["w_emb"], pe_tok,
      params["wqkv"], params["bqkv"], params["wo"], params["bo"],
      params["ln1_g"], params["ln1_b"], params["w1"], params["b1"],
      params["w2"], params["b2"], params["ln2_g"], params["ln2_b"])

    dist = out.reshape(bs_pad, D)[:bs]
    return dist[None, :, :]                          # (1, bs, D), as in PyTorch


# ----------------------------------------------------------------------------
if __name__ == "__main__":
    key = jax.random.PRNGKey(0)

    # nfeats is fixed at 3 by the Linear(3, d_model); d_model scaled 256 -> 32,
    # d_ff 2048 -> 64 for a small test.
    bs, nframes, nfeats = 2, 8, 3
    d_model, num_heads, d_ff = 32, 4, 64

    params = init_params(key, d_model, num_heads, d_ff,
                         max_len=nframes + 1, nfeats=nfeats, num_layers=2)

    x = jax.random.normal(jax.random.fold_in(key, 7),
                          (bs, nframes, nfeats), jnp.float32)
    lengths = jnp.array([8, 5], dtype=jnp.int32)

    fwd = jax.jit(functools.partial(trans_encoder_forward, num_heads=num_heads))
    dist = jax.block_until_ready(fwd(x, lengths, params))

    assert dist.shape == (1, bs, d_model), dist.shape
    assert bool(jnp.all(jnp.isfinite(dist)))
    print("KERNEL_OK")
</pallas_src>

<mosaic_0001>
module attributes {stable_mosaic.version = 11 : i64} {
  func.func @trans_encoder_kernel(%arg0: i32, %arg1: memref<2x128x3xf32, #tpu.memory_space<vmem>>, %arg2: memref<2x1x128xf32, #tpu.memory_space<vmem>>, %arg3: memref<3x32xf32, #tpu.memory_space<vmem>>, %arg4: memref<128x32xf32, #tpu.memory_space<vmem>>, %arg5: memref<2x32x96xbf16, #tpu.memory_space<vmem>>, %arg6: memref<2x1x96xf32, #tpu.memory_space<vmem>>, %arg7: memref<2x4x8x32xbf16, #tpu.memory_space<vmem>>, %arg8: memref<2x1x32xf32, #tpu.memory_space<vmem>>, %arg9: memref<2x1x32xf32, #tpu.memory_space<vmem>>, %arg10: memref<2x1x32xf32, #tpu.memory_space<vmem>>, %arg11: memref<2x32x64xbf16, #tpu.memory_space<vmem>>, %arg12: memref<2x1x64xf32, #tpu.memory_space<vmem>>, %arg13: memref<2x64x32xbf16, #tpu.memory_space<vmem>>, %arg14: memref<2x1x32xf32, #tpu.memory_space<vmem>>, %arg15: memref<2x1x32xf32, #tpu.memory_space<vmem>>, %arg16: memref<2x1x32xf32, #tpu.memory_space<vmem>>, %arg17: memref<1x2x32xf32, #tpu.memory_space<vmem>>) attributes {dimension_semantics = [#tpu.dimension_semantics<parallel>], iteration_bounds = array<i64: 1>, scalar_prefetch = 0 : i64, scratch_operands = 0 : i64, tpu.core_type = #tpu.core_type<tc>, window_params = [{transform_indices = @transform_0, window_bounds = array<i64: 2, 128, 3>}, {transform_indices = @transform_1, window_bounds = array<i64: 2, 1, 128>}, {pipeline_mode = #tpu.pipeline_mode<synchronous>, transform_indices = @transform_2, window_bounds = array<i64: 3, 32>}, {pipeline_mode = #tpu.pipeline_mode<synchronous>, transform_indices = @transform_3, window_bounds = array<i64: 128, 32>}, {pipeline_mode = #tpu.pipeline_mode<synchronous>, transform_indices = @transform_4, window_bounds = array<i64: 2, 32, 96>}, {pipeline_mode = #tpu.pipeline_mode<synchronous>, transform_indices = @transform_5, window_bounds = array<i64: 2, 1, 96>}, {pipeline_mode = #tpu.pipeline_mode<synchronous>, transform_indices = @transform_6, window_bounds = array<i64: 2, 4, 8, 32>}, {pipeline_mode = #tpu.pipeline_mode<synchronous>, transform_indices = @transform_7, window_bounds = array<i64: 2, 1, 32>}, {pipeline_mode = #tpu.pipeline_mode<synchronous>, transform_indices = @transform_8, window_bounds = array<i64: 2, 1, 32>}, {pipeline_mode = #tpu.pipeline_mode<synchronous>, transform_indices = @transform_9, window_bounds = array<i64: 2, 1, 32>}, {pipeline_mode = #tpu.pipeline_mode<synchronous>, transform_indices = @transform_10, window_bounds = array<i64: 2, 32, 64>}, {pipeline_mode = #tpu.pipeline_mode<synchronous>, transform_indices = @transform_11, window_bounds = array<i64: 2, 1, 64>}, {pipeline_mode = #tpu.pipeline_mode<synchronous>, transform_indices = @transform_12, window_bounds = array<i64: 2, 64, 32>}, {pipeline_mode = #tpu.pipeline_mode<synchronous>, transform_indices = @transform_13, window_bounds = array<i64: 2, 1, 32>}, {pipeline_mode = #tpu.pipeline_mode<synchronous>, transform_indices = @transform_14, window_bounds = array<i64: 2, 1, 32>}, {pipeline_mode = #tpu.pipeline_mode<synchronous>, transform_indices = @transform_15, window_bounds = array<i64: 2, 1, 32>}, {transform_indices = @transform_16, window_bounds = array<i64: 1, 2, 32>}]} {
    %c0 = arith.constant 0 : index
    %c0_0 = arith.constant 0 : index
    %c0_1 = arith.constant 0 : index
    %0 = vector.load %arg1[%c0, %c0_0, %c0_1] : memref<2x128x3xf32, #tpu.memory_space<vmem>>, vector<2x128x3xf32>
    %1 = vector.shape_cast %0 : vector<2x128x3xf32> to vector<256x3xf32>
    %cst = arith.constant 0.000000e+00 : f32
    %2 = vector.broadcast %cst : f32 to vector<256x3xf32>
    %3 = arith.maximumf %1, %2 : vector<256x3xf32>
    %c0_2 = arith.constant 0 : index
    %c0_3 = arith.constant 0 : index
    %4 = vector.load %arg3[%c0_2, %c0_3] : memref<3x32xf32, #tpu.memory_space<vmem>>, vector<3x32xf32>
    %cst_4 = arith.constant dense<0.000000e+00> : vector<256x32xf32>
    %5 = tpu.matmul %3, %4, %cst_4 {dimension_numbers = #tpu.dot_dimension_numbers<[1], [0], [0], [1], [0, 0, 1, 1], [], []>} : vector<256x3xf32>, vector<3x32xf32>, vector<256x32xf32> -> vector<256x32xf32>
    %6 = vector.shape_cast %5 : vector<256x32xf32> to vector<2x128x32xf32>
    %c0_5 = arith.constant 0 : index
    %c0_6 = arith.constant 0 : index
    %7 = vector.load %arg4[%c0_5, %c0_6] : memref<128x32xf32, #tpu.memory_space<vmem>>, vector<128x32xf32>
    %8 = vector.shape_cast %7 : vector<128x32xf32> to vector<1x128x32xf32>
    %9 = vector.broadcast %8 : vector<1x128x32xf32> to vector<2x128x32xf32>
    %10 = arith.addf %6, %9 : vector<2x128x32xf32>
    %11 = vector.shape_cast %10 : vector<2x128x32xf32> to vector<256x32xf32>
    %12 = arith.truncf %11 : vector<256x32xf32> to vector<256x32xbf16>
    %c0_7 = arith.constant 0 : index
    %c0_8 = arith.constant 0 : index
    %c0_9 = arith.constant 0 : index
    %13 = vector.load %arg5[%c0_7, %c0_8, %c0_9] : memref<2x32x96xbf16, #tpu.memory_space<vmem>>, vector<1x32x96xbf16>
    %14 = vector.shape_cast %13 : vector<1x32x96xbf16> to vector<32x96xbf16>
    %cst_10 = arith.constant dense<0.000000e+00> : vector<256x96xf32>
    %15 = tpu.matmul %12, %14, %cst_10 {dimension_numbers = #tpu.dot_dimension_numbers<[1], [0], [0], [1], [0, 0, 1, 1], [], []>} : vector<256x32xbf16>, vector<32x96xbf16>, vector<256x96xf32> -> vector<256x96xf32>
    %c0_11 = arith.constant 0 : index
    %c0_12 = arith.constant 0 : index
    %c0_13 = arith.constant 0 : index
    %16 = vector.load %arg6[%c0_11, %c0_12, %c0_13] : memref<2x1x96xf32, #tpu.memory_space<vmem>>, vector<1x1x96xf32>
    %17 = vector.shape_cast %16 : vector<1x1x96xf32> to vector<1x96xf32>
    %18 = vector.broadcast %17 : vector<1x96xf32> to vector<256x96xf32>
    %19 = arith.addf %15, %18 : vector<256x96xf32>
    %20 = vector.extract_strided_slice %19 {offsets = [0, 0], sizes = [256, 32], strides = [1, 1]} : vector<256x96xf32> to vector<256x32xf32>
    %21 = arith.truncf %20 : vector<256x32xf32> to vector<256x32xbf16>
    %22 = vector.extract_strided_slice %19 {offsets = [0, 32], sizes = [256, 32], strides = [1, 1]} : vector<256x96xf32> to vector<256x32xf32>
    %23 = arith.truncf %22 : vector<256x32xf32> to vector<256x32xbf16>
    %24 = vector.extract_strided_slice %19 {offsets = [0, 64], sizes = [256, 32], strides = [1, 1]} : vector<256x96xf32> to vector<256x32xf32>
    %25 = arith.truncf %24 : vector<256x32xf32> to vector<256x32xbf16>
    %cst_14 = arith.constant 0.000000e+00 : f32
    %26 = vector.broadcast %cst_14 : f32 to vector<256x32xf32>
    %27 = vector.extract_strided_slice %21 {offsets = [0, 0], sizes = [128, 8], strides = [1, 1]} : vector<256x32xbf16> to vector<128x8xbf16>
    %28 = vector.extract_strided_slice %23 {offsets = [0, 0], sizes = [128, 8], strides = [1, 1]} : vector<256x32xbf16> to vector<128x8xbf16>
    %29 = vector.extract_strided_slice %25 {offsets = [0, 0], sizes = [128, 8], strides = [1, 1]} : vector<256x32xbf16> to vector<128x8xbf16>
    %c0_15 = arith.constant 0 : index
    %c0_16 = arith.constant 0 : index
    %c0_17 = arith.constant 0 : index
    %30 = vector.load %arg2[%c0_15, %c0_16, %c0_17] : memref<2x1x128xf32, #tpu.memory_space<vmem>>, vector<1x1x128xf32>
    %31 = vector.shape_cast %30 : vector<1x1x128xf32> to vector<1x128xf32>
    %cst_18 = arith.constant dense<0.000000e+00> : vector<128x128xf32>
    %32 = tpu.matmul %27, %28, %cst_18 {dimension_numbers = #tpu.dot_dimension_numbers<[1], [1], [0], [0], [0, 0, 1, 0], [], []>} : vector<128x8xbf16>, vector<128x8xbf16>, vector<128x128xf32> -> vector<128x128xf32>
    %33 = vector.broadcast %31 : vector<1x128xf32> to vector<128x128xf32>
    %34 = arith.addf %32, %33 : vector<128x128xf32>
    %cst_19 = arith.constant dense<0xFF800000> : vector<128xf32>
    %35 = vector.multi_reduction <maximumf>, %34, %cst_19 [1] : vector<128x128xf32> to vector<128xf32>
    %36 = vector.shape_cast %35 : vector<128xf32> to vector<128x1xf32>
    %37 = vector.broadcast %36 : vector<128x1xf32> to vector<128x128xf32>
    %38 = arith.subf %34, %37 : vector<128x128xf32>
    %39 = math.exp %38 : vector<128x128xf32>
    %cst_20 = arith.constant dense<0.000000e+00> : vector<128xf32>
    %40 = vector.multi_reduction <add>, %39, %cst_20 [1] : vector<128x128xf32> to vector<128xf32>
    %41 = vector.shape_cast %40 : vector<128xf32> to vector<128x1xf32>
    %42 = tpu.reciprocal %41 {approx = true} : vector<128x1xf32> -> vector<128x1xf32>
    %43 = vector.broadcast %42 : vector<128x1xf32> to vector<128x128xf32>
    %44 = arith.mulf %39, %43 : vector<128x128xf32>
    %45 = arith.truncf %44 : vector<128x128xf32> to vector<128x128xbf16>
    %cst_21 = arith.constant dense<0.000000e+00> : vector<128x8xf32>
    %46 = tpu.matmul %45, %29, %cst_21 {dimension_numbers = #tpu.dot_dimension_numbers<[1], [0], [0], [1], [0, 0, 1, 1], [], []>} : vector<128x128xbf16>, vector<128x8xbf16>, vector<128x8xf32> -> vector<128x8xf32>
    %47 = vector.extract_strided_slice %21 {offsets = [128, 0], sizes = [128, 8], strides = [1, 1]} : vector<256x32xbf16> to vector<128x8xbf16>
    %48 = vector.extract_strided_slice %23 {offsets = [128, 0], sizes = [128, 8], strides = [1, 1]} : vector<256x32xbf16> to vector<128x8xbf16>
    %49 = vector.extract_strided_slice %25 {offsets = [128, 0], sizes = [128, 8], strides = [1, 1]} : vector<256x32xbf16> to vector<128x8xbf16>
    %c1 = arith.constant 1 : index
    %c0_22 = arith.constant 0 : index
    %c0_23 = arith.constant 0 : index
    %50 = vector.load %arg2[%c1, %c0_22, %c0_23] : memref<2x1x128xf32, #tpu.memory_space<vmem>>, vector<1x1x128xf32>
    %51 = vector.shape_cast %50 : vector<1x1x128xf32> to vector<1x128xf32>
    %cst_24 = arith.constant dense<0.000000e+00> : vector<128x128xf32>
    %52 = tpu.matmul %47, %48, %cst_24 {dimension_numbers = #tpu.dot_dimension_numbers<[1], [1], [0], [0], [0, 0, 1, 0], [], []>} : vector<128x8xbf16>, vector<128x8xbf16>, vector<128x128xf32> -> vector<128x128xf32>
    %53 = vector.broadcast %51 : vector<1x128xf32> to vector<128x128xf32>
    %54 = arith.addf %52, %53 : vector<128x128xf32>
    %cst_25 = arith.constant dense<0xFF800000> : vector<128xf32>
    %55 = vector.multi_reduction <maximumf>, %54, %cst_25 [1] : vector<128x128xf32> to vector<128xf32>
    %56 = vector.shape_cast %55 : vector<128xf32> to vector<128x1xf32>
    %57 = vector.broadcast %56 : vector<128x1xf32> to vector<128x128xf32>
    %58 = arith.subf %54, %57 : vector<128x128xf32>
    %59 = math.exp %58 : vector<128x128xf32>
    %cst_26 = arith.constant dense<0.000000e+00> : vector<128xf32>
    %60 = vector.multi_reduction <add>, %59, %cst_26 [1] : vector<128x128xf32> to vector<128xf32>
    %61 = vector.shape_cast %60 : vector<128xf32> to vector<128x1xf32>
    %62 = tpu.reciprocal %61 {approx = true} : vector<128x1xf32> -> vector<128x1xf32>
    %63 = vector.broadcast %62 : vector<128x1xf32> to vector<128x128xf32>
    %64 = arith.mulf %59, %63 : vector<128x128xf32>
    %65 = arith.truncf %64 : vector<128x128xf32> to vector<128x128xbf16>
    %cst_27 = arith.constant dense<0.000000e+00> : vector<128x8xf32>
    %66 = tpu.matmul %65, %49, %cst_27 {dimension_numbers = #tpu.dot_dimension_numbers<[1], [0], [0], [1], [0, 0, 1, 1], [], []>} : vector<128x128xbf16>, vector<128x8xbf16>, vector<128x8xf32> -> vector<128x8xf32>
    %67 = tpu.concatenate %46, %66 in 0 : vector<128x8xf32>, vector<128x8xf32> -> vector<256x8xf32>
    %68 = arith.truncf %67 : vector<256x8xf32> to vector<256x8xbf16>
    %c0_28 = arith.constant 0 : index
    %c0_29 = arith.constant 0 : index
    %c0_30 = arith.constant 0 : index
    %c0_31 = arith.constant 0 : index
    %69 = vector.load %arg7[%c0_28, %c0_29, %c0_30, %c0_31] : memref<2x4x8x32xbf16, #tpu.memory_space<vmem>>, vector<1x1x8x32xbf16>
    %70 = vector.shape_cast %69 : vector<1x1x8x32xbf16> to vector<8x32xbf16>
    %cst_32 = arith.constant dense<0.000000e+00> : vector<256x32xf32>
    %71 = tpu.matmul %68, %70, %cst_32 {dimension_numbers = #tpu.dot_dimension_numbers<[1], [0], [0], [1], [0, 0, 1, 1], [], []>} : vector<256x8xbf16>, vector<8x32xbf16>, vector<256x32xf32> -> vector<256x32xf32>
    %72 = arith.addf %26, %71 : vector<256x32xf32>
    %73 = vector.extract_strided_slice %21 {offsets = [0, 8], sizes = [128, 8], strides = [1, 1]} : vector<256x32xbf16> to vector<128x8xbf16>
    %74 = vector.extract_strided_slice %23 {offsets = [0, 8], sizes = [128, 8], strides = [1, 1]} : vector<256x32xbf16> to vector<128x8xbf16>
    %75 = vector.extract_strided_slice %25 {offsets = [0, 8], sizes = [128, 8], strides = [1, 1]} : vector<256x32xbf16> to vector<128x8xbf16>
    %c0_33 = arith.constant 0 : index
    %c0_34 = arith.constant 0 : index
    %c0_35 = arith.constant 0 : index
    %76 = vector.load %arg2[%c0_33, %c0_34, %c0_35] : memref<2x1x128xf32, #tpu.memory_space<vmem>>, vector<1x1x128xf32>
    %77 = vector.shape_cast %76 : vector<1x1x128xf32> to vector<1x128xf32>
    %cst_36 = arith.constant dense<0.000000e+00> : vector<128x128xf32>
    %78 = tpu.matmul %73, %74, %cst_36 {dimension_numbers = #tpu.dot_dimension_numbers<[1], [1], [0], [0], [0, 0, 1, 0], [], []>} : vector<128x8xbf16>, vector<128x8xbf16>, vector<128x128xf32> -> vector<128x128xf32>
    %79 = vector.broadcast %77 : vector<1x128xf32> to vector<128x128xf32>
    %80 = arith.addf %78, %79 : vector<128x128xf32>
    %cst_37 = arith.constant dense<0xFF800000> : vector<128xf32>
    %81 = vector.multi_reduction <maximumf>, %80, %cst_37 [1] : vector<128x128xf32> to vector<128xf32>
    %82 = vector.shape_cast %81 : vector<128xf32> to vector<128x1xf32>
    %83 = vector.broadcast %82 : vector<128x1xf32> to vector<128x128xf32>
    %84 = arith.subf %80, %83 : vector<128x128xf32>
    %85 = math.exp %84 : vector<128x128xf32>
    %cst_38 = arith.constant dense<0.000000e+00> : vector<128xf32>
    %86 = vector.multi_reduction <add>, %85, %cst_38 [1] : vector<128x128xf32> to vector<128xf32>
    %87 = vector.shape_cast %86 : vector<128xf32> to vector<128x1xf32>
    %88 = tpu.reciprocal %87 {approx = true} : vector<128x1xf32> -> vector<128x1xf32>
    %89 = vector.broadcast %88 : vector<128x1xf32> to vector<128x128xf32>
    %90 = arith.mulf %85, %89 : vector<128x128xf32>
    %91 = arith.truncf %90 : vector<128x128xf32> to vector<128x128xbf16>
    %cst_39 = arith.constant dense<0.000000e+00> : vector<128x8xf32>
    %92 = tpu.matmul %91, %75, %cst_39 {dimension_numbers = #tpu.dot_dimension_numbers<[1], [0], [0], [1], [0, 0, 1, 1], [], []>} : vector<128x128xbf16>, vector<128x8xbf16>, vector<128x8xf32> -> vector<128x8xf32>
    %93 = vector.extract_strided_slice %21 {offsets = [128, 8], sizes = [128, 8], strides = [1, 1]} : vector<256x32xbf16> to vector<128x8xbf16>
    %94 = vector.extract_strided_slice %23 {offsets = [128, 8], sizes = [128, 8], strides = [1, 1]} : vector<256x32xbf16> to vector<128x8xbf16>
    %95 = vector.extract_strided_slice %25 {offsets = [128, 8], sizes = [128, 8], strides = [1, 1]} : vector<256x32xbf16> to vector<128x8xbf16>
    %c1_40 = arith.constant 1 : index
    %c0_41 = arith.constant 0 : index
    %c0_42 = arith.constant 0 : index
    %96 = vector.load %arg2[%c1_40, %c0_41, %c0_42] : memref<2x1x128xf32, #tpu.memory_space<vmem>>, vector<1x1x128xf32>
    %97 = vector.shape_cast %96 : vector<1x1x128xf32> to vector<1x128xf32>
    %cst_43 = arith.constant dense<0.000000e+00> : vector<128x128xf32>
    %98 = tpu.matmul %93, %94, %cst_43 {dimension_numbers = #tpu.dot_dimension_numbers<[1], [1], [0], [0], [0, 0, 1, 0], [], []>} : vector<128x8xbf16>, vector<128x8xbf16>, vector<128x128xf32> -> vector<128x128xf32>
    %99 = vector.broadcast %97 : vector<1x128xf32> to vector<128x128xf32>
    %100 = arith.addf %98, %99 : vector<128x128xf32>
    %cst_44 = arith.constant dense<0xFF800000> : vector<128xf32>
    %101 = vector.multi_reduction <maximumf>, %100, %cst_44 [1] : vector<128x128xf32> to vector<128xf32>
    %102 = vector.shape_cast %101 : vector<128xf32> to vector<128x1xf32>
    %103 = vector.broadcast %102 : vector<128x1xf32> to vector<128x128xf32>
    %104 = arith.subf %100, %103 : vector<128x128xf32>
    %105 = math.exp %104 : vector<128x128xf32>
    %cst_45 = arith.constant dense<0.000000e+00> : vector<128xf32>
    %106 = vector.multi_reduction <add>, %105, %cst_45 [1] : vector<128x128xf32> to vector<128xf32>
    %107 = vector.shape_cast %106 : vector<128xf32> to vector<128x1xf32>
    %108 = tpu.reciprocal %107 {approx = true} : vector<128x1xf32> -> vector<128x1xf32>
    %109 = vector.broadcast %108 : vector<128x1xf32> to vector<128x128xf32>
    %110 = arith.mulf %105, %109 : vector<128x128xf32>
    %111 = arith.truncf %110 : vector<128x128xf32> to vector<128x128xbf16>
    %cst_46 = arith.constant dense<0.000000e+00> : vector<128x8xf32>
    %112 = tpu.matmul %111, %95, %cst_46 {dimension_numbers = #tpu.dot_dimension_numbers<[1], [0], [0], [1], [0, 0, 1, 1], [], []>} : vector<128x128xbf16>, vector<128x8xbf16>, vector<128x8xf32> -> vector<128x8xf32>
    %113 = tpu.concatenate %92, %112 in 0 : vector<128x8xf32>, vector<128x8xf32> -> vector<256x8xf32>
    %114 = arith.truncf %113 : vector<256x8xf32> to vector<256x8xbf16>
    %c0_47 = arith.constant 0 : index
    %c1_48 = arith.constant 1 : index
    %c0_49 = arith.constant 0 : index
    %c0_50 = arith.constant 0 : index
    %115 = vector.load %arg7[%c0_47, %c1_48, %c0_49, %c0_50] : memref<2x4x8x32xbf16, #tpu.memory_space<vmem>>, vector<1x1x8x32xbf16>
    %116 = vector.shape_cast %115 : vector<1x1x8x32xbf16> to vector<8x32xbf16>
    %cst_51 = arith.constant dense<0.000000e+00> : vector<256x32xf32>
    %117 = tpu.matmul %114, %116, %cst_51 {dimension_numbers = #tpu.dot_dimension_numbers<[1], [0], [0], [1], [0, 0, 1, 1], [], []>} : vector<256x8xbf16>, vector<8x32xbf16>, vector<256x32xf32> -> vector<256x32xf32>
    %118 = arith.addf %72, %117 : vector<256x32xf32>
    %119 = vector.extract_strided_slice %21 {offsets = [0, 16], sizes = [128, 8], strides = [1, 1]} : vector<256x32xbf16> to vector<128x8xbf16>
    %120 = vector.extract_strided_slice %23 {offsets = [0, 16], sizes = [128, 8], strides = [1, 1]} : vector<256x32xbf16> to vector<128x8xbf16>
    %121 = vector.extract_strided_slice %25 {offsets = [0, 16], sizes = [128, 8], strides = [1, 1]} : vector<256x32xbf16> to vector<128x8xbf16>
    %c0_52 = arith.constant 0 : index
    %c0_53 = arith.constant 0 : index
    %c0_54 = arith.constant 0 : index
    %122 = vector.load %arg2[%c0_52, %c0_53, %c0_54] : memref<2x1x128xf32, #tpu.memory_space<vmem>>, vector<1x1x128xf32>
    %123 = vector.shape_cast %122 : vector<1x1x128xf32> to vector<1x128xf32>
    %cst_55 = arith.constant dense<0.000000e+00> : vector<128x128xf32>
    %124 = tpu.matmul %119, %120, %cst_55 {dimension_numbers = #tpu.dot_dimension_numbers<[1], [1], [0], [0], [0, 0, 1, 0], [], []>} : vector<128x8xbf16>, vector<128x8xbf16>, vector<128x128xf32> -> vector<128x128xf32>
    %125 = vector.broadcast %123 : vector<1x128xf32> to vector<128x128xf32>
    %126 = arith.addf %124, %125 : vector<128x128xf32>
    %cst_56 = arith.constant dense<0xFF800000> : vector<128xf32>
    %127 = vector.multi_reduction <maximumf>, %126, %cst_56 [1] : vector<128x128xf32> to vector<128xf32>
    %128 = vector.shape_cast %127 : vector<128xf32> to vector<128x1xf32>
    %129 = vector.broadcast %128 : vector<128x1xf32> to vector<128x128xf32>
    %130 = arith.subf %126, %129 : vector<128x128xf32>
    %131 = math.exp %130 : vector<128x128xf32>
    %cst_57 = arith.constant dense<0.000000e+00> : vector<128xf32>
    %132 = vector.multi_reduction <add>, %131, %cst_57 [1] : vector<128x128xf32> to vector<128xf32>
    %133 = vector.shape_cast %132 : vector<128xf32> to vector<128x1xf32>
    %134 = tpu.reciprocal %133 {approx = true} : vector<128x1xf32> -> vector<128x1xf32>
    %135 = vector.broadcast %134 : vector<128x1xf32> to vector<128x128xf32>
    %136 = arith.mulf %131, %135 : vector<128x128xf32>
    %137 = arith.truncf %136 : vector<128x128xf32> to vector<128x128xbf16>
    %cst_58 = arith.constant dense<0.000000e+00> : vector<128x8xf32>
    %138 = tpu.matmul %137, %121, %cst_58 {dimension_numbers = #tpu.dot_dimension_numbers<[1], [0], [0], [1], [0, 0, 1, 1], [], []>} : vector<128x128xbf16>, vector<128x8xbf16>, vector<128x8xf32> -> vector<128x8xf32>
    %139 = vector.extract_strided_slice %21 {offsets = [128, 16], sizes = [128, 8], strides = [1, 1]} : vector<256x32xbf16> to vector<128x8xbf16>
    %140 = vector.extract_strided_slice %23 {offsets = [128, 16], sizes = [128, 8], strides = [1, 1]} : vector<256x32xbf16> to vector<128x8xbf16>
    %141 = vector.extract_strided_slice %25 {offsets = [128, 16], sizes = [128, 8], strides = [1, 1]} : vector<256x32xbf16> to vector<128x8xbf16>
    %c1_59 = arith.constant 1 : index
    %c0_60 = arith.constant 0 : index
    %c0_61 = arith.constant 0 : index
    %142 = vector.load %arg2[%c1_59, %c0_60, %c0_61] : memref<2x1x128xf32, #tpu.memory_space<vmem>>, vector<1x1x128xf32>
    %143 = vector.shape_cast %142 : vector<1x1x128xf32> to vector<1x128xf32>
    %cst_62 = arith.constant dense<0.000000e+00> : vector<128x128xf32>
    %144 = tpu.matmul %139, %140, %cst_62 {dimension_numbers = #tpu.dot_dimension_numbers<[1], [1], [0], [0], [0, 0, 1, 0], [], []>} : vector<128x8xbf16>, vector<128x8xbf16>, vector<128x128xf32> -> vector<128x128xf32>
    %145 = vector.broadcast %143 : vector<1x128xf32> to vector<128x128xf32>
    %146 = arith.addf %144, %145 : vector<128x128xf32>
    %cst_63 = arith.constant dense<0xFF800000> : vector<128xf32>
    %147 = vector.multi_reduction <maximumf>, %146, %cst_63 [1] : vector<128x128xf32> to vector<128xf32>
    %148 = vector.shape_cast %147 : vector<128xf32> to vector<128x1xf32>
    %149 = vector.broadcast %148 : vector<128x1xf32> to vector<128x128xf32>
    %150 = arith.subf %146, %149 : vector<128x128xf32>
    %151 = math.exp %150 : vector<128x128xf32>
    %cst_64 = arith.constant dense<0.000000e+00> : vector<128xf32>
    %152 = vector.multi_reduction <add>, %151, %cst_64 [1] : vector<128x128xf32> to vector<128xf32>
    %153 = vector.shape_cast %152 : vector<128xf32> to vector<128x1xf32>
    %154 = tpu.reciprocal %153 {approx = true} : vector<128x1xf32> -> vector<128x1xf32>
    %155 = vector.broadcast %154 : vector<128x1xf32> to vector<128x128xf32>
    %156 = arith.mulf %151, %155 : vector<128x128xf32>
    %157 = arith.truncf %156 : vector<128x128xf32> to vector<128x128xbf16>
    %cst_65 = arith.constant dense<0.000000e+00> : vector<128x8xf32>
    %158 = tpu.matmul %157, %141, %cst_65 {dimension_numbers = #tpu.dot_dimension_numbers<[1], [0], [0], [1], [0, 0, 1, 1], [], []>} : vector<128x128xbf16>, vector<128x8xbf16>, vector<128x8xf32> -> vector<128x8xf32>
    %159 = tpu.concatenate %138, %158 in 0 : vector<128x8xf32>, vector<128x8xf32> -> vector<256x8xf32>
    %160 = arith.truncf %159 : vector<256x8xf32> to vector<256x8xbf16>
    %c0_66 = arith.constant 0 : index
    %c2 = arith.constant 2 : index
    %c0_67 = arith.constant 0 : index
    %c0_68 = arith.constant 0 : index
    %161 = vector.load %arg7[%c0_66, %c2, %c0_67, %c0_68] : memref<2x4x8x32xbf16, #tpu.memory_space<vmem>>, vector<1x1x8x32xbf16>
    %162 = vector.shape_cast %161 : vector<1x1x8x32xbf16> to vector<8x32xbf16>
    %cst_69 = arith.constant dense<0.000000e+00> : vector<256x32xf32>
    %163 = tpu.matmul %160, %162, %cst_69 {dimension_numbers = #tpu.dot_dimension_numbers<[1], [0], [0], [1], [0, 0, 1, 1], [], []>} : vector<256x8xbf16>, vector<8x32xbf16>, vector<256x32xf32> -> vector<256x32xf32>
    %164 = arith.addf %118, %163 : vector<256x32xf32>
    %165 = vector.extract_strided_slice %21 {offsets = [0, 24], sizes = [128, 8], strides = [1, 1]} : vector<256x32xbf16> to vector<128x8xbf16>
    %166 = vector.extract_strided_slice %23 {offsets = [0, 24], sizes = [128, 8], strides = [1, 1]} : vector<256x32xbf16> to vector<128x8xbf16>
    %167 = vector.extract_strided_slice %25 {offsets = [0, 24], sizes = [128, 8], strides = [1, 1]} : vector<256x32xbf16> to vector<128x8xbf16>
    %c0_70 = arith.constant 0 : index
    %c0_71 = arith.constant 0 : index
    %c0_72 = arith.constant 0 : index
    %168 = vector.load %arg2[%c0_70, %c0_71, %c0_72] : memref<2x1x128xf32, #tpu.memory_space<vmem>>, vector<1x1x128xf32>
    %169 = vector.shape_cast %168 : vector<1x1x128xf32> to vector<1x128xf32>
    %cst_73 = arith.constant dense<0.000000e+00> : vector<128x128xf32>
    %170 = tpu.matmul %165, %166, %cst_73 {dimension_numbers = #tpu.dot_dimension_numbers<[1], [1], [0], [0], [0, 0, 1, 0], [], []>} : vector<128x8xbf16>, vector<128x8xbf16>, vector<128x128xf32> -> vector<128x128xf32>
    %171 = vector.broadcast %169 : vector<1x128xf32> to vector<128x128xf32>
    %172 = arith.addf %170, %171 : vector<128x128xf32>
    %cst_74 = arith.constant dense<0xFF800000> : vector<128xf32>
    %173 = vector.multi_reduction <maximumf>, %172, %cst_74 [1] : vector<128x128xf32> to vector<128xf32>
    %174 = vector.shape_cast %173 : vector<128xf32> to vector<128x1xf32>
    %175 = vector.broadcast %174 : vector<128x1xf32> to vector<128x128xf32>
    %176 = arith.subf %172, %175 : vector<128x128xf32>
    %177 = math.exp %176 : vector<128x128xf32>
    %cst_75 = arith.constant dense<0.000000e+00> : vector<128xf32>
    %178 = vector.multi_reduction <add>, %177, %cst_75 [1] : vector<128x128xf32> to vector<128xf32>
    %179 = vector.shape_cast %178 : vector<128xf32> to vector<128x1xf32>
    %180 = tpu.reciprocal %179 {approx = true} : vector<128x1xf32> -> vector<128x1xf32>
    %181 = vector.broadcast %180 : vector<128x1xf32> to vector<128x128xf32>
    %182 = arith.mulf %177, %181 : vector<128x128xf32>
    %183 = arith.truncf %182 : vector<128x128xf32> to vector<128x128xbf16>
    %cst_76 = arith.constant dense<0.000000e+00> : vector<128x8xf32>
    %184 = tpu.matmul %183, %167, %cst_76 {dimension_numbers = #tpu.dot_dimension_numbers<[1], [0], [0], [1], [0, 0, 1, 1], [], []>} : vector<128x128xbf16>, vector<128x8xbf16>, vector<128x8xf32> -> vector<128x8xf32>
    %185 = vector.extract_strided_slice %21 {offsets = [128, 24], sizes = [128, 8], strides = [1, 1]} : vector<256x32xbf16> to vector<128x8xbf16>
    %186 = vector.extract_strided_slice %23 {offsets = [128, 24], sizes = [128, 8], strides = [1, 1]} : vector<256x32xbf16> to vector<128x8xbf16>
    %187 = vector.extract_strided_slice %25 {offsets = [128, 24], sizes = [128, 8], strides = [1, 1]} : vector<256x32xbf16> to vector<128x8xbf16>
    %c1_77 = arith.constant 1 : index
    %c0_78 = arith.constant 0 : index
    %c0_79 = arith.constant 0 : index
    %188 = vector.load %arg2[%c1_77, %c0_78, %c0_79] : memref<2x1x128xf32, #tpu.memory_space<vmem>>, vector<1x1x128xf32>
    %189 = vector.shape_cast %188 : vector<1x1x128xf32> to vector<1x128xf32>
    %cst_80 = arith.constant dense<0.000000e+00> : vector<128x128xf32>
    %190 = tpu.matmul %185, %186, %cst_80 {dimension_numbers = #tpu.dot_dimension_numbers<[1], [1], [0], [0], [0, 0, 1, 0], [], []>} : vector<128x8xbf16>, vector<128x8xbf16>, vector<128x128xf32> -> vector<128x128xf32>
    %191 = vector.broadcast %189 : vector<1x128xf32> to vector<128x128xf32>
    %192 = arith.addf %190, %191 : vector<128x128xf32>
    %cst_81 = arith.constant dense<0xFF800000> : vector<128xf32>
    %193 = vector.multi_reduction <maximumf>, %192, %cst_81 [1] : vector<128x128xf32> to vector<128xf32>
    %194 = vector.shape_cast %193 : vector<128xf32> to vector<128x1xf32>
    %195 = vector.broadcast %194 : vector<128x1xf32> to vector<128x128xf32>
    %196 = arith.subf %192, %195 : vector<128x128xf32>
    %197 = math.exp %196 : vector<128x128xf32>
    %cst_82 = arith.constant dense<0.000000e+00> : vector<128xf32>
    %198 = vector.multi_reduction <add>, %197, %cst_82 [1] : vector<128x128xf32> to vector<128xf32>
    %199 = vector.shape_cast %198 : vector<128xf32> to vector<128x1xf32>
    %200 = tpu.reciprocal %199 {approx = true} : vector<128x1xf32> -> vector<128x1xf32>
    %201 = vector.broadcast %200 : vector<128x1xf32> to vector<128x128xf32>
    %202 = arith.mulf %197, %201 : vector<128x128xf32>
    %203 = arith.truncf %202 : vector<128x128xf32> to vector<128x128xbf16>
    %cst_83 = arith.constant dense<0.000000e+00> : vector<128x8xf32>
    %204 = tpu.matmul %203, %187, %cst_83 {dimension_numbers = #tpu.dot_dimension_numbers<[1], [0], [0], [1], [0, 0, 1, 1], [], []>} : vector<128x128xbf16>, vector<128x8xbf16>, vector<128x8xf32> -> vector<128x8xf32>
    %205 = tpu.concatenate %184, %204 in 0 : vector<128x8xf32>, vector<128x8xf32> -> vector<256x8xf32>
    %206 = arith.truncf %205 : vector<256x8xf32> to vector<256x8xbf16>
    %c0_84 = arith.constant 0 : index
    %c3 = arith.constant 3 : index
    %c0_85 = arith.constant 0 : index
    %c0_86 = arith.constant 0 : index
    %207 = vector.load %arg7[%c0_84, %c3, %c0_85, %c0_86] : memref<2x4x8x32xbf16, #tpu.memory_space<vmem>>, vector<1x1x8x32xbf16>
    %208 = vector.shape_cast %207 : vector<1x1x8x32xbf16> to vector<8x32xbf16>
    %cst_87 = arith.constant dense<0.000000e+00> : vector<256x32xf32>
    %209 = tpu.matmul %206, %208, %cst_87 {dimension_numbers = #tpu.dot_dimension_numbers<[1], [0], [0], [1], [0, 0, 1, 1], [], []>} : vector<256x8xbf16>, vector<8x32xbf16>, vector<256x32xf32> -> vector<256x32xf32>
    %210 = arith.addf %164, %209 : vector<256x32xf32>
    %211 = arith.addf %11, %210 : vector<256x32xf32>
    %c0_88 = arith.constant 0 : index
    %c0_89 = arith.constant 0 : index
    %c0_90 = arith.constant 0 : index
    %212 = vector.load %arg8[%c0_88, %c0_89, %c0_90] : memref<2x1x32xf32, #tpu.memory_space<vmem>>, vector<1x1x32xf32>
    %213 = vector.shape_cast %212 : vector<1x1x32xf32> to vector<1x32xf32>
    %214 = vector.broadcast %213 : vector<1x32xf32> to vector<256x32xf32>
    %215 = arith.addf %211, %214 : vector<256x32xf32>
    %c0_91 = arith.constant 0 : index
    %c0_92 = arith.constant 0 : index
    %c0_93 = arith.constant 0 : index
    %216 = vector.load %arg9[%c0_91, %c0_92, %c0_93] : memref<2x1x32xf32, #tpu.memory_space<vmem>>, vector<1x1x32xf32>
    %217 = vector.shape_cast %216 : vector<1x1x32xf32> to vector<1x32xf32>
    %c0_94 = arith.constant 0 : index
    %c0_95 = arith.constant 0 : index
    %c0_96 = arith.constant 0 : index
    %218 = vector.load %arg10[%c0_94, %c0_95, %c0_96] : memref<2x1x32xf32, #tpu.memory_space<vmem>>, vector<1x1x32xf32>
    %219 = vector.shape_cast %218 : vector<1x1x32xf32> to vector<1x32xf32>
    %cst_97 = arith.constant dense<0.000000e+00> : vector<256xf32>
    %220 = vector.multi_reduction <add>, %215, %cst_97 [1] : vector<256x32xf32> to vector<256xf32>
    %221 = vector.shape_cast %220 : vector<256xf32> to vector<256x1xf32>
    %cst_98 = arith.constant 3.200000e+01 : f32
    %222 = vector.broadcast %cst_98 : f32 to vector<256x1xf32>
    %223 = arith.divf %221, %222 : vector<256x1xf32>
    %224 = vector.broadcast %223 : vector<256x1xf32> to vector<256x32xf32>
    %225 = arith.subf %215, %224 : vector<256x32xf32>
    %226 = arith.mulf %225, %225 : vector<256x32xf32>
    %cst_99 = arith.constant dense<0.000000e+00> : vector<256xf32>
    %227 = vector.multi_reduction <add>, %226, %cst_99 [1] : vector<256x32xf32> to vector<256xf32>
    %228 = vector.shape_cast %227 : vector<256xf32> to vector<256x1xf32>
    %cst_100 = arith.constant 3.200000e+01 : f32
    %229 = vector.broadcast %cst_100 : f32 to vector<256x1xf32>
    %230 = arith.divf %228, %229 : vector<256x1xf32>
    %cst_101 = arith.constant 9.99999974E-6 : f32
    %231 = vector.broadcast %cst_101 : f32 to vector<256x1xf32>
    %232 = arith.addf %230, %231 : vector<256x1xf32>
    %233 = math.rsqrt %232 : vector<256x1xf32>
    %234 = vector.broadcast %233 : vector<256x1xf32> to vector<256x32xf32>
    %235 = arith.mulf %225, %234 : vector<256x32xf32>
    %236 = vector.broadcast %217 : vector<1x32xf32> to vector<256x32xf32>
    %237 = arith.mulf %235, %236 : vector<256x32xf32>
    %238 = vector.broadcast %219 : vector<1x32xf32> to vector<256x32xf32>
    %239 = arith.addf %237, %238 : vector<256x32xf32>
    %240 = arith.truncf %239 : vector<256x32xf32> to vector<256x32xbf16>
    %c0_102 = arith.constant 0 : index
    %c0_103 = arith.constant 0 : index
    %c0_104 = arith.constant 0 : index
    %241 = vector.load %arg11[%c0_102, %c0_103, %c0_104] : memref<2x32x64xbf16, #tpu.memory_space<vmem>>, vector<1x32x64xbf16>
    %242 = vector.shape_cast %241 : vector<1x32x64xbf16> to vector<32x64xbf16>
    %cst_105 = arith.constant dense<0.000000e+00> : vector<256x64xf32>
    %243 = tpu.matmul %240, %242, %cst_105 {dimension_numbers = #tpu.dot_dimension_numbers<[1], [0], [0], [1], [0, 0, 1, 1], [], []>} : vector<256x32xbf16>, vector<32x64xbf16>, vector<256x64xf32> -> vector<256x64xf32>
    %c0_106 = arith.constant 0 : index
    %c0_107 = arith.constant 0 : index
    %c0_108 = arith.constant 0 : index
    %244 = vector.load %arg12[%c0_106, %c0_107, %c0_108] : memref<2x1x64xf32, #tpu.memory_space<vmem>>, vector<1x1x64xf32>
    %245 = vector.shape_cast %244 : vector<1x1x64xf32> to vector<1x64xf32>
    %246 = vector.broadcast %245 : vector<1x64xf32> to vector<256x64xf32>
    %247 = arith.addf %243, %246 : vector<256x64xf32>
    %cst_109 = arith.constant 0.000000e+00 : f32
    %248 = vector.broadcast %cst_109 : f32 to vector<256x64xf32>
    %249 = arith.maximumf %247, %248 : vector<256x64xf32>
    %250 = arith.truncf %249 : vector<256x64xf32> to vector<256x64xbf16>
    %c0_110 = arith.constant 0 : index
    %c0_111 = arith.constant 0 : index
    %c0_112 = arith.constant 0 : index
    %251 = vector.load %arg13[%c0_110, %c0_111, %c0_112] : memref<2x64x32xbf16, #tpu.memory_space<vmem>>, vector<1x64x32xbf16>
    %252 = vector.shape_cast %251 : vector<1x64x32xbf16> to vector<64x32xbf16>
    %cst_113 = arith.constant dense<0.000000e+00> : vector<256x32xf32>
    %253 = tpu.matmul %250, %252, %cst_113 {dimension_numbers = #tpu.dot_dimension_numbers<[1], [0], [0], [1], [0, 0, 1, 1], [], []>} : vector<256x64xbf16>, vector<64x32xbf16>, vector<256x32xf32> -> vector<256x32xf32>
    %c0_114 = arith.constant 0 : index
    %c0_115 = arith.constant 0 : index
    %c0_116 = arith.constant 0 : index
    %254 = vector.load %arg14[%c0_114, %c0_115, %c0_116] : memref<2x1x32xf32, #tpu.memory_space<vmem>>, vector<1x1x32xf32>
    %255 = vector.shape_cast %254 : vector<1x1x32xf32> to vector<1x32xf32>
    %256 = vector.broadcast %255 : vector<1x32xf32> to vector<256x32xf32>
    %257 = arith.addf %253, %256 : vector<256x32xf32>
    %258 = arith.addf %239, %257 : vector<256x32xf32>
    %c0_117 = arith.constant 0 : index
    %c0_118 = arith.constant 0 : index
    %c0_119 = arith.constant 0 : index
    %259 = vector.load %arg15[%c0_117, %c0_118, %c0_119] : memref<2x1x32xf32, #tpu.memory_space<vmem>>, vector<1x1x32xf32>
    %260 = vector.shape_cast %259 : vector<1x1x32xf32> to vector<1x32xf32>
    %c0_120 = arith.constant 0 : index
    %c0_121 = arith.constant 0 : index
    %c0_122 = arith.constant 0 : index
    %261 = vector.load %arg16[%c0_120, %c0_121, %c0_122] : memref<2x1x32xf32, #tpu.memory_space<vmem>>, vector<1x1x32xf32>
    %262 = vector.shape_cast %261 : vector<1x1x32xf32> to vector<1x32xf32>
    %cst_123 = arith.constant dense<0.000000e+00> : vector<256xf32>
    %263 = vector.multi_reduction <add>, %258, %cst_123 [1] : vector<256x32xf32> to vector<256xf32>
    %264 = vector.shape_cast %263 : vector<256xf32> to vector<256x1xf32>
    %cst_124 = arith.constant 3.200000e+01 : f32
    %265 = vector.broadcast %cst_124 : f32 to vector<256x1xf32>
    %266 = arith.divf %264, %265 : vector<256x1xf32>
    %267 = vector.broadcast %266 : vector<256x1xf32> to vector<256x32xf32>
    %268 = arith.subf %258, %267 : vector<256x32xf32>
    %269 = arith.mulf %268, %268 : vector<256x32xf32>
    %cst_125 = arith.constant dense<0.000000e+00> : vector<256xf32>
    %270 = vector.multi_reduction <add>, %269, %cst_125 [1] : vector<256x32xf32> to vector<256xf32>
    %271 = vector.shape_cast %270 : vector<256xf32> to vector<256x1xf32>
    %cst_126 = arith.constant 3.200000e+01 : f32
    %272 = vector.broadcast %cst_126 : f32 to vector<256x1xf32>
    %273 = arith.divf %271, %272 : vector<256x1xf32>
    %cst_127 = arith.constant 9.99999974E-6 : f32
    %274 = vector.broadcast %cst_127 : f32 to vector<256x1xf32>
    %275 = arith.addf %273, %274 : vector<256x1xf32>
    %276 = math.rsqrt %275 : vector<256x1xf32>
    %277 = vector.broadcast %276 : vector<256x1xf32> to vector<256x32xf32>
    %278 = arith.mulf %268, %277 : vector<256x32xf32>
    %279 = vector.broadcast %260 : vector<1x32xf32> to vector<256x32xf32>
    %280 = arith.mulf %278, %279 : vector<256x32xf32>
    %281 = vector.broadcast %262 : vector<1x32xf32> to vector<256x32xf32>
    %282 = arith.addf %280, %281 : vector<256x32xf32>
    %283 = arith.truncf %282 : vector<256x32xf32> to vector<256x32xbf16>
    %284 = vector.extract_strided_slice %282 {offsets = [0, 0], sizes = [1, 32], strides = [1, 1]} : vector<256x32xf32> to vector<1x32xf32>
    %285 = vector.extract_strided_slice %282 {offsets = [128, 0], sizes = [1, 32], strides = [1, 1]} : vector<256x32xf32> to vector<1x32xf32>
    %286 = tpu.concatenate %284, %285 in 0 : vector<1x32xf32>, vector<1x32xf32> -> vector<2x32xf32>
    %287 = arith.truncf %286 : vector<2x32xf32> to vector<2x32xbf16>
    %c1_128 = arith.constant 1 : index
    %c0_129 = arith.constant 0 : index
    %c0_130 = arith.constant 0 : index
    %288 = vector.load %arg5[%c1_128, %c0_129, %c0_130] : memref<2x32x96xbf16, #tpu.memory_space<vmem>>, vector<1x32x96xbf16>
    %289 = vector.shape_cast %288 : vector<1x32x96xbf16> to vector<32x96xbf16>
    %290 = vector.extract_strided_slice %289 {offsets = [0, 0], sizes = [32, 32], strides = [1, 1]} : vector<32x96xbf16> to vector<32x32xbf16>
    %cst_131 = arith.constant dense<0.000000e+00> : vector<2x32xf32>
    %291 = tpu.matmul %287, %290, %cst_131 {dimension_numbers = #tpu.dot_dimension_numbers<[1], [0], [0], [1], [0, 0, 1, 1], [], []>} : vector<2x32xbf16>, vector<32x32xbf16>, vector<2x32xf32> -> vector<2x32xf32>
    %c1_132 = arith.constant 1 : index
    %c0_133 = arith.constant 0 : index
    %c0_134 = arith.constant 0 : index
    %292 = vector.load %arg6[%c1_132, %c0_133, %c0_134] : memref<2x1x96xf32, #tpu.memory_space<vmem>>, vector<1x1x96xf32>
    %293 = vector.shape_cast %292 : vector<1x1x96xf32> to vector<1x96xf32>
    %294 = vector.extract_strided_slice %293 {offsets = [0, 0], sizes = [1, 32], strides = [1, 1]} : vector<1x96xf32> to vector<1x32xf32>
    %295 = vector.broadcast %294 : vector<1x32xf32> to vector<2x32xf32>
    %296 = arith.addf %291, %295 : vector<2x32xf32>
    %297 = arith.truncf %296 : vector<2x32xf32> to vector<2x32xbf16>
    %c1_135 = arith.constant 1 : index
    %c0_136 = arith.constant 0 : index
    %c0_137 = arith.constant 0 : index
    %298 = vector.load %arg5[%c1_135, %c0_136, %c0_137] : memref<2x32x96xbf16, #tpu.memory_space<vmem>>, vector<1x32x96xbf16>
    %299 = vector.shape_cast %298 : vector<1x32x96xbf16> to vector<32x96xbf16>
    %300 = vector.extract_strided_slice %299 {offsets = [0, 32], sizes = [32, 64], strides = [1, 1]} : vector<32x96xbf16> to vector<32x64xbf16>
    %cst_138 = arith.constant dense<0.000000e+00> : vector<256x64xf32>
    %301 = tpu.matmul %283, %300, %cst_138 {dimension_numbers = #tpu.dot_dimension_numbers<[1], [0], [0], [1], [0, 0, 1, 1], [], []>} : vector<256x32xbf16>, vector<32x64xbf16>, vector<256x64xf32> -> vector<256x64xf32>
    %c1_139 = arith.constant 1 : index
    %c0_140 = arith.constant 0 : index
    %c0_141 = arith.constant 0 : index
    %302 = vector.load %arg6[%c1_139, %c0_140, %c0_141] : memref<2x1x96xf32, #tpu.memory_space<vmem>>, vector<1x1x96xf32>
    %303 = vector.shape_cast %302 : vector<1x1x96xf32> to vector<1x96xf32>
    %304 = vector.extract_strided_slice %303 {offsets = [0, 32], sizes = [1, 64], strides = [1, 1]} : vector<1x96xf32> to vector<1x64xf32>
    %305 = vector.broadcast %304 : vector<1x64xf32> to vector<256x64xf32>
    %306 = arith.addf %301, %305 : vector<256x64xf32>
    %307 = vector.extract_strided_slice %306 {offsets = [0, 0], sizes = [256, 32], strides = [1, 1]} : vector<256x64xf32> to vector<256x32xf32>
    %308 = arith.truncf %307 : vector<256x32xf32> to vector<256x32xbf16>
    %309 = vector.extract_strided_slice %306 {offsets = [0, 32], sizes = [256, 32], strides = [1, 1]} : vector<256x64xf32> to vector<256x32xf32>
    %310 = arith.truncf %309 : vector<256x32xf32> to vector<256x32xbf16>
    %cst_142 = arith.constant 0.000000e+00 : f32
    %311 = vector.broadcast %cst_142 : f32 to vector<2x32xf32>
    %312 = vector.extract_strided_slice %297 {offsets = [0, 0], sizes = [1, 8], strides = [1, 1]} : vector<2x32xbf16> to vector<1x8xbf16>
    %313 = vector.extract_strided_slice %308 {offsets = [0, 0], sizes = [128, 8], strides = [1, 1]} : vector<256x32xbf16> to vector<128x8xbf16>
    %314 = vector.extract_strided_slice %310 {offsets = [0, 0], sizes = [128, 8], strides = [1, 1]} : vector<256x32xbf16> to vector<128x8xbf16>
    %c0_143 = arith.constant 0 : index
    %c0_144 = arith.constant 0 : index
    %c0_145 = arith.constant 0 : index
    %315 = vector.load %arg2[%c0_143, %c0_144, %c0_145] : memref<2x1x128xf32, #tpu.memory_space<vmem>>, vector<1x1x128xf32>
    %316 = vector.shape_cast %315 : vector<1x1x128xf32> to vector<1x128xf32>
    %cst_146 = arith.constant dense<0.000000e+00> : vector<1x128xf32>
    %317 = tpu.matmul %312, %313, %cst_146 {dimension_numbers = #tpu.dot_dimension_numbers<[1], [1], [0], [0], [0, 0, 1, 0], [], []>} : vector<1x8xbf16>, vector<128x8xbf16>, vector<1x128xf32> -> vector<1x128xf32>
    %318 = arith.addf %317, %316 : vector<1x128xf32>
    %cst_147 = arith.constant dense<0xFF800000> : vector<1xf32>
    %319 = vector.multi_reduction <maximumf>, %318, %cst_147 [1] : vector<1x128xf32> to vector<1xf32>
    %320 = vector.shape_cast %319 : vector<1xf32> to vector<1x1xf32>
    %321 = vector.broadcast %320 : vector<1x1xf32> to vector<1x128xf32>
    %322 = arith.subf %318, %321 : vector<1x128xf32>
    %323 = math.exp %322 : vector<1x128xf32>
    %cst_148 = arith.constant dense<0.000000e+00> : vector<1xf32>
    %324 = vector.multi_reduction <add>, %323, %cst_148 [1] : vector<1x128xf32> to vector<1xf32>
    %325 = vector.shape_cast %324 : vector<1xf32> to vector<1x1xf32>
    %326 = tpu.reciprocal %325 {approx = true} : vector<1x1xf32> -> vector<1x1xf32>
    %327 = vector.broadcast %326 : vector<1x1xf32> to vector<1x128xf32>
    %328 = arith.mulf %323, %327 : vector<1x128xf32>
    %329 = arith.truncf %328 : vector<1x128xf32> to vector<1x128xbf16>
    %cst_149 = arith.constant dense<0.000000e+00> : vector<1x8xf32>
    %330 = tpu.matmul %329, %314, %cst_149 {dimension_numbers = #tpu.dot_dimension_numbers<[1], [0], [0], [1], [0, 0, 1, 1], [], []>} : vector<1x128xbf16>, vector<128x8xbf16>, vector<1x8xf32> -> vector<1x8xf32>
    %331 = vector.extract_strided_slice %297 {offsets = [1, 0], sizes = [1, 8], strides = [1, 1]} : vector<2x32xbf16> to vector<1x8xbf16>
    %332 = vector.extract_strided_slice %308 {offsets = [128, 0], sizes = [128, 8], strides = [1, 1]} : vector<256x32xbf16> to vector<128x8xbf16>
    %333 = vector.extract_strided_slice %310 {offsets = [128, 0], sizes = [128, 8], strides = [1, 1]} : vector<256x32xbf16> to vector<128x8xbf16>
    %c1_150 = arith.constant 1 : index
    %c0_151 = arith.constant 0 : index
    %c0_152 = arith.constant 0 : index
    %334 = vector.load %arg2[%c1_150, %c0_151, %c0_152] : memref<2x1x128xf32, #tpu.memory_space<vmem>>, vector<1x1x128xf32>
    %335 = vector.shape_cast %334 : vector<1x1x128xf32> to vector<1x128xf32>
    %cst_153 = arith.constant dense<0.000000e+00> : vector<1x128xf32>
    %336 = tpu.matmul %331, %332, %cst_153 {dimension_numbers = #tpu.dot_dimension_numbers<[1], [1], [0], [0], [0, 0, 1, 0], [], []>} : vector<1x8xbf16>, vector<128x8xbf16>, vector<1x128xf32> -> vector<1x128xf32>
    %337 = arith.addf %336, %335 : vector<1x128xf32>
    %cst_154 = arith.constant dense<0xFF800000> : vector<1xf32>
    %338 = vector.multi_reduction <maximumf>, %337, %cst_154 [1] : vector<1x128xf32> to vector<1xf32>
    %339 = vector.shape_cast %338 : vector<1xf32> to vector<1x1xf32>
    %340 = vector.broadcast %339 : vector<1x1xf32> to vector<1x128xf32>
    %341 = arith.subf %337, %340 : vector<1x128xf32>
    %342 = math.exp %341 : vector<1x128xf32>
    %cst_155 = arith.constant dense<0.000000e+00> : vector<1xf32>
    %343 = vector.multi_reduction <add>, %342, %cst_155 [1] : vector<1x128xf32> to vector<1xf32>
    %344 = vector.shape_cast %343 : vector<1xf32> to vector<1x1xf32>
    %345 = tpu.reciprocal %344 {approx = true} : vector<1x1xf32> -> vector<1x1xf32>
    %346 = vector.broadcast %345 : vector<1x1xf32> to vector<1x128xf32>
    %347 = arith.mulf %342, %346 : vector<1x128xf32>
    %348 = arith.truncf %347 : vector<1x128xf32> to vector<1x128xbf16>
    %cst_156 = arith.constant dense<0.000000e+00> : vector<1x8xf32>
    %349 = tpu.matmul %348, %333, %cst_156 {dimension_numbers = #tpu.dot_dimension_numbers<[1], [0], [0], [1], [0, 0, 1, 1], [], []>} : vector<1x128xbf16>, vector<128x8xbf16>, vector<1x8xf32> -> vector<1x8xf32>
    %350 = tpu.concatenate %330, %349 in 0 : vector<1x8xf32>, vector<1x8xf32> -> vector<2x8xf32>
    %351 = arith.truncf %350 : vector<2x8xf32> to vector<2x8xbf16>
    %c1_157 = arith.constant 1 : index
    %c0_158 = arith.constant 0 : index
    %c0_159 = arith.constant 0 : index
    %c0_160 = arith.constant 0 : index
    %352 = vector.load %arg7[%c1_157, %c0_158, %c0_159, %c0_160] : memref<2x4x8x32xbf16, #tpu.memory_space<vmem>>, vector<1x1x8x32xbf16>
    %353 = vector.shape_cast %352 : vector<1x1x8x32xbf16> to vector<8x32xbf16>
    %cst_161 = arith.constant dense<0.000000e+00> : vector<2x32xf32>
    %354 = tpu.matmul %351, %353, %cst_161 {dimension_numbers = #tpu.dot_dimension_numbers<[1], [0], [0], [1], [0, 0, 1, 1], [], []>} : vector<2x8xbf16>, vector<8x32xbf16>, vector<2x32xf32> -> vector<2x32xf32>
    %355 = arith.addf %311, %354 : vector<2x32xf32>
    %356 = vector.extract_strided_slice %297 {offsets = [0, 8], sizes = [1, 8], strides = [1, 1]} : vector<2x32xbf16> to vector<1x8xbf16>
    %357 = vector.extract_strided_slice %308 {offsets = [0, 8], sizes = [128, 8], strides = [1, 1]} : vector<256x32xbf16> to vector<128x8xbf16>
    %358 = vector.extract_strided_slice %310 {offsets = [0, 8], sizes = [128, 8], strides = [1, 1]} : vector<256x32xbf16> to vector<128x8xbf16>
    %c0_162 = arith.constant 0 : index
    %c0_163 = arith.constant 0 : index
    %c0_164 = arith.constant 0 : index
    %359 = vector.load %arg2[%c0_162, %c0_163, %c0_164] : memref<2x1x128xf32, #tpu.memory_space<vmem>>, vector<1x1x128xf32>
    %360 = vector.shape_cast %359 : vector<1x1x128xf32> to vector<1x128xf32>
    %cst_165 = arith.constant dense<0.000000e+00> : vector<1x128xf32>
    %361 = tpu.matmul %356, %357, %cst_165 {dimension_numbers = #tpu.dot_dimension_numbers<[1], [1], [0], [0], [0, 0, 1, 0], [], []>} : vector<1x8xbf16>, vector<128x8xbf16>, vector<1x128xf32> -> vector<1x128xf32>
    %362 = arith.addf %361, %360 : vector<1x128xf32>
    %cst_166 = arith.constant dense<0xFF800000> : vector<1xf32>
    %363 = vector.multi_reduction <maximumf>, %362, %cst_166 [1] : vector<1x128xf32> to vector<1xf32>
    %364 = vector.shape_cast %363 : vector<1xf32> to vector<1x1xf32>
    %365 = vector.broadcast %364 : vector<1x1xf32> to vector<1x128xf32>
    %366 = arith.subf %362, %365 : vector<1x128xf32>
    %367 = math.exp %366 : vector<1x128xf32>
    %cst_167 = arith.constant dense<0.000000e+00> : vector<1xf32>
    %368 = vector.multi_reduction <add>, %367, %cst_167 [1] : vector<1x128xf32> to vector<1xf32>
    %369 = vector.shape_cast %368 : vector<1xf32> to vector<1x1xf32>
    %370 = tpu.reciprocal %369 {approx = true} : vector<1x1xf32> -> vector<1x1xf32>
    %371 = vector.broadcast %370 : vector<1x1xf32> to vector<1x128xf32>
    %372 = arith.mulf %367, %371 : vector<1x128xf32>
    %373 = arith.truncf %372 : vector<1x128xf32> to vector<1x128xbf16>
    %cst_168 = arith.constant dense<0.000000e+00> : vector<1x8xf32>
    %374 = tpu.matmul %373, %358, %cst_168 {dimension_numbers = #tpu.dot_dimension_numbers<[1], [0], [0], [1], [0, 0, 1, 1], [], []>} : vector<1x128xbf16>, vector<128x8xbf16>, vector<1x8xf32> -> vector<1x8xf32>
    %375 = vector.extract_strided_slice %297 {offsets = [1, 8], sizes = [1, 8], strides = [1, 1]} : vector<2x32xbf16> to vector<1x8xbf16>
    %376 = vector.extract_strided_slice %308 {offsets = [128, 8], sizes = [128, 8], strides = [1, 1]} : vector<256x32xbf16> to vector<128x8xbf16>
    %377 = vector.extract_strided_slice %310 {offsets = [128, 8], sizes = [128, 8], strides = [1, 1]} : vector<256x32xbf16> to vector<128x8xbf16>
    %c1_169 = arith.constant 1 : index
    %c0_170 = arith.constant 0 : index
    %c0_171 = arith.constant 0 : index
    %378 = vector.load %arg2[%c1_169, %c0_170, %c0_171] : memref<2x1x128xf32, #tpu.memory_space<vmem>>, vector<1x1x128xf32>
    %379 = vector.shape_cast %378 : vector<1x1x128xf32> to vector<1x128xf32>
    %cst_172 = arith.constant dense<0.000000e+00> : vector<1x128xf32>
    %380 = tpu.matmul %375, %376, %cst_172 {dimension_numbers = #tpu.dot_dimension_numbers<[1], [1], [0], [0], [0, 0, 1, 0], [], []>} : vector<1x8xbf16>, vector<128x8xbf16>, vector<1x128xf32> -> vector<1x128xf32>
    %381 = arith.addf %380, %379 : vector<1x128xf32>
    %cst_173 = arith.constant dense<0xFF800000> : vector<1xf32>
    %382 = vector.multi_reduction <maximumf>, %381, %cst_173 [1] : vector<1x128xf32> to vector<1xf32>
    %383 = vector.shape_cast %382 : vector<1xf32> to vector<1x1xf32>
    %384 = vector.broadcast %383 : vector<1x1xf32> to vector<1x128xf32>
    %385 = arith.subf %381, %384 : vector<1x128xf32>
    %386 = math.exp %385 : vector<1x128xf32>
    %cst_174 = arith.constant dense<0.000000e+00> : vector<1xf32>
    %387 = vector.multi_reduction <add>, %386, %cst_174 [1] : vector<1x128xf32> to vector<1xf32>
    %388 = vector.shape_cast %387 : vector<1xf32> to vector<1x1xf32>
    %389 = tpu.reciprocal %388 {approx = true} : vector<1x1xf32> -> vector<1x1xf32>
    %390 = vector.broadcast %389 : vector<1x1xf32> to vector<1x128xf32>
    %391 = arith.mulf %386, %390 : vector<1x128xf32>
    %392 = arith.truncf %391 : vector<1x128xf32> to vector<1x128xbf16>
    %cst_175 = arith.constant dense<0.000000e+00> : vector<1x8xf32>
    %393 = tpu.matmul %392, %377, %cst_175 {dimension_numbers = #tpu.dot_dimension_numbers<[1], [0], [0], [1], [0, 0, 1, 1], [], []>} : vector<1x128xbf16>, vector<128x8xbf16>, vector<1x8xf32> -> vector<1x8xf32>
    %394 = tpu.concatenate %374, %393 in 0 : vector<1x8xf32>, vector<1x8xf32> -> vector<2x8xf32>
    %395 = arith.truncf %394 : vector<2x8xf32> to vector<2x8xbf16>
    %c1_176 = arith.constant 1 : index
    %c1_177 = arith.constant 1 : index
    %c0_178 = arith.constant 0 : index
    %c0_179 = arith.constant 0 : index
    %396 = vector.load %arg7[%c1_176, %c1_177, %c0_178, %c0_179] : memref<2x4x8x32xbf16, #tpu.memory_space<vmem>>, vector<1x1x8x32xbf16>
    %397 = vector.shape_cast %396 : vector<1x1x8x32xbf16> to vector<8x32xbf16>
    %cst_180 = arith.constant dense<0.000000e+00> : vector<2x32xf32>
    %398 = tpu.matmul %395, %397, %cst_180 {dimension_numbers = #tpu.dot_dimension_numbers<[1], [0], [0], [1], [0, 0, 1, 1], [], []>} : vector<2x8xbf16>, vector<8x32xbf16>, vector<2x32xf32> -> vector<2x32xf32>
    %399 = arith.addf %355, %398 : vector<2x32xf32>
    %400 = vector.extract_strided_slice %297 {offsets = [0, 16], sizes = [1, 8], strides = [1, 1]} : vector<2x32xbf16> to vector<1x8xbf16>
    %401 = vector.extract_strided_slice %308 {offsets = [0, 16], sizes = [128, 8], strides = [1, 1]} : vector<256x32xbf16> to vector<128x8xbf16>
    %402 = vector.extract_strided_slice %310 {offsets = [0, 16], sizes = [128, 8], strides = [1, 1]} : vector<256x32xbf16> to vector<128x8xbf16>
    %c0_181 = arith.constant 0 : index
    %c0_182 = arith.constant 0 : index
    %c0_183 = arith.constant 0 : index
    %403 = vector.load %arg2[%c0_181, %c0_182, %c0_183] : memref<2x1x128xf32, #tpu.memory_space<vmem>>, vector<1x1x128xf32>
    %404 = vector.shape_cast %403 : vector<1x1x128xf32> to vector<1x128xf32>
    %cst_184 = arith.constant dense<0.000000e+00> : vector<1x128xf32>
    %405 = tpu.matmul %400, %401, %cst_184 {dimension_numbers = #tpu.dot_dimension_numbers<[1], [1], [0], [0], [0, 0, 1, 0], [], []>} : vector<1x8xbf16>, vector<128x8xbf16>, vector<1x128xf32> -> vector<1x128xf32>
    %406 = arith.addf %405, %404 : vector<1x128xf32>
    %cst_185 = arith.constant dense<0xFF800000> : vector<1xf32>
    %407 = vector.multi_reduction <maximumf>, %406, %cst_185 [1] : vector<1x128xf32> to vector<1xf32>
    %408 = vector.shape_cast %407 : vector<1xf32> to vector<1x1xf32>
    %409 = vector.broadcast %408 : vector<1x1xf32> to vector<1x128xf32>
    %410 = arith.subf %406, %409 : vector<1x128xf32>
    %411 = math.exp %410 : vector<1x128xf32>
    %cst_186 = arith.constant dense<0.000000e+00> : vector<1xf32>
    %412 = vector.multi_reduction <add>, %411, %cst_186 [1] : vector<1x128xf32> to vector<1xf32>
    %413 = vector.shape_cast %412 : vector<1xf32> to vector<1x1xf32>
    %414 = tpu.reciprocal %413 {approx = true} : vector<1x1xf32> -> vector<1x1xf32>
    %415 = vector.broadcast %414 : vector<1x1xf32> to vector<1x128xf32>
    %416 = arith.mulf %411, %415 : vector<1x128xf32>
    %417 = arith.truncf %416 : vector<1x128xf32> to vector<1x128xbf16>
    %cst_187 = arith.constant dense<0.000000e+00> : vector<1x8xf32>
    %418 = tpu.matmul %417, %402, %cst_187 {dimension_numbers = #tpu.dot_dimension_numbers<[1], [0], [0], [1], [0, 0, 1, 1], [], []>} : vector<1x128xbf16>, vector<128x8xbf16>, vector<1x8xf32> -> vector<1x8xf32>
    %419 = vector.extract_strided_slice %297 {offsets = [1, 16], sizes = [1, 8], strides = [1, 1]} : vector<2x32xbf16> to vector<1x8xbf16>
    %420 = vector.extract_strided_slice %308 {offsets = [128, 16], sizes = [128, 8], strides = [1, 1]} : vector<256x32xbf16> to vector<128x8xbf16>
    %421 = vector.extract_strided_slice %310 {offsets = [128, 16], sizes = [128, 8], strides = [1, 1]} : vector<256x32xbf16> to vector<128x8xbf16>
    %c1_188 = arith.constant 1 : index
    %c0_189 = arith.constant 0 : index
    %c0_190 = arith.constant 0 : index
    %422 = vector.load %arg2[%c1_188, %c0_189, %c0_190] : memref<2x1x128xf32, #tpu.memory_space<vmem>>, vector<1x1x128xf32>
    %423 = vector.shape_cast %422 : vector<1x1x128xf32> to vector<1x128xf32>
    %cst_191 = arith.constant dense<0.000000e+00> : vector<1x128xf32>
    %424 = tpu.matmul %419, %420, %cst_191 {dimension_numbers = #tpu.dot_dimension_numbers<[1], [1], [0], [0], [0, 0, 1, 0], [], []>} : vector<1x8xbf16>, vector<128x8xbf16>, vector<1x128xf32> -> vector<1x128xf32>
    %425 = arith.addf %424, %423 : vector<1x128xf32>
    %cst_192 = arith.constant dense<0xFF800000> : vector<1xf32>
    %426 = vector.multi_reduction <maximumf>, %425, %cst_192 [1] : vector<1x128xf32> to vector<1xf32>
    %427 = vector.shape_cast %426 : vector<1xf32> to vector<1x1xf32>
    %428 = vector.broadcast %427 : vector<1x1xf32> to vector<1x128xf32>
    %429 = arith.subf %425, %428 : vector<1x128xf32>
    %430 = math.exp %429 : vector<1x128xf32>
    %cst_193 = arith.constant dense<0.000000e+00> : vector<1xf32>
    %431 = vector.multi_reduction <add>, %430, %cst_193 [1] : vector<1x128xf32> to vector<1xf32>
    %432 = vector.shape_cast %431 : vector<1xf32> to vector<1x1xf32>
    %433 = tpu.reciprocal %432 {approx = true} : vector<1x1xf32> -> vector<1x1xf32>
    %434 = vector.broadcast %433 : vector<1x1xf32> to vector<1x128xf32>
    %435 = arith.mulf %430, %434 : vector<1x128xf32>
    %436 = arith.truncf %435 : vector<1x128xf32> to vector<1x128xbf16>
    %cst_194 = arith.constant dense<0.000000e+00> : vector<1x8xf32>
    %437 = tpu.matmul %436, %421, %cst_194 {dimension_numbers = #tpu.dot_dimension_numbers<[1], [0], [0], [1], [0, 0, 1, 1], [], []>} : vector<1x128xbf16>, vector<128x8xbf16>, vector<1x8xf32> -> vector<1x8xf32>
    %438 = tpu.concatenate %418, %437 in 0 : vector<1x8xf32>, vector<1x8xf32> -> vector<2x8xf32>
    %439 = arith.truncf %438 : vector<2x8xf32> to vector<2x8xbf16>
    %c1_195 = arith.constant 1 : index
    %c2_196 = arith.constant 2 : index
    %c0_197 = arith.constant 0 : index
    %c0_198 = arith.constant 0 : index
    %440 = vector.load %arg7[%c1_195, %c2_196, %c0_197, %c0_198] : memref<2x4x8x32xbf16, #tpu.memory_space<vmem>>, vector<1x1x8x32xbf16>
    %441 = vector.shape_cast %440 : vector<1x1x8x32xbf16> to vector<8x32xbf16>
    %cst_199 = arith.constant dense<0.000000e+00> : vector<2x32xf32>
    %442 = tpu.matmul %439, %441, %cst_199 {dimension_numbers = #tpu.dot_dimension_numbers<[1], [0], [0], [1], [0, 0, 1, 1], [], []>} : vector<2x8xbf16>, vector<8x32xbf16>, vector<2x32xf32> -> vector<2x32xf32>
    %443 = arith.addf %399, %442 : vector<2x32xf32>
    %444 = vector.extract_strided_slice %297 {offsets = [0, 24], sizes = [1, 8], strides = [1, 1]} : vector<2x32xbf16> to vector<1x8xbf16>
    %445 = vector.extract_strided_slice %308 {offsets = [0, 24], sizes = [128, 8], strides = [1, 1]} : vector<256x32xbf16> to vector<128x8xbf16>
    %446 = vector.extract_strided_slice %310 {offsets = [0, 24], sizes = [128, 8], strides = [1, 1]} : vector<256x32xbf16> to vector<128x8xbf16>
    %c0_200 = arith.constant 0 : index
    %c0_201 = arith.constant 0 : index
    %c0_202 = arith.constant 0 : index
    %447 = vector.load %arg2[%c0_200, %c0_201, %c0_202] : memref<2x1x128xf32, #tpu.memory_space<vmem>>, vector<1x1x128xf32>
    %448 = vector.shape_cast %447 : vector<1x1x128xf32> to vector<1x128xf32>
    %cst_203 = arith.constant dense<0.000000e+00> : vector<1x128xf32>
    %449 = tpu.matmul %444, %445, %cst_203 {dimension_numbers = #tpu.dot_dimension_numbers<[1], [1], [0], [0], [0, 0, 1, 0], [], []>} : vector<1x8xbf16>, vector<128x8xbf16>, vector<1x128xf32> -> vector<1x128xf32>
    %450 = arith.addf %449, %448 : vector<1x128xf32>
    %cst_204 = arith.constant dense<0xFF800000> : vector<1xf32>
    %451 = vector.multi_reduction <maximumf>, %450, %cst_204 [1] : vector<1x128xf32> to vector<1xf32>
    %452 = vector.shape_cast %451 : vector<1xf32> to vector<1x1xf32>
    %453 = vector.broadcast %452 : vector<1x1xf32> to vector<1x128xf32>
    %454 = arith.subf %450, %453 : vector<1x128xf32>
    %455 = math.exp %454 : vector<1x128xf32>
    %cst_205 = arith.constant dense<0.000000e+00> : vector<1xf32>
    %456 = vector.multi_reduction <add>, %455, %cst_205 [1] : vector<1x128xf32> to vector<1xf32>
    %457 = vector.shape_cast %456 : vector<1xf32> to vector<1x1xf32>
    %458 = tpu.reciprocal %457 {approx = true} : vector<1x1xf32> -> vector<1x1xf32>
    %459 = vector.broadcast %458 : vector<1x1xf32> to vector<1x128xf32>
    %460 = arith.mulf %455, %459 : vector<1x128xf32>
    %461 = arith.truncf %460 : vector<1x128xf32> to vector<1x128xbf16>
    %cst_206 = arith.constant dense<0.000000e+00> : vector<1x8xf32>
    %462 = tpu.matmul %461, %446, %cst_206 {dimension_numbers = #tpu.dot_dimension_numbers<[1], [0], [0], [1], [0, 0, 1, 1], [], []>} : vector<1x128xbf16>, vector<128x8xbf16>, vector<1x8xf32> -> vector<1x8xf32>
    %463 = vector.extract_strided_slice %297 {offsets = [1, 24], sizes = [1, 8], strides = [1, 1]} : vector<2x32xbf16> to vector<1x8xbf16>
    %464 = vector.extract_strided_slice %308 {offsets = [128, 24], sizes = [128, 8], strides = [1, 1]} : vector<256x32xbf16> to vector<128x8xbf16>
    %465 = vector.extract_strided_slice %310 {offsets = [128, 24], sizes = [128, 8], strides = [1, 1]} : vector<256x32xbf16> to vector<128x8xbf16>
    %c1_207 = arith.constant 1 : index
    %c0_208 = arith.constant 0 : index
    %c0_209 = arith.constant 0 : index
    %466 = vector.load %arg2[%c1_207, %c0_208, %c0_209] : memref<2x1x128xf32, #tpu.memory_space<vmem>>, vector<1x1x128xf32>
    %467 = vector.shape_cast %466 : vector<1x1x128xf32> to vector<1x128xf32>
    %cst_210 = arith.constant dense<0.000000e+00> : vector<1x128xf32>
    %468 = tpu.matmul %463, %464, %cst_210 {dimension_numbers = #tpu.dot_dimension_numbers<[1], [1], [0], [0], [0, 0, 1, 0], [], []>} : vector<1x8xbf16>, vector<128x8xbf16>, vector<1x128xf32> -> vector<1x128xf32>
    %469 = arith.addf %468, %467 : vector<1x128xf32>
    %cst_211 = arith.constant dense<0xFF800000> : vector<1xf32>
    %470 = vector.multi_reduction <maximumf>, %469, %cst_211 [1] : vector<1x128xf32> to vector<1xf32>
    %471 = vector.shape_cast %470 : vector<1xf32> to vector<1x1xf32>
    %472 = vector.broadcast %471 : vector<1x1xf32> to vector<1x128xf32>
    %473 = arith.subf %469, %472 : vector<1x128xf32>
    %474 = math.exp %473 : vector<1x128xf32>
    %cst_212 = arith.constant dense<0.000000e+00> : vector<1xf32>
    %475 = vector.multi_reduction <add>, %474, %cst_212 [1] : vector<1x128xf32> to vector<1xf32>
    %476 = vector.shape_cast %475 : vector<1xf32> to vector<1x1xf32>
    %477 = tpu.reciprocal %476 {approx = true} : vector<1x1xf32> -> vector<1x1xf32>
    %478 = vector.broadcast %477 : vector<1x1xf32> to vector<1x128xf32>
    %479 = arith.mulf %474, %478 : vector<1x128xf32>
    %480 = arith.truncf %479 : vector<1x128xf32> to vector<1x128xbf16>
    %cst_213 = arith.constant dense<0.000000e+00> : vector<1x8xf32>
    %481 = tpu.matmul %480, %465, %cst_213 {dimension_numbers = #tpu.dot_dimension_numbers<[1], [0], [0], [1], [0, 0, 1, 1], [], []>} : vector<1x128xbf16>, vector<128x8xbf16>, vector<1x8xf32> -> vector<1x8xf32>
    %482 = tpu.concatenate %462, %481 in 0 : vector<1x8xf32>, vector<1x8xf32> -> vector<2x8xf32>
    %483 = arith.truncf %482 : vector<2x8xf32> to vector<2x8xbf16>
    %c1_214 = arith.constant 1 : index
    %c3_215 = arith.constant 3 : index
    %c0_216 = arith.constant 0 : index
    %c0_217 = arith.constant 0 : index
    %484 = vector.load %arg7[%c1_214, %c3_215, %c0_216, %c0_217] : memref<2x4x8x32xbf16, #tpu.memory_space<vmem>>, vector<1x1x8x32xbf16>
    %485 = vector.shape_cast %484 : vector<1x1x8x32xbf16> to vector<8x32xbf16>
    %cst_218 = arith.constant dense<0.000000e+00> : vector<2x32xf32>
    %486 = tpu.matmul %483, %485, %cst_218 {dimension_numbers = #tpu.dot_dimension_numbers<[1], [0], [0], [1], [0, 0, 1, 1], [], []>} : vector<2x8xbf16>, vector<8x32xbf16>, vector<2x32xf32> -> vector<2x32xf32>
    %487 = arith.addf %443, %486 : vector<2x32xf32>
    %488 = arith.addf %286, %487 : vector<2x32xf32>
    %c1_219 = arith.constant 1 : index
    %c0_220 = arith.constant 0 : index
    %c0_221 = arith.constant 0 : index
    %489 = vector.load %arg8[%c1_219, %c0_220, %c0_221] : memref<2x1x32xf32, #tpu.memory_space<vmem>>, vector<1x1x32xf32>
    %490 = vector.shape_cast %489 : vector<1x1x32xf32> to vector<1x32xf32>
    %491 = vector.broadcast %490 : vector<1x32xf32> to vector<2x32xf32>
    %492 = arith.addf %488, %491 : vector<2x32xf32>
    %c1_222 = arith.constant 1 : index
    %c0_223 = arith.constant 0 : index
    %c0_224 = arith.constant 0 : index
    %493 = vector.load %arg9[%c1_222, %c0_223, %c0_224] : memref<2x1x32xf32, #tpu.memory_space<vmem>>, vector<1x1x32xf32>
    %494 = vector.shape_cast %493 : vector<1x1x32xf32> to vector<1x32xf32>
    %c1_225 = arith.constant 1 : index
    %c0_226 = arith.constant 0 : index
    %c0_227 = arith.constant 0 : index
    %495 = vector.load %arg10[%c1_225, %c0_226, %c0_227] : memref<2x1x32xf32, #tpu.memory_space<vmem>>, vector<1x1x32xf32>
    %496 = vector.shape_cast %495 : vector<1x1x32xf32> to vector<1x32xf32>
    %cst_228 = arith.constant dense<0.000000e+00> : vector<2xf32>
    %497 = vector.multi_reduction <add>, %492, %cst_228 [1] : vector<2x32xf32> to vector<2xf32>
    %498 = vector.shape_cast %497 : vector<2xf32> to vector<2x1xf32>
    %cst_229 = arith.constant 3.200000e+01 : f32
    %499 = vector.broadcast %cst_229 : f32 to vector<2x1xf32>
    %500 = arith.divf %498, %499 : vector<2x1xf32>
    %501 = vector.broadcast %500 : vector<2x1xf32> to vector<2x32xf32>
    %502 = arith.subf %492, %501 : vector<2x32xf32>
    %503 = arith.mulf %502, %502 : vector<2x32xf32>
    %cst_230 = arith.constant dense<0.000000e+00> : vector<2xf32>
    %504 = vector.multi_reduction <add>, %503, %cst_230 [1] : vector<2x32xf32> to vector<2xf32>
    %505 = vector.shape_cast %504 : vector<2xf32> to vector<2x1xf32>
    %cst_231 = arith.constant 3.200000e+01 : f32
    %506 = vector.broadcast %cst_231 : f32 to vector<2x1xf32>
    %507 = arith.divf %505, %506 : vector<2x1xf32>
    %cst_232 = arith.constant 9.99999974E-6 : f32
    %508 = vector.broadcast %cst_232 : f32 to vector<2x1xf32>
    %509 = arith.addf %507, %508 : vector<2x1xf32>
    %510 = math.rsqrt %509 : vector<2x1xf32>
    %511 = vector.broadcast %510 : vector<2x1xf32> to vector<2x32xf32>
    %512 = arith.mulf %502, %511 : vector<2x32xf32>
    %513 = vector.broadcast %494 : vector<1x32xf32> to vector<2x32xf32>
    %514 = arith.mulf %512, %513 : vector<2x32xf32>
    %515 = vector.broadcast %496 : vector<1x32xf32> to vector<2x32xf32>
    %516 = arith.addf %514, %515 : vector<2x32xf32>
    %517 = arith.truncf %516 : vector<2x32xf32> to vector<2x32xbf16>
    %c1_233 = arith.constant 1 : index
    %c0_234 = arith.constant 0 : index
    %c0_235 = arith.constant 0 : index
    %518 = vector.load %arg11[%c1_233, %c0_234, %c0_235] : memref<2x32x64xbf16, #tpu.memory_space<vmem>>, vector<1x32x64xbf16>
    %519 = vector.shape_cast %518 : vector<1x32x64xbf16> to vector<32x64xbf16>
    %cst_236 = arith.constant dense<0.000000e+00> : vector<2x64xf32>
    %520 = tpu.matmul %517, %519, %cst_236 {dimension_numbers = #tpu.dot_dimension_numbers<[1], [0], [0], [1], [0, 0, 1, 1], [], []>} : vector<2x32xbf16>, vector<32x64xbf16>, vector<2x64xf32> -> vector<2x64xf32>
    %c1_237 = arith.constant 1 : index
    %c0_238 = arith.constant 0 : index
    %c0_239 = arith.constant 0 : index
    %521 = vector.load %arg12[%c1_237, %c0_238, %c0_239] : memref<2x1x64xf32, #tpu.memory_space<vmem>>, vector<1x1x64xf32>
    %522 = vector.shape_cast %521 : vector<1x1x64xf32> to vector<1x64xf32>
    %523 = vector.broadcast %522 : vector<1x64xf32> to vector<2x64xf32>
    %524 = arith.addf %520, %523 : vector<2x64xf32>
    %cst_240 = arith.constant 0.000000e+00 : f32
    %525 = vector.broadcast %cst_240 : f32 to vector<2x64xf32>
    %526 = arith.maximumf %524, %525 : vector<2x64xf32>
    %527 = arith.truncf %526 : vector<2x64xf32> to vector<2x64xbf16>
    %c1_241 = arith.constant 1 : index
    %c0_242 = arith.constant 0 : index
    %c0_243 = arith.constant 0 : index
    %528 = vector.load %arg13[%c1_241, %c0_242, %c0_243] : memref<2x64x32xbf16, #tpu.memory_space<vmem>>, vector<1x64x32xbf16>
    %529 = vector.shape_cast %528 : vector<1x64x32xbf16> to vector<64x32xbf16>
    %cst_244 = arith.constant dense<0.000000e+00> : vector<2x32xf32>
    %530 = tpu.matmul %527, %529, %cst_244 {dimension_numbers = #tpu.dot_dimension_numbers<[1], [0], [0], [1], [0, 0, 1, 1], [], []>} : vector<2x64xbf16>, vector<64x32xbf16>, vector<2x32xf32> -> vector<2x32xf32>
    %c1_245 = arith.constant 1 : index
    %c0_246 = arith.constant 0 : index
    %c0_247 = arith.constant 0 : index
    %531 = vector.load %arg14[%c1_245, %c0_246, %c0_247] : memref<2x1x32xf32, #tpu.memory_space<vmem>>, vector<1x1x32xf32>
    %532 = vector.shape_cast %531 : vector<1x1x32xf32> to vector<1x32xf32>
    %533 = vector.broadcast %532 : vector<1x32xf32> to vector<2x32xf32>
    %534 = arith.addf %530, %533 : vector<2x32xf32>
    %535 = arith.addf %516, %534 : vector<2x32xf32>
    %c1_248 = arith.constant 1 : index
    %c0_249 = arith.constant 0 : index
    %c0_250 = arith.constant 0 : index
    %536 = vector.load %arg15[%c1_248, %c0_249, %c0_250] : memref<2x1x32xf32, #tpu.memory_space<vmem>>, vector<1x1x32xf32>
    %537 = vector.shape_cast %536 : vector<1x1x32xf32> to vector<1x32xf32>
    %c1_251 = arith.constant 1 : index
    %c0_252 = arith.constant 0 : index
    %c0_253 = arith.constant 0 : index
    %538 = vector.load %arg16[%c1_251, %c0_252, %c0_253] : memref<2x1x32xf32, #tpu.memory_space<vmem>>, vector<1x1x32xf32>
    %539 = vector.shape_cast %538 : vector<1x1x32xf32> to vector<1x32xf32>
    %cst_254 = arith.constant dense<0.000000e+00> : vector<2xf32>
    %540 = vector.multi_reduction <add>, %535, %cst_254 [1] : vector<2x32xf32> to vector<2xf32>
    %541 = vector.shape_cast %540 : vector<2xf32> to vector<2x1xf32>
    %cst_255 = arith.constant 3.200000e+01 : f32
    %542 = vector.broadcast %cst_255 : f32 to vector<2x1xf32>
    %543 = arith.divf %541, %542 : vector<2x1xf32>
    %544 = vector.broadcast %543 : vector<2x1xf32> to vector<2x32xf32>
    %545 = arith.subf %535, %544 : vector<2x32xf32>
    %546 = arith.mulf %545, %545 : vector<2x32xf32>
    %cst_256 = arith.constant dense<0.000000e+00> : vector<2xf32>
    %547 = vector.multi_reduction <add>, %546, %cst_256 [1] : vector<2x32xf32> to vector<2xf32>
    %548 = vector.shape_cast %547 : vector<2xf32> to vector<2x1xf32>
    %cst_257 = arith.constant 3.200000e+01 : f32
    %549 = vector.broadcast %cst_257 : f32 to vector<2x1xf32>
    %550 = arith.divf %548, %549 : vector<2x1xf32>
    %cst_258 = arith.constant 9.99999974E-6 : f32
    %551 = vector.broadcast %cst_258 : f32 to vector<2x1xf32>
    %552 = arith.addf %550, %551 : vector<2x1xf32>
    %553 = math.rsqrt %552 : vector<2x1xf32>
    %554 = vector.broadcast %553 : vector<2x1xf32> to vector<2x32xf32>
    %555 = arith.mulf %545, %554 : vector<2x32xf32>
    %556 = vector.broadcast %537 : vector<1x32xf32> to vector<2x32xf32>
    %557 = arith.mulf %555, %556 : vector<2x32xf32>
    %558 = vector.broadcast %539 : vector<1x32xf32> to vector<2x32xf32>
    %559 = arith.addf %557, %558 : vector<2x32xf32>
    %c0_259 = arith.constant 0 : index
    %c0_260 = arith.constant 0 : index
    %c0_261 = arith.constant 0 : index
    %560 = vector.load %arg17[%c0_259, %c0_260, %c0_261] : memref<1x2x32xf32, #tpu.memory_space<vmem>>, vector<1x2x32xf32>
    %561 = vector.shape_cast %560 : vector<1x2x32xf32> to vector<2x32xf32>
    %562 = vector.shape_cast %559 : vector<2x32xf32> to vector<1x2x32xf32>
    tpu.vector_store %arg17[%c0_259, %c0_260, %c0_261], %562 {strides = array<i32>} : memref<1x2x32xf32, #tpu.memory_space<vmem>>, vector<1x2x32xf32>,
    return
  }
  func.func @transform_0(%arg0: i32) -> (i32, i32, i32) {
    %c0_i32 = arith.constant 0 : i32
    %c0_i32_0 = arith.constant 0 : i32
    %c0_i32_1 = arith.constant 0 : i32
    return %arg0, %c0_i32, %c0_i32_0 : i32, i32, i32
  }
  func.func @transform_1(%arg0: i32) -> (i32, i32, i32) {
    %c0_i32 = arith.constant 0 : i32
    %c0_i32_0 = arith.constant 0 : i32
    %c0_i32_1 = arith.constant 0 : i32
    return %arg0, %c0_i32, %c0_i32_0 : i32, i32, i32
  }
  func.func @transform_2(%arg0: i32) -> (i32, i32) {
    %c0_i32 = arith.constant 0 : i32
    %c0_i32_0 = arith.constant 0 : i32
    %c0_i32_1 = arith.constant 0 : i32
    return %c0_i32, %c0_i32_0 : i32, i32
  }
  func.func @transform_3(%arg0: i32) -> (i32, i32) {
    %c0_i32 = arith.constant 0 : i32
    %c0_i32_0 = arith.constant 0 : i32
    %c0_i32_1 = arith.constant 0 : i32
    return %c0_i32, %c0_i32_0 : i32, i32
  }
  func.func @transform_4(%arg0: i32) -> (i32, i32, i32) {
    %c0_i32 = arith.constant 0 : i32
    %c0_i32_0 = arith.constant 0 : i32
    %c0_i32_1 = arith.constant 0 : i32
    %c0_i32_2 = arith.constant 0 : i32
    return %c0_i32, %c0_i32_0, %c0_i32_1 : i32, i32, i32
  }
  func.func @transform_5(%arg0: i32) -> (i32, i32, i32) {
    %c0_i32 = arith.constant 0 : i32
    %c0_i32_0 = arith.constant 0 : i32
    %c0_i32_1 = arith.constant 0 : i32
    %c0_i32_2 = arith.constant 0 : i32
    return %c0_i32, %c0_i32_0, %c0_i32_1 : i32, i32, i32
  }
  func.func @transform_6(%arg0: i32) -> (i32, i32, i32, i32) {
    %c0_i32 = arith.constant 0 : i32
    %c0_i32_0 = arith.constant 0 : i32
    %c0_i32_1 = arith.constant 0 : i32
    %c0_i32_2 = arith.constant 0 : i32
    %c0_i32_3 = arith.constant 0 : i32
    return %c0_i32, %c0_i32_0, %c0_i32_1, %c0_i32_2 : i32, i32, i32, i32
  }
  func.func @transform_7(%arg0: i32) -> (i32, i32, i32) {
    %c0_i32 = arith.constant 0 : i32
    %c0_i32_0 = arith.constant 0 : i32
    %c0_i32_1 = arith.constant 0 : i32
    %c0_i32_2 = arith.constant 0 : i32
    return %c0_i32, %c0_i32_0, %c0_i32_1 : i32, i32, i32
  }
  func.func @transform_8(%arg0: i32) -> (i32, i32, i32) {
    %c0_i32 = arith.constant 0 : i32
    %c0_i32_0 = arith.constant 0 : i32
    %c0_i32_1 = arith.constant 0 : i32
    %c0_i32_2 = arith.constant 0 : i32
    return %c0_i32, %c0_i32_0, %c0_i32_1 : i32, i32, i32
  }
  func.func @transform_9(%arg0: i32) -> (i32, i32, i32) {
    %c0_i32 = arith.constant 0 : i32
    %c0_i32_0 = arith.constant 0 : i32
    %c0_i32_1 = arith.constant 0 : i32
    %c0_i32_2 = arith.constant 0 : i32
    return %c0_i32, %c0_i32_0, %c0_i32_1 : i32, i32, i32
  }
  func.func @transform_10(%arg0: i32) -> (i32, i32, i32) {
    %c0_i32 = arith.constant 0 : i32
    %c0_i32_0 = arith.constant 0 : i32
    %c0_i32_1 = arith.constant 0 : i32
    %c0_i32_2 = arith.constant 0 : i32
    return %c0_i32, %c0_i32_0, %c0_i32_1 : i32, i32, i32
  }
  func.func @transform_11(%arg0: i32) -> (i32, i32, i32) {
    %c0_i32 = arith.constant 0 : i32
    %c0_i32_0 = arith.constant 0 : i32
    %c0_i32_1 = arith.constant 0 : i32
    %c0_i32_2 = arith.constant 0 : i32
    return %c0_i32, %c0_i32_0, %c0_i32_1 : i32, i32, i32
  }
  func.func @transform_12(%arg0: i32) -> (i32, i32, i32) {
    %c0_i32 = arith.constant 0 : i32
    %c0_i32_0 = arith.constant 0 : i32
    %c0_i32_1 = arith.constant 0 : i32
    %c0_i32_2 = arith.constant 0 : i32
    return %c0_i32, %c0_i32_0, %c0_i32_1 : i32, i32, i32
  }
  func.func @transform_13(%arg0: i32) -> (i32, i32, i32) {
    %c0_i32 = arith.constant 0 : i32
    %c0_i32_0 = arith.constant 0 : i32
    %c0_i32_1 = arith.constant 0 : i32
    %c0_i32_2 = arith.constant 0 : i32
    return %c0_i32, %c0_i32_0, %c0_i32_1 : i32, i32, i32
  }
  func.func @transform_14(%arg0: i32) -> (i32, i32, i32) {
    %c0_i32 = arith.constant 0 : i32
    %c0_i32_0 = arith.constant 0 : i32
    %c0_i32_1 = arith.constant 0 : i32
    %c0_i32_2 = arith.constant 0 : i32
    return %c0_i32, %c0_i32_0, %c0_i32_1 : i32, i32, i32
  }
  func.func @transform_15(%arg0: i32) -> (i32, i32, i32) {
    %c0_i32 = arith.constant 0 : i32
    %c0_i32_0 = arith.constant 0 : i32
    %c0_i32_1 = arith.constant 0 : i32
    %c0_i32_2 = arith.constant 0 : i32
    return %c0_i32, %c0_i32_0, %c0_i32_1 : i32, i32, i32
  }
  func.func @transform_16(%arg0: i32) -> (i32, i32, i32) {
    %c0_i32 = arith.constant 0 : i32
    %c0_i32_0 = arith.constant 0 : i32
    %c0_i32_1 = arith.constant 0 : i32
    return %arg0, %c0_i32, %c0_i32_0 : i32, i32, i32
  }
}

</mosaic_0001>

<llo_original>
// kernel: trans_encoder_forward.1
$region0: #{trans_encoder_forward.1}
  #allocation0 [shape = 'u32[]', space=smem, size = 0x4, offset = 0x4, fixed_abs, tag = 'smem constant byte address 0x4 - core index']
  #allocation1 [shape = 'u32[144,128]{1,0:T(1,128)}', space=vmem, size = 0x12000, scoped, tag = 'internal scratch']
  %s0 = inlined_call_operand.vmem [shape: f32[2,128,3], index: 0, kind: input, shape index: {}]
  %s1 = inlined_call_operand.vmem [shape: f32[2,1,128], index: 1, kind: input, shape index: {}]
  %s2 = inlined_call_operand.vmem [shape: f32[3,32], index: 2, kind: input, shape index: {}]
  %s3 = inlined_call_operand.vmem [shape: f32[128,32], index: 3, kind: input, shape index: {}]
  %s4 = inlined_call_operand.vmem [shape: bf16[2,32,96], index: 4, kind: input, shape index: {}]
  %s5 = inlined_call_operand.vmem [shape: f32[2,1,96], index: 5, kind: input, shape index: {}]
  %s6 = inlined_call_operand.vmem [shape: bf16[2,4,8,32], index: 6, kind: input, shape index: {}]
  %s7 = inlined_call_operand.vmem [shape: f32[2,1,32], index: 7, kind: input, shape index: {}]
  %s8 = inlined_call_operand.vmem [shape: f32[2,1,32], index: 8, kind: input, shape index: {}]
  %s9 = inlined_call_operand.vmem [shape: f32[2,1,32], index: 9, kind: input, shape index: {}]
  %s10 = inlined_call_operand.vmem [shape: bf16[2,32,64], index: 10, kind: input, shape index: {}]
  %s11 = inlined_call_operand.vmem [shape: f32[2,1,64], index: 11, kind: input, shape index: {}]
  %s12 = inlined_call_operand.vmem [shape: bf16[2,64,32], index: 12, kind: input, shape index: {}]
  %s13 = inlined_call_operand.vmem [shape: f32[2,1,32], index: 13, kind: input, shape index: {}]
  %s14 = inlined_call_operand.vmem [shape: f32[2,1,32], index: 14, kind: input, shape index: {}]
  %s15 = inlined_call_operand.vmem [shape: f32[2,1,32], index: 15, kind: input, shape index: {}]
  %s16 = inlined_call_operand.hbm [shape: f32[1,2,32], index: 16, kind: output, shape index: {}]
  %s17 = sld [smem:[#allocation0]]
  $region74: #{trans_encoder_forward.1} parent=0
    _
  %s19 = ssub.s32 1, %s17
  %s20 = scalar_select 0, %s19, %s17
  $region1: #{trans_encoder_forward.1} parent=0
    #allocation2 [shape = 'u8[1024]{0}', space=vmem, size = 0x400, scoped, tag = 'output window, operand 0, single buffered']
    #allocation3 [shape = 's32[1]{0}', space=sflag, size = 0x4, scoped, tag = 'scoped memory for trans_encoder_forward.1']
    %21 = vsyncpa [#allocation3], 0
    // Predicated region
    $region2: #{trans_encoder_forward.1} parent=1 // pred_check
      _
    $region3: #{trans_encoder_forward.1} parent=1 // pred_check_branch
      %23 = sbr.rel (0) target = $region5
    $region4: #{trans_encoder_forward.1} parent=1 // pred_region
      _
    $region5: #{trans_encoder_forward.1} parent=1 // pred_fallthru
      _
    // Predicated region
    $region6: #{trans_encoder_forward.1} parent=1 // pred_check
      _
    $region7: #{trans_encoder_forward.1} parent=1 // pred_check_branch
      %25 = sbr.rel (0) target = $region9
    $region8: #{trans_encoder_forward.1} parent=1 // pred_region
      _
    $region9: #{trans_encoder_forward.1} parent=1 // pred_fallthru
      _
    // Predicated region
    $region10: #{trans_encoder_forward.1} parent=1 // pred_check
      _
    $region11: #{trans_encoder_forward.1} parent=1 // pred_check_branch
      %27 = sbr.rel (0) target = $region13
    $region12: #{trans_encoder_forward.1} parent=1 // pred_region
      _
    $region13: #{trans_encoder_forward.1} parent=1 // pred_fallthru
      _
    // Predicated region
    $region14: #{trans_encoder_forward.1} parent=1 // pred_check
      _
    $region15: #{trans_encoder_forward.1} parent=1 // pred_check_branch
      %29 = sbr.rel (0) target = $region17
    $region16: #{trans_encoder_forward.1} parent=1 // pred_region
      _
    $region17: #{trans_encoder_forward.1} parent=1 // pred_fallthru
      _
    // Predicated region
    $region18: #{trans_encoder_forward.1} parent=1 // pred_check
      _
    $region19: #{trans_encoder_forward.1} parent=1 // pred_check_branch
      %31 = sbr.rel (0) target = $region21
    $region20: #{trans_encoder_forward.1} parent=1 // pred_region
      _
    $region21: #{trans_encoder_forward.1} parent=1 // pred_fallthru
      _
    // Predicated region
    $region22: #{trans_encoder_forward.1} parent=1 // pred_check
      _
    $region23: #{trans_encoder_forward.1} parent=1 // pred_check_branch
      %33 = sbr.rel (0) target = $region25
    $region24: #{trans_encoder_forward.1} parent=1 // pred_region
      _
    $region25: #{trans_encoder_forward.1} parent=1 // pred_fallthru
      _
    // Predicated region
    $region26: #{trans_encoder_forward.1} parent=1 // pred_check
      _
    $region27: #{trans_encoder_forward.1} parent=1 // pred_check_branch
      %35 = sbr.rel (0) target = $region29
    $region28: #{trans_encoder_forward.1} parent=1 // pred_region
      _
    $region29: #{trans_encoder_forward.1} parent=1 // pred_fallthru
      _
    // Predicated region
    $region30: #{trans_encoder_forward.1} parent=1 // pred_check
      _
    $region31: #{trans_encoder_forward.1} parent=1 // pred_check_branch
      %37 = sbr.rel (0) target = $region33
    $region32: #{trans_encoder_forward.1} parent=1 // pred_region
      _
    $region33: #{trans_encoder_forward.1} parent=1 // pred_fallthru
      _
    // Predicated region
    $region34: #{trans_encoder_forward.1} parent=1 // pred_check
      _
    $region35: #{trans_encoder_forward.1} parent=1 // pred_check_branch
      %39 = sbr.rel (0) target = $region37
    $region36: #{trans_encoder_forward.1} parent=1 // pred_region
      _
    $region37: #{trans_encoder_forward.1} parent=1 // pred_fallthru
      _
    // Predicated region
    $region38: #{trans_encoder_forward.1} parent=1 // pred_check
      _
    $region39: #{trans_encoder_forward.1} parent=1 // pred_check_branch
      %41 = sbr.rel (0) target = $region41
    $region40: #{trans_encoder_forward.1} parent=1 // pred_region
      _
    $region41: #{trans_encoder_forward.1} parent=1 // pred_fallthru
      _
    // Predicated region
    $region42: #{trans_encoder_forward.1} parent=1 // pred_check
      _
    $region43: #{trans_encoder_forward.1} parent=1 // pred_check_branch
      %43 = sbr.rel (0) target = $region45
    $region44: #{trans_encoder_forward.1} parent=1 // pred_region
      _
    $region45: #{trans_encoder_forward.1} parent=1 // pred_fallthru
      _
    // Predicated region
    $region46: #{trans_encoder_forward.1} parent=1 // pred_check
      _
    $region47: #{trans_encoder_forward.1} parent=1 // pred_check_branch
      %45 = sbr.rel (0) target = $region49
    $region48: #{trans_encoder_forward.1} parent=1 // pred_region
      _
    $region49: #{trans_encoder_forward.1} parent=1 // pred_fallthru
      _
    // Predicated region
    $region50: #{trans_encoder_forward.1} parent=1 // pred_check
      _
    $region51: #{trans_encoder_forward.1} parent=1 // pred_check_branch
      %47 = sbr.rel (0) target = $region53
    $region52: #{trans_encoder_forward.1} parent=1 // pred_region
      _
    $region53: #{trans_encoder_forward.1} parent=1 // pred_fallthru
      _
    // Predicated region
    $region54: #{trans_encoder_forward.1} parent=1 // pred_check
      _
    $region55: #{trans_encoder_forward.1} parent=1 // pred_check_branch
      %49 = sbr.rel (0) target = $region57
    $region56: #{trans_encoder_forward.1} parent=1 // pred_region
      _
    $region57: #{trans_encoder_forward.1} parent=1 // pred_fallthru
      _
    // Predicated region
    $region58: #{trans_encoder_forward.1} parent=1 // pred_check
      _
    $region59: #{trans_encoder_forward.1} parent=1 // pred_check_branch
      %51 = sbr.rel (0) target = $region61
    $region60: #{trans_encoder_forward.1} parent=1 // pred_region
      _
    $region61: #{trans_encoder_forward.1} parent=1 // pred_fallthru
      _
    // Predicated region
    $region62: #{trans_encoder_forward.1} parent=1 // pred_check
      _
    $region63: #{trans_encoder_forward.1} parent=1 // pred_check_branch
      %53 = sbr.rel (0) target = $region65
    $region64: #{trans_encoder_forward.1} parent=1 // pred_region
      _
    $region65: #{trans_encoder_forward.1} parent=1 // pred_fallthru
      _
    %v55 = vld [vmem:[%s0] sm:$0xff]
    %v56 = vld [vmem:[%s0 + $0x8] sm:$0xff]
    %v57 = vld [vmem:[%s0 + $0x10] sm:$0xff]
    %v58 = vld [vmem:[%s0 + $0x18] sm:$0xff]
    %v59 = vld [vmem:[%s0 + $0x20] sm:$0xff]
    %v60 = vld [vmem:[%s0 + $0x28] sm:$0xff]
    %v61 = vld [vmem:[%s0 + $0x30] sm:$0xff]
    %v62 = vld [vmem:[%s0 + $0x38] sm:$0xff]
    %v63 = vld [vmem:[%s0 + $0x40] sm:$0xff]
    %v64 = vld [vmem:[%s0 + $0x48] sm:$0xff]
    %v65 = vld [vmem:[%s0 + $0x50] sm:$0xff]
    %v66 = vld [vmem:[%s0 + $0x58] sm:$0xff]
    %v67 = vld [vmem:[%s0 + $0x60] sm:$0xff]
    %v68 = vld [vmem:[%s0 + $0x68] sm:$0xff]
    %v69 = vld [vmem:[%s0 + $0x70] sm:$0xff]
    %v70 = vld [vmem:[%s0 + $0x78] sm:$0xff]
    %v71 = vld [vmem:[%s0 + $0x80] sm:$0xff]
    %v72 = vld [vmem:[%s0 + $0x88] sm:$0xff]
    %v73 = vld [vmem:[%s0 + $0x90] sm:$0xff]
    %v74 = vld [vmem:[%s0 + $0x98] sm:$0xff]
    %v75 = vld [vmem:[%s0 + $0xa0] sm:$0xff]
    %v76 = vld [vmem:[%s0 + $0xa8] sm:$0xff]
    %v77 = vld [vmem:[%s0 + $0xb0] sm:$0xff]
    %v78 = vld [vmem:[%s0 + $0xb8] sm:$0xff]
    %v79 = vld [vmem:[%s0 + $0xc0] sm:$0xff]
    %v80 = vld [vmem:[%s0 + $0xc8] sm:$0xff]
    %v81 = vld [vmem:[%s0 + $0xd0] sm:$0xff]
    %v82 = vld [vmem:[%s0 + $0xd8] sm:$0xff]
    %v83 = vld [vmem:[%s0 + $0xe0] sm:$0xff]
    %v84 = vld [vmem:[%s0 + $0xe8] sm:$0xff]
    %v85 = vld [vmem:[%s0 + $0xf0] sm:$0xff]
    %v86 = vld [vmem:[%s0 + $0xf8] sm:$0xff]
    %v87 = vmax.f32 %v55, 0.0
    %v88 = vmax.f32 %v56, 0.0
    %v89 = vmax.f32 %v57, 0.0
    %v90 = vmax.f32 %v58, 0.0
    %v91 = vmax.f32 %v59, 0.0
    %v92 = vmax.f32 %v60, 0.0
    %v93 = vmax.f32 %v61, 0.0
    %v94 = vmax.f32 %v62, 0.0
    %v95 = vmax.f32 %v63, 0.0
    %v96 = vmax.f32 %v64, 0.0
    %v97 = vmax.f32 %v65, 0.0
    %v98 = vmax.f32 %v66, 0.0
    %v99 = vmax.f32 %v67, 0.0
    %v100 = vmax.f32 %v68, 0.0
    %v101 = vmax.f32 %v69, 0.0
    %v102 = vmax.f32 %v70, 0.0
    %v103 = vmax.f32 %v71, 0.0
    %v104 = vmax.f32 %v72, 0.0
    %v105 = vmax.f32 %v73, 0.0
    %v106 = vmax.f32 %v74, 0.0
    %v107 = vmax.f32 %v75, 0.0
    %v108 = vmax.f32 %v76, 0.0
    %v109 = vmax.f32 %v77, 0.0
    %v110 = vmax.f32 %v78, 0.0
    %v111 = vmax.f32 %v79, 0.0
    %v112 = vmax.f32 %v80, 0.0
    %v113 = vmax.f32 %v81, 0.0
    %v114 = vmax.f32 %v82, 0.0
    %v115 = vmax.f32 %v83, 0.0
    %v116 = vmax.f32 %v84, 0.0
    %v117 = vmax.f32 %v85, 0.0
    %v118 = vmax.f32 %v86, 0.0
    %v119 = vld [vmem:[%s2] sm:$0x7]
    %vm120 = vcmask 23552
    %v122 = vsel %vm120, %v87, 0
    %v125 = vsel %vm120, %v88, 0
    %v128 = vsel %vm120, %v89, 0
    %v131 = vsel %vm120, %v90, 0
    %v134 = vsel %vm120, %v91, 0
    %v137 = vsel %vm120, %v92, 0
    %v140 = vsel %vm120, %v93, 0
    %v143 = vsel %vm120, %v94, 0
    %v146 = vsel %vm120, %v95, 0
    %v149 = vsel %vm120, %v96, 0
    %v152 = vsel %vm120, %v97, 0
    %v155 = vsel %vm120, %v98, 0
    %v158 = vsel %vm120, %v99, 0
    %v161 = vsel %vm120, %v100, 0
    %v164 = vsel %vm120, %v101, 0
    %v167 = vsel %vm120, %v102, 0
    %v170 = vsel %vm120, %v103, 0
    %v173 = vsel %vm120, %v104, 0
    %v176 = vsel %vm120, %v105, 0
    %v179 = vsel %vm120, %v106, 0
    %v182 = vsel %vm120, %v107, 0
    %v185 = vsel %vm120, %v108, 0
    %v188 = vsel %vm120, %v109, 0
    %v191 = vsel %vm120, %v110, 0
    %v194 = vsel %vm120, %v111, 0
    %v197 = vsel %vm120, %v112, 0
    %v200 = vsel %vm120, %v113, 0
    %v203 = vsel %vm120, %v114, 0
    %v206 = vsel %vm120, %v115, 0
    %v209 = vsel %vm120, %v116, 0
    %v212 = vsel %vm120, %v117, 0
    %v215 = vsel %vm120, %v118, 0
    %vm217 = vcmask 1042432
    %v219 = vsel %vm217, %v119, 0
    %221 = vmatprep.subr.mxu0 0.0
    %222 = vmatpush1.msra.mxu0 0.0
    %223 = vmatprep.subr.mxu0 0.0
    %224 = vmatpush1.msra.mxu0 0.0
    %225 = vmatprep.subr.mxu0 0.0
    %226 = vmatpush1.msra.mxu0 0.0
    %227 = vmatprep.subr.mxu0 0.0
    %228 = vmatpush1.msra.mxu0 0.0
    %229 = vmatprep.subr.mxu0 0.0
    %230 = vmatpush1.msra.mxu0 0.0
    %231 = vmatprep.subr.mxu0 0.0
    %232 = vmatpush1.msra.mxu0 0.0
    %233 = vmatprep.subr.mxu0 0.0
    %234 = vmatpush1.msra.mxu0 0.0
    %235 = vmatprep.subr.mxu0 0.0
    %236 = vmatpush1.msra.mxu0 0.0
    %237 = vmatprep.subr.mxu0 0.0
    %238 = vmatpush1.msra.mxu0 0.0
    %239 = vmatprep.subr.mxu0 0.0
    %240 = vmatpush1.msra.mxu0 0.0
    %241 = vmatprep.subr.mxu0 0.0
    %242 = vmatpush1.msra.mxu0 0.0
    %243 = vmatprep.subr.mxu0 0.0
    %244 = vmatpush1.msra.mxu0 0.0
    %245 = vmatprep.subr.mxu0 0.0
    %246 = vmatpush1.msra.mxu0 0.0
    %247 = vmatprep.subr.mxu0 0.0
    %248 = vmatpush1.msra.mxu0 0.0
    %249 = vmatprep.subr.mxu0 0.0
    %250 = vmatpush1.msra.mxu0 0.0
    %251 = vmatprep.subr.mxu0 0.0
    %252 = vmatpush1.msra.mxu0 %v219
    %253 = vmatprep.subr.mxu0 0.0
    %254 = vmatpush2.msra.mxu0 0.0
    %255 = vmatprep.subr.mxu0 0.0
    %256 = vmatpush2.msra.mxu0 0.0
    %257 = vmatprep.subr.mxu0 0.0
    %258 = vmatpush2.msra.mxu0 0.0
    %259 = vmatprep.subr.mxu0 0.0
    %260 = vmatpush2.msra.mxu0 0.0
    %261 = vmatprep.subr.mxu0 0.0
    %262 = vmatpush2.msra.mxu0 0.0
    %263 = vmatprep.subr.mxu0 0.0
    %264 = vmatpush2.msra.mxu0 0.0
    %265 = vmatprep.subr.mxu0 0.0
    %266 = vmatpush2.msra.mxu0 0.0
    %267 = vmatprep.subr.mxu0 0.0
    %268 = vmatpush2.msra.mxu0 0.0
    %269 = vmatprep.subr.mxu0 0.0
    %270 = vmatpush2.msra.mxu0 0.0
    %271 = vmatprep.subr.mxu0 0.0
    %272 = vmatpush2.msra.mxu0 0.0
    %273 = vmatprep.subr.mxu0 0.0
    %274 = vmatpush2.msra.mxu0 0.0
    %275 = vmatprep.subr.mxu0 0.0
    %276 = vmatpush2.msra.mxu0 0.0
    %277 = vmatprep.subr.mxu0 0.0
    %278 = vmatpush2.msra.mxu0 0.0
    %279 = vmatprep.subr.mxu0 0.0
    %280 = vmatpush2.msra.mxu0 0.0
    %281 = vmatprep.subr.mxu0 0.0
    %282 = vmatpush2.msra.mxu0 0.0
    %283 = vmatprep.subr.mxu0 0.0
    %284 = vmatpush2.msra.mxu0 0.0
    %285 = vmatprep.mubr.f32.mxu0 0.0
    %286 = vmatmul.mubr.f32.gmra.mxu0 %v122
    %v287 = vpop.f32.mrf.mxu0
    %v288 = vadd.f32 0.0, %v287
    %v289 = vpop.f32.mrf.mxu0
    %290 = vmatprep.mubr.f32.mxu0 0.0
    %291 = vmatmul.mubr.f32.gmra.mxu0 %v125
    %v292 = vpop.f32.mrf.mxu0
    %v293 = vadd.f32 0.0, %v292
    %v294 = vpop.f32.mrf.mxu0
    %295 = vmatprep.mubr.f32.mxu0 0.0
    %296 = vmatmul.mubr.f32.gmra.mxu0 %v128
    %v297 = vpop.f32.mrf.mxu0
    %v298 = vadd.f32 0.0, %v297
    %v299 = vpop.f32.mrf.mxu0
    %300 = vmatprep.mubr.f32.mxu0 0.0
    %301 = vmatmul.mubr.f32.gmra.mxu0 %v131
    %v302 = vpop.f32.mrf.mxu0
    %v303 = vadd.f32 0.0, %v302
    %v304 = vpop.f32.mrf.mxu0
    %305 = vmatprep.mubr.f32.mxu0 0.0
    %306 = vmatmul.mubr.f32.gmra.mxu0 %v134
    %v307 = vpop.f32.mrf.mxu0
    %v308 = vadd.f32 0.0, %v307
    %v309 = vpop.f32.mrf.mxu0
    %310 = vmatprep.mubr.f32.mxu0 0.0
    %311 = vmatmul.mubr.f32.gmra.mxu0 %v137
    %v312 = vpop.f32.mrf.mxu0
    %v313 = vadd.f32 0.0, %v312
    %v314 = vpop.f32.mrf.mxu0
    %315 = vmatprep.mubr.f32.mxu0 0.0
    %316 = vmatmul.mubr.f32.gmra.mxu0 %v140
    %v317 = vpop.f32.mrf.mxu0
    %v318 = vadd.f32 0.0, %v317
    %v319 = vpop.f32.mrf.mxu0
    %320 = vmatprep.mubr.f32.mxu0 0.0
    %321 = vmatmul.mubr.f32.gmra.mxu0 %v143
    %v322 = vpop.f32.mrf.mxu0
    %v323 = vadd.f32 0.0, %v322
    %v324 = vpop.f32.mrf.mxu0
    %325 = vmatprep.mubr.f32.mxu0 0.0
    %326 = vmatmul.mubr.f32.gmra.mxu0 %v146
    %v327 = vpop.f32.mrf.mxu0
    %v328 = vadd.f32 0.0, %v327
    %v329 = vpop.f32.mrf.mxu0
    %330 = vmatprep.mubr.f32.mxu0 0.0
    %331 = vmatmul.mubr.f32.gmra.mxu0 %v149
    %v332 = vpop.f32.mrf.mxu0
    %v333 = vadd.f32 0.0, %v332
    %v334 = vpop.f32.mrf.mxu0
    %335 = vmatprep.mubr.f32.mxu0 0.0
    %336 = vmatmul.mubr.f32.gmra.mxu0 %v152
    %v337 = vpop.f32.mrf.mxu0
    %v338 = vadd.f32 0.0, %v337
    %v339 = vpop.f32.mrf.mxu0
    %340 = vmatprep.mubr.f32.mxu0 0.0
    %341 = vmatmul.mubr.f32.gmra.mxu0 %v155
    %v342 = vpop.f32.mrf.mxu0
    %v343 = vadd.f32 0.0, %v342
    %v344 = vpop.f32.mrf.mxu0
    %345 = vmatprep.mubr.f32.mxu0 0.0
    %346 = vmatmul.mubr.f32.gmra.mxu0 %v158
    %v347 = vpop.f32.mrf.mxu0
    %v348 = vadd.f32 0.0, %v347
    %v349 = vpop.f32.mrf.mxu0
    %350 = vmatprep.mubr.f32.mxu0 0.0
    %351 = vmatmul.mubr.f32.gmra.mxu0 %v161
    %v352 = vpop.f32.mrf.mxu0
    %v353 = vadd.f32 0.0, %v352
    %v354 = vpop.f32.mrf.mxu0
    %355 = vmatprep.mubr.f32.mxu0 0.0
    %356 = vmatmul.mubr.f32.gmra.mxu0 %v164
    %v357 = vpop.f32.mrf.mxu0
    %v358 = vadd.f32 0.0, %v357
    %v359 = vpop.f32.mrf.mxu0
    %360 = vmatprep.mubr.f32.mxu0 0.0
    %361 = vmatmul.mubr.f32.gmra.mxu0 %v167
    %v362 = vpop.f32.mrf.mxu0
    %v363 = vadd.f32 0.0, %v362
    %v364 = vpop.f32.mrf.mxu0
    %365 = vmatprep.mubr.f32.mxu0 0.0
    %366 = vmatmul.mubr.f32.gmra.mxu0 %v170
    %v367 = vpop.f32.mrf.mxu0
    %v368 = vadd.f32 0.0, %v367
    %v369 = vpop.f32.mrf.mxu0
    %370 = vmatprep.mubr.f32.mxu0 0.0
    %371 = vmatmul.mubr.f32.gmra.mxu0 %v173
    %v372 = vpop.f32.mrf.mxu0
    %v373 = vadd.f32 0.0, %v372
    %v374 = vpop.f32.mrf.mxu0
    %375 = vmatprep.mubr.f32.mxu0 0.0
    %376 = vmatmul.mubr.f32.gmra.mxu0 %v176
    %v377 = vpop.f32.mrf.mxu0
    %v378 = vadd.f32 0.0, %v377
    %v379 = vpop.f32.mrf.mxu0
    %380 = vmatprep.mubr.f32.mxu0 0.0
    %381 = vmatmul.mubr.f32.gmra.mxu0 %v179
    %v382 = vpop.f32.mrf.mxu0
    %v383 = vadd.f32 0.0, %v382
    %v384 = vpop.f32.mrf.mxu0
    %385 = vmatprep.mubr.f32.mxu0 0.0
    %386 = vmatmul.mubr.f32.gmra.mxu0 %v182
    %v387 = vpop.f32.mrf.mxu0
    %v388 = vadd.f32 0.0, %v387
    %v389 = vpop.f32.mrf.mxu0
    %390 = vmatprep.mubr.f32.mxu0 0.0
    %391 = vmatmul.mubr.f32.gmra.mxu0 %v185
    %v392 = vpop.f32.mrf.mxu0
    %v393 = vadd.f32 0.0, %v392
    %v394 = vpop.f32.mrf.mxu0
    %395 = vmatprep.mubr.f32.mxu0 0.0
    %396 = vmatmul.mubr.f32.gmra.mxu0 %v188
    %v397 = vpop.f32.mrf.mxu0
    %v398 = vadd.f32 0.0, %v397
    %v399 = vpop.f32.mrf.mxu0
    %400 = vmatprep.mubr.f32.mxu0 0.0
    %401 = vmatmul.mubr.f32.gmra.mxu0 %v191
    %v402 = vpop.f32.mrf.mxu0
    %v403 = vadd.f32 0.0, %v402
    %v404 = vpop.f32.mrf.mxu0
    %405 = vmatprep.mubr.f32.mxu0 0.0
    %406 = vmatmul.mubr.f32.gmra.mxu0 %v194
    %v407 = vpop.f32.mrf.mxu0
    %v408 = vadd.f32 0.0, %v407
    %v409 = vpop.f32.mrf.mxu0
    %410 = vmatprep.mubr.f32.mxu0 0.0
    %411 = vmatmul.mubr.f32.gmra.mxu0 %v197
    %v412 = vpop.f32.mrf.mxu0
    %v413 = vadd.f32 0.0, %v412
    %v414 = vpop.f32.mrf.mxu0
    %415 = vmatprep.mubr.f32.mxu0 0.0
    %416 = vmatmul.mubr.f32.gmra.mxu0 %v200
    %v417 = vpop.f32.mrf.mxu0
    %v418 = vadd.f32 0.0, %v417
    %v419 = vpop.f32.mrf.mxu0
    %420 = vmatprep.mubr.f32.mxu0 0.0
    %421 = vmatmul.mubr.f32.gmra.mxu0 %v203
    %v422 = vpop.f32.mrf.mxu0
    %v423 = vadd.f32 0.0, %v422
    %v424 = vpop.f32.mrf.mxu0
    %425 = vmatprep.mubr.f32.mxu0 0.0
    %426 = vmatmul.mubr.f32.gmra.mxu0 %v206
    %v427 = vpop.f32.mrf.mxu0
    %v428 = vadd.f32 0.0, %v427
    %v429 = vpop.f32.mrf.mxu0
    %430 = vmatprep.mubr.f32.mxu0 0.0
    %431 = vmatmul.mubr.f32.gmra.mxu0 %v209
    %v432 = vpop.f32.mrf.mxu0
    %v433 = vadd.f32 0.0, %v432
    %v434 = vpop.f32.mrf.mxu0
    %435 = vmatprep.mubr.f32.mxu0 0.0
    %436 = vmatmul.mubr.f32.gmra.mxu0 %v212
    %v437 = vpop.f32.mrf.mxu0
    %v438 = vadd.f32 0.0, %v437
    %v439 = vpop.f32.mrf.mxu0
    %440 = vmatprep.mubr.f32.mxu0 0.0
    %441 = vmatmul.mubr.f32.gmra.mxu0 %v215
    %v442 = vpop.f32.mrf.mxu0
    %v443 = vadd.f32 0.0, %v442
    %v444 = vpop.f32.mrf.mxu0
    %445 = vdwg.mxu0
    %v446 = vld [vmem:[%s3] sm:$0xff]
    %v447 = vld [vmem:[%s3 + $0x8] sm:$0xff]
    %v448 = vld [vmem:[%s3 + $0x10] sm:$0xff]
    %v449 = vld [vmem:[%s3 + $0x18] sm:$0xff]
    %v450 = vld [vmem:[%s3 + $0x20] sm:$0xff]
    %v451 = vld [vmem:[%s3 + $0x28] sm:$0xff]
    %v452 = vld [vmem:[%s3 + $0x30] sm:$0xff]
    %v453 = vld [vmem:[%s3 + $0x38] sm:$0xff]
    %v454 = vld [vmem:[%s3 + $0x40] sm:$0xff]
    %v455 = vld [vmem:[%s3 + $0x48] sm:$0xff]
    %v456 = vld [vmem:[%s3 + $0x50] sm:$0xff]
    %v457 = vld [vmem:[%s3 + $0x58] sm:$0xff]
    %v458 = vld [vmem:[%s3 + $0x60] sm:$0xff]
    %v459 = vld [vmem:[%s3 + $0x68] sm:$0xff]
    %v460 = vld [vmem:[%s3 + $0x70] sm:$0xff]
    %v461 = vld [vmem:[%s3 + $0x78] sm:$0xff]
    %v462 = vadd.f32 %v288, %v446
    %v463 = vadd.f32 %v293, %v447
    %v464 = vadd.f32 %v298, %v448
    %v465 = vadd.f32 %v303, %v449
    %v466 = vadd.f32 %v308, %v450
    %v467 = vadd.f32 %v313, %v451
    %v468 = vadd.f32 %v318, %v452
    %v469 = vadd.f32 %v323, %v453
    %v470 = vadd.f32 %v328, %v454
    %v471 = vadd.f32 %v333, %v455
    %v472 = vadd.f32 %v338, %v456
    %v473 = vadd.f32 %v343, %v457
    %v474 = vadd.f32 %v348, %v458
    %v475 = vadd.f32 %v353, %v459
    %v476 = vadd.f32 %v358, %v460
    %v477 = vadd.f32 %v363, %v461
    %v478 = vadd.f32 %v368, %v446
    %v479 = vadd.f32 %v373, %v447
    %v480 = vadd.f32 %v378, %v448
    %v481 = vadd.f32 %v383, %v449
    %v482 = vadd.f32 %v388, %v450
    %v483 = vadd.f32 %v393, %v451
    %v484 = vadd.f32 %v398, %v452
    %v485 = vadd.f32 %v403, %v453
    %v486 = vadd.f32 %v408, %v454
    %v487 = vadd.f32 %v413, %v455
    %v488 = vadd.f32 %v418, %v456
    %v489 = vadd.f32 %v423, %v457
    %v490 = vadd.f32 %v428, %v458
    %v491 = vadd.f32 %v433, %v459
    %v492 = vadd.f32 %v438, %v460
    %v493 = vadd.f32 %v443, %v461
    %v494 = vpack.c.bf16 %v463, %v462
    %v495 = vpack.c.bf16 %v465, %v464
    %v496 = vpack.c.bf16 %v467, %v466
    %v497 = vpack.c.bf16 %v469, %v468
    %v498 = vpack.c.bf16 %v471, %v470
    %v499 = vpack.c.bf16 %v473, %v472
    %v500 = vpack.c.bf16 %v475, %v474
    %v501 = vpack.c.bf16 %v477, %v476
    %v502 = vpack.c.bf16 %v479, %v478
    %v503 = vpack.c.bf16 %v481, %v480
    %v504 = vpack.c.bf16 %v483, %v482
    %v505 = vpack.c.bf16 %v485, %v484
    %v506 = vpack.c.bf16 %v487, %v486
    %v507 = vpack.c.bf16 %v489, %v488
    %v508 = vpack.c.bf16 %v491, %v490
    %v509 = vpack.c.bf16 %v493, %v492
    %v510 = vld [vmem:[%s4] sm:$0xf]
    %v511 = vld [vmem:[%s4 + $0x4] sm:$0xf]
    %v512 = vld [vmem:[%s4 + $0x8] sm:$0xf]
    %v513 = vld [vmem:[%s4 + $0xc] sm:$0xf]
    %v514 = vld [vmem:[%s5] sm:$0x1]
    %v516 = vlaneseq
    %v517 = vshrl.u32 %v516, 7
    %v518 = vsub.s32 0, %v517
    %v519 = vrot.slane %v514, %v518
    %v525 = vunpack.c.l.b16 %v510
    %v526 = vunpack.c.l.b16 %v511
    %v527 = vunpack.c.l.b16 %v512
    %v528 = vunpack.c.l.b16 %v513
    %v529 = vpack.c.b16 %v526, %v525
    %v530 = vpack.c.b16 %v528, %v527
    %vm533 = vcmask 261120
    %v535 = vsel %vm533, %v494, 0
    %v538 = vsel %vm533, %v495, 0
    %v541 = vsel %vm533, %v496, 0
    %v544 = vsel %vm533, %v497, 0
    %v547 = vsel %vm533, %v498, 0
    %v550 = vsel %vm533, %v499, 0
    %v553 = vsel %vm533, %v500, 0
    %v556 = vsel %vm533, %v501, 0
    %v559 = vsel %vm533, %v502, 0
    %v562 = vsel %vm533, %v503, 0
    %v565 = vsel %vm533, %v504, 0
    %v568 = vsel %vm533, %v505, 0
    %v571 = vsel %vm533, %v506, 0
    %v574 = vsel %vm533, %v507, 0
    %v577 = vsel %vm533, %v508, 0
    %v580 = vsel %vm533, %v509, 0
    %582 = vmatprep.subr.bf16.mxu0 0
    %583 = vmatpush1.bf16.msra.mxu0 0
    %584 = vmatprep.subr.bf16.mxu0 0
    %585 = vmatpush1.bf16.msra.mxu0 0
    %586 = vmatprep.subr.bf16.mxu0 0
    %587 = vmatpush1.bf16.msra.mxu0 0
    %588 = vmatprep.subr.bf16.mxu0 0
    %589 = vmatpush1.bf16.msra.mxu0 0
    %590 = vmatprep.subr.bf16.mxu0 0
    %591 = vmatpush1.bf16.msra.mxu0 0
    %592 = vmatprep.subr.bf16.mxu0 0
    %593 = vmatpush1.bf16.msra.mxu0 0
    %594 = vmatprep.subr.bf16.mxu0 0
    %595 = vmatpush1.bf16.msra.mxu0 %v530
    %596 = vmatprep.subr.bf16.mxu0 0
    %597 = vmatpush1.bf16.msra.mxu0 %v529
    %598 = vmatprep.subr.bf16.mxu0 0
    %599 = vmatpush2.bf16.msra.mxu0 0
    %600 = vmatprep.subr.bf16.mxu0 0
    %601 = vmatpush2.bf16.msra.mxu0 0
    %602 = vmatprep.subr.bf16.mxu0 0
    %603 = vmatpush2.bf16.msra.mxu0 0
    %604 = vmatprep.subr.bf16.mxu0 0
    %605 = vmatpush2.bf16.msra.mxu0 0
    %606 = vmatprep.subr.bf16.mxu0 0
    %607 = vmatpush2.bf16.msra.mxu0 0
    %608 = vmatprep.subr.bf16.mxu0 0
    %609 = vmatpush2.bf16.msra.mxu0 0
    %610 = vmatprep.subr.bf16.mxu0 0
    %611 = vmatpush2.bf16.msra.mxu0 0
    %612 = vmatprep.subr.bf16.mxu0 0
    %613 = vmatpush2.bf16.msra.mxu0 0
    %614 = vmatprep.mubr.bf16.mxu0 0
    %615 = vmatmul.mubr.bf16.gmra.mxu0 %v535
    %v616 = vpop.f32.mrf.mxu0
    %v617 = vadd.f32 %v519, %v616
    %v618 = vpop.f32.mrf.mxu0
    %v619 = vpop.f32.mrf.mxu0
    %v620 = vadd.f32 %v519, %v619
    %v621 = vpop.f32.mrf.mxu0
    %622 = vmatprep.mubr.bf16.mxu0 0
    %623 = vmatmul.mubr.bf16.gmra.mxu0 %v538
    %v624 = vpop.f32.mrf.mxu0
    %v625 = vadd.f32 %v519, %v624
    %v626 = vpop.f32.mrf.mxu0
    %v627 = vpop.f32.mrf.mxu0
    %v628 = vadd.f32 %v519, %v627
    %v629 = vpop.f32.mrf.mxu0
    %630 = vmatprep.mubr.bf16.mxu0 0
    %631 = vmatmul.mubr.bf16.gmra.mxu0 %v541
    %v632 = vpop.f32.mrf.mxu0
    %v633 = vadd.f32 %v519, %v632
    %v634 = vpop.f32.mrf.mxu0
    %v635 = vpop.f32.mrf.mxu0
    %v636 = vadd.f32 %v519, %v635
    %v637 = vpop.f32.mrf.mxu0
    %638 = vmatprep.mubr.bf16.mxu0 0
    %639 = vmatmul.mubr.bf16.gmra.mxu0 %v544
    %v640 = vpop.f32.mrf.mxu0
    %v641 = vadd.f32 %v519, %v640
    %v642 = vpop.f32.mrf.mxu0
    %v643 = vpop.f32.mrf.mxu0
    %v644 = vadd.f32 %v519, %v643
    %v645 = vpop.f32.mrf.mxu0
    %646 = vmatprep.mubr.bf16.mxu0 0
    %647 = vmatmul.mubr.bf16.gmra.mxu0 %v547
    %v648 = vpop.f32.mrf.mxu0
    %v649 = vadd.f32 %v519, %v648
    %v650 = vpop.f32.mrf.mxu0
    %v651 = vpop.f32.mrf.mxu0
    %v652 = vadd.f32 %v519, %v651
    %v653 = vpop.f32.mrf.mxu0
    %654 = vmatprep.mubr.bf16.mxu0 0
    %655 = vmatmul.mubr.bf16.gmra.mxu0 %v550
    %v656 = vpop.f32.mrf.mxu0
    %v657 = vadd.f32 %v519, %v656
    %v658 = vpop.f32.mrf.mxu0
    %v659 = vpop.f32.mrf.mxu0
    %v660 = vadd.f32 %v519, %v659
    %v661 = vpop.f32.mrf.mxu0
    %662 = vmatprep.mubr.bf16.mxu0 0
    %663 = vmatmul.mubr.bf16.gmra.mxu0 %v553
    %v664 = vpop.f32.mrf.mxu0
    %v665 = vadd.f32 %v519, %v664
    %v666 = vpop.f32.mrf.mxu0
    %v667 = vpop.f32.mrf.mxu0
    %v668 = vadd.f32 %v519, %v667
    %v669 = vpop.f32.mrf.mxu0
    %670 = vmatprep.mubr.bf16.mxu0 0
    %671 = vmatmul.mubr.bf16.gmra.mxu0 %v556
    %v672 = vpop.f32.mrf.mxu0
    %v673 = vadd.f32 %v519, %v672
    %v674 = vpop.f32.mrf.mxu0
    %v675 = vpop.f32.mrf.mxu0
    %v676 = vadd.f32 %v519, %v675
    %v677 = vpop.f32.mrf.mxu0
    %678 = vmatprep.mubr.bf16.mxu0 0
    %679 = vmatmul.mubr.bf16.gmra.mxu0 %v559
    %v680 = vpop.f32.mrf.mxu0
    %v681 = vadd.f32 %v519, %v680
    %v682 = vpop.f32.mrf.mxu0
    %v683 = vpop.f32.mrf.mxu0
    %v684 = vadd.f32 %v519, %v683
    %v685 = vpop.f32.mrf.mxu0
    %686 = vmatprep.mubr.bf16.mxu0 0
    %687 = vmatmul.mubr.bf16.gmra.mxu0 %v562
    %v688 = vpop.f32.mrf.mxu0
    %v689 = vadd.f32 %v519, %v688
    %v690 = vpop.f32.mrf.mxu0
    %v691 = vpop.f32.mrf.mxu0
    %v692 = vadd.f32 %v519, %v691
    %v693 = vpop.f32.mrf.mxu0
    %694 = vmatprep.mubr.bf16.mxu0 0
    %695 = vmatmul.mubr.bf16.gmra.mxu0 %v565
    %v696 = vpop.f32.mrf.mxu0
    %v697 = vadd.f32 %v519, %v696
    %v698 = vpop.f32.mrf.mxu0
    %v699 = vpop.f32.mrf.mxu0
    %v700 = vadd.f32 %v519, %v699
    %v701 = vpop.f32.mrf.mxu0
    %702 = vmatprep.mubr.bf16.mxu0 0
    %703 = vmatmul.mubr.bf16.gmra.mxu0 %v568
    %v704 = vpop.f32.mrf.mxu0
    %v705 = vadd.f32 %v519, %v704
    %v706 = vpop.f32.mrf.mxu0
    %v707 = vpop.f32.mrf.mxu0
    %v708 = vadd.f32 %v519, %v707
    %v709 = vpop.f32.mrf.mxu0
    %710 = vmatprep.mubr.bf16.mxu0 0
    %711 = vmatmul.mubr.bf16.gmra.mxu0 %v571
    %v712 = vpop.f32.mrf.mxu0
    %v713 = vadd.f32 %v519, %v712
    %v714 = vpop.f32.mrf.mxu0
    %v715 = vpop.f32.mrf.mxu0
    %v716 = vadd.f32 %v519, %v715
    %v717 = vpop.f32.mrf.mxu0
    %718 = vmatprep.mubr.bf16.mxu0 0
    %719 = vmatmul.mubr.bf16.gmra.mxu0 %v574
    %v720 = vpop.f32.mrf.mxu0
    %v721 = vadd.f32 %v519, %v720
    %v722 = vpop.f32.mrf.mxu0
    %v723 = vpop.f32.mrf.mxu0
    %v724 = vadd.f32 %v519, %v723
    %v725 = vpop.f32.mrf.mxu0
    %726 = vmatprep.mubr.bf16.mxu0 0
    %727 = vmatmul.mubr.bf16.gmra.mxu0 %v577
    %v728 = vpop.f32.mrf.mxu0
    %v729 = vadd.f32 %v519, %v728
    %v730 = vpop.f32.mrf.mxu0
    %v731 = vpop.f32.mrf.mxu0
    %v732 = vadd.f32 %v519, %v731
    %v733 = vpop.f32.mrf.mxu0
    %734 = vmatprep.mubr.bf16.mxu0 0
    %735 = vmatmul.mubr.bf16.gmra.mxu0 %v580
    %v736 = vpop.f32.mrf.mxu0
    %v737 = vadd.f32 %v519, %v736
    %v738 = vpop.f32.mrf.mxu0
    %v739 = vpop.f32.mrf.mxu0
    %v740 = vadd.f32 %v519, %v739
    %v741 = vpop.f32.mrf.mxu0
    %742 = vdwg.mxu0
    %v743 = vpack.c.bf16 %v620, %v617
    %v744 = vpack.c.bf16 %v628, %v625
    %v745 = vpack.c.bf16 %v636, %v633
    %v746 = vpack.c.bf16 %v644, %v641
    %v747 = vpack.c.bf16 %v652, %v649
    %v748 = vpack.c.bf16 %v660, %v657
    %v749 = vpack.c.bf16 %v668, %v665
    %v750 = vpack.c.bf16 %v676, %v673
    %v751 = vpack.c.bf16 %v684, %v681
    %v752 = vpack.c.bf16 %v692, %v689
    %v753 = vpack.c.bf16 %v700, %v697
    %v754 = vpack.c.bf16 %v708, %v705
    %v755 = vpack.c.bf16 %v716, %v713
    %v756 = vpack.c.bf16 %v724, %v721
    %v757 = vpack.c.bf16 %v732, %v729
    %v758 = vpack.c.bf16 %v740, %v737
    %v759 = vld [vmem:[%s1] sm:$0x1]
    %v761 = vlaneseq
    %v762 = vshrl.u32 %v761, 7
    %v763 = vsub.s32 0, %v762
    %v764 = vrot.slane %v759, %v763
    %774 = vrot.lane.b32.xlu0 %v743, 96
    %v775 = vpop.permute.xlu0 %774
    %776 = vrot.lane.b32.xlu0 %v744, 96
    %v777 = vpop.permute.xlu0 %776
    %778 = vrot.lane.b32.xlu0 %v745, 96
    %v779 = vpop.permute.xlu0 %778
    %780 = vrot.lane.b32.xlu0 %v746, 96
    %v781 = vpop.permute.xlu0 %780
    %782 = vrot.lane.b32.xlu0 %v747, 96
    %v783 = vpop.permute.xlu0 %782
    %784 = vrot.lane.b32.xlu0 %v748, 96
    %v785 = vpop.permute.xlu0 %784
    %786 = vrot.lane.b32.xlu0 %v749, 96
    %v787 = vpop.permute.xlu0 %786
    %788 = vrot.lane.b32.xlu0 %v750, 96
    %v789 = vpop.permute.xlu0 %788
    %vm790 = vcmask 64512
    %v792 = vsel %vm790, %v743, 0
    %v795 = vsel %vm790, %v744, 0
    %v798 = vsel %vm790, %v745, 0
    %v801 = vsel %vm790, %v746, 0
    %v804 = vsel %vm790, %v747, 0
    %v807 = vsel %vm790, %v748, 0
    %v810 = vsel %vm790, %v749, 0
    %v813 = vsel %vm790, %v750, 0
    %v816 = vsel %vm790, %v775, 0
    %v819 = vsel %vm790, %v777, 0
    %v822 = vsel %vm790, %v779, 0
    %v825 = vsel %vm790, %v781, 0
    %v828 = vsel %vm790, %v783, 0
    %v831 = vsel %vm790, %v785, 0
    %v834 = vsel %vm790, %v787, 0
    %v837 = vsel %vm790, %v789, 0
    %839 = vmatprep.subr.bf16.mxu0 0
    %840 = vmatpush1.bf16.xpose.msra.mxu0 %v837
    %841 = vmatprep.subr.bf16.mxu0 0
    %842 = vmatpush1.bf16.xpose.msra.mxu0 %v834
    %843 = vmatprep.subr.bf16.mxu0 0
    %844 = vmatpush1.bf16.xpose.msra.mxu0 %v831
    %845 = vmatprep.subr.bf16.mxu0 0
    %846 = vmatpush1.bf16.xpose.msra.mxu0 %v828
    %847 = vmatprep.subr.bf16.mxu0 0
    %848 = vmatpush1.bf16.xpose.msra.mxu0 %v825
    %849 = vmatprep.subr.bf16.mxu0 0
    %850 = vmatpush1.bf16.xpose.msra.mxu0 %v822
    %851 = vmatprep.subr.bf16.mxu0 0
    %852 = vmatpush1.bf16.xpose.msra.mxu0 %v819
    %853 = vmatprep.subr.bf16.mxu0 0
    %854 = vmatpush1.bf16.xpose.msra.mxu0 %v816
    %855 = vmatprep.subr.bf16.mxu0 0
    %856 = vmatpush2.bf16.xpose.msra.mxu0 0
    %857 = vmatprep.subr.bf16.mxu0 0
    %858 = vmatpush2.bf16.xpose.msra.mxu0 0
    %859 = vmatprep.subr.bf16.mxu0 0
    %860 = vmatpush2.bf16.xpose.msra.mxu0 0
    %861 = vmatprep.subr.bf16.mxu0 0
    %862 = vmatpush2.bf16.xpose.msra.mxu0 0
    %863 = vmatprep.subr.bf16.mxu0 0
    %864 = vmatpush2.bf16.xpose.msra.mxu0 0
    %865 = vmatprep.subr.bf16.mxu0 0
    %866 = vmatpush2.bf16.xpose.msra.mxu0 0
    %867 = vmatprep.subr.bf16.mxu0 0
    %868 = vmatpush2.bf16.xpose.msra.mxu0 0
    %869 = vmatprep.subr.bf16.mxu0 0
    %870 = vmatpush2.bf16.xpose.msra.mxu0 0
    %871 = vmatprep.mubr.bf16.mxu0 0
    %872 = vmatmul.mubr.bf16.gmra.mxu0 %v792
    %v873 = vpop.f32.mrf.mxu0
    %v874 = vadd.f32 %v764, %v873
    %v875 = vpop.f32.mrf.mxu0
    %v876 = vpop.f32.mrf.mxu0
    %v877 = vadd.f32 %v764, %v876
    %v878 = vpop.f32.mrf.mxu0
    %879 = vmatprep.mubr.bf16.mxu0 0
    %880 = vmatmul.mubr.bf16.gmra.mxu0 %v795
    %v881 = vpop.f32.mrf.mxu0
    %v882 = vadd.f32 %v764, %v881
    %v883 = vpop.f32.mrf.mxu0
    %v884 = vpop.f32.mrf.mxu0
    %v885 = vadd.f32 %v764, %v884
    %v886 = vpop.f32.mrf.mxu0
    %887 = vmatprep.mubr.bf16.mxu0 0
    %888 = vmatmul.mubr.bf16.gmra.mxu0 %v798
    %v889 = vpop.f32.mrf.mxu0
    %v890 = vadd.f32 %v764, %v889
    %v891 = vpop.f32.mrf.mxu0
    %v892 = vpop.f32.mrf.mxu0
    %v893 = vadd.f32 %v764, %v892
    %v894 = vpop.f32.mrf.mxu0
    %895 = vmatprep.mubr.bf16.mxu0 0
    %896 = vmatmul.mubr.bf16.gmra.mxu0 %v801
    %v897 = vpop.f32.mrf.mxu0
    %v898 = vadd.f32 %v764, %v897
    %v899 = vpop.f32.mrf.mxu0
    %v900 = vpop.f32.mrf.mxu0
    %v901 = vadd.f32 %v764, %v900
    %v902 = vpop.f32.mrf.mxu0
    %903 = vmatprep.mubr.bf16.mxu0 0
    %904 = vmatmul.mubr.bf16.gmra.mxu0 %v804
    %v905 = vpop.f32.mrf.mxu0
    %v906 = vadd.f32 %v764, %v905
    %v907 = vpop.f32.mrf.mxu0
    %v908 = vpop.f32.mrf.mxu0
    %v909 = vadd.f32 %v764, %v908
    %v910 = vpop.f32.mrf.mxu0
    %911 = vmatprep.mubr.bf16.mxu0 0
    %912 = vmatmul.mubr.bf16.gmra.mxu0 %v807
    %v913 = vpop.f32.mrf.mxu0
    %v914 = vadd.f32 %v764, %v913
    %v915 = vpop.f32.mrf.mxu0
    %v916 = vpop.f32.mrf.mxu0
    %v917 = vadd.f32 %v764, %v916
    %v918 = vpop.f32.mrf.mxu0
    %919 = vmatprep.mubr.bf16.mxu0 0
    %920 = vmatmul.mubr.bf16.gmra.mxu0 %v810
    %v921 = vpop.f32.mrf.mxu0
    %v922 = vadd.f32 %v764, %v921
    %v923 = vpop.f32.mrf.mxu0
    %v924 = vpop.f32.mrf.mxu0
    %v925 = vadd.f32 %v764, %v924
    %v926 = vpop.f32.mrf.mxu0
    %927 = vmatprep.mubr.bf16.mxu0 0
    %928 = vmatmul.mubr.bf16.gmra.mxu0 %v813
    %v929 = vpop.f32.mrf.mxu0
    %v930 = vadd.f32 %v764, %v929
    %v931 = vpop.f32.mrf.mxu0
    %v932 = vpop.f32.mrf.mxu0
    %v933 = vadd.f32 %v764, %v932
    %v934 = vpop.f32.mrf.mxu0
    %935 = vdwg.mxu0
    %936 = vmax.xlane.f32.xlu0 %v874
    %v937 = vpop.xlane.xlu0 %936
    %938 = vmax.xlane.f32.xlu0 %v877
    %v939 = vpop.xlane.xlu0 %938
    %940 = vmax.xlane.f32.xlu0 %v882
    %v941 = vpop.xlane.xlu0 %940
    %942 = vmax.xlane.f32.xlu0 %v885
    %v943 = vpop.xlane.xlu0 %942
    %944 = vmax.xlane.f32.xlu0 %v890
    %v945 = vpop.xlane.xlu0 %944
    %946 = vmax.xlane.f32.xlu0 %v893
    %v947 = vpop.xlane.xlu0 %946
    %948 = vmax.xlane.f32.xlu0 %v898
    %v949 = vpop.xlane.xlu0 %948
    %950 = vmax.xlane.f32.xlu0 %v901
    %v951 = vpop.xlane.xlu0 %950
    %952 = vmax.xlane.f32.xlu0 %v906
    %v953 = vpop.xlane.xlu0 %952
    %954 = vmax.xlane.f32.xlu0 %v909
    %v955 = vpop.xlane.xlu0 %954
    %956 = vmax.xlane.f32.xlu0 %v914
    %v957 = vpop.xlane.xlu0 %956
    %958 = vmax.xlane.f32.xlu0 %v917
    %v959 = vpop.xlane.xlu0 %958
    %960 = vmax.xlane.f32.xlu0 %v922
    %v961 = vpop.xlane.xlu0 %960
    %962 = vmax.xlane.f32.xlu0 %v925
    %v963 = vpop.xlane.xlu0 %962
    %964 = vmax.xlane.f32.xlu0 %v930
    %v965 = vpop.xlane.xlu0 %964
    %966 = vmax.xlane.f32.xlu0 %v933
    %v967 = vpop.xlane.xlu0 %966
    %v968 = vsub.f32 %v874, %v937
    %v969 = vsub.f32 %v877, %v939
    %v970 = vsub.f32 %v882, %v941
    %v971 = vsub.f32 %v885, %v943
    %v972 = vsub.f32 %v890, %v945
    %v973 = vsub.f32 %v893, %v947
    %v974 = vsub.f32 %v898, %v949
    %v975 = vsub.f32 %v901, %v951
    %v976 = vsub.f32 %v906, %v953
    %v977 = vsub.f32 %v909, %v955
    %v978 = vsub.f32 %v914, %v957
    %v979 = vsub.f32 %v917, %v959
    %v980 = vsub.f32 %v922, %v961
    %v981 = vsub.f32 %v925, %v963
    %v982 = vsub.f32 %v930, %v965
    %v983 = vsub.f32 %v933, %v967
    %v984 = vmul.f32 %v968, 1.442695
    %v985 = vpow.pop %v984
    %v986 = vmul.f32 %v969, 1.442695
    %v987 = vpow.pop %v986
    %v988 = vmul.f32 %v970, 1.442695
    %v989 = vpow.pop %v988
    %v990 = vmul.f32 %v971, 1.442695
    %v991 = vpow.pop %v990
    %v992 = vmul.f32 %v972, 1.442695
    %v993 = vpow.pop %v992
    %v994 = vmul.f32 %v973, 1.442695
    %v995 = vpow.pop %v994
    %v996 = vmul.f32 %v974, 1.442695
    %v997 = vpow.pop %v996
    %v998 = vmul.f32 %v975, 1.442695
    %v999 = vpow.pop %v998
    %v1000 = vmul.f32 %v976, 1.442695
    %v1001 = vpow.pop %v1000
    %v1002 = vmul.f32 %v977, 1.442695
    %v1003 = vpow.pop %v1002
    %v1004 = vmul.f32 %v978, 1.442695
    %v1005 = vpow.pop %v1004
    %v1006 = vmul.f32 %v979, 1.442695
    %v1007 = vpow.pop %v1006
    %v1008 = vmul.f32 %v980, 1.442695
    %v1009 = vpow.pop %v1008
    %v1010 = vmul.f32 %v981, 1.442695
    %v1011 = vpow.pop %v1010
    %v1012 = vmul.f32 %v982, 1.442695
    %v1013 = vpow.pop %v1012
    %v1014 = vmul.f32 %v983, 1.442695
    %v1015 = vpow.pop %v1014
    %1016 = vadd.xlane.f32.xlu0 %v985
    %v1017 = vpop.xlane.xlu0 %1016
    %1018 = vadd.xlane.f32.xlu0 %v987
    %v1019 = vpop.xlane.xlu0 %1018
    %1020 = vadd.xlane.f32.xlu0 %v989
    %v1021 = vpop.xlane.xlu0 %1020
    %1022 = vadd.xlane.f32.xlu0 %v991
    %v1023 = vpop.xlane.xlu0 %1022
    %1024 = vadd.xlane.f32.xlu0 %v993
    %v1025 = vpop.xlane.xlu0 %1024
    %1026 = vadd.xlane.f32.xlu0 %v995
    %v1027 = vpop.xlane.xlu0 %1026
    %1028 = vadd.xlane.f32.xlu0 %v997
    %v1029 = vpop.xlane.xlu0 %1028
    %1030 = vadd.xlane.f32.xlu0 %v999
    %v1031 = vpop.xlane.xlu0 %1030
    %1032 = vadd.xlane.f32.xlu0 %v1001
    %v1033 = vpop.xlane.xlu0 %1032
    %1034 = vadd.xlane.f32.xlu0 %v1003
    %v1035 = vpop.xlane.xlu0 %1034
    %1036 = vadd.xlane.f32.xlu0 %v1005
    %v1037 = vpop.xlane.xlu0 %1036
    %1038 = vadd.xlane.f32.xlu0 %v1007
    %v1039 = vpop.xlane.xlu0 %1038
    %1040 = vadd.xlane.f32.xlu0 %v1009
    %v1041 = vpop.xlane.xlu0 %1040
    %1042 = vadd.xlane.f32.xlu0 %v1011
    %v1043 = vpop.xlane.xlu0 %1042
    %1044 = vadd.xlane.f32.xlu0 %v1013
    %v1045 = vpop.xlane.xlu0 %1044
    %1046 = vadd.xlane.f32.xlu0 %v1015
    %v1047 = vpop.xlane.xlu0 %1046
    %v1048 = vrcp.pop %v1017
    %v1049 = vrcp.pop %v1019
    %v1050 = vrcp.pop %v1021
    %v1051 = vrcp.pop %v1023
    %v1052 = vrcp.pop %v1025
    %v1053 = vrcp.pop %v1027
    %v1054 = vrcp.pop %v1029
    %v1055 = vrcp.pop %v1031
    %v1056 = vrcp.pop %v1033
    %v1057 = vrcp.pop %v1035
    %v1058 = vrcp.pop %v1037
    %v1059 = vrcp.pop %v1039
    %v1060 = vrcp.pop %v1041
    %v1061 = vrcp.pop %v1043
    %v1062 = vrcp.pop %v1045
    %v1063 = vrcp.pop %v1047
    %v1064 = vmul.f32 %v985, %v1048
    %v1065 = vmul.f32 %v987, %v1049
    %v1066 = vmul.f32 %v989, %v1050
    %v1067 = vmul.f32 %v991, %v1051
    %v1068 = vmul.f32 %v993, %v1052
    %v1069 = vmul.f32 %v995, %v1053
    %v1070 = vmul.f32 %v997, %v1054
    %v1071 = vmul.f32 %v999, %v1055
    %v1072 = vmul.f32 %v1001, %v1056
    %v1073 = vmul.f32 %v1003, %v1057
    %v1074 = vmul.f32 %v1005, %v1058
    %v1075 = vmul.f32 %v1007, %v1059
    %v1076 = vmul.f32 %v1009, %v1060
    %v1077 = vmul.f32 %v1011, %v1061
    %v1078 = vmul.f32 %v1013, %v1062
    %v1079 = vmul.f32 %v1015, %v1063
    %v1080 = vpack.c.bf16 %v1065, %v1064
    %v1081 = vpack.c.bf16 %v1067, %v1066
    %v1082 = vpack.c.bf16 %v1069, %v1068
    %v1083 = vpack.c.bf16 %v1071, %v1070
    %v1084 = vpack.c.bf16 %v1073, %v1072
    %v1085 = vpack.c.bf16 %v1075, %v1074
    %v1086 = vpack.c.bf16 %v1077, %v1076
    %v1087 = vpack.c.bf16 %v1079, %v1078
    %1088 = vrot.lane.b32.xlu0 %v743, 64
    %v1089 = vpop.permute.xlu0 %1088
    %1090 = vrot.lane.b32.xlu0 %v744, 64
    %v1091 = vpop.permute.xlu0 %1090
    %1092 = vrot.lane.b32.xlu0 %v745, 64
    %v1093 = vpop.permute.xlu0 %1092
    %1094 = vrot.lane.b32.xlu0 %v746, 64
    %v1095 = vpop.permute.xlu0 %1094
    %1096 = vrot.lane.b32.xlu0 %v747, 64
    %v1097 = vpop.permute.xlu0 %1096
    %1098 = vrot.lane.b32.xlu0 %v748, 64
    %v1099 = vpop.permute.xlu0 %1098
    %1100 = vrot.lane.b32.xlu0 %v749, 64
    %v1101 = vpop.permute.xlu0 %1100
    %1102 = vrot.lane.b32.xlu0 %v750, 64
    %v1103 = vpop.permute.xlu0 %1102
    %1112 = vmatprep.subr.bf16.mxu0 0
    %1113 = vmatpush1.bf16.msra.mxu0 %v1103
    %1114 = vmatprep.subr.bf16.mxu0 0
    %1115 = vmatpush1.bf16.msra.mxu0 %v1101
    %1116 = vmatprep.subr.bf16.mxu0 0
    %1117 = vmatpush1.bf16.msra.mxu0 %v1099
    %1118 = vmatprep.subr.bf16.mxu0 0
    %1119 = vmatpush1.bf16.msra.mxu0 %v1097
    %1120 = vmatprep.subr.bf16.mxu0 0
    %1121 = vmatpush1.bf16.msra.mxu0 %v1095
    %1122 = vmatprep.subr.bf16.mxu0 0
    %1123 = vmatpush1.bf16.msra.mxu0 %v1093
    %1124 = vmatprep.subr.bf16.mxu0 0
    %1125 = vmatpush1.bf16.msra.mxu0 %v1091
    %1126 = vmatprep.subr.bf16.mxu0 0
    %1127 = vmatpush1.bf16.msra.mxu0 %v1089
    %1128 = vmatprep.subr.bf16.mxu0 0
    %1129 = vmatpush2.bf16.msra.mxu0 0
    %1130 = vmatprep.subr.bf16.mxu0 0
    %1131 = vmatpush2.bf16.msra.mxu0 0
    %1132 = vmatprep.subr.bf16.mxu0 0
    %1133 = vmatpush2.bf16.msra.mxu0 0
    %1134 = vmatprep.subr.bf16.mxu0 0
    %1135 = vmatpush2.bf16.msra.mxu0 0
    %1136 = vmatprep.subr.bf16.mxu0 0
    %1137 = vmatpush2.bf16.msra.mxu0 0
    %1138 = vmatprep.subr.bf16.mxu0 0
    %1139 = vmatpush2.bf16.msra.mxu0 0
    %1140 = vmatprep.subr.bf16.mxu0 0
    %1141 = vmatpush2.bf16.msra.mxu0 0
    %1142 = vmatprep.subr.bf16.mxu0 0
    %1143 = vmatpush2.bf16.msra.mxu0 0
    %1144 = vmatprep.mubr.bf16.mxu0 0
    %1145 = vmatmul.mubr.bf16.gmra.mxu0 %v1080
    %v1146 = vpop.f32.mrf.mxu0
    %v1147 = vadd.f32 0.0, %v1146
    %v1148 = vpop.f32.mrf.mxu0
    %v1149 = vpop.f32.mrf.mxu0
    %v1150 = vadd.f32 0.0, %v1149
    %v1151 = vpop.f32.mrf.mxu0
    %1152 = vmatprep.mubr.bf16.mxu0 0
    %1153 = vmatmul.mubr.bf16.gmra.mxu0 %v1081
    %v1154 = vpop.f32.mrf.mxu0
    %v1155 = vadd.f32 0.0, %v1154
    %v1156 = vpop.f32.mrf.mxu0
    %v1157 = vpop.f32.mrf.mxu0
    %v1158 = vadd.f32 0.0, %v1157
    %v1159 = vpop.f32.mrf.mxu0
    %1160 = vmatprep.mubr.bf16.mxu0 0
    %1161 = vmatmul.mubr.bf16.gmra.mxu0 %v1082
    %v1162 = vpop.f32.mrf.mxu0
    %v1163 = vadd.f32 0.0, %v1162
    %v1164 = vpop.f32.mrf.mxu0
    %v1165 = vpop.f32.mrf.mxu0
    %v1166 = vadd.f32 0.0, %v1165
    %v1167 = vpop.f32.mrf.mxu0
    %1168 = vmatprep.mubr.bf16.mxu0 0
    %1169 = vmatmul.mubr.bf16.gmra.mxu0 %v1083
    %v1170 = vpop.f32.mrf.mxu0
    %v1171 = vadd.f32 0.0, %v1170
    %v1172 = vpop.f32.mrf.mxu0
    %v1173 = vpop.f32.mrf.mxu0
    %v1174 = vadd.f32 0.0, %v1173
    %v1175 = vpop.f32.mrf.mxu0
    %1176 = vmatprep.mubr.bf16.mxu0 0
    %1177 = vmatmul.mubr.bf16.gmra.mxu0 %v1084
    %v1178 = vpop.f32.mrf.mxu0
    %v1179 = vadd.f32 0.0, %v1178
    %v1180 = vpop.f32.mrf.mxu0
    %v1181 = vpop.f32.mrf.mxu0
    %v1182 = vadd.f32 0.0, %v1181
    %v1183 = vpop.f32.mrf.mxu0
    %1184 = vmatprep.mubr.bf16.mxu0 0
    %1185 = vmatmul.mubr.bf16.gmra.mxu0 %v1085
    %v1186 = vpop.f32.mrf.mxu0
    %v1187 = vadd.f32 0.0, %v1186
    %v1188 = vpop.f32.mrf.mxu0
    %v1189 = vpop.f32.mrf.mxu0
    %v1190 = vadd.f32 0.0, %v1189
    %v1191 = vpop.f32.mrf.mxu0
    %1192 = vmatprep.mubr.bf16.mxu0 0
    %1193 = vmatmul.mubr.bf16.gmra.mxu0 %v1086
    %v1194 = vpop.f32.mrf.mxu0
    %v1195 = vadd.f32 0.0, %v1194
    %v1196 = vpop.f32.mrf.mxu0
    %v1197 = vpop.f32.mrf.mxu0
    %v1198 = vadd.f32 0.0, %v1197
    %v1199 = vpop.f32.mrf.mxu0
    %1200 = vmatprep.mubr.bf16.mxu0 0
    %1201 = vmatmul.mubr.bf16.gmra.mxu0 %v1087
    %v1202 = vpop.f32.mrf.mxu0
    %v1203 = vadd.f32 0.0, %v1202
    %v1204 = vpop.f32.mrf.mxu0
    %v1205 = vpop.f32.mrf.mxu0
    %v1206 = vadd.f32 0.0, %v1205
    %v1207 = vpop.f32.mrf.mxu0
    %1208 = vdwg.mxu0
    %s1209 = scalar_lea.vmem %s1, 1
    %v1210 = vld [vmem:[%s1209] sm:$0x1]
    %v1212 = vlaneseq
    %v1213 = vshrl.u32 %v1212, 7
    %v1214 = vsub.s32 0, %v1213
    %v1215 = vrot.slane %v1210, %v1214
    %1225 = vrot.lane.b32.xlu0 %v751, 96
    %v1226 = vpop.permute.xlu0 %1225
    %1227 = vrot.lane.b32.xlu0 %v752, 96
    %v1228 = vpop.permute.xlu0 %1227
    %1229 = vrot.lane.b32.xlu0 %v753, 96
    %v1230 = vpop.permute.xlu0 %1229
    %1231 = vrot.lane.b32.xlu0 %v754, 96
    %v1232 = vpop.permute.xlu0 %1231
    %1233 = vrot.lane.b32.xlu0 %v755, 96
    %v1234 = vpop.permute.xlu0 %1233
    %1235 = vrot.lane.b32.xlu0 %v756, 96
    %v1236 = vpop.permute.xlu0 %1235
    %1237 = vrot.lane.b32.xlu0 %v757, 96
    %v1238 = vpop.permute.xlu0 %1237
    %1239 = vrot.lane.b32.xlu0 %v758, 96
    %v1240 = vpop.permute.xlu0 %1239
    %v1242 = vsel %vm790, %v751, 0
    %v1245 = vsel %vm790, %v752, 0
    %v1248 = vsel %vm790, %v753, 0
    %v1251 = vsel %vm790, %v754, 0
    %v1254 = vsel %vm790, %v755, 0
    %v1257 = vsel %vm790, %v756, 0
    %v1260 = vsel %vm790, %v757, 0
    %v1263 = vsel %vm790, %v758, 0
    %v1266 = vsel %vm790, %v1226, 0
    %v1269 = vsel %vm790, %v1228, 0
    %v1272 = vsel %vm790, %v1230, 0
    %v1275 = vsel %vm790, %v1232, 0
    %v1278 = vsel %vm790, %v1234, 0
    %v1281 = vsel %vm790, %v1236, 0
    %v1284 = vsel %vm790, %v1238, 0
    %v1287 = vsel %vm790, %v1240, 0
    %1289 = vmatprep.subr.bf16.mxu0 0
    %1290 = vmatpush1.bf16.xpose.msra.mxu0 %v1287
    %1291 = vmatprep.subr.bf16.mxu0 0
    %1292 = vmatpush1.bf16.xpose.msra.mxu0 %v1284
    %1293 = vmatprep.subr.bf16.mxu0 0
    %1294 = vmatpush1.bf16.xpose.msra.mxu0 %v1281
    %1295 = vmatprep.subr.bf16.mxu0 0
    %1296 = vmatpush1.bf16.xpose.msra.mxu0 %v1278
    %1297 = vmatprep.subr.bf16.mxu0 0
    %1298 = vmatpush1.bf16.xpose.msra.mxu0 %v1275
    %1299 = vmatprep.subr.bf16.mxu0 0
    %1300 = vmatpush1.bf16.xpose.msra.mxu0 %v1272
    %1301 = vmatprep.subr.bf16.mxu0 0
    %1302 = vmatpush1.bf16.xpose.msra.mxu0 %v1269
    %1303 = vmatprep.subr.bf16.mxu0 0
    %1304 = vmatpush1.bf16.xpose.msra.mxu0 %v1266
    %1305 = vmatprep.subr.bf16.mxu0 0
    %1306 = vmatpush2.bf16.xpose.msra.mxu0 0
    %1307 = vmatprep.subr.bf16.mxu0 0
    %1308 = vmatpush2.bf16.xpose.msra.mxu0 0
    %1309 = vmatprep.subr.bf16.mxu0 0
    %1310 = vmatpush2.bf16.xpose.msra.mxu0 0
    %1311 = vmatprep.subr.bf16.mxu0 0
    %1312 = vmatpush2.bf16.xpose.msra.mxu0 0
    %1313 = vmatprep.subr.bf16.mxu0 0
    %1314 = vmatpush2.bf16.xpose.msra.mxu0 0
    %1315 = vmatprep.subr.bf16.mxu0 0
    %1316 = vmatpush2.bf16.xpose.msra.mxu0 0
    %1317 = vmatprep.subr.bf16.mxu0 0
    %1318 = vmatpush2.bf16.xpose.msra.mxu0 0
    %1319 = vmatprep.subr.bf16.mxu0 0
    %1320 = vmatpush2.bf16.xpose.msra.mxu0 0
    %1321 = vmatprep.mubr.bf16.mxu0 0
    %1322 = vmatmul.mubr.bf16.gmra.mxu0 %v1242
    %v1323 = vpop.f32.mrf.mxu0
    %v1324 = vadd.f32 %v1215, %v1323
    %v1325 = vpop.f32.mrf.mxu0
    %v1326 = vpop.f32.mrf.mxu0
    %v1327 = vadd.f32 %v1215, %v1326
    %v1328 = vpop.f32.mrf.mxu0
    %1329 = vmatprep.mubr.bf16.mxu0 0
    %1330 = vmatmul.mubr.bf16.gmra.mxu0 %v1245
    %v1331 = vpop.f32.mrf.mxu0
    %v1332 = vadd.f32 %v1215, %v1331
    %v1333 = vpop.f32.mrf.mxu0
    %v1334 = vpop.f32.mrf.mxu0
    %v1335 = vadd.f32 %v1215, %v1334
    %v1336 = vpop.f32.mrf.mxu0
    %1337 = vmatprep.mubr.bf16.mxu0 0
    %1338 = vmatmul.mubr.bf16.gmra.mxu0 %v1248
    %v1339 = vpop.f32.mrf.mxu0
    %v1340 = vadd.f32 %v1215, %v1339
    %v1341 = vpop.f32.mrf.mxu0
    %v1342 = vpop.f32.mrf.mxu0
    %v1343 = vadd.f32 %v1215, %v1342
    %v1344 = vpop.f32.mrf.mxu0
    %1345 = vmatprep.mubr.bf16.mxu0 0
    %1346 = vmatmul.mubr.bf16.gmra.mxu0 %v1251
    %v1347 = vpop.f32.mrf.mxu0
    %v1348 = vadd.f32 %v1215, %v1347
    %v1349 = vpop.f32.mrf.mxu0
    %v1350 = vpop.f32.mrf.mxu0
    %v1351 = vadd.f32 %v1215, %v1350
    %v1352 = vpop.f32.mrf.mxu0
    %1353 = vmatprep.mubr.bf16.mxu0 0
    %1354 = vmatmul.mubr.bf16.gmra.mxu0 %v1254
    %v1355 = vpop.f32.mrf.mxu0
    %v1356 = vadd.f32 %v1215, %v1355
    %v1357 = vpop.f32.mrf.mxu0
    %v1358 = vpop.f32.mrf.mxu0
    %v1359 = vadd.f32 %v1215, %v1358
    %v1360 = vpop.f32.mrf.mxu0
    %1361 = vmatprep.mubr.bf16.mxu0 0
    %1362 = vmatmul.mubr.bf16.gmra.mxu0 %v1257
    %v1363 = vpop.f32.mrf.mxu0
    %v1364 = vadd.f32 %v1215, %v1363
    %v1365 = vpop.f32.mrf.mxu0
    %v1366 = vpop.f32.mrf.mxu0
    %v1367 = vadd.f32 %v1215, %v1366
    %v1368 = vpop.f32.mrf.mxu0
    %1369 = vmatprep.mubr.bf16.mxu0 0
    %1370 = vmatmul.mubr.bf16.gmra.mxu0 %v1260
    %v1371 = vpop.f32.mrf.mxu0
    %v1372 = vadd.f32 %v1215, %v1371
    %v1373 = vpop.f32.mrf.mxu0
    %v1374 = vpop.f32.mrf.mxu0
    %v1375 = vadd.f32 %v1215, %v1374
    %v1376 = vpop.f32.mrf.mxu0
    %1377 = vmatprep.mubr.bf16.mxu0 0
    %1378 = vmatmul.mubr.bf16.gmra.mxu0 %v1263
    %v1379 = vpop.f32.mrf.mxu0
    %v1380 = vadd.f32 %v1215, %v1379
    %v1381 = vpop.f32.mrf.mxu0
    %v1382 = vpop.f32.mrf.mxu0
    %v1383 = vadd.f32 %v1215, %v1382
    %v1384 = vpop.f32.mrf.mxu0
    %1385 = vdwg.mxu0
    %1386 = vmax.xlane.f32.xlu0 %v1324
    %v1387 = vpop.xlane.xlu0 %1386
    %1388 = vmax.xlane.f32.xlu0 %v1327
    %v1389 = vpop.xlane.xlu0 %1388
    %1390 = vmax.xlane.f32.xlu0 %v1332
    %v1391 = vpop.xlane.xlu0 %1390
    %1392 = vmax.xlane.f32.xlu0 %v1335
    %v1393 = vpop.xlane.xlu0 %1392
    %1394 = vmax.xlane.f32.xlu0 %v1340
    %v1395 = vpop.xlane.xlu0 %1394
    %1396 = vmax.xlane.f32.xlu0 %v1343
    %v1397 = vpop.xlane.xlu0 %1396
    %1398 = vmax.xlane.f32.xlu0 %v1348
    %v1399 = vpop.xlane.xlu0 %1398
    %1400 = vmax.xlane.f32.xlu0 %v1351
    %v1401 = vpop.xlane.xlu0 %1400
    %1402 = vmax.xlane.f32.xlu0 %v1356
    %v1403 = vpop.xlane.xlu0 %1402
    %1404 = vmax.xlane.f32.xlu0 %v1359
    %v1405 = vpop.xlane.xlu0 %1404
    %1406 = vmax.xlane.f32.xlu0 %v1364
    %v1407 = vpop.xlane.xlu0 %1406
    %1408 = vmax.xlane.f32.xlu0 %v1367
    %v1409 = vpop.xlane.xlu0 %1408
    %1410 = vmax.xlane.f32.xlu0 %v1372
    %v1411 = vpop.xlane.xlu0 %1410
    %1412 = vmax.xlane.f32.xlu0 %v1375
    %v1413 = vpop.xlane.xlu0 %1412
    %1414 = vmax.xlane.f32.xlu0 %v1380
    %v1415 = vpop.xlane.xlu0 %1414
    %1416 = vmax.xlane.f32.xlu0 %v1383
    %v1417 = vpop.xlane.xlu0 %1416
    %v1418 = vsub.f32 %v1324, %v1387
    %v1419 = vsub.f32 %v1327, %v1389
    %v1420 = vsub.f32 %v1332, %v1391
    %v1421 = vsub.f32 %v1335, %v1393
    %v1422 = vsub.f32 %v1340, %v1395
    %v1423 = vsub.f32 %v1343, %v1397
    %v1424 = vsub.f32 %v1348, %v1399
    %v1425 = vsub.f32 %v1351, %v1401
    %v1426 = vsub.f32 %v1356, %v1403
    %v1427 = vsub.f32 %v1359, %v1405
    %v1428 = vsub.f32 %v1364, %v1407
    %v1429 = vsub.f32 %v1367, %v1409
    %v1430 = vsub.f32 %v1372, %v1411
    %v1431 = vsub.f32 %v1375, %v1413
    %v1432 = vsub.f32 %v1380, %v1415
    %v1433 = vsub.f32 %v1383, %v1417
    %v1434 = vmul.f32 %v1418, 1.442695
    %v1435 = vpow.pop %v1434
    %v1436 = vmul.f32 %v1419, 1.442695
    %v1437 = vpow.pop %v1436
    %v1438 = vmul.f32 %v1420, 1.442695
    %v1439 = vpow.pop %v1438
    %v1440 = vmul.f32 %v1421, 1.442695
    %v1441 = vpow.pop %v1440
    %v1442 = vmul.f32 %v1422, 1.442695
    %v1443 = vpow.pop %v1442
    %v1444 = vmul.f32 %v1423, 1.442695
    %v1445 = vpow.pop %v1444
    %v1446 = vmul.f32 %v1424, 1.442695
    %v1447 = vpow.pop %v1446
    %v1448 = vmul.f32 %v1425, 1.442695
    %v1449 = vpow.pop %v1448
    %v1450 = vmul.f32 %v1426, 1.442695
    %v1451 = vpow.pop %v1450
    %v1452 = vmul.f32 %v1427, 1.442695
    %v1453 = vpow.pop %v1452
    %v1454 = vmul.f32 %v1428, 1.442695
    %v1455 = vpow.pop %v1454
    %v1456 = vmul.f32 %v1429, 1.442695
    %v1457 = vpow.pop %v1456
    %v1458 = vmul.f32 %v1430, 1.442695
    %v1459 = vpow.pop %v1458
    %v1460 = vmul.f32 %v1431, 1.442695
    %v1461 = vpow.pop %v1460
    %v1462 = vmul.f32 %v1432, 1.442695
    %v1463 = vpow.pop %v1462
    %v1464 = vmul.f32 %v1433, 1.442695
    %v1465 = vpow.pop %v1464
    %1466 = vadd.xlane.f32.xlu0 %v1435
    %v1467 = vpop.xlane.xlu0 %1466
    %1468 = vadd.xlane.f32.xlu0 %v1437
    %v1469 = vpop.xlane.xlu0 %1468
    %1470 = vadd.xlane.f32.xlu0 %v1439
    %v1471 = vpop.xlane.xlu0 %1470
    %1472 = vadd.xlane.f32.xlu0 %v1441
    %v1473 = vpop.xlane.xlu0 %1472
    %1474 = vadd.xlane.f32.xlu0 %v1443
    %v1475 = vpop.xlane.xlu0 %1474
    %1476 = vadd.xlane.f32.xlu0 %v1445
    %v1477 = vpop.xlane.xlu0 %1476
    %1478 = vadd.xlane.f32.xlu0 %v1447
    %v1479 = vpop.xlane.xlu0 %1478
    %1480 = vadd.xlane.f32.xlu0 %v1449
    %v1481 = vpop.xlane.xlu0 %1480
    %1482 = vadd.xlane.f32.xlu0 %v1451
    %v1483 = vpop.xlane.xlu0 %1482
    %1484 = vadd.xlane.f32.xlu0 %v1453
    %v1485 = vpop.xlane.xlu0 %1484
    %1486 = vadd.xlane.f32.xlu0 %v1455
    %v1487 = vpop.xlane.xlu0 %1486
    %1488 = vadd.xlane.f32.xlu0 %v1457
    %v1489 = vpop.xlane.xlu0 %1488
    %1490 = vadd.xlane.f32.xlu0 %v1459
    %v1491 = vpop.xlane.xlu0 %1490
    %1492 = vadd.xlane.f32.xlu0 %v1461
    %v1493 = vpop.xlane.xlu0 %1492
    %1494 = vadd.xlane.f32.xlu0 %v1463
    %v1495 = vpop.xlane.xlu0 %1494
    %1496 = vadd.xlane.f32.xlu0 %v1465
    %v1497 = vpop.xlane.xlu0 %1496
    %v1498 = vrcp.pop %v1467
    %v1499 = vrcp.pop %v1469
    %v1500 = vrcp.pop %v1471
    %v1501 = vrcp.pop %v1473
    %v1502 = vrcp.pop %v1475
    %v1503 = vrcp.pop %v1477
    %v1504 = vrcp.pop %v1479
    %v1505 = vrcp.pop %v1481
    %v1506 = vrcp.pop %v1483
    %v1507 = vrcp.pop %v1485
    %v1508 = vrcp.pop %v1487
    %v1509 = vrcp.pop %v1489
    %v1510 = vrcp.pop %v1491
    %v1511 = vrcp.pop %v1493
    %v1512 = vrcp.pop %v1495
    %v1513 = vrcp.pop %v1497
    %v1514 = vmul.f32 %v1435, %v1498
    %v1515 = vmul.f32 %v1437, %v1499
    %v1516 = vmul.f32 %v1439, %v1500
    %v1517 = vmul.f32 %v1441, %v1501
    %v1518 = vmul.f32 %v1443, %v1502
    %v1519 = vmul.f32 %v1445, %v1503
    %v1520 = vmul.f32 %v1447, %v1504
    %v1521 = vmul.f32 %v1449, %v1505
    %v1522 = vmul.f32 %v1451, %v1506
    %v1523 = vmul.f32 %v1453, %v1507
    %v1524 = vmul.f32 %v1455, %v1508
    %v1525 = vmul.f32 %v1457, %v1509
    %v1526 = vmul.f32 %v1459, %v1510
    %v1527 = vmul.f32 %v1461, %v1511
    %v1528 = vmul.f32 %v1463, %v1512
    %v1529 = vmul.f32 %v1465, %v1513
    %v1530 = vpack.c.bf16 %v1515, %v1514
    %v1531 = vpack.c.bf16 %v1517, %v1516
    %v1532 = vpack.c.bf16 %v1519, %v1518
    %v1533 = vpack.c.bf16 %v1521, %v1520
    %v1534 = vpack.c.bf16 %v1523, %v1522
    %v1535 = vpack.c.bf16 %v1525, %v1524
    %v1536 = vpack.c.bf16 %v1527, %v1526
    %v1537 = vpack.c.bf16 %v1529, %v1528
    %1538 = vrot.lane.b32.xlu0 %v751, 64
    %v1539 = vpop.permute.xlu0 %1538
    %1540 = vrot.lane.b32.xlu0 %v752, 64
    %v1541 = vpop.permute.xlu0 %1540
    %1542 = vrot.lane.b32.xlu0 %v753, 64
    %v1543 = vpop.permute.xlu0 %1542
    %1544 = vrot.lane.b32.xlu0 %v754, 64
    %v1545 = vpop.permute.xlu0 %1544
    %1546 = vrot.lane.b32.xlu0 %v755, 64
    %v1547 = vpop.permute.xlu0 %1546
    %1548 = vrot.lane.b32.xlu0 %v756, 64
    %v1549 = vpop.permute.xlu0 %1548
    %1550 = vrot.lane.b32.xlu0 %v757, 64
    %v1551 = vpop.permute.xlu0 %1550
    %1552 = vrot.lane.b32.xlu0 %v758, 64
    %v1553 = vpop.permute.xlu0 %1552
    %1562 = vmatprep.subr.bf16.mxu0 0
    %1563 = vmatpush1.bf16.msra.mxu0 %v1553
    %1564 = vmatprep.subr.bf16.mxu0 0
    %1565 = vmatpush1.bf16.msra.mxu0 %v1551
    %1566 = vmatprep.subr.bf16.mxu0 0
    %1567 = vmatpush1.bf16.msra.mxu0 %v1549
    %1568 = vmatprep.subr.bf16.mxu0 0
    %1569 = vmatpush1.bf16.msra.mxu0 %v1547
    %1570 = vmatprep.subr.bf16.mxu0 0
    %1571 = vmatpush1.bf16.msra.mxu0 %v1545
    %1572 = vmatprep.subr.bf16.mxu0 0
    %1573 = vmatpush1.bf16.msra.mxu0 %v1543
    %1574 = vmatprep.subr.bf16.mxu0 0
    %1575 = vmatpush1.bf16.msra.mxu0 %v1541
    %1576 = vmatprep.subr.bf16.mxu0 0
    %1577 = vmatpush1.bf16.msra.mxu0 %v1539
    %1578 = vmatprep.subr.bf16.mxu0 0
    %1579 = vmatpush2.bf16.msra.mxu0 0
    %1580 = vmatprep.subr.bf16.mxu0 0
    %1581 = vmatpush2.bf16.msra.mxu0 0
    %1582 = vmatprep.subr.bf16.mxu0 0
    %1583 = vmatpush2.bf16.msra.mxu0 0
    %1584 = vmatprep.subr.bf16.mxu0 0
    %1585 = vmatpush2.bf16.msra.mxu0 0
    %1586 = vmatprep.subr.bf16.mxu0 0
    %1587 = vmatpush2.bf16.msra.mxu0 0
    %1588 = vmatprep.subr.bf16.mxu0 0
    %1589 = vmatpush2.bf16.msra.mxu0 0
    %1590 = vmatprep.subr.bf16.mxu0 0
    %1591 = vmatpush2.bf16.msra.mxu0 0
    %1592 = vmatprep.subr.bf16.mxu0 0
    %1593 = vmatpush2.bf16.msra.mxu0 0
    %1594 = vmatprep.mubr.bf16.mxu0 0
    %1595 = vmatmul.mubr.bf16.gmra.mxu0 %v1530
    %v1596 = vpop.f32.mrf.mxu0
    %v1597 = vadd.f32 0.0, %v1596
    %v1598 = vpop.f32.mrf.mxu0
    %v1599 = vpop.f32.mrf.mxu0
    %v1600 = vadd.f32 0.0, %v1599
    %v1601 = vpop.f32.mrf.mxu0
    %1602 = vmatprep.mubr.bf16.mxu0 0
    %1603 = vmatmul.mubr.bf16.gmra.mxu0 %v1531
    %v1604 = vpop.f32.mrf.mxu0
    %v1605 = vadd.f32 0.0, %v1604
    %v1606 = vpop.f32.mrf.mxu0
    %v1607 = vpop.f32.mrf.mxu0
    %v1608 = vadd.f32 0.0, %v1607
    %v1609 = vpop.f32.mrf.mxu0
    %1610 = vmatprep.mubr.bf16.mxu0 0
    %1611 = vmatmul.mubr.bf16.gmra.mxu0 %v1532
    %v1612 = vpop.f32.mrf.mxu0
    %v1613 = vadd.f32 0.0, %v1612
    %v1614 = vpop.f32.mrf.mxu0
    %v1615 = vpop.f32.mrf.mxu0
    %v1616 = vadd.f32 0.0, %v1615
    %v1617 = vpop.f32.mrf.mxu0
    %1618 = vmatprep.mubr.bf16.mxu0 0
    %1619 = vmatmul.mubr.bf16.gmra.mxu0 %v1533
    %v1620 = vpop.f32.mrf.mxu0
    %v1621 = vadd.f32 0.0, %v1620
    %v1622 = vpop.f32.mrf.mxu0
    %v1623 = vpop.f32.mrf.mxu0
    %v1624 = vadd.f32 0.0, %v1623
    %v1625 = vpop.f32.mrf.mxu0
    %1626 = vmatprep.mubr.bf16.mxu0 0
    %1627 = vmatmul.mubr.bf16.gmra.mxu0 %v1534
    %v1628 = vpop.f32.mrf.mxu0
    %v1629 = vadd.f32 0.0, %v1628
    %v1630 = vpop.f32.mrf.mxu0
    %v1631 = vpop.f32.mrf.mxu0
    %v1632 = vadd.f32 0.0, %v1631
    %v1633 = vpop.f32.mrf.mxu0
    %1634 = vmatprep.mubr.bf16.mxu0 0
    %1635 = vmatmul.mubr.bf16.gmra.mxu0 %v1535
    %v1636 = vpop.f32.mrf.mxu0
    %v1637 = vadd.f32 0.0, %v1636
    %v1638 = vpop.f32.mrf.mxu0
    %v1639 = vpop.f32.mrf.mxu0
    %v1640 = vadd.f32 0.0, %v1639
    %v1641 = vpop.f32.mrf.mxu0
    %1642 = vmatprep.mubr.bf16.mxu0 0
    %1643 = vmatmul.mubr.bf16.gmra.mxu0 %v1536
    %v1644 = vpop.f32.mrf.mxu0
    %v1645 = vadd.f32 0.0, %v1644
    %v1646 = vpop.f32.mrf.mxu0
    %v1647 = vpop.f32.mrf.mxu0
    %v1648 = vadd.f32 0.0, %v1647
    %v1649 = vpop.f32.mrf.mxu0
    %1650 = vmatprep.mubr.bf16.mxu0 0
    %1651 = vmatmul.mubr.bf16.gmra.mxu0 %v1537
    %v1652 = vpop.f32.mrf.mxu0
    %v1653 = vadd.f32 0.0, %v1652
    %v1654 = vpop.f32.mrf.mxu0
    %v1655 = vpop.f32.mrf.mxu0
    %v1656 = vadd.f32 0.0, %v1655
    %v1657 = vpop.f32.mrf.mxu0
    %1658 = vdwg.mxu0
    %v1659 = vpack.c.bf16 %v1150, %v1147
    %v1660 = vpack.c.bf16 %v1158, %v1155
    %v1661 = vpack.c.bf16 %v1166, %v1163
    %v1662 = vpack.c.bf16 %v1174, %v1171
    %v1663 = vpack.c.bf16 %v1182, %v1179
    %v1664 = vpack.c.bf16 %v1190, %v1187
    %v1665 = vpack.c.bf16 %v1198, %v1195
    %v1666 = vpack.c.bf16 %v1206, %v1203
    %v1667 = vpack.c.bf16 %v1600, %v1597
    %v1668 = vpack.c.bf16 %v1608, %v1605
    %v1669 = vpack.c.bf16 %v1616, %v1613
    %v1670 = vpack.c.bf16 %v1624, %v1621
    %v1671 = vpack.c.bf16 %v1632, %v1629
    %v1672 = vpack.c.bf16 %v1640, %v1637
    %v1673 = vpack.c.bf16 %v1648, %v1645
    %v1674 = vpack.c.bf16 %v1656, %v1653
    %v1675 = vld [vmem:[%s6] sm:$0xf]
    %1676 = vrot.lane.b32.xlu0 %v743, 120
    %v1677 = vpop.permute.xlu0 %1676
    %1678 = vrot.lane.b32.xlu0 %v744, 120
    %v1679 = vpop.permute.xlu0 %1678
    %1680 = vrot.lane.b32.xlu0 %v745, 120
    %v1681 = vpop.permute.xlu0 %1680
    %1682 = vrot.lane.b32.xlu0 %v746, 120
    %v1683 = vpop.permute.xlu0 %1682
    %1684 = vrot.lane.b32.xlu0 %v747, 120
    %v1685 = vpop.permute.xlu0 %1684
    %1686 = vrot.lane.b32.xlu0 %v748, 120
    %v1687 = vpop.permute.xlu0 %1686
    %1688 = vrot.lane.b32.xlu0 %v749, 120
    %v1689 = vpop.permute.xlu0 %1688
    %1690 = vrot.lane.b32.xlu0 %v750, 120
    %v1691 = vpop.permute.xlu0 %1690
    %1692 = vrot.lane.b32.xlu0 %v743, 88
    %v1693 = vpop.permute.xlu0 %1692
    %1694 = vrot.lane.b32.xlu0 %v744, 88
    %v1695 = vpop.permute.xlu0 %1694
    %1696 = vrot.lane.b32.xlu0 %v745, 88
    %v1697 = vpop.permute.xlu0 %1696
    %1698 = vrot.lane.b32.xlu0 %v746, 88
    %v1699 = vpop.permute.xlu0 %1698
    %1700 = vrot.lane.b32.xlu0 %v747, 88
    %v1701 = vpop.permute.xlu0 %1700
    %1702 = vrot.lane.b32.xlu0 %v748, 88
    %v1703 = vpop.permute.xlu0 %1702
    %1704 = vrot.lane.b32.xlu0 %v749, 88
    %v1705 = vpop.permute.xlu0 %1704
    %1706 = vrot.lane.b32.xlu0 %v750, 88
    %v1707 = vpop.permute.xlu0 %1706
    %v1709 = vsel %vm790, %v1677, 0
    %v1712 = vsel %vm790, %v1679, 0
    %v1715 = vsel %vm790, %v1681, 0
    %v1718 = vsel %vm790, %v1683, 0
    %v1721 = vsel %vm790, %v1685, 0
    %v1724 = vsel %vm790, %v1687, 0
    %v1727 = vsel %vm790, %v1689, 0
    %v1730 = vsel %vm790, %v1691, 0
    %v1733 = vsel %vm790, %v1693, 0
    %v1736 = vsel %vm790, %v1695, 0
    %v1739 = vsel %vm790, %v1697, 0
    %v1742 = vsel %vm790, %v1699, 0
    %v1745 = vsel %vm790, %v1701, 0
    %v1748 = vsel %vm790, %v1703, 0
    %v1751 = vsel %vm790, %v1705, 0
    %v1754 = vsel %vm790, %v1707, 0
    %1756 = vmatprep.subr.bf16.mxu0 0
    %1757 = vmatpush1.bf16.xpose.msra.mxu0 %v1754
    %1758 = vmatprep.subr.bf16.mxu0 0
    %1759 = vmatpush1.bf16.xpose.msra.mxu0 %v1751
    %1760 = vmatprep.subr.bf16.mxu0 0
    %1761 = vmatpush1.bf16.xpose.msra.mxu0 %v1748
    %1762 = vmatprep.subr.bf16.mxu0 0
    %1763 = vmatpush1.bf16.xpose.msra.mxu0 %v1745
    %1764 = vmatprep.subr.bf16.mxu0 0
    %1765 = vmatpush1.bf16.xpose.msra.mxu0 %v1742
    %1766 = vmatprep.subr.bf16.mxu0 0
    %1767 = vmatpush1.bf16.xpose.msra.mxu0 %v1739
    %1768 = vmatprep.subr.bf16.mxu0 0
    %1769 = vmatpush1.bf16.xpose.msra.mxu0 %v1736
    %1770 = vmatprep.subr.bf16.mxu0 0
    %1771 = vmatpush1.bf16.xpose.msra.mxu0 %v1733
    %1772 = vmatprep.subr.bf16.mxu0 0
    %1773 = vmatpush2.bf16.xpose.msra.mxu0 0
    %1774 = vmatprep.subr.bf16.mxu0 0
    %1775 = vmatpush2.bf16.xpose.msra.mxu0 0
    %1776 = vmatprep.subr.bf16.mxu0 0
    %1777 = vmatpush2.bf16.xpose.msra.mxu0 0
    %1778 = vmatprep.subr.bf16.mxu0 0
    %1779 = vmatpush2.bf16.xpose.msra.mxu0 0
    %1780 = vmatprep.subr.bf16.mxu0 0
    %1781 = vmatpush2.bf16.xpose.msra.mxu0 0
    %1782 = vmatprep.subr.bf16.mxu0 0
    %1783 = vmatpush2.bf16.xpose.msra.mxu0 0
    %1784 = vmatprep.subr.bf16.mxu0 0
    %1785 = vmatpush2.bf16.xpose.msra.mxu0 0
    %1786 = vmatprep.subr.bf16.mxu0 0
    %1787 = vmatpush2.bf16.xpose.msra.mxu0 0
    %1788 = vmatprep.mubr.bf16.mxu0 0
    %1789 = vmatmul.mubr.bf16.gmra.mxu0 %v1709
    %v1790 = vpop.f32.mrf.mxu0
    %v1791 = vadd.f32 %v764, %v1790
    %v1792 = vpop.f32.mrf.mxu0
    %v1793 = vpop.f32.mrf.mxu0
    %v1794 = vadd.f32 %v764, %v1793
    %v1795 = vpop.f32.mrf.mxu0
    %1796 = vmatprep.mubr.bf16.mxu0 0
    %1797 = vmatmul.mubr.bf16.gmra.mxu0 %v1712
    %v1798 = vpop.f32.mrf.mxu0
    %v1799 = vadd.f32 %v764, %v1798
    %v1800 = vpop.f32.mrf.mxu0
    %v1801 = vpop.f32.mrf.mxu0
    %v1802 = vadd.f32 %v764, %v1801
    %v1803 = vpop.f32.mrf.mxu0
    %1804 = vmatprep.mubr.bf16.mxu0 0
    %1805 = vmatmul.mubr.bf16.gmra.mxu0 %v1715
    %v1806 = vpop.f32.mrf.mxu0
    %v1807 = vadd.f32 %v764, %v1806
    %v1808 = vpop.f32.mrf.mxu0
    %v1809 = vpop.f32.mrf.mxu0
    %v1810 = vadd.f32 %v764, %v1809
    %v1811 = vpop.f32.mrf.mxu0
    %1812 = vmatprep.mubr.bf16.mxu0 0
    %1813 = vmatmul.mubr.bf16.gmra.mxu0 %v1718
    %v1814 = vpop.f32.mrf.mxu0
    %v1815 = vadd.f32 %v764, %v1814
    %v1816 = vpop.f32.mrf.mxu0
    %v1817 = vpop.f32.mrf.mxu0
    %v1818 = vadd.f32 %v764, %v1817
    %v1819 = vpop.f32.mrf.mxu0
    %1820 = vmatprep.mubr.bf16.mxu0 0
    %1821 = vmatmul.mubr.bf16.gmra.mxu0 %v1721
    %v1822 = vpop.f32.mrf.mxu0
    %v1823 = vadd.f32 %v764, %v1822
    %v1824 = vpop.f32.mrf.mxu0
    %v1825 = vpop.f32.mrf.mxu0
    %v1826 = vadd.f32 %v764, %v1825
    %v1827 = vpop.f32.mrf.mxu0
    %1828 = vmatprep.mubr.bf16.mxu0 0
    %1829 = vmatmul.mubr.bf16.gmra.mxu0 %v1724
    %v1830 = vpop.f32.mrf.mxu0
    %v1831 = vadd.f32 %v764, %v1830
    %v1832 = vpop.f32.mrf.mxu0
    %v1833 = vpop.f32.mrf.mxu0
    %v1834 = vadd.f32 %v764, %v1833
    %v1835 = vpop.f32.mrf.mxu0
    %1836 = vmatprep.mubr.bf16.mxu0 0
    %1837 = vmatmul.mubr.bf16.gmra.mxu0 %v1727
    %v1838 = vpop.f32.mrf.mxu0
    %v1839 = vadd.f32 %v764, %v1838
    %v1840 = vpop.f32.mrf.mxu0
    %v1841 = vpop.f32.mrf.mxu0
    %v1842 = vadd.f32 %v764, %v1841
    %v1843 = vpop.f32.mrf.mxu0
    %1844 = vmatprep.mubr.bf16.mxu0 0
    %1845 = vmatmul.mubr.bf16.gmra.mxu0 %v1730
    %v1846 = vpop.f32.mrf.mxu0
    %v1847 = vadd.f32 %v764, %v1846
    %v1848 = vpop.f32.mrf.mxu0
    %v1849 = vpop.f32.mrf.mxu0
    %v1850 = vadd.f32 %v764, %v1849
    %v1851 = vpop.f32.mrf.mxu0
    %1852 = vdwg.mxu0
    %1853 = vmax.xlane.f32.xlu0 %v1791
    %v1854 = vpop.xlane.xlu0 %1853
    %1855 = vmax.xlane.f32.xlu0 %v1794
    %v1856 = vpop.xlane.xlu0 %1855
    %1857 = vmax.xlane.f32.xlu0 %v1799
    %v1858 = vpop.xlane.xlu0 %1857
    %1859 = vmax.xlane.f32.xlu0 %v1802
    %v1860 = vpop.xlane.xlu0 %1859
    %1861 = vmax.xlane.f32.xlu0 %v1807
    %v1862 = vpop.xlane.xlu0 %1861
    %1863 = vmax.xlane.f32.xlu0 %v1810
    %v1864 = vpop.xlane.xlu0 %1863
    %1865 = vmax.xlane.f32.xlu0 %v1815
    %v1866 = vpop.xlane.xlu0 %1865
    %1867 = vmax.xlane.f32.xlu0 %v1818
    %v1868 = vpop.xlane.xlu0 %1867
    %1869 = vmax.xlane.f32.xlu0 %v1823
    %v1870 = vpop.xlane.xlu0 %1869
    %1871 = vmax.xlane.f32.xlu0 %v1826
    %v1872 = vpop.xlane.xlu0 %1871
    %1873 = vmax.xlane.f32.xlu0 %v1831
    %v1874 = vpop.xlane.xlu0 %1873
    %1875 = vmax.xlane.f32.xlu0 %v1834
    %v1876 = vpop.xlane.xlu0 %1875
    %1877 = vmax.xlane.f32.xlu0 %v1839
    %v1878 = vpop.xlane.xlu0 %1877
    %1879 = vmax.xlane.f32.xlu0 %v1842
    %v1880 = vpop.xlane.xlu0 %1879
    %1881 = vmax.xlane.f32.xlu0 %v1847
    %v1882 = vpop.xlane.xlu0 %1881
    %1883 = vmax.xlane.f32.xlu0 %v1850
    %v1884 = vpop.xlane.xlu0 %1883
    %v1885 = vsub.f32 %v1791, %v1854
    %v1886 = vsub.f32 %v1794, %v1856
    %v1887 = vsub.f32 %v1799, %v1858
    %v1888 = vsub.f32 %v1802, %v1860
    %v1889 = vsub.f32 %v1807, %v1862
    %v1890 = vsub.f32 %v1810, %v1864
    %v1891 = vsub.f32 %v1815, %v1866
    %v1892 = vsub.f32 %v1818, %v1868
    %v1893 = vsub.f32 %v1823, %v1870
    %v1894 = vsub.f32 %v1826, %v1872
    %v1895 = vsub.f32 %v1831, %v1874
    %v1896 = vsub.f32 %v1834, %v1876
    %v1897 = vsub.f32 %v1839, %v1878
    %v1898 = vsub.f32 %v1842, %v1880
    %v1899 = vsub.f32 %v1847, %v1882
    %v1900 = vsub.f32 %v1850, %v1884
    %v1901 = vmul.f32 %v1885, 1.442695
    %v1902 = vpow.pop %v1901
    %v1903 = vmul.f32 %v1886, 1.442695
    %v1904 = vpow.pop %v1903
    %v1905 = vmul.f32 %v1887, 1.442695
    %v1906 = vpow.pop %v1905
    %v1907 = vmul.f32 %v1888, 1.442695
    %v1908 = vpow.pop %v1907
    %v1909 = vmul.f32 %v1889, 1.442695
    %v1910 = vpow.pop %v1909
    %v1911 = vmul.f32 %v1890, 1.442695
    %v1912 = vpow.pop %v1911
    %v1913 = vmul.f32 %v1891, 1.442695
    %v1914 = vpow.pop %v1913
    %v1915 = vmul.f32 %v1892, 1.442695
    %v1916 = vpow.pop %v1915
    %v1917 = vmul.f32 %v1893, 1.442695
    %v1918 = vpow.pop %v1917
    %v1919 = vmul.f32 %v1894, 1.442695
    %v1920 = vpow.pop %v1919
    %v1921 = vmul.f32 %v1895, 1.442695
    %v1922 = vpow.pop %v1921
    %v1923 = vmul.f32 %v1896, 1.442695
    %v1924 = vpow.pop %v1923
    %v1925 = vmul.f32 %v1897, 1.442695
    %v1926 = vpow.pop %v1925
    %v1927 = vmul.f32 %v1898, 1.442695
    %v1928 = vpow.pop %v1927
    %v1929 = vmul.f32 %v1899, 1.442695
    %v1930 = vpow.pop %v1929
    %v1931 = vmul.f32 %v1900, 1.442695
    %v1932 = vpow.pop %v1931
    %1933 = vadd.xlane.f32.xlu0 %v1902
    %v1934 = vpop.xlane.xlu0 %1933
    %1935 = vadd.xlane.f32.xlu0 %v1904
    %v1936 = vpop.xlane.xlu0 %1935
    %1937 = vadd.xlane.f32.xlu0 %v1906
    %v1938 = vpop.xlane.xlu0 %1937
    %1939 = vadd.xlane.f32.xlu0 %v1908
    %v1940 = vpop.xlane.xlu0 %1939
    %1941 = vadd.xlane.f32.xlu0 %v1910
    %v1942 = vpop.xlane.xlu0 %1941
    %1943 = vadd.xlane.f32.xlu0 %v1912
    %v1944 = vpop.xlane.xlu0 %1943
    %1945 = vadd.xlane.f32.xlu0 %v1914
    %v1946 = vpop.xlane.xlu0 %1945
    %1947 = vadd.xlane.f32.xlu0 %v1916
    %v1948 = vpop.xlane.xlu0 %1947
    %1949 = vadd.xlane.f32.xlu0 %v1918
    %v1950 = vpop.xlane.xlu0 %1949
    %1951 = vadd.xlane.f32.xlu0 %v1920
    %v1952 = vpop.xlane.xlu0 %1951
    %1953 = vadd.xlane.f32.xlu0 %v1922
    %v1954 = vpop.xlane.xlu0 %1953
    %1955 = vadd.xlane.f32.xlu0 %v1924
    %v1956 = vpop.xlane.xlu0 %1955
    %1957 = vadd.xlane.f32.xlu0 %v1926
    %v1958 = vpop.xlane.xlu0 %1957
    %1959 = vadd.xlane.f32.xlu0 %v1928
    %v1960 = vpop.xlane.xlu0 %1959
    %1961 = vadd.xlane.f32.xlu0 %v1930
    %v1962 = vpop.xlane.xlu0 %1961
    %1963 = vadd.xlane.f32.xlu0 %v1932
    %v1964 = vpop.xlane.xlu0 %1963
    %v1965 = vrcp.pop %v1934
    %v1966 = vrcp.pop %v1936
    %v1967 = vrcp.pop %v1938
    %v1968 = vrcp.pop %v1940
    %v1969 = vrcp.pop %v1942
    %v1970 = vrcp.pop %v1944
    %v1971 = vrcp.pop %v1946
    %v1972 = vrcp.pop %v1948
    %v1973 = vrcp.pop %v1950
    %v1974 = vrcp.pop %v1952
    %v1975 = vrcp.pop %v1954
    %v1976 = vrcp.pop %v1956
    %v1977 = vrcp.pop %v1958
    %v1978 = vrcp.pop %v1960
    %v1979 = vrcp.pop %v1962
    %v1980 = vrcp.pop %v1964
    %v1981 = vmul.f32 %v1902, %v1965
    %v1982 = vmul.f32 %v1904, %v1966
    %v1983 = vmul.f32 %v1906, %v1967
    %v1984 = vmul.f32 %v1908, %v1968
    %v1985 = vmul.f32 %v1910, %v1969
    %v1986 = vmul.f32 %v1912, %v1970
    %v1987 = vmul.f32 %v1914, %v1971
    %v1988 = vmul.f32 %v1916, %v1972
    %v1989 = vmul.f32 %v1918, %v1973
    %v1990 = vmul.f32 %v1920, %v1974
    %v1991 = vmul.f32 %v1922, %v1975
    %v1992 = vmul.f32 %v1924, %v1976
    %v1993 = vmul.f32 %v1926, %v1977
    %v1994 = vmul.f32 %v1928, %v1978
    %v1995 = vmul.f32 %v1930, %v1979
    %v1996 = vmul.f32 %v1932, %v1980
    %v1997 = vpack.c.bf16 %v1982, %v1981
    %v1998 = vpack.c.bf16 %v1984, %v1983
    %v1999 = vpack.c.bf16 %v1986, %v1985
    %v2000 = vpack.c.bf16 %v1988, %v1987
    %v2001 = vpack.c.bf16 %v1990, %v1989
    %v2002 = vpack.c.bf16 %v1992, %v1991
    %v2003 = vpack.c.bf16 %v1994, %v1993
    %v2004 = vpack.c.bf16 %v1996, %v1995
    %2005 = vrot.lane.b32.xlu0 %v743, 56
    %v2006 = vpop.permute.xlu0 %2005
    %2007 = vrot.lane.b32.xlu0 %v744, 56
    %v2008 = vpop.permute.xlu0 %2007
    %2009 = vrot.lane.b32.xlu0 %v745, 56
    %v2010 = vpop.permute.xlu0 %2009
    %2011 = vrot.lane.b32.xlu0 %v746, 56
    %v2012 = vpop.permute.xlu0 %2011
    %2013 = vrot.lane.b32.xlu0 %v747, 56
    %v2014 = vpop.permute.xlu0 %2013
    %2015 = vrot.lane.b32.xlu0 %v748, 56
    %v2016 = vpop.permute.xlu0 %2015
    %2017 = vrot.lane.b32.xlu0 %v749, 56
    %v2018 = vpop.permute.xlu0 %2017
    %2019 = vrot.lane.b32.xlu0 %v750, 56
    %v2020 = vpop.permute.xlu0 %2019
    %2029 = vmatprep.subr.bf16.mxu0 0
    %2030 = vmatpush1.bf16.msra.mxu0 %v2020
    %2031 = vmatprep.subr.bf16.mxu0 0
    %2032 = vmatpush1.bf16.msra.mxu0 %v2018
    %2033 = vmatprep.subr.bf16.mxu0 0
    %2034 = vmatpush1.bf16.msra.mxu0 %v2016
    %2035 = vmatprep.subr.bf16.mxu0 0
    %2036 = vmatpush1.bf16.msra.mxu0 %v2014
    %2037 = vmatprep.subr.bf16.mxu0 0
    %2038 = vmatpush1.bf16.msra.mxu0 %v2012
    %2039 = vmatprep.subr.bf16.mxu0 0
    %2040 = vmatpush1.bf16.msra.mxu0 %v2010
    %2041 = vmatprep.subr.bf16.mxu0 0
    %2042 = vmatpush1.bf16.msra.mxu0 %v2008
    %2043 = vmatprep.subr.bf16.mxu0 0
    %2044 = vmatpush1.bf16.msra.mxu0 %v2006
    %2045 = vmatprep.subr.bf16.mxu0 0
    %2046 = vmatpush2.bf16.msra.mxu0 0
    %2047 = vmatprep.subr.bf16.mxu0 0
    %2048 = vmatpush2.bf16.msra.mxu0 0
    %2049 = vmatprep.subr.bf16.mxu0 0
    %2050 = vmatpush2.bf16.msra.mxu0 0
    %2051 = vmatprep.subr.bf16.mxu0 0
    %2052 = vmatpush2.bf16.msra.mxu0 0
    %2053 = vmatprep.subr.bf16.mxu0 0
    %2054 = vmatpush2.bf16.msra.mxu0 0
    %2055 = vmatprep.subr.bf16.mxu0 0
    %2056 = vmatpush2.bf16.msra.mxu0 0
    %2057 = vmatprep.subr.bf16.mxu0 0
    %2058 = vmatpush2.bf16.msra.mxu0 0
    %2059 = vmatprep.subr.bf16.mxu0 0
    %2060 = vmatpush2.bf16.msra.mxu0 0
    %2061 = vmatprep.mubr.bf16.mxu0 0
    %2062 = vmatmul.mubr.bf16.gmra.mxu0 %v1997
    %v2063 = vpop.f32.mrf.mxu0
    %v2064 = vadd.f32 0.0, %v2063
    %v2065 = vpop.f32.mrf.mxu0
    %v2066 = vpop.f32.mrf.mxu0
    %v2067 = vadd.f32 0.0, %v2066
    %v2068 = vpop.f32.mrf.mxu0
    %2069 = vmatprep.mubr.bf16.mxu0 0
    %2070 = vmatmul.mubr.bf16.gmra.mxu0 %v1998
    %v2071 = vpop.f32.mrf.mxu0
    %v2072 = vadd.f32 0.0, %v2071
    %v2073 = vpop.f32.mrf.mxu0
    %v2074 = vpop.f32.mrf.mxu0
    %v2075 = vadd.f32 0.0, %v2074
    %v2076 = vpop.f32.mrf.mxu0
    %2077 = vmatprep.mubr.bf16.mxu0 0
    %2078 = vmatmul.mubr.bf16.gmra.mxu0 %v1999
    %v2079 = vpop.f32.mrf.mxu0
    %v2080 = vadd.f32 0.0, %v2079
    %v2081 = vpop.f32.mrf.mxu0
    %v2082 = vpop.f32.mrf.mxu0
    %v2083 = vadd.f32 0.0, %v2082
    %v2084 = vpop.f32.mrf.mxu0
    %2085 = vmatprep.mubr.bf16.mxu0 0
    %2086 = vmatmul.mubr.bf16.gmra.mxu0 %v2000
    %v2087 = vpop.f32.mrf.mxu0
    %v2088 = vadd.f32 0.0, %v2087
    %v2089 = vpop.f32.mrf.mxu0
    %v2090 = vpop.f32.mrf.mxu0
    %v2091 = vadd.f32 0.0, %v2090
    %v2092 = vpop.f32.mrf.mxu0
    %2093 = vmatprep.mubr.bf16.mxu0 0
    %2094 = vmatmul.mubr.bf16.gmra.mxu0 %v2001
    %v2095 = vpop.f32.mrf.mxu0
    %v2096 = vadd.f32 0.0, %v2095
    %v2097 = vpop.f32.mrf.mxu0
    %v2098 = vpop.f32.mrf.mxu0
    %v2099 = vadd.f32 0.0, %v2098
    %v2100 = vpop.f32.mrf.mxu0
    %2101 = vmatprep.mubr.bf16.mxu0 0
    %2102 = vmatmul.mubr.bf16.gmra.mxu0 %v2002
    %v2103 = vpop.f32.mrf.mxu0
    %v2104 = vadd.f32 0.0, %v2103
    %v2105 = vpop.f32.mrf.mxu0
    %v2106 = vpop.f32.mrf.mxu0
    %v2107 = vadd.f32 0.0, %v2106
    %v2108 = vpop.f32.mrf.mxu0
    %2109 = vmatprep.mubr.bf16.mxu0 0
    %2110 = vmatmul.mubr.bf16.gmra.mxu0 %v2003
    %v2111 = vpop.f32.mrf.mxu0
    %v2112 = vadd.f32 0.0, %v2111
    %v2113 = vpop.f32.mrf.mxu0
    %v2114 = vpop.f32.mrf.mxu0
    %v2115 = vadd.f32 0.0, %v2114
    %v2116 = vpop.f32.mrf.mxu0
    %2117 = vmatprep.mubr.bf16.mxu0 0
    %2118 = vmatmul.mubr.bf16.gmra.mxu0 %v2004
    %v2119 = vpop.f32.mrf.mxu0
    %v2120 = vadd.f32 0.0, %v2119
    %v2121 = vpop.f32.mrf.mxu0
    %v2122 = vpop.f32.mrf.mxu0
    %v2123 = vadd.f32 0.0, %v2122
    %v2124 = vpop.f32.mrf.mxu0
    %2125 = vdwg.mxu0
    %2126 = vrot.lane.b32.xlu0 %v751, 120
    %v2127 = vpop.permute.xlu0 %2126
    %2128 = vrot.lane.b32.xlu0 %v752, 120
    %v2129 = vpop.permute.xlu0 %2128
    %2130 = vrot.lane.b32.xlu0 %v753, 120
    %v2131 = vpop.permute.xlu0 %2130
    %2132 = vrot.lane.b32.xlu0 %v754, 120
    %v2133 = vpop.permute.xlu0 %2132
    %2134 = vrot.lane.b32.xlu0 %v755, 120
    %v2135 = vpop.permute.xlu0 %2134
    %2136 = vrot.lane.b32.xlu0 %v756, 120
    %v2137 = vpop.permute.xlu0 %2136
    %2138 = vrot.lane.b32.xlu0 %v757, 120
    %v2139 = vpop.permute.xlu0 %2138
    %2140 = vrot.lane.b32.xlu0 %v758, 120
    %v2141 = vpop.permute.xlu0 %2140
    %2142 = vrot.lane.b32.xlu0 %v751, 88
    %v2143 = vpop.permute.xlu0 %2142
    %2144 = vrot.lane.b32.xlu0 %v752, 88
    %v2145 = vpop.permute.xlu0 %2144
    %2146 = vrot.lane.b32.xlu0 %v753, 88
    %v2147 = vpop.permute.xlu0 %2146
    %2148 = vrot.lane.b32.xlu0 %v754, 88
    %v2149 = vpop.permute.xlu0 %2148
    %2150 = vrot.lane.b32.xlu0 %v755, 88
    %v2151 = vpop.permute.xlu0 %2150
    %2152 = vrot.lane.b32.xlu0 %v756, 88
    %v2153 = vpop.permute.xlu0 %2152
    %2154 = vrot.lane.b32.xlu0 %v757, 88
    %v2155 = vpop.permute.xlu0 %2154
    %2156 = vrot.lane.b32.xlu0 %v758, 88
    %v2157 = vpop.permute.xlu0 %2156
    %v2159 = vsel %vm790, %v2127, 0
    %v2162 = vsel %vm790, %v2129, 0
    %v2165 = vsel %vm790, %v2131, 0
    %v2168 = vsel %vm790, %v2133, 0
    %v2171 = vsel %vm790, %v2135, 0
    %v2174 = vsel %vm790, %v2137, 0
    %v2177 = vsel %vm790, %v2139, 0
    %v2180 = vsel %vm790, %v2141, 0
    %v2183 = vsel %vm790, %v2143, 0
    %v2186 = vsel %vm790, %v2145, 0
    %v2189 = vsel %vm790, %v2147, 0
    %v2192 = vsel %vm790, %v2149, 0
    %v2195 = vsel %vm790, %v2151, 0
    %v2198 = vsel %vm790, %v2153, 0
    %v2201 = vsel %vm790, %v2155, 0
    %v2204 = vsel %vm790, %v2157, 0
    %2206 = vmatprep.subr.bf16.mxu0 0
    %2207 = vmatpush1.bf16.xpose.msra.mxu0 %v2204
    %2208 = vmatprep.subr.bf16.mxu0 0
    %2209 = vmatpush1.bf16.xpose.msra.mxu0 %v2201
    %2210 = vmatprep.subr.bf16.mxu0 0
    %2211 = vmatpush1.bf16.xpose.msra.mxu0 %v2198
    %2212 = vmatprep.subr.bf16.mxu0 0
    %2213 = vmatpush1.bf16.xpose.msra.mxu0 %v2195
    %2214 = vmatprep.subr.bf16.mxu0 0
    %2215 = vmatpush1.bf16.xpose.msra.mxu0 %v2192
    %2216 = vmatprep.subr.bf16.mxu0 0
    %2217 = vmatpush1.bf16.xpose.msra.mxu0 %v2189
    %2218 = vmatprep.subr.bf16.mxu0 0
    %2219 = vmatpush1.bf16.xpose.msra.mxu0 %v2186
    %2220 = vmatprep.subr.bf16.mxu0 0
    %2221 = vmatpush1.bf16.xpose.msra.mxu0 %v2183
    %2222 = vmatprep.subr.bf16.mxu0 0
    %2223 = vmatpush2.bf16.xpose.msra.mxu0 0
    %2224 = vmatprep.subr.bf16.mxu0 0
    %2225 = vmatpush2.bf16.xpose.msra.mxu0 0
    %2226 = vmatprep.subr.bf16.mxu0 0
    %2227 = vmatpush2.bf16.xpose.msra.mxu0 0
    %2228 = vmatprep.subr.bf16.mxu0 0
    %2229 = vmatpush2.bf16.xpose.msra.mxu0 0
    %2230 = vmatprep.subr.bf16.mxu0 0
    %2231 = vmatpush2.bf16.xpose.msra.mxu0 0
    %2232 = vmatprep.subr.bf16.mxu0 0
    %2233 = vmatpush2.bf16.xpose.msra.mxu0 0
    %2234 = vmatprep.subr.bf16.mxu0 0
    %2235 = vmatpush2.bf16.xpose.msra.mxu0 0
    %2236 = vmatprep.subr.bf16.mxu0 0
    %2237 = vmatpush2.bf16.xpose.msra.mxu0 0
    %2238 = vmatprep.mubr.bf16.mxu0 0
    %2239 = vmatmul.mubr.bf16.gmra.mxu0 %v2159
    %v2240 = vpop.f32.mrf.mxu0
    %v2241 = vadd.f32 %v1215, %v2240
    %v2242 = vpop.f32.mrf.mxu0
    %v2243 = vpop.f32.mrf.mxu0
    %v2244 = vadd.f32 %v1215, %v2243
    %v2245 = vpop.f32.mrf.mxu0
    %2246 = vmatprep.mubr.bf16.mxu0 0
    %2247 = vmatmul.mubr.bf16.gmra.mxu0 %v2162
    %v2248 = vpop.f32.mrf.mxu0
    %v2249 = vadd.f32 %v1215, %v2248
    %v2250 = vpop.f32.mrf.mxu0
    %v2251 = vpop.f32.mrf.mxu0
    %v2252 = vadd.f32 %v1215, %v2251
    %v2253 = vpop.f32.mrf.mxu0
    %2254 = vmatprep.mubr.bf16.mxu0 0
    %2255 = vmatmul.mubr.bf16.gmra.mxu0 %v2165
    %v2256 = vpop.f32.mrf.mxu0
    %v2257 = vadd.f32 %v1215, %v2256
    %v2258 = vpop.f32.mrf.mxu0
    %v2259 = vpop.f32.mrf.mxu0
    %v2260 = vadd.f32 %v1215, %v2259
    %v2261 = vpop.f32.mrf.mxu0
    %2262 = vmatprep.mubr.bf16.mxu0 0
    %2263 = vmatmul.mubr.bf16.gmra.mxu0 %v2168
    %v2264 = vpop.f32.mrf.mxu0
    %v2265 = vadd.f32 %v1215, %v2264
    %v2266 = vpop.f32.mrf.mxu0
    %v2267 = vpop.f32.mrf.mxu0
    %v2268 = vadd.f32 %v1215, %v2267
    %v2269 = vpop.f32.mrf.mxu0
    %2270 = vmatprep.mubr.bf16.mxu0 0
    %2271 = vmatmul.mubr.bf16.gmra.mxu0 %v2171
    %v2272 = vpop.f32.mrf.mxu0
    %v2273 = vadd.f32 %v1215, %v2272
    %v2274 = vpop.f32.mrf.mxu0
    %v2275 = vpop.f32.mrf.mxu0
    %v2276 = vadd.f32 %v1215, %v2275
    %v2277 = vpop.f32.mrf.mxu0
    %2278 = vmatprep.mubr.bf16.mxu0 0
    %2279 = vmatmul.mubr.bf16.gmra.mxu0 %v2174
    %v2280 = vpop.f32.mrf.mxu0
    %v2281 = vadd.f32 %v1215, %v2280
    %v2282 = vpop.f32.mrf.mxu0
    %v2283 = vpop.f32.mrf.mxu0
    %v2284 = vadd.f32 %v1215, %v2283
    %v2285 = vpop.f32.mrf.mxu0
    %2286 = vmatprep.mubr.bf16.mxu0 0
    %2287 = vmatmul.mubr.bf16.gmra.mxu0 %v2177
    %v2288 = vpop.f32.mrf.mxu0
    %v2289 = vadd.f32 %v1215, %v2288
    %v2290 = vpop.f32.mrf.mxu0
    %v2291 = vpop.f32.mrf.mxu0
    %v2292 = vadd.f32 %v1215, %v2291
    %v2293 = vpop.f32.mrf.mxu0
    %2294 = vmatprep.mubr.bf16.mxu0 0
    %2295 = vmatmul.mubr.bf16.gmra.mxu0 %v2180
    %v2296 = vpop.f32.mrf.mxu0
    %v2297 = vadd.f32 %v1215, %v2296
    %v2298 = vpop.f32.mrf.mxu0
    %v2299 = vpop.f32.mrf.mxu0
    %v2300 = vadd.f32 %v1215, %v2299
    %v2301 = vpop.f32.mrf.mxu0
    %2302 = vdwg.mxu0
    %2303 = vmax.xlane.f32.xlu0 %v2241
    %v2304 = vpop.xlane.xlu0 %2303
    %2305 = vmax.xlane.f32.xlu0 %v2244
    %v2306 = vpop.xlane.xlu0 %2305
    %2307 = vmax.xlane.f32.xlu0 %v2249
    %v2308 = vpop.xlane.xlu0 %2307
    %2309 = vmax.xlane.f32.xlu0 %v2252
    %v2310 = vpop.xlane.xlu0 %2309
    %2311 = vmax.xlane.f32.xlu0 %v2257
    %v2312 = vpop.xlane.xlu0 %2311
    %2313 = vmax.xlane.f32.xlu0 %v2260
    %v2314 = vpop.xlane.xlu0 %2313
    %2315 = vmax.xlane.f32.xlu0 %v2265
    %v2316 = vpop.xlane.xlu0 %2315
    %2317 = vmax.xlane.f32.xlu0 %v2268
    %v2318 = vpop.xlane.xlu0 %2317
    %2319 = vmax.xlane.f32.xlu0 %v2273
    %v2320 = vpop.xlane.xlu0 %2319
    %2321 = vmax.xlane.f32.xlu0 %v2276
    %v2322 = vpop.xlane.xlu0 %2321
    %2323 = vmax.xlane.f32.xlu0 %v2281
    %v2324 = vpop.xlane.xlu0 %2323
    %2325 = vmax.xlane.f32.xlu0 %v2284
    %v2326 = vpop.xlane.xlu0 %2325
    %2327 = vmax.xlane.f32.xlu0 %v2289
    %v2328 = vpop.xlane.xlu0 %2327
    %2329 = vmax.xlane.f32.xlu0 %v2292
    %v2330 = vpop.xlane.xlu0 %2329
    %2331 = vmax.xlane.f32.xlu0 %v2297
    %v2332 = vpop.xlane.xlu0 %2331
    %2333 = vmax.xlane.f32.xlu0 %v2300
    %v2334 = vpop.xlane.xlu0 %2333
    %v2335 = vsub.f32 %v2241, %v2304
    %v2336 = vsub.f32 %v2244, %v2306
    %v2337 = vsub.f32 %v2249, %v2308
    %v2338 = vsub.f32 %v2252, %v2310
    %v2339 = vsub.f32 %v2257, %v2312
    %v2340 = vsub.f32 %v2260, %v2314
    %v2341 = vsub.f32 %v2265, %v2316
    %v2342 = vsub.f32 %v2268, %v2318
    %v2343 = vsub.f32 %v2273, %v2320
    %v2344 = vsub.f32 %v2276, %v2322
    %v2345 = vsub.f32 %v2281, %v2324
    %v2346 = vsub.f32 %v2284, %v2326
    %v2347 = vsub.f32 %v2289, %v2328
    %v2348 = vsub.f32 %v2292, %v2330
    %v2349 = vsub.f32 %v2297, %v2332
    %v2350 = vsub.f32 %v2300, %v2334
    %v2351 = vmul.f32 %v2335, 1.442695
    %v2352 = vpow.pop %v2351
    %v2353 = vmul.f32 %v2336, 1.442695
    %v2354 = vpow.pop %v2353
    %v2355 = vmul.f32 %v2337, 1.442695
    %v2356 = vpow.pop %v2355
    %v2357 = vmul.f32 %v2338, 1.442695
    %v2358 = vpow.pop %v2357
    %v2359 = vmul.f32 %v2339, 1.442695
    %v2360 = vpow.pop %v2359
    %v2361 = vmul.f32 %v2340, 1.442695
    %v2362 = vpow.pop %v2361
    %v2363 = vmul.f32 %v2341, 1.442695
    %v2364 = vpow.pop %v2363
    %v2365 = vmul.f32 %v2342, 1.442695
    %v2366 = vpow.pop %v2365
    %v2367 = vmul.f32 %v2343, 1.442695
    %v2368 = vpow.pop %v2367
    %v2369 = vmul.f32 %v2344, 1.442695
    %v2370 = vpow.pop %v2369
    %v2371 = vmul.f32 %v2345, 1.442695
    %v2372 = vpow.pop %v2371
    %v2373 = vmul.f32 %v2346, 1.442695
    %v2374 = vpow.pop %v2373
    %v2375 = vmul.f32 %v2347, 1.442695
    %v2376 = vpow.pop %v2375
    %v2377 = vmul.f32 %v2348, 1.442695
    %v2378 = vpow.pop %v2377
    %v2379 = vmul.f32 %v2349, 1.442695
    %v2380 = vpow.pop %v2379
    %v2381 = vmul.f32 %v2350, 1.442695
    %v2382 = vpow.pop %v2381
    %2383 = vadd.xlane.f32.xlu0 %v2352
    %v2384 = vpop.xlane.xlu0 %2383
    %2385 = vadd.xlane.f32.xlu0 %v2354
    %v2386 = vpop.xlane.xlu0 %2385
    %2387 = vadd.xlane.f32.xlu0 %v2356
    %v2388 = vpop.xlane.xlu0 %2387
    %2389 = vadd.xlane.f32.xlu0 %v2358
    %v2390 = vpop.xlane.xlu0 %2389
    %2391 = vadd.xlane.f32.xlu0 %v2360
    %v2392 = vpop.xlane.xlu0 %2391
    %2393 = vadd.xlane.f32.xlu0 %v2362
    %v2394 = vpop.xlane.xlu0 %2393
    %2395 = vadd.xlane.f32.xlu0 %v2364
    %v2396 = vpop.xlane.xlu0 %2395
    %2397 = vadd.xlane.f32.xlu0 %v2366
    %v2398 = vpop.xlane.xlu0 %2397
    %2399 = vadd.xlane.f32.xlu0 %v2368
    %v2400 = vpop.xlane.xlu0 %2399
    %2401 = vadd.xlane.f32.xlu0 %v2370
    %v2402 = vpop.xlane.xlu0 %2401
    %2403 = vadd.xlane.f32.xlu0 %v2372
    %v2404 = vpop.xlane.xlu0 %2403
    %2405 = vadd.xlane.f32.xlu0 %v2374
    %v2406 = vpop.xlane.xlu0 %2405
    %2407 = vadd.xlane.f32.xlu0 %v2376
    %v2408 = vpop.xlane.xlu0 %2407
    %2409 = vadd.xlane.f32.xlu0 %v2378
    %v2410 = vpop.xlane.xlu0 %2409
    %2411 = vadd.xlane.f32.xlu0 %v2380
    %v2412 = vpop.xlane.xlu0 %2411
    %2413 = vadd.xlane.f32.xlu0 %v2382
    %v2414 = vpop.xlane.xlu0 %2413
    %v2415 = vrcp.pop %v2384
    %v2416 = vrcp.pop %v2386
    %v2417 = vrcp.pop %v2388
    %v2418 = vrcp.pop %v2390
    %v2419 = vrcp.pop %v2392
    %v2420 = vrcp.pop %v2394
    %v2421 = vrcp.pop %v2396
    %v2422 = vrcp.pop %v2398
    %v2423 = vrcp.pop %v2400
    %v2424 = vrcp.pop %v2402
    %v2425 = vrcp.pop %v2404
    %v2426 = vrcp.pop %v2406
    %v2427 = vrcp.pop %v2408
    %v2428 = vrcp.pop %v2410
    %v2429 = vrcp.pop %v2412
    %v2430 = vrcp.pop %v2414
    %v2431 = vmul.f32 %v2352, %v2415
    %v2432 = vmul.f32 %v2354, %v2416
    %v2433 = vmul.f32 %v2356, %v2417
    %v2434 = vmul.f32 %v2358, %v2418
    %v2435 = vmul.f32 %v2360, %v2419
    %v2436 = vmul.f32 %v2362, %v2420
    %v2437 = vmul.f32 %v2364, %v2421
    %v2438 = vmul.f32 %v2366, %v2422
    %v2439 = vmul.f32 %v2368, %v2423
    %v2440 = vmul.f32 %v2370, %v2424
    %v2441 = vmul.f32 %v2372, %v2425
    %v2442 = vmul.f32 %v2374, %v2426
    %v2443 = vmul.f32 %v2376, %v2427
    %v2444 = vmul.f32 %v2378, %v2428
    %v2445 = vmul.f32 %v2380, %v2429
    %v2446 = vmul.f32 %v2382, %v2430
    %v2447 = vpack.c.bf16 %v2432, %v2431
    %v2448 = vpack.c.bf16 %v2434, %v2433
    %v2449 = vpack.c.bf16 %v2436, %v2435
    %v2450 = vpack.c.bf16 %v2438, %v2437
    %v2451 = vpack.c.bf16 %v2440, %v2439
    %v2452 = vpack.c.bf16 %v2442, %v2441
    %v2453 = vpack.c.bf16 %v2444, %v2443
    %v2454 = vpack.c.bf16 %v2446, %v2445
    %2455 = vrot.lane.b32.xlu0 %v751, 56
    %v2456 = vpop.permute.xlu0 %2455
    %2457 = vrot.lane.b32.xlu0 %v752, 56
    %v2458 = vpop.permute.xlu0 %2457
    %2459 = vrot.lane.b32.xlu0 %v753, 56
    %v2460 = vpop.permute.xlu0 %2459
    %2461 = vrot.lane.b32.xlu0 %v754, 56
    %v2462 = vpop.permute.xlu0 %2461
    %2463 = vrot.lane.b32.xlu0 %v755, 56
    %v2464 = vpop.permute.xlu0 %2463
    %2465 = vrot.lane.b32.xlu0 %v756, 56
    %v2466 = vpop.permute.xlu0 %2465
    %2467 = vrot.lane.b32.xlu0 %v757, 56
    %v2468 = vpop.permute.xlu0 %2467
    %2469 = vrot.lane.b32.xlu0 %v758, 56
    %v2470 = vpop.permute.xlu0 %2469
    %2479 = vmatprep.subr.bf16.mxu0 0
    %2480 = vmatpush1.bf16.msra.mxu0 %v2470
    %2481 = vmatprep.subr.bf16.mxu0 0
    %2482 = vmatpush1.bf16.msra.mxu0 %v2468
    %2483 = vmatprep.subr.bf16.mxu0 0
    %2484 = vmatpush1.bf16.msra.mxu0 %v2466
    %2485 = vmatprep.subr.bf16.mxu0 0
    %2486 = vmatpush1.bf16.msra.mxu0 %v2464
    %2487 = vmatprep.subr.bf16.mxu0 0
    %2488 = vmatpush1.bf16.msra.mxu0 %v2462
    %2489 = vmatprep.subr.bf16.mxu0 0
    %2490 = vmatpush1.bf16.msra.mxu0 %v2460
    %2491 = vmatprep.subr.bf16.mxu0 0
    %2492 = vmatpush1.bf16.msra.mxu0 %v2458
    %2493 = vmatprep.subr.bf16.mxu0 0
    %2494 = vmatpush1.bf16.msra.mxu0 %v2456
    %2495 = vmatprep.subr.bf16.mxu0 0
    %2496 = vmatpush2.bf16.msra.mxu0 0
    %2497 = vmatprep.subr.bf16.mxu0 0
    %2498 = vmatpush2.bf16.msra.mxu0 0
    %2499 = vmatprep.subr.bf16.mxu0 0
    %2500 = vmatpush2.bf16.msra.mxu0 0
    %2501 = vmatprep.subr.bf16.mxu0 0
    %2502 = vmatpush2.bf16.msra.mxu0 0
    %2503 = vmatprep.subr.bf16.mxu0 0
    %2504 = vmatpush2.bf16.msra.mxu0 0
    %2505 = vmatprep.subr.bf16.mxu0 0
    %2506 = vmatpush2.bf16.msra.mxu0 0
    %2507 = vmatprep.subr.bf16.mxu0 0
    %2508 = vmatpush2.bf16.msra.mxu0 0
    %2509 = vmatprep.subr.bf16.mxu0 0
    %2510 = vmatpush2.bf16.msra.mxu0 0
    %2511 = vmatprep.mubr.bf16.mxu0 0
    %2512 = vmatmul.mubr.bf16.gmra.mxu0 %v2447
    %v2513 = vpop.f32.mrf.mxu0
    %v2514 = vadd.f32 0.0, %v2513
    %v2515 = vpop.f32.mrf.mxu0
    %v2516 = vpop.f32.mrf.mxu0
    %v2517 = vadd.f32 0.0, %v2516
    %v2518 = vpop.f32.mrf.mxu0
    %2519 = vmatprep.mubr.bf16.mxu0 0
    %2520 = vmatmul.mubr.bf16.gmra.mxu0 %v2448
    %v2521 = vpop.f32.mrf.mxu0
    %v2522 = vadd.f32 0.0, %v2521
    %v2523 = vpop.f32.mrf.mxu0
    %v2524 = vpop.f32.mrf.mxu0
    %v2525 = vadd.f32 0.0, %v2524
    %v2526 = vpop.f32.mrf.mxu0
    %2527 = vmatprep.mubr.bf16.mxu0 0
    %2528 = vmatmul.mubr.bf16.gmra.mxu0 %v2449
    %v2529 = vpop.f32.mrf.mxu0
    %v2530 = vadd.f32 0.0, %v2529
    %v2531 = vpop.f32.mrf.mxu0
    %v2532 = vpop.f32.mrf.mxu0
    %v2533 = vadd.f32 0.0, %v2532
    %v2534 = vpop.f32.mrf.mxu0
    %2535 = vmatprep.mubr.bf16.mxu0 0
    %2536 = vmatmul.mubr.bf16.gmra.mxu0 %v2450
    %v2537 = vpop.f32.mrf.mxu0
    %v2538 = vadd.f32 0.0, %v2537
    %v2539 = vpop.f32.mrf.mxu0
    %v2540 = vpop.f32.mrf.mxu0
    %v2541 = vadd.f32 0.0, %v2540
    %v2542 = vpop.f32.mrf.mxu0
    %2543 = vmatprep.mubr.bf16.mxu0 0
    %2544 = vmatmul.mubr.bf16.gmra.mxu0 %v2451
    %v2545 = vpop.f32.mrf.mxu0
    %v2546 = vadd.f32 0.0, %v2545
    %v2547 = vpop.f32.mrf.mxu0
    %v2548 = vpop.f32.mrf.mxu0
    %v2549 = vadd.f32 0.0, %v2548
    %v2550 = vpop.f32.mrf.mxu0
    %2551 = vmatprep.mubr.bf16.mxu0 0
    %2552 = vmatmul.mubr.bf16.gmra.mxu0 %v2452
    %v2553 = vpop.f32.mrf.mxu0
    %v2554 = vadd.f32 0.0, %v2553
    %v2555 = vpop.f32.mrf.mxu0
    %v2556 = vpop.f32.mrf.mxu0
    %v2557 = vadd.f32 0.0, %v2556
    %v2558 = vpop.f32.mrf.mxu0
    %2559 = vmatprep.mubr.bf16.mxu0 0
    %2560 = vmatmul.mubr.bf16.gmra.mxu0 %v2453
    %v2561 = vpop.f32.mrf.mxu0
    %v2562 = vadd.f32 0.0, %v2561
    %v2563 = vpop.f32.mrf.mxu0
    %v2564 = vpop.f32.mrf.mxu0
    %v2565 = vadd.f32 0.0, %v2564
    %v2566 = vpop.f32.mrf.mxu0
    %2567 = vmatprep.mubr.bf16.mxu0 0
    %2568 = vmatmul.mubr.bf16.gmra.mxu0 %v2454
    %v2569 = vpop.f32.mrf.mxu0
    %v2570 = vadd.f32 0.0, %v2569
    %v2571 = vpop.f32.mrf.mxu0
    %v2572 = vpop.f32.mrf.mxu0
    %v2573 = vadd.f32 0.0, %v2572
    %v2574 = vpop.f32.mrf.mxu0
    %2575 = vdwg.mxu0
    %v2576 = vpack.c.bf16 %v2067, %v2064
    %v2577 = vpack.c.bf16 %v2075, %v2072
    %v2578 = vpack.c.bf16 %v2083, %v2080
    %v2579 = vpack.c.bf16 %v2091, %v2088
    %v2580 = vpack.c.bf16 %v2099, %v2096
    %v2581 = vpack.c.bf16 %v2107, %v2104
    %v2582 = vpack.c.bf16 %v2115, %v2112
    %v2583 = vpack.c.bf16 %v2123, %v2120
    %v2584 = vpack.c.bf16 %v2517, %v2514
    %v2585 = vpack.c.bf16 %v2525, %v2522
    %v2586 = vpack.c.bf16 %v2533, %v2530
    %v2587 = vpack.c.bf16 %v2541, %v2538
    %v2588 = vpack.c.bf16 %v2549, %v2546
    %v2589 = vpack.c.bf16 %v2557, %v2554
    %v2590 = vpack.c.bf16 %v2565, %v2562
    %v2591 = vpack.c.bf16 %v2573, %v2570
    %s2592 = scalar_lea.vmem %s6, 4
    %v2593 = vld [vmem:[%s2592] sm:$0xf]
    %v2595 = vsel %vm790, %v2576, 0
    %v2598 = vsel %vm790, %v2577, 0
    %v2601 = vsel %vm790, %v2578, 0
    %v2604 = vsel %vm790, %v2579, 0
    %v2607 = vsel %vm790, %v2580, 0
    %v2610 = vsel %vm790, %v2581, 0
    %v2613 = vsel %vm790, %v2582, 0
    %v2616 = vsel %vm790, %v2583, 0
    %v2619 = vsel %vm790, %v2584, 0
    %v2622 = vsel %vm790, %v2585, 0
    %v2625 = vsel %vm790, %v2586, 0
    %v2628 = vsel %vm790, %v2587, 0
    %v2631 = vsel %vm790, %v2588, 0
    %v2634 = vsel %vm790, %v2589, 0
    %v2637 = vsel %vm790, %v2590, 0
    %v2640 = vsel %vm790, %v2591, 0
    %vm2642 = vcmask 1043456
    %v2644 = vsel %vm2642, %v2593, 0
    %2646 = vmatprep.subr.bf16.mxu0 0
    %2647 = vmatpush1.bf16.msra.mxu0 0
    %2648 = vmatprep.subr.bf16.mxu0 0
    %2649 = vmatpush1.bf16.msra.mxu0 0
    %2650 = vmatprep.subr.bf16.mxu0 0
    %2651 = vmatpush1.bf16.msra.mxu0 0
    %2652 = vmatprep.subr.bf16.mxu0 0
    %2653 = vmatpush1.bf16.msra.mxu0 0
    %2654 = vmatprep.subr.bf16.mxu0 0
    %2655 = vmatpush1.bf16.msra.mxu0 0
    %2656 = vmatprep.subr.bf16.mxu0 0
    %2657 = vmatpush1.bf16.msra.mxu0 0
    %2658 = vmatprep.subr.bf16.mxu0 0
    %2659 = vmatpush1.bf16.msra.mxu0 0
    %2660 = vmatprep.subr.bf16.mxu0 0
    %2661 = vmatpush1.bf16.msra.mxu0 %v2644
    %2662 = vmatprep.subr.bf16.mxu0 0
    %2663 = vmatpush2.bf16.msra.mxu0 0
    %2664 = vmatprep.subr.bf16.mxu0 0
    %2665 = vmatpush2.bf16.msra.mxu0 0
    %2666 = vmatprep.subr.bf16.mxu0 0
    %2667 = vmatpush2.bf16.msra.mxu0 0
    %2668 = vmatprep.subr.bf16.mxu0 0
    %2669 = vmatpush2.bf16.msra.mxu0 0
    %2670 = vmatprep.subr.bf16.mxu0 0
    %2671 = vmatpush2.bf16.msra.mxu0 0
    %2672 = vmatprep.subr.bf16.mxu0 0
    %2673 = vmatpush2.bf16.msra.mxu0 0
    %2674 = vmatprep.subr.bf16.mxu0 0
    %2675 = vmatpush2.bf16.msra.mxu0 0
    %2676 = vmatprep.subr.bf16.mxu0 0
    %2677 = vmatpush2.bf16.msra.mxu0 0
    %2678 = vmatprep.mubr.bf16.mxu0 0
    %2679 = vmatmul.mubr.bf16.gmra.mxu0 %v2595
    %v2680 = vpop.f32.mrf.mxu0
    %v2681 = vadd.f32 0.0, %v2680
    %v2682 = vpop.f32.mrf.mxu0
    %v2683 = vpop.f32.mrf.mxu0
    %v2684 = vadd.f32 0.0, %v2683
    %v2685 = vpop.f32.mrf.mxu0
    %2686 = vmatprep.mubr.bf16.mxu0 0
    %2687 = vmatmul.mubr.bf16.gmra.mxu0 %v2598
    %v2688 = vpop.f32.mrf.mxu0
    %v2689 = vadd.f32 0.0, %v2688
    %v2690 = vpop.f32.mrf.mxu0
    %v2691 = vpop.f32.mrf.mxu0
    %v2692 = vadd.f32 0.0, %v2691
    %v2693 = vpop.f32.mrf.mxu0
    %2694 = vmatprep.mubr.bf16.mxu0 0
    %2695 = vmatmul.mubr.bf16.gmra.mxu0 %v2601
    %v2696 = vpop.f32.mrf.mxu0
    %v2697 = vadd.f32 0.0, %v2696
    %v2698 = vpop.f32.mrf.mxu0
    %v2699 = vpop.f32.mrf.mxu0
    %v2700 = vadd.f32 0.0, %v2699
    %v2701 = vpop.f32.mrf.mxu0
    %2702 = vmatprep.mubr.bf16.mxu0 0
    %2703 = vmatmul.mubr.bf16.gmra.mxu0 %v2604
    %v2704 = vpop.f32.mrf.mxu0
    %v2705 = vadd.f32 0.0, %v2704
    %v2706 = vpop.f32.mrf.mxu0
    %v2707 = vpop.f32.mrf.mxu0
    %v2708 = vadd.f32 0.0, %v2707
    %v2709 = vpop.f32.mrf.mxu0
    %2710 = vmatprep.mubr.bf16.mxu0 0
    %2711 = vmatmul.mubr.bf16.gmra.mxu0 %v2607
    %v2712 = vpop.f32.mrf.mxu0
    %v2713 = vadd.f32 0.0, %v2712
    %v2714 = vpop.f32.mrf.mxu0
    %v2715 = vpop.f32.mrf.mxu0
    %v2716 = vadd.f32 0.0, %v2715
    %v2717 = vpop.f32.mrf.mxu0
    %2718 = vmatprep.mubr.bf16.mxu0 0
    %2719 = vmatmul.mubr.bf16.gmra.mxu0 %v2610
    %v2720 = vpop.f32.mrf.mxu0
    %v2721 = vadd.f32 0.0, %v2720
    %v2722 = vpop.f32.mrf.mxu0
    %v2723 = vpop.f32.mrf.mxu0
    %v2724 = vadd.f32 0.0, %v2723
    %v2725 = vpop.f32.mrf.mxu0
    %2726 = vmatprep.mubr.bf16.mxu0 0
    %2727 = vmatmul.mubr.bf16.gmra.mxu0 %v2613
    %v2728 = vpop.f32.mrf.mxu0
    %v2729 = vadd.f32 0.0, %v2728
    %v2730 = vpop.f32.mrf.mxu0
    %v2731 = vpop.f32.mrf.mxu0
    %v2732 = vadd.f32 0.0, %v2731
    %v2733 = vpop.f32.mrf.mxu0
    %2734 = vmatprep.mubr.bf16.mxu0 0
    %2735 = vmatmul.mubr.bf16.gmra.mxu0 %v2616
    %v2736 = vpop.f32.mrf.mxu0
    %v2737 = vadd.f32 0.0, %v2736
    %v2738 = vpop.f32.mrf.mxu0
    %v2739 = vpop.f32.mrf.mxu0
    %v2740 = vadd.f32 0.0, %v2739
    %v2741 = vpop.f32.mrf.mxu0
    %2742 = vmatprep.mubr.bf16.mxu0 0
    %2743 = vmatmul.mubr.bf16.gmra.mxu0 %v2619
    %v2744 = vpop.f32.mrf.mxu0
    %v2745 = vadd.f32 0.0, %v2744
    %v2746 = vpop.f32.mrf.mxu0
    %v2747 = vpop.f32.mrf.mxu0
    %v2748 = vadd.f32 0.0, %v2747
    %v2749 = vpop.f32.mrf.mxu0
    %2750 = vmatprep.mubr.bf16.mxu0 0
    %2751 = vmatmul.mubr.bf16.gmra.mxu0 %v2622
    %v2752 = vpop.f32.mrf.mxu0
    %v2753 = vadd.f32 0.0, %v2752
    %v2754 = vpop.f32.mrf.mxu0
    %v2755 = vpop.f32.mrf.mxu0
    %v2756 = vadd.f32 0.0, %v2755
    %v2757 = vpop.f32.mrf.mxu0
    %2758 = vmatprep.mubr.bf16.mxu0 0
    %2759 = vmatmul.mubr.bf16.gmra.mxu0 %v2625
    %v2760 = vpop.f32.mrf.mxu0
    %v2761 = vadd.f32 0.0, %v2760
    %v2762 = vpop.f32.mrf.mxu0
    %v2763 = vpop.f32.mrf.mxu0
    %v2764 = vadd.f32 0.0, %v2763
    %v2765 = vpop.f32.mrf.mxu0
    %2766 = vmatprep.mubr.bf16.mxu0 0
    %2767 = vmatmul.mubr.bf16.gmra.mxu0 %v2628
    %v2768 = vpop.f32.mrf.mxu0
    %v2769 = vadd.f32 0.0, %v2768
    %v2770 = vpop.f32.mrf.mxu0
    %v2771 = vpop.f32.mrf.mxu0
    %v2772 = vadd.f32 0.0, %v2771
    %v2773 = vpop.f32.mrf.mxu0
    %2774 = vmatprep.mubr.bf16.mxu0 0
    %2775 = vmatmul.mubr.bf16.gmra.mxu0 %v2631
    %v2776 = vpop.f32.mrf.mxu0
    %v2777 = vadd.f32 0.0, %v2776
    %v2778 = vpop.f32.mrf.mxu0
    %v2779 = vpop.f32.mrf.mxu0
    %v2780 = vadd.f32 0.0, %v2779
    %v2781 = vpop.f32.mrf.mxu0
    %2782 = vmatprep.mubr.bf16.mxu0 0
    %2783 = vmatmul.mubr.bf16.gmra.mxu0 %v2634
    %v2784 = vpop.f32.mrf.mxu0
    %v2785 = vadd.f32 0.0, %v2784
    %v2786 = vpop.f32.mrf.mxu0
    %v2787 = vpop.f32.mrf.mxu0
    %v2788 = vadd.f32 0.0, %v2787
    %v2789 = vpop.f32.mrf.mxu0
    %2790 = vmatprep.mubr.bf16.mxu0 0
    %2791 = vmatmul.mubr.bf16.gmra.mxu0 %v2637
    %v2792 = vpop.f32.mrf.mxu0
    %v2793 = vadd.f32 0.0, %v2792
    %v2794 = vpop.f32.mrf.mxu0
    %v2795 = vpop.f32.mrf.mxu0
    %v2796 = vadd.f32 0.0, %v2795
    %v2797 = vpop.f32.mrf.mxu0
    %2798 = vmatprep.mubr.bf16.mxu0 0
    %2799 = vmatmul.mubr.bf16.gmra.mxu0 %v2640
    %v2800 = vpop.f32.mrf.mxu0
    %v2801 = vadd.f32 0.0, %v2800
    %v2802 = vpop.f32.mrf.mxu0
    %v2803 = vpop.f32.mrf.mxu0
    %v2804 = vadd.f32 0.0, %v2803
    %v2805 = vpop.f32.mrf.mxu0
    %2806 = vdwg.mxu0
    %v2808 = vsel %vm790, %v1659, 0
    %v2811 = vsel %vm790, %v1660, 0
    %v2814 = vsel %vm790, %v1661, 0
    %v2817 = vsel %vm790, %v1662, 0
    %v2820 = vsel %vm790, %v1663, 0
    %v2823 = vsel %vm790, %v1664, 0
    %v2826 = vsel %vm790, %v1665, 0
    %v2829 = vsel %vm790, %v1666, 0
    %v2832 = vsel %vm790, %v1667, 0
    %v2835 = vsel %vm790, %v1668, 0
    %v2838 = vsel %vm790, %v1669, 0
    %v2841 = vsel %vm790, %v1670, 0
    %v2844 = vsel %vm790, %v1671, 0
    %v2847 = vsel %vm790, %v1672, 0
    %v2850 = vsel %vm790, %v1673, 0
    %v2853 = vsel %vm790, %v1674, 0
    %v2856 = vsel %vm2642, %v1675, 0
    %2858 = vmatprep.subr.bf16.mxu0 0
    %2859 = vmatpush1.bf16.msra.mxu0 0
    %2860 = vmatprep.subr.bf16.mxu0 0
    %2861 = vmatpush1.bf16.msra.mxu0 0
    %2862 = vmatprep.subr.bf16.mxu0 0
    %2863 = vmatpush1.bf16.msra.mxu0 0
    %2864 = vmatprep.subr.bf16.mxu0 0
    %2865 = vmatpush1.bf16.msra.mxu0 0
    %2866 = vmatprep.subr.bf16.mxu0 0
    %2867 = vmatpush1.bf16.msra.mxu0 0
    %2868 = vmatprep.subr.bf16.mxu0 0
    %2869 = vmatpush1.bf16.msra.mxu0 0
    %2870 = vmatprep.subr.bf16.mxu0 0
    %2871 = vmatpush1.bf16.msra.mxu0 0
    %2872 = vmatprep.subr.bf16.mxu0 0
    %2873 = vmatpush1.bf16.msra.mxu0 %v2856
    %2874 = vmatprep.subr.bf16.mxu0 0
    %2875 = vmatpush2.bf16.msra.mxu0 0
    %2876 = vmatprep.subr.bf16.mxu0 0
    %2877 = vmatpush2.bf16.msra.mxu0 0
    %2878 = vmatprep.subr.bf16.mxu0 0
    %2879 = vmatpush2.bf16.msra.mxu0 0
    %2880 = vmatprep.subr.bf16.mxu0 0
    %2881 = vmatpush2.bf16.msra.mxu0 0
    %2882 = vmatprep.subr.bf16.mxu0 0
    %2883 = vmatpush2.bf16.msra.mxu0 0
    %2884 = vmatprep.subr.bf16.mxu0 0
    %2885 = vmatpush2.bf16.msra.mxu0 0
    %2886 = vmatprep.subr.bf16.mxu0 0
    %2887 = vmatpush2.bf16.msra.mxu0 0
    %2888 = vmatprep.subr.bf16.mxu0 0
    %2889 = vmatpush2.bf16.msra.mxu0 0
    %2890 = vmatprep.mubr.bf16.mxu0 0
    %2891 = vmatmul.mubr.bf16.gmra.mxu0 %v2808
    %v2892 = vpop.f32.mrf.mxu0
    %v2893 = vadd.f32 %v2681, %v2892
    %v2894 = vpop.f32.mrf.mxu0
    %v2895 = vpop.f32.mrf.mxu0
    %v2896 = vadd.f32 %v2684, %v2895
    %v2897 = vpop.f32.mrf.mxu0
    %2898 = vmatprep.mubr.bf16.mxu0 0
    %2899 = vmatmul.mubr.bf16.gmra.mxu0 %v2811
    %v2900 = vpop.f32.mrf.mxu0
    %v2901 = vadd.f32 %v2689, %v2900
    %v2902 = vpop.f32.mrf.mxu0
    %v2903 = vpop.f32.mrf.mxu0
    %v2904 = vadd.f32 %v2692, %v2903
    %v2905 = vpop.f32.mrf.mxu0
    %2906 = vmatprep.mubr.bf16.mxu0 0
    %2907 = vmatmul.mubr.bf16.gmra.mxu0 %v2814
    %v2908 = vpop.f32.mrf.mxu0
    %v2909 = vadd.f32 %v2697, %v2908
    %v2910 = vpop.f32.mrf.mxu0
    %v2911 = vpop.f32.mrf.mxu0
    %v2912 = vadd.f32 %v2700, %v2911
    %v2913 = vpop.f32.mrf.mxu0
    %2914 = vmatprep.mubr.bf16.mxu0 0
    %2915 = vmatmul.mubr.bf16.gmra.mxu0 %v2817
    %v2916 = vpop.f32.mrf.mxu0
    %v2917 = vadd.f32 %v2705, %v2916
    %v2918 = vpop.f32.mrf.mxu0
    %v2919 = vpop.f32.mrf.mxu0
    %v2920 = vadd.f32 %v2708, %v2919
    %v2921 = vpop.f32.mrf.mxu0
    %2922 = vmatprep.mubr.bf16.mxu0 0
    %2923 = vmatmul.mubr.bf16.gmra.mxu0 %v2820
    %v2924 = vpop.f32.mrf.mxu0
    %v2925 = vadd.f32 %v2713, %v2924
    %v2926 = vpop.f32.mrf.mxu0
    %v2927 = vpop.f32.mrf.mxu0
    %v2928 = vadd.f32 %v2716, %v2927
    %v2929 = vpop.f32.mrf.mxu0
    %2930 = vmatprep.mubr.bf16.mxu0 0
    %2931 = vmatmul.mubr.bf16.gmra.mxu0 %v2823
    %v2932 = vpop.f32.mrf.mxu0
    %v2933 = vadd.f32 %v2721, %v2932
    %v2934 = vpop.f32.mrf.mxu0
    %v2935 = vpop.f32.mrf.mxu0
    %v2936 = vadd.f32 %v2724, %v2935
    %v2937 = vpop.f32.mrf.mxu0
    %2938 = vmatprep.mubr.bf16.mxu0 0
    %2939 = vmatmul.mubr.bf16.gmra.mxu0 %v2826
    %v2940 = vpop.f32.mrf.mxu0
    %v2941 = vadd.f32 %v2729, %v2940
    %v2942 = vpop.f32.mrf.mxu0
    %v2943 = vpop.f32.mrf.mxu0
    %v2944 = vadd.f32 %v2732, %v2943
    %v2945 = vpop.f32.mrf.mxu0
    %2946 = vmatprep.mubr.bf16.mxu0 0
    %2947 = vmatmul.mubr.bf16.gmra.mxu0 %v2829
    %v2948 = vpop.f32.mrf.mxu0
    %v2949 = vadd.f32 %v2737, %v2948
    %v2950 = vpop.f32.mrf.mxu0
    %v2951 = vpop.f32.mrf.mxu0
    %v2952 = vadd.f32 %v2740, %v2951
    %v2953 = vpop.f32.mrf.mxu0
    %2954 = vmatprep.mubr.bf16.mxu0 0
    %2955 = vmatmul.mubr.bf16.gmra.mxu0 %v2832
    %v2956 = vpop.f32.mrf.mxu0
    %v2957 = vadd.f32 %v2745, %v2956
    %v2958 = vpop.f32.mrf.mxu0
    %v2959 = vpop.f32.mrf.mxu0
    %v2960 = vadd.f32 %v2748, %v2959
    %v2961 = vpop.f32.mrf.mxu0
    %2962 = vmatprep.mubr.bf16.mxu0 0
    %2963 = vmatmul.mubr.bf16.gmra.mxu0 %v2835
    %v2964 = vpop.f32.mrf.mxu0
    %v2965 = vadd.f32 %v2753, %v2964
    %v2966 = vpop.f32.mrf.mxu0
    %v2967 = vpop.f32.mrf.mxu0
    %v2968 = vadd.f32 %v2756, %v2967
    %v2969 = vpop.f32.mrf.mxu0
    %2970 = vmatprep.mubr.bf16.mxu0 0
    %2971 = vmatmul.mubr.bf16.gmra.mxu0 %v2838
    %v2972 = vpop.f32.mrf.mxu0
    %v2973 = vadd.f32 %v2761, %v2972
    %v2974 = vpop.f32.mrf.mxu0
    %v2975 = vpop.f32.mrf.mxu0
    %v2976 = vadd.f32 %v2764, %v2975
    %v2977 = vpop.f32.mrf.mxu0
    %2978 = vmatprep.mubr.bf16.mxu0 0
    %2979 = vmatmul.mubr.bf16.gmra.mxu0 %v2841
    %v2980 = vpop.f32.mrf.mxu0
    %v2981 = vadd.f32 %v2769, %v2980
    %v2982 = vpop.f32.mrf.mxu0
    %v2983 = vpop.f32.mrf.mxu0
    %v2984 = vadd.f32 %v2772, %v2983
    %v2985 = vpop.f32.mrf.mxu0
    %2986 = vmatprep.mubr.bf16.mxu0 0
    %2987 = vmatmul.mubr.bf16.gmra.mxu0 %v2844
    %v2988 = vpop.f32.mrf.mxu0
    %v2989 = vadd.f32 %v2777, %v2988
    %v2990 = vpop.f32.mrf.mxu0
    %v2991 = vpop.f32.mrf.mxu0
    %v2992 = vadd.f32 %v2780, %v2991
    %v2993 = vpop.f32.mrf.mxu0
    %2994 = vmatprep.mubr.bf16.mxu0 0
    %2995 = vmatmul.mubr.bf16.gmra.mxu0 %v2847
    %v2996 = vpop.f32.mrf.mxu0
    %v2997 = vadd.f32 %v2785, %v2996
    %v2998 = vpop.f32.mrf.mxu0
    %v2999 = vpop.f32.mrf.mxu0
    %v3000 = vadd.f32 %v2788, %v2999
    %v3001 = vpop.f32.mrf.mxu0
    %3002 = vmatprep.mubr.bf16.mxu0 0
    %3003 = vmatmul.mubr.bf16.gmra.mxu0 %v2850
    %v3004 = vpop.f32.mrf.mxu0
    %v3005 = vadd.f32 %v2793, %v3004
    %v3006 = vpop.f32.mrf.mxu0
    %v3007 = vpop.f32.mrf.mxu0
    %v3008 = vadd.f32 %v2796, %v3007
    %v3009 = vpop.f32.mrf.mxu0
    %3010 = vmatprep.mubr.bf16.mxu0 0
    %3011 = vmatmul.mubr.bf16.gmra.mxu0 %v2853
    %v3012 = vpop.f32.mrf.mxu0
    %v3013 = vadd.f32 %v2801, %v3012
    %v3014 = vpop.f32.mrf.mxu0
    %v3015 = vpop.f32.mrf.mxu0
    %v3016 = vadd.f32 %v2804, %v3015
    %v3017 = vpop.f32.mrf.mxu0
    %3018 = vdwg.mxu0
    %3019 = vrot.lane.b32.xlu0 %v743, 112
    %v3020 = vpop.permute.xlu0 %3019
    %3021 = vrot.lane.b32.xlu0 %v744, 112
    %v3022 = vpop.permute.xlu0 %3021
    %3023 = vrot.lane.b32.xlu0 %v745, 112
    %v3024 = vpop.permute.xlu0 %3023
    %3025 = vrot.lane.b32.xlu0 %v746, 112
    %v3026 = vpop.permute.xlu0 %3025
    %3027 = vrot.lane.b32.xlu0 %v747, 112
    %v3028 = vpop.permute.xlu0 %3027
    %3029 = vrot.lane.b32.xlu0 %v748, 112
    %v3030 = vpop.permute.xlu0 %3029
    %3031 = vrot.lane.b32.xlu0 %v749, 112
    %v3032 = vpop.permute.xlu0 %3031
    %3033 = vrot.lane.b32.xlu0 %v750, 112
    %v3034 = vpop.permute.xlu0 %3033
    %3035 = vrot.lane.b32.xlu0 %v743, 80
    %v3036 = vpop.permute.xlu0 %3035
    %3037 = vrot.lane.b32.xlu0 %v744, 80
    %v3038 = vpop.permute.xlu0 %3037
    %3039 = vrot.lane.b32.xlu0 %v745, 80
    %v3040 = vpop.permute.xlu0 %3039
    %3041 = vrot.lane.b32.xlu0 %v746, 80
    %v3042 = vpop.permute.xlu0 %3041
    %3043 = vrot.lane.b32.xlu0 %v747, 80
    %v3044 = vpop.permute.xlu0 %3043
    %3045 = vrot.lane.b32.xlu0 %v748, 80
    %v3046 = vpop.permute.xlu0 %3045
    %3047 = vrot.lane.b32.xlu0 %v749, 80
    %v3048 = vpop.permute.xlu0 %3047
    %3049 = vrot.lane.b32.xlu0 %v750, 80
    %v3050 = vpop.permute.xlu0 %3049
    %v3052 = vsel %vm790, %v3020, 0
    %v3055 = vsel %vm790, %v3022, 0
    %v3058 = vsel %vm790, %v3024, 0
    %v3061 = vsel %vm790, %v3026, 0
    %v3064 = vsel %vm790, %v3028, 0
    %v3067 = vsel %vm790, %v3030, 0
    %v3070 = vsel %vm790, %v3032, 0
    %v3073 = vsel %vm790, %v3034, 0
    %v3076 = vsel %vm790, %v3036, 0
    %v3079 = vsel %vm790, %v3038, 0
    %v3082 = vsel %vm790, %v3040, 0
    %v3085 = vsel %vm790, %v3042, 0
    %v3088 = vsel %vm790, %v3044, 0
    %v3091 = vsel %vm790, %v3046, 0
    %v3094 = vsel %vm790, %v3048, 0
    %v3097 = vsel %vm790, %v3050, 0
    %3099 = vmatprep.subr.bf16.mxu0 0
    %3100 = vmatpush1.bf16.xpose.msra.mxu0 %v3097
    %3101 = vmatprep.subr.bf16.mxu0 0
    %3102 = vmatpush1.bf16.xpose.msra.mxu0 %v3094
    %3103 = vmatprep.subr.bf16.mxu0 0
    %3104 = vmatpush1.bf16.xpose.msra.mxu0 %v3091
    %3105 = vmatprep.subr.bf16.mxu0 0
    %3106 = vmatpush1.bf16.xpose.msra.mxu0 %v3088
    %3107 = vmatprep.subr.bf16.mxu0 0
    %3108 = vmatpush1.bf16.xpose.msra.mxu0 %v3085
    %3109 = vmatprep.subr.bf16.mxu0 0
    %3110 = vmatpush1.bf16.xpose.msra.mxu0 %v3082
    %3111 = vmatprep.subr.bf16.mxu0 0
    %3112 = vmatpush1.bf16.xpose.msra.mxu0 %v3079
    %3113 = vmatprep.subr.bf16.mxu0 0
    %3114 = vmatpush1.bf16.xpose.msra.mxu0 %v3076
    %3115 = vmatprep.subr.bf16.mxu0 0
    %3116 = vmatpush2.bf16.xpose.msra.mxu0 0
    %3117 = vmatprep.subr.bf16.mxu0 0
    %3118 = vmatpush2.bf16.xpose.msra.mxu0 0
    %3119 = vmatprep.subr.bf16.mxu0 0
    %3120 = vmatpush2.bf16.xpose.msra.mxu0 0
    %3121 = vmatprep.subr.bf16.mxu0 0
    %3122 = vmatpush2.bf16.xpose.msra.mxu0 0
    %3123 = vmatprep.subr.bf16.mxu0 0
    %3124 = vmatpush2.bf16.xpose.msra.mxu0 0
    %3125 = vmatprep.subr.bf16.mxu0 0
    %3126 = vmatpush2.bf16.xpose.msra.mxu0 0
    %3127 = vmatprep.subr.bf16.mxu0 0
    %3128 = vmatpush2.bf16.xpose.msra.mxu0 0
    %3129 = vmatprep.subr.bf16.mxu0 0
    %3130 = vmatpush2.bf16.xpose.msra.mxu0 0
    %3131 = vmatprep.mubr.bf16.mxu0 0
    %3132 = vmatmul.mubr.bf16.gmra.mxu0 %v3052
    %v3133 = vpop.f32.mrf.mxu0
    %v3134 = vadd.f32 %v764, %v3133
    %v3135 = vpop.f32.mrf.mxu0
    %v3136 = vpop.f32.mrf.mxu0
    %v3137 = vadd.f32 %v764, %v3136
    %v3138 = vpop.f32.mrf.mxu0
    %3139 = vmatprep.mubr.bf16.mxu0 0
    %3140 = vmatmul.mubr.bf16.gmra.mxu0 %v3055
    %v3141 = vpop.f32.mrf.mxu0
    %v3142 = vadd.f32 %v764, %v3141
    %v3143 = vpop.f32.mrf.mxu0
    %v3144 = vpop.f32.mrf.mxu0
    %v3145 = vadd.f32 %v764, %v3144
    %v3146 = vpop.f32.mrf.mxu0
    %3147 = vmatprep.mubr.bf16.mxu0 0
    %3148 = vmatmul.mubr.bf16.gmra.mxu0 %v3058
    %v3149 = vpop.f32.mrf.mxu0
    %v3150 = vadd.f32 %v764, %v3149
    %v3151 = vpop.f32.mrf.mxu0
    %v3152 = vpop.f32.mrf.mxu0
    %v3153 = vadd.f32 %v764, %v3152
    %v3154 = vpop.f32.mrf.mxu0
    %3155 = vmatprep.mubr.bf16.mxu0 0
    %3156 = vmatmul.mubr.bf16.gmra.mxu0 %v3061
    %v3157 = vpop.f32.mrf.mxu0
    %v3158 = vadd.f32 %v764, %v3157
    %v3159 = vpop.f32.mrf.mxu0
    %v3160 = vpop.f32.mrf.mxu0
    %v3161 = vadd.f32 %v764, %v3160
    %v3162 = vpop.f32.mrf.mxu0
    %3163 = vmatprep.mubr.bf16.mxu0 0
    %3164 = vmatmul.mubr.bf16.gmra.mxu0 %v3064
    %v3165 = vpop.f32.mrf.mxu0
    %v3166 = vadd.f32 %v764, %v3165
    %v3167 = vpop.f32.mrf.mxu0
    %v3168 = vpop.f32.mrf.mxu0
    %v3169 = vadd.f32 %v764, %v3168
    %v3170 = vpop.f32.mrf.mxu0
    %3171 = vmatprep.mubr.bf16.mxu0 0
    %3172 = vmatmul.mubr.bf16.gmra.mxu0 %v3067
    %v3173 = vpop.f32.mrf.mxu0
    %v3174 = vadd.f32 %v764, %v3173
    %v3175 = vpop.f32.mrf.mxu0
    %v3176 = vpop.f32.mrf.mxu0
    %v3177 = vadd.f32 %v764, %v3176
    %v3178 = vpop.f32.mrf.mxu0
    %3179 = vmatprep.mubr.bf16.mxu0 0
    %3180 = vmatmul.mubr.bf16.gmra.mxu0 %v3070
    %v3181 = vpop.f32.mrf.mxu0
    %v3182 = vadd.f32 %v764, %v3181
    %v3183 = vpop.f32.mrf.mxu0
    %v3184 = vpop.f32.mrf.mxu0
    %v3185 = vadd.f32 %v764, %v3184
    %v3186 = vpop.f32.mrf.mxu0
    %3187 = vmatprep.mubr.bf16.mxu0 0
    %3188 = vmatmul.mubr.bf16.gmra.mxu0 %v3073
    %v3189 = vpop.f32.mrf.mxu0
    %v3190 = vadd.f32 %v764, %v3189
    %v3191 = vpop.f32.mrf.mxu0
    %v3192 = vpop.f32.mrf.mxu0
    %v3193 = vadd.f32 %v764, %v3192
    %v3194 = vpop.f32.mrf.mxu0
    %3195 = vdwg.mxu0
    %3196 = vmax.xlane.f32.xlu0 %v3134
    %v3197 = vpop.xlane.xlu0 %3196
    %3198 = vmax.xlane.f32.xlu0 %v3137
    %v3199 = vpop.xlane.xlu0 %3198
    %3200 = vmax.xlane.f32.xlu0 %v3142
    %v3201 = vpop.xlane.xlu0 %3200
    %3202 = vmax.xlane.f32.xlu0 %v3145
    %v3203 = vpop.xlane.xlu0 %3202
    %3204 = vmax.xlane.f32.xlu0 %v3150
    %v3205 = vpop.xlane.xlu0 %3204
    %3206 = vmax.xlane.f32.xlu0 %v3153
    %v3207 = vpop.xlane.xlu0 %3206
    %3208 = vmax.xlane.f32.xlu0 %v3158
    %v3209 = vpop.xlane.xlu0 %3208
    %3210 = vmax.xlane.f32.xlu0 %v3161
    %v3211 = vpop.xlane.xlu0 %3210
    %3212 = vmax.xlane.f32.xlu0 %v3166
    %v3213 = vpop.xlane.xlu0 %3212
    %3214 = vmax.xlane.f32.xlu0 %v3169
    %v3215 = vpop.xlane.xlu0 %3214
    %3216 = vmax.xlane.f32.xlu0 %v3174
    %v3217 = vpop.xlane.xlu0 %3216
    %3218 = vmax.xlane.f32.xlu0 %v3177
    %v3219 = vpop.xlane.xlu0 %3218
    %3220 = vmax.xlane.f32.xlu0 %v3182
    %v3221 = vpop.xlane.xlu0 %3220
    %3222 = vmax.xlane.f32.xlu0 %v3185
    %v3223 = vpop.xlane.xlu0 %3222
    %3224 = vmax.xlane.f32.xlu0 %v3190
    %v3225 = vpop.xlane.xlu0 %3224
    %3226 = vmax.xlane.f32.xlu0 %v3193
    %v3227 = vpop.xlane.xlu0 %3226
    %v3228 = vsub.f32 %v3134, %v3197
    %v3229 = vsub.f32 %v3137, %v3199
    %v3230 = vsub.f32 %v3142, %v3201
    %v3231 = vsub.f32 %v3145, %v3203
    %v3232 = vsub.f32 %v3150, %v3205
    %v3233 = vsub.f32 %v3153, %v3207
    %v3234 = vsub.f32 %v3158, %v3209
    %v3235 = vsub.f32 %v3161, %v3211
    %v3236 = vsub.f32 %v3166, %v3213
    %v3237 = vsub.f32 %v3169, %v3215
    %v3238 = vsub.f32 %v3174, %v3217
    %v3239 = vsub.f32 %v3177, %v3219
    %v3240 = vsub.f32 %v3182, %v3221
    %v3241 = vsub.f32 %v3185, %v3223
    %v3242 = vsub.f32 %v3190, %v3225
    %v3243 = vsub.f32 %v3193, %v3227
    %v3244 = vmul.f32 %v3228, 1.442695
    %v3245 = vpow.pop %v3244
    %v3246 = vmul.f32 %v3229, 1.442695
    %v3247 = vpow.pop %v3246
    %v3248 = vmul.f32 %v3230, 1.442695
    %v3249 = vpow.pop %v3248
    %v3250 = vmul.f32 %v3231, 1.442695
    %v3251 = vpow.pop %v3250
    %v3252 = vmul.f32 %v3232, 1.442695
    %v3253 = vpow.pop %v3252
    %v3254 = vmul.f32 %v3233, 1.442695
    %v3255 = vpow.pop %v3254
    %v3256 = vmul.f32 %v3234, 1.442695
    %v3257 = vpow.pop %v3256
    %v3258 = vmul.f32 %v3235, 1.442695
    %v3259 = vpow.pop %v3258
    %v3260 = vmul.f32 %v3236, 1.442695
    %v3261 = vpow.pop %v3260
    %v3262 = vmul.f32 %v3237, 1.442695
    %v3263 = vpow.pop %v3262
    %v3264 = vmul.f32 %v3238, 1.442695
    %v3265 = vpow.pop %v3264
    %v3266 = vmul.f32 %v3239, 1.442695
    %v3267 = vpow.pop %v3266
    %v3268 = vmul.f32 %v3240, 1.442695
    %v3269 = vpow.pop %v3268
    %v3270 = vmul.f32 %v3241, 1.442695
    %v3271 = vpow.pop %v3270
    %v3272 = vmul.f32 %v3242, 1.442695
    %v3273 = vpow.pop %v3272
    %v3274 = vmul.f32 %v3243, 1.442695
    %v3275 = vpow.pop %v3274
    %3276 = vadd.xlane.f32.xlu0 %v3245
    %v3277 = vpop.xlane.xlu0 %3276
    %3278 = vadd.xlane.f32.xlu0 %v3247
    %v3279 = vpop.xlane.xlu0 %3278
    %3280 = vadd.xlane.f32.xlu0 %v3249
    %v3281 = vpop.xlane.xlu0 %3280
    %3282 = vadd.xlane.f32.xlu0 %v3251
    %v3283 = vpop.xlane.xlu0 %3282
    %3284 = vadd.xlane.f32.xlu0 %v3253
    %v3285 = vpop.xlane.xlu0 %3284
    %3286 = vadd.xlane.f32.xlu0 %v3255
    %v3287 = vpop.xlane.xlu0 %3286
    %3288 = vadd.xlane.f32.xlu0 %v3257
    %v3289 = vpop.xlane.xlu0 %3288
    %3290 = vadd.xlane.f32.xlu0 %v3259
    %v3291 = vpop.xlane.xlu0 %3290
    %3292 = vadd.xlane.f32.xlu0 %v3261
    %v3293 = vpop.xlane.xlu0 %3292
    %3294 = vadd.xlane.f32.xlu0 %v3263
    %v3295 = vpop.xlane.xlu0 %3294
    %3296 = vadd.xlane.f32.xlu0 %v3265
    %v3297 = vpop.xlane.xlu0 %3296
    %3298 = vadd.xlane.f32.xlu0 %v3267
    %v3299 = vpop.xlane.xlu0 %3298
    %3300 = vadd.xlane.f32.xlu0 %v3269
    %v3301 = vpop.xlane.xlu0 %3300
    %3302 = vadd.xlane.f32.xlu0 %v3271
    %v3303 = vpop.xlane.xlu0 %3302
    %3304 = vadd.xlane.f32.xlu0 %v3273
    %v3305 = vpop.xlane.xlu0 %3304
    %3306 = vadd.xlane.f32.xlu0 %v3275
    %v3307 = vpop.xlane.xlu0 %3306
    %v3308 = vrcp.pop %v3277
    %v3309 = vrcp.pop %v3279
    %v3310 = vrcp.pop %v3281
    %v3311 = vrcp.pop %v3283
    %v3312 = vrcp.pop %v3285
    %v3313 = vrcp.pop %v3287
    %v3314 = vrcp.pop %v3289
    %v3315 = vrcp.pop %v3291
    %v3316 = vrcp.pop %v3293
    %v3317 = vrcp.pop %v3295
    %v3318 = vrcp.pop %v3297
    %v3319 = vrcp.pop %v3299
    %v3320 = vrcp.pop %v3301
    %v3321 = vrcp.pop %v3303
    %v3322 = vrcp.pop %v3305
    %v3323 = vrcp.pop %v3307
    %v3324 = vmul.f32 %v3245, %v3308
    %v3325 = vmul.f32 %v3247, %v3309
    %v3326 = vmul.f32 %v3249, %v3310
    %v3327 = vmul.f32 %v3251, %v3311
    %v3328 = vmul.f32 %v3253, %v3312
    %v3329 = vmul.f32 %v3255, %v3313
    %v3330 = vmul.f32 %v3257, %v3314
    %v3331 = vmul.f32 %v3259, %v3315
    %v3332 = vmul.f32 %v3261, %v3316
    %v3333 = vmul.f32 %v3263, %v3317
    %v3334 = vmul.f32 %v3265, %v3318
    %v3335 = vmul.f32 %v3267, %v3319
    %v3336 = vmul.f32 %v3269, %v3320
    %v3337 = vmul.f32 %v3271, %v3321
    %v3338 = vmul.f32 %v3273, %v3322
    %v3339 = vmul.f32 %v3275, %v3323
    %v3340 = vpack.c.bf16 %v3325, %v3324
    %v3341 = vpack.c.bf16 %v3327, %v3326
    %v3342 = vpack.c.bf16 %v3329, %v3328
    %v3343 = vpack.c.bf16 %v3331, %v3330
    %v3344 = vpack.c.bf16 %v3333, %v3332
    %v3345 = vpack.c.bf16 %v3335, %v3334
    %v3346 = vpack.c.bf16 %v3337, %v3336
    %v3347 = vpack.c.bf16 %v3339, %v3338
    %3348 = vrot.lane.b32.xlu0 %v743, 48
    %v3349 = vpop.permute.xlu0 %3348
    %3350 = vrot.lane.b32.xlu0 %v744, 48
    %v3351 = vpop.permute.xlu0 %3350
    %3352 = vrot.lane.b32.xlu0 %v745, 48
    %v3353 = vpop.permute.xlu0 %3352
    %3354 = vrot.lane.b32.xlu0 %v746, 48
    %v3355 = vpop.permute.xlu0 %3354
    %3356 = vrot.lane.b32.xlu0 %v747, 48
    %v3357 = vpop.permute.xlu0 %3356
    %3358 = vrot.lane.b32.xlu0 %v748, 48
    %v3359 = vpop.permute.xlu0 %3358
    %3360 = vrot.lane.b32.xlu0 %v749, 48
    %v3361 = vpop.permute.xlu0 %3360
    %3362 = vrot.lane.b32.xlu0 %v750, 48
    %v3363 = vpop.permute.xlu0 %3362
    %3372 = vmatprep.subr.bf16.mxu0 0
    %3373 = vmatpush1.bf16.msra.mxu0 %v3363
    %3374 = vmatprep.subr.bf16.mxu0 0
    %3375 = vmatpush1.bf16.msra.mxu0 %v3361
    %3376 = vmatprep.subr.bf16.mxu0 0
    %3377 = vmatpush1.bf16.msra.mxu0 %v3359
    %3378 = vmatprep.subr.bf16.mxu0 0
    %3379 = vmatpush1.bf16.msra.mxu0 %v3357
    %3380 = vmatprep.subr.bf16.mxu0 0
    %3381 = vmatpush1.bf16.msra.mxu0 %v3355
    %3382 = vmatprep.subr.bf16.mxu0 0
    %3383 = vmatpush1.bf16.msra.mxu0 %v3353
    %3384 = vmatprep.subr.bf16.mxu0 0
    %3385 = vmatpush1.bf16.msra.mxu0 %v3351
    %3386 = vmatprep.subr.bf16.mxu0 0
    %3387 = vmatpush1.bf16.msra.mxu0 %v3349
    %3388 = vmatprep.subr.bf16.mxu0 0
    %3389 = vmatpush2.bf16.msra.mxu0 0
    %3390 = vmatprep.subr.bf16.mxu0 0
    %3391 = vmatpush2.bf16.msra.mxu0 0
    %3392 = vmatprep.subr.bf16.mxu0 0
    %3393 = vmatpush2.bf16.msra.mxu0 0
    %3394 = vmatprep.subr.bf16.mxu0 0
    %3395 = vmatpush2.bf16.msra.mxu0 0
    %3396 = vmatprep.subr.bf16.mxu0 0
    %3397 = vmatpush2.bf16.msra.mxu0 0
    %3398 = vmatprep.subr.bf16.mxu0 0
    %3399 = vmatpush2.bf16.msra.mxu0 0
    %3400 = vmatprep.subr.bf16.mxu0 0
    %3401 = vmatpush2.bf16.msra.mxu0 0
    %3402 = vmatprep.subr.bf16.mxu0 0
    %3403 = vmatpush2.bf16.msra.mxu0 0
    %3404 = vmatprep.mubr.bf16.mxu0 0
    %3405 = vmatmul.mubr.bf16.gmra.mxu0 %v3340
    %v3406 = vpop.f32.mrf.mxu0
    %v3407 = vadd.f32 0.0, %v3406
    %v3408 = vpop.f32.mrf.mxu0
    %v3409 = vpop.f32.mrf.mxu0
    %v3410 = vadd.f32 0.0, %v3409
    %v3411 = vpop.f32.mrf.mxu0
    %3412 = vmatprep.mubr.bf16.mxu0 0
    %3413 = vmatmul.mubr.bf16.gmra.mxu0 %v3341
    %v3414 = vpop.f32.mrf.mxu0
    %v3415 = vadd.f32 0.0, %v3414
    %v3416 = vpop.f32.mrf.mxu0
    %v3417 = vpop.f32.mrf.mxu0
    %v3418 = vadd.f32 0.0, %v3417
    %v3419 = vpop.f32.mrf.mxu0
    %3420 = vmatprep.mubr.bf16.mxu0 0
    %3421 = vmatmul.mubr.bf16.gmra.mxu0 %v3342
    %v3422 = vpop.f32.mrf.mxu0
    %v3423 = vadd.f32 0.0, %v3422
    %v3424 = vpop.f32.mrf.mxu0
    %v3425 = vpop.f32.mrf.mxu0
    %v3426 = vadd.f32 0.0, %v3425
    %v3427 = vpop.f32.mrf.mxu0
    %3428 = vmatprep.mubr.bf16.mxu0 0
    %3429 = vmatmul.mubr.bf16.gmra.mxu0 %v3343
    %v3430 = vpop.f32.mrf.mxu0
    %v3431 = vadd.f32 0.0, %v3430
    %v3432 = vpop.f32.mrf.mxu0
    %v3433 = vpop.f32.mrf.mxu0
    %v3434 = vadd.f32 0.0, %v3433
    %v3435 = vpop.f32.mrf.mxu0
    %3436 = vmatprep.mubr.bf16.mxu0 0
    %3437 = vmatmul.mubr.bf16.gmra.mxu0 %v3344
    %v3438 = vpop.f32.mrf.mxu0
    %v3439 = vadd.f32 0.0, %v3438
    %v3440 = vpop.f32.mrf.mxu0
    %v3441 = vpop.f32.mrf.mxu0
    %v3442 = vadd.f32 0.0, %v3441
    %v3443 = vpop.f32.mrf.mxu0
    %3444 = vmatprep.mubr.bf16.mxu0 0
    %3445 = vmatmul.mubr.bf16.gmra.mxu0 %v3345
    %v3446 = vpop.f32.mrf.mxu0
    %v3447 = vadd.f32 0.0, %v3446
    %v3448 = vpop.f32.mrf.mxu0
    %v3449 = vpop.f32.mrf.mxu0
    %v3450 = vadd.f32 0.0, %v3449
    %v3451 = vpop.f32.mrf.mxu0
    %3452 = vmatprep.mubr.bf16.mxu0 0
    %3453 = vmatmul.mubr.bf16.gmra.mxu0 %v3346
    %v3454 = vpop.f32.mrf.mxu0
    %v3455 = vadd.f32 0.0, %v3454
    %v3456 = vpop.f32.mrf.mxu0
    %v3457 = vpop.f32.mrf.mxu0
    %v3458 = vadd.f32 0.0, %v3457
    %v3459 = vpop.f32.mrf.mxu0
    %3460 = vmatprep.mubr.bf16.mxu0 0
    %3461 = vmatmul.mubr.bf16.gmra.mxu0 %v3347
    %v3462 = vpop.f32.mrf.mxu0
    %v3463 = vadd.f32 0.0, %v3462
    %v3464 = vpop.f32.mrf.mxu0
    %v3465 = vpop.f32.mrf.mxu0
    %v3466 = vadd.f32 0.0, %v3465
    %v3467 = vpop.f32.mrf.mxu0
    %3468 = vdwg.mxu0
    %3469 = vrot.lane.b32.xlu0 %v751, 112
    %v3470 = vpop.permute.xlu0 %3469
    %3471 = vrot.lane.b32.xlu0 %v752, 112
    %v3472 = vpop.permute.xlu0 %3471
    %3473 = vrot.lane.b32.xlu0 %v753, 112
    %v3474 = vpop.permute.xlu0 %3473
    %3475 = vrot.lane.b32.xlu0 %v754, 112
    %v3476 = vpop.permute.xlu0 %3475
    %3477 = vrot.lane.b32.xlu0 %v755, 112
    %v3478 = vpop.permute.xlu0 %3477
    %3479 = vrot.lane.b32.xlu0 %v756, 112
    %v3480 = vpop.permute.xlu0 %3479
    %3481 = vrot.lane.b32.xlu0 %v757, 112
    %v3482 = vpop.permute.xlu0 %3481
    %3483 = vrot.lane.b32.xlu0 %v758, 112
    %v3484 = vpop.permute.xlu0 %3483
    %3485 = vrot.lane.b32.xlu0 %v751, 80
    %v3486 = vpop.permute.xlu0 %3485
    %3487 = vrot.lane.b32.xlu0 %v752, 80
    %v3488 = vpop.permute.xlu0 %3487
    %3489 = vrot.lane.b32.xlu0 %v753, 80
    %v3490 = vpop.permute.xlu0 %3489
    %3491 = vrot.lane.b32.xlu0 %v754, 80
    %v3492 = vpop.permute.xlu0 %3491
    %3493 = vrot.lane.b32.xlu0 %v755, 80
    %v3494 = vpop.permute.xlu0 %3493
    %3495 = vrot.lane.b32.xlu0 %v756, 80
    %v3496 = vpop.permute.xlu0 %3495
    %3497 = vrot.lane.b32.xlu0 %v757, 80
    %v3498 = vpop.permute.xlu0 %3497
    %3499 = vrot.lane.b32.xlu0 %v758, 80
    %v3500 = vpop.permute.xlu0 %3499
    %v3502 = vsel %vm790, %v3470, 0
    %v3505 = vsel %vm790, %v3472, 0
    %v3508 = vsel %vm790, %v3474, 0
    %v3511 = vsel %vm790, %v3476, 0
    %v3514 = vsel %vm790, %v3478, 0
    %v3517 = vsel %vm790, %v3480, 0
    %v3520 = vsel %vm790, %v3482, 0
    %v3523 = vsel %vm790, %v3484, 0
    %v3526 = vsel %vm790, %v3486, 0
    %v3529 = vsel %vm790, %v3488, 0
    %v3532 = vsel %vm790, %v3490, 0
    %v3535 = vsel %vm790, %v3492, 0
    %v3538 = vsel %vm790, %v3494, 0
    %v3541 = vsel %vm790, %v3496, 0
    %v3544 = vsel %vm790, %v3498, 0
    %v3547 = vsel %vm790, %v3500, 0
    %3549 = vmatprep.subr.bf16.mxu0 0
    %3550 = vmatpush1.bf16.xpose.msra.mxu0 %v3547
    %3551 = vmatprep.subr.bf16.mxu0 0
    %3552 = vmatpush1.bf16.xpose.msra.mxu0 %v3544
    %3553 = vmatprep.subr.bf16.mxu0 0
    %3554 = vmatpush1.bf16.xpose.msra.mxu0 %v3541
    %3555 = vmatprep.subr.bf16.mxu0 0
    %3556 = vmatpush1.bf16.xpose.msra.mxu0 %v3538
    %3557 = vmatprep.subr.bf16.mxu0 0
    %3558 = vmatpush1.bf16.xpose.msra.mxu0 %v3535
    %3559 = vmatprep.subr.bf16.mxu0 0
    %3560 = vmatpush1.bf16.xpose.msra.mxu0 %v3532
    %3561 = vmatprep.subr.bf16.mxu0 0
    %3562 = vmatpush1.bf16.xpose.msra.mxu0 %v3529
    %3563 = vmatprep.subr.bf16.mxu0 0
    %3564 = vmatpush1.bf16.xpose.msra.mxu0 %v3526
    %3565 = vmatprep.subr.bf16.mxu0 0
    %3566 = vmatpush2.bf16.xpose.msra.mxu0 0
    %3567 = vmatprep.subr.bf16.mxu0 0
    %3568 = vmatpush2.bf16.xpose.msra.mxu0 0
    %3569 = vmatprep.subr.bf16.mxu0 0
    %3570 = vmatpush2.bf16.xpose.msra.mxu0 0
    %3571 = vmatprep.subr.bf16.mxu0 0
    %3572 = vmatpush2.bf16.xpose.msra.mxu0 0
    %3573 = vmatprep.subr.bf16.mxu0 0
    %3574 = vmatpush2.bf16.xpose.msra.mxu0 0
    %3575 = vmatprep.subr.bf16.mxu0 0
    %3576 = vmatpush2.bf16.xpose.msra.mxu0 0
    %3577 = vmatprep.subr.bf16.mxu0 0
    %3578 = vmatpush2.bf16.xpose.msra.mxu0 0
    %3579 = vmatprep.subr.bf16.mxu0 0
    %3580 = vmatpush2.bf16.xpose.msra.mxu0 0
    %3581 = vmatprep.mubr.bf16.mxu0 0
    %3582 = vmatmul.mubr.bf16.gmra.mxu0 %v3502
    %v3583 = vpop.f32.mrf.mxu0
    %v3584 = vadd.f32 %v1215, %v3583
    %v3585 = vpop.f32.mrf.mxu0
    %v3586 = vpop.f32.mrf.mxu0
    %v3587 = vadd.f32 %v1215, %v3586
    %v3588 = vpop.f32.mrf.mxu0
    %3589 = vmatprep.mubr.bf16.mxu0 0
    %3590 = vmatmul.mubr.bf16.gmra.mxu0 %v3505
    %v3591 = vpop.f32.mrf.mxu0
    %v3592 = vadd.f32 %v1215, %v3591
    %v3593 = vpop.f32.mrf.mxu0
    %v3594 = vpop.f32.mrf.mxu0
    %v3595 = vadd.f32 %v1215, %v3594
    %v3596 = vpop.f32.mrf.mxu0
    %3597 = vmatprep.mubr.bf16.mxu0 0
    %3598 = vmatmul.mubr.bf16.gmra.mxu0 %v3508
    %v3599 = vpop.f32.mrf.mxu0
    %v3600 = vadd.f32 %v1215, %v3599
    %v3601 = vpop.f32.mrf.mxu0
    %v3602 = vpop.f32.mrf.mxu0
    %v3603 = vadd.f32 %v1215, %v3602
    %v3604 = vpop.f32.mrf.mxu0
    %3605 = vmatprep.mubr.bf16.mxu0 0
    %3606 = vmatmul.mubr.bf16.gmra.mxu0 %v3511
    %v3607 = vpop.f32.mrf.mxu0
    %v3608 = vadd.f32 %v1215, %v3607
    %v3609 = vpop.f32.mrf.mxu0
    %v3610 = vpop.f32.mrf.mxu0
    %v3611 = vadd.f32 %v1215, %v3610
    %v3612 = vpop.f32.mrf.mxu0
    %3613 = vmatprep.mubr.bf16.mxu0 0
    %3614 = vmatmul.mubr.bf16.gmra.mxu0 %v3514
    %v3615 = vpop.f32.mrf.mxu0
    %v3616 = vadd.f32 %v1215, %v3615
    %v3617 = vpop.f32.mrf.mxu0
    %v3618 = vpop.f32.mrf.mxu0
    %v3619 = vadd.f32 %v1215, %v3618
    %v3620 = vpop.f32.mrf.mxu0
    %3621 = vmatprep.mubr.bf16.mxu0 0
    %3622 = vmatmul.mubr.bf16.gmra.mxu0 %v3517
    %v3623 = vpop.f32.mrf.mxu0
    %v3624 = vadd.f32 %v1215, %v3623
    %v3625 = vpop.f32.mrf.mxu0
    %v3626 = vpop.f32.mrf.mxu0
    %v3627 = vadd.f32 %v1215, %v3626
    %v3628 = vpop.f32.mrf.mxu0
    %3629 = vmatprep.mubr.bf16.mxu0 0
    %3630 = vmatmul.mubr.bf16.gmra.mxu0 %v3520
    %v3631 = vpop.f32.mrf.mxu0
    %v3632 = vadd.f32 %v1215, %v3631
    %v3633 = vpop.f32.mrf.mxu0
    %v3634 = vpop.f32.mrf.mxu0
    %v3635 = vadd.f32 %v1215, %v3634
    %v3636 = vpop.f32.mrf.mxu0
    %3637 = vmatprep.mubr.bf16.mxu0 0
    %3638 = vmatmul.mubr.bf16.gmra.mxu0 %v3523
    %v3639 = vpop.f32.mrf.mxu0
    %v3640 = vadd.f32 %v1215, %v3639
    %v3641 = vpop.f32.mrf.mxu0
    %v3642 = vpop.f32.mrf.mxu0
    %v3643 = vadd.f32 %v1215, %v3642
    %v3644 = vpop.f32.mrf.mxu0
    %3645 = vdwg.mxu0
    %3646 = vmax.xlane.f32.xlu0 %v3584
    %v3647 = vpop.xlane.xlu0 %3646
    %3648 = vmax.xlane.f32.xlu0 %v3587
    %v3649 = vpop.xlane.xlu0 %3648
    %3650 = vmax.xlane.f32.xlu0 %v3592
    %v3651 = vpop.xlane.xlu0 %3650
    %3652 = vmax.xlane.f32.xlu0 %v3595
    %v3653 = vpop.xlane.xlu0 %3652
    %3654 = vmax.xlane.f32.xlu0 %v3600
    %v3655 = vpop.xlane.xlu0 %3654
    %3656 = vmax.xlane.f32.xlu0 %v3603
    %v3657 = vpop.xlane.xlu0 %3656
    %3658 = vmax.xlane.f32.xlu0 %v3608
    %v3659 = vpop.xlane.xlu0 %3658
    %3660 = vmax.xlane.f32.xlu0 %v3611
    %v3661 = vpop.xlane.xlu0 %3660
    %3662 = vmax.xlane.f32.xlu0 %v3616
    %v3663 = vpop.xlane.xlu0 %3662
    %3664 = vmax.xlane.f32.xlu0 %v3619
    %v3665 = vpop.xlane.xlu0 %3664
    %3666 = vmax.xlane.f32.xlu0 %v3624
    %v3667 = vpop.xlane.xlu0 %3666
    %3668 = vmax.xlane.f32.xlu0 %v3627
    %v3669 = vpop.xlane.xlu0 %3668
    %3670 = vmax.xlane.f32.xlu0 %v3632
    %v3671 = vpop.xlane.xlu0 %3670
    %3672 = vmax.xlane.f32.xlu0 %v3635
    %v3673 = vpop.xlane.xlu0 %3672
    %3674 = vmax.xlane.f32.xlu0 %v3640
    %v3675 = vpop.xlane.xlu0 %3674
    %3676 = vmax.xlane.f32.xlu0 %v3643
    %v3677 = vpop.xlane.xlu0 %3676
    %v3678 = vsub.f32 %v3584, %v3647
    %v3679 = vsub.f32 %v3587, %v3649
    %v3680 = vsub.f32 %v3592, %v3651
    %v3681 = vsub.f32 %v3595, %v3653
    %v3682 = vsub.f32 %v3600, %v3655
    %v3683 = vsub.f32 %v3603, %v3657
    %v3684 = vsub.f32 %v3608, %v3659
    %v3685 = vsub.f32 %v3611, %v3661
    %v3686 = vsub.f32 %v3616, %v3663
    %v3687 = vsub.f32 %v3619, %v3665
    %v3688 = vsub.f32 %v3624, %v3667
    %v3689 = vsub.f32 %v3627, %v3669
    %v3690 = vsub.f32 %v3632, %v3671
    %v3691 = vsub.f32 %v3635, %v3673
    %v3692 = vsub.f32 %v3640, %v3675
    %v3693 = vsub.f32 %v3643, %v3677
    %v3694 = vmul.f32 %v3678, 1.442695
    %v3695 = vpow.pop %v3694
    %v3696 = vmul.f32 %v3679, 1.442695
    %v3697 = vpow.pop %v3696
    %v3698 = vmul.f32 %v3680, 1.442695
    %v3699 = vpow.pop %v3698
    %v3700 = vmul.f32 %v3681, 1.442695
    %v3701 = vpow.pop %v3700
    %v3702 = vmul.f32 %v3682, 1.442695
    %v3703 = vpow.pop %v3702
    %v3704 = vmul.f32 %v3683, 1.442695
    %v3705 = vpow.pop %v3704
    %v3706 = vmul.f32 %v3684, 1.442695
    %v3707 = vpow.pop %v3706
    %v3708 = vmul.f32 %v3685, 1.442695
    %v3709 = vpow.pop %v3708
    %v3710 = vmul.f32 %v3686, 1.442695
    %v3711 = vpow.pop %v3710
    %v3712 = vmul.f32 %v3687, 1.442695
    %v3713 = vpow.pop %v3712
    %v3714 = vmul.f32 %v3688, 1.442695
    %v3715 = vpow.pop %v3714
    %v3716 = vmul.f32 %v3689, 1.442695
    %v3717 = vpow.pop %v3716
    %v3718 = vmul.f32 %v3690, 1.442695
    %v3719 = vpow.pop %v3718
    %v3720 = vmul.f32 %v3691, 1.442695
    %v3721 = vpow.pop %v3720
    %v3722 = vmul.f32 %v3692, 1.442695
    %v3723 = vpow.pop %v3722
    %v3724 = vmul.f32 %v3693, 1.442695
    %v3725 = vpow.pop %v3724
    %3726 = vadd.xlane.f32.xlu0 %v3695
    %v3727 = vpop.xlane.xlu0 %3726
    %3728 = vadd.xlane.f32.xlu0 %v3697
    %v3729 = vpop.xlane.xlu0 %3728
    %3730 = vadd.xlane.f32.xlu0 %v3699
    %v3731 = vpop.xlane.xlu0 %3730
    %3732 = vadd.xlane.f32.xlu0 %v3701
    %v3733 = vpop.xlane.xlu0 %3732
    %3734 = vadd.xlane.f32.xlu0 %v3703
    %v3735 = vpop.xlane.xlu0 %3734
    %3736 = vadd.xlane.f32.xlu0 %v3705
    %v3737 = vpop.xlane.xlu0 %3736
    %3738 = vadd.xlane.f32.xlu0 %v3707
    %v3739 = vpop.xlane.xlu0 %3738
    %3740 = vadd.xlane.f32.xlu0 %v3709
    %v3741 = vpop.xlane.xlu0 %3740
    %3742 = vadd.xlane.f32.xlu0 %v3711
    %v3743 = vpop.xlane.xlu0 %3742
    %3744 = vadd.xlane.f32.xlu0 %v3713
    %v3745 = vpop.xlane.xlu0 %3744
    %3746 = vadd.xlane.f32.xlu0 %v3715
    %v3747 = vpop.xlane.xlu0 %3746
    %3748 = vadd.xlane.f32.xlu0 %v3717
    %v3749 = vpop.xlane.xlu0 %3748
    %3750 = vadd.xlane.f32.xlu0 %v3719
    %v3751 = vpop.xlane.xlu0 %3750
    %3752 = vadd.xlane.f32.xlu0 %v3721
    %v3753 = vpop.xlane.xlu0 %3752
    %3754 = vadd.xlane.f32.xlu0 %v3723
    %v3755 = vpop.xlane.xlu0 %3754
    %3756 = vadd.xlane.f32.xlu0 %v3725
    %v3757 = vpop.xlane.xlu0 %3756
    %v3758 = vrcp.pop %v3727
    %v3759 = vrcp.pop %v3729
    %v3760 = vrcp.pop %v3731
    %v3761 = vrcp.pop %v3733
    %v3762 = vrcp.pop %v3735
    %v3763 = vrcp.pop %v3737
    %v3764 = vrcp.pop %v3739
    %v3765 = vrcp.pop %v3741
    %v3766 = vrcp.pop %v3743
    %v3767 = vrcp.pop %v3745
    %v3768 = vrcp.pop %v3747
    %v3769 = vrcp.pop %v3749
    %v3770 = vrcp.pop %v3751
    %v3771 = vrcp.pop %v3753
    %v3772 = vrcp.pop %v3755
    %v3773 = vrcp.pop %v3757
    %v3774 = vmul.f32 %v3695, %v3758
    %v3775 = vmul.f32 %v3697, %v3759
    %v3776 = vmul.f32 %v3699, %v3760
    %v3777 = vmul.f32 %v3701, %v3761
    %v3778 = vmul.f32 %v3703, %v3762
    %v3779 = vmul.f32 %v3705, %v3763
    %v3780 = vmul.f32 %v3707, %v3764
    %v3781 = vmul.f32 %v3709, %v3765
    %v3782 = vmul.f32 %v3711, %v3766
    %v3783 = vmul.f32 %v3713, %v3767
    %v3784 = vmul.f32 %v3715, %v3768
    %v3785 = vmul.f32 %v3717, %v3769
    %v3786 = vmul.f32 %v3719, %v3770
    %v3787 = vmul.f32 %v3721, %v3771
    %v3788 = vmul.f32 %v3723, %v3772
    %v3789 = vmul.f32 %v3725, %v3773
    %v3790 = vpack.c.bf16 %v3775, %v3774
    %v3791 = vpack.c.bf16 %v3777, %v3776
    %v3792 = vpack.c.bf16 %v3779, %v3778
    %v3793 = vpack.c.bf16 %v3781, %v3780
    %v3794 = vpack.c.bf16 %v3783, %v3782
    %v3795 = vpack.c.bf16 %v3785, %v3784
    %v3796 = vpack.c.bf16 %v3787, %v3786
    %v3797 = vpack.c.bf16 %v3789, %v3788
    %3798 = vrot.lane.b32.xlu0 %v751, 48
    %v3799 = vpop.permute.xlu0 %3798
    %3800 = vrot.lane.b32.xlu0 %v752, 48
    %v3801 = vpop.permute.xlu0 %3800
    %3802 = vrot.lane.b32.xlu0 %v753, 48
    %v3803 = vpop.permute.xlu0 %3802
    %3804 = vrot.lane.b32.xlu0 %v754, 48
    %v3805 = vpop.permute.xlu0 %3804
    %3806 = vrot.lane.b32.xlu0 %v755, 48
    %v3807 = vpop.permute.xlu0 %3806
    %3808 = vrot.lane.b32.xlu0 %v756, 48
    %v3809 = vpop.permute.xlu0 %3808
    %3810 = vrot.lane.b32.xlu0 %v757, 48
    %v3811 = vpop.permute.xlu0 %3810
    %3812 = vrot.lane.b32.xlu0 %v758, 48
    %v3813 = vpop.permute.xlu0 %3812
    %3822 = vmatprep.subr.bf16.mxu0 0
    %3823 = vmatpush1.bf16.msra.mxu0 %v3813
    %3824 = vmatprep.subr.bf16.mxu0 0
    %3825 = vmatpush1.bf16.msra.mxu0 %v3811
    %3826 = vmatprep.subr.bf16.mxu0 0
    %3827 = vmatpush1.bf16.msra.mxu0 %v3809
    %3828 = vmatprep.subr.bf16.mxu0 0
    %3829 = vmatpush1.bf16.msra.mxu0 %v3807
    %3830 = vmatprep.subr.bf16.mxu0 0
    %3831 = vmatpush1.bf16.msra.mxu0 %v3805
    %3832 = vmatprep.subr.bf16.mxu0 0
    %3833 = vmatpush1.bf16.msra.mxu0 %v3803
    %3834 = vmatprep.subr.bf16.mxu0 0
    %3835 = vmatpush1.bf16.msra.mxu0 %v3801
    %3836 = vmatprep.subr.bf16.mxu0 0
    %3837 = vmatpush1.bf16.msra.mxu0 %v3799
    %3838 = vmatprep.subr.bf16.mxu0 0
    %3839 = vmatpush2.bf16.msra.mxu0 0
    %3840 = vmatprep.subr.bf16.mxu0 0
    %3841 = vmatpush2.bf16.msra.mxu0 0
    %3842 = vmatprep.subr.bf16.mxu0 0
    %3843 = vmatpush2.bf16.msra.mxu0 0
    %3844 = vmatprep.subr.bf16.mxu0 0
    %3845 = vmatpush2.bf16.msra.mxu0 0
    %3846 = vmatprep.subr.bf16.mxu0 0
    %3847 = vmatpush2.bf16.msra.mxu0 0
    %3848 = vmatprep.subr.bf16.mxu0 0
    %3849 = vmatpush2.bf16.msra.mxu0 0
    %3850 = vmatprep.subr.bf16.mxu0 0
    %3851 = vmatpush2.bf16.msra.mxu0 0
    %3852 = vmatprep.subr.bf16.mxu0 0
    %3853 = vmatpush2.bf16.msra.mxu0 0
    %3854 = vmatprep.mubr.bf16.mxu0 0
    %3855 = vmatmul.mubr.bf16.gmra.mxu0 %v3790
    %v3856 = vpop.f32.mrf.mxu0
    %v3857 = vadd.f32 0.0, %v3856
    %v3858 = vpop.f32.mrf.mxu0
    %v3859 = vpop.f32.mrf.mxu0
    %v3860 = vadd.f32 0.0, %v3859
    %v3861 = vpop.f32.mrf.mxu0
    %3862 = vmatprep.mubr.bf16.mxu0 0
    %3863 = vmatmul.mubr.bf16.gmra.mxu0 %v3791
    %v3864 = vpop.f32.mrf.mxu0
    %v3865 = vadd.f32 0.0, %v3864
    %v3866 = vpop.f32.mrf.mxu0
    %v3867 = vpop.f32.mrf.mxu0
    %v3868 = vadd.f32 0.0, %v3867
    %v3869 = vpop.f32.mrf.mxu0
    %3870 = vmatprep.mubr.bf16.mxu0 0
    %3871 = vmatmul.mubr.bf16.gmra.mxu0 %v3792
    %v3872 = vpop.f32.mrf.mxu0
    %v3873 = vadd.f32 0.0, %v3872
    %v3874 = vpop.f32.mrf.mxu0
    %v3875 = vpop.f32.mrf.mxu0
    %v3876 = vadd.f32 0.0, %v3875
    %v3877 = vpop.f32.mrf.mxu0
    %3878 = vmatprep.mubr.bf16.mxu0 0
    %3879 = vmatmul.mubr.bf16.gmra.mxu0 %v3793
    %v3880 = vpop.f32.mrf.mxu0
    %v3881 = vadd.f32 0.0, %v3880
    %v3882 = vpop.f32.mrf.mxu0
    %v3883 = vpop.f32.mrf.mxu0
    %v3884 = vadd.f32 0.0, %v3883
    %v3885 = vpop.f32.mrf.mxu0
    %3886 = vmatprep.mubr.bf16.mxu0 0
    %3887 = vmatmul.mubr.bf16.gmra.mxu0 %v3794
    %v3888 = vpop.f32.mrf.mxu0
    %v3889 = vadd.f32 0.0, %v3888
    %v3890 = vpop.f32.mrf.mxu0
    %v3891 = vpop.f32.mrf.mxu0
    %v3892 = vadd.f32 0.0, %v3891
    %v3893 = vpop.f32.mrf.mxu0
    %3894 = vmatprep.mubr.bf16.mxu0 0
    %3895 = vmatmul.mubr.bf16.gmra.mxu0 %v3795
    %v3896 = vpop.f32.mrf.mxu0
    %v3897 = vadd.f32 0.0, %v3896
    %v3898 = vpop.f32.mrf.mxu0
    %v3899 = vpop.f32.mrf.mxu0
    %v3900 = vadd.f32 0.0, %v3899
    %v3901 = vpop.f32.mrf.mxu0
    %3902 = vmatprep.mubr.bf16.mxu0 0
    %3903 = vmatmul.mubr.bf16.gmra.mxu0 %v3796
    %v3904 = vpop.f32.mrf.mxu0
    %v3905 = vadd.f32 0.0, %v3904
    %v3906 = vpop.f32.mrf.mxu0
    %v3907 = vpop.f32.mrf.mxu0
    %v3908 = vadd.f32 0.0, %v3907
    %v3909 = vpop.f32.mrf.mxu0
    %3910 = vmatprep.mubr.bf16.mxu0 0
    %3911 = vmatmul.mubr.bf16.gmra.mxu0 %v3797
    %v3912 = vpop.f32.mrf.mxu0
    %v3913 = vadd.f32 0.0, %v3912
    %v3914 = vpop.f32.mrf.mxu0
    %v3915 = vpop.f32.mrf.mxu0
    %v3916 = vadd.f32 0.0, %v3915
    %v3917 = vpop.f32.mrf.mxu0
    %3918 = vdwg.mxu0
    %v3919 = vpack.c.bf16 %v3410, %v3407
    %v3920 = vpack.c.bf16 %v3418, %v3415
    %v3921 = vpack.c.bf16 %v3426, %v3423
    %v3922 = vpack.c.bf16 %v3434, %v3431
    %v3923 = vpack.c.bf16 %v3442, %v3439
    %v3924 = vpack.c.bf16 %v3450, %v3447
    %v3925 = vpack.c.bf16 %v3458, %v3455
    %v3926 = vpack.c.bf16 %v3466, %v3463
    %v3927 = vpack.c.bf16 %v3860, %v3857
    %v3928 = vpack.c.bf16 %v3868, %v3865
    %v3929 = vpack.c.bf16 %v3876, %v3873
    %v3930 = vpack.c.bf16 %v3884, %v3881
    %v3931 = vpack.c.bf16 %v3892, %v3889
    %v3932 = vpack.c.bf16 %v3900, %v3897
    %v3933 = vpack.c.bf16 %v3908, %v3905
    %v3934 = vpack.c.bf16 %v3916, %v3913
    %s3935 = scalar_lea.vmem %s6, 8
    %v3936 = vld [vmem:[%s3935] sm:$0xf]
    %v3938 = vsel %vm790, %v3919, 0
    %v3941 = vsel %vm790, %v3920, 0
    %v3944 = vsel %vm790, %v3921, 0
    %v3947 = vsel %vm790, %v3922, 0
    %v3950 = vsel %vm790, %v3923, 0
    %v3953 = vsel %vm790, %v3924, 0
    %v3956 = vsel %vm790, %v3925, 0
    %v3959 = vsel %vm790, %v3926, 0
    %v3962 = vsel %vm790, %v3927, 0
    %v3965 = vsel %vm790, %v3928, 0
    %v3968 = vsel %vm790, %v3929, 0
    %v3971 = vsel %vm790, %v3930, 0
    %v3974 = vsel %vm790, %v3931, 0
    %v3977 = vsel %vm790, %v3932, 0
    %v3980 = vsel %vm790, %v3933, 0
    %v3983 = vsel %vm790, %v3934, 0
    %v3986 = vsel %vm2642, %v3936, 0
    %3988 = vmatprep.subr.bf16.mxu0 0
    %3989 = vmatpush1.bf16.msra.mxu0 0
    %3990 = vmatprep.subr.bf16.mxu0 0
    %3991 = vmatpush1.bf16.msra.mxu0 0
    %3992 = vmatprep.subr.bf16.mxu0 0
    %3993 = vmatpush1.bf16.msra.mxu0 0
    %3994 = vmatprep.subr.bf16.mxu0 0
    %3995 = vmatpush1.bf16.msra.mxu0 0
    %3996 = vmatprep.subr.bf16.mxu0 0
    %3997 = vmatpush1.bf16.msra.mxu0 0
    %3998 = vmatprep.subr.bf16.mxu0 0
    %3999 = vmatpush1.bf16.msra.mxu0 0
    %4000 = vmatprep.subr.bf16.mxu0 0
    %4001 = vmatpush1.bf16.msra.mxu0 0
    %4002 = vmatprep.subr.bf16.mxu0 0
    %4003 = vmatpush1.bf16.msra.mxu0 %v3986
    %4004 = vmatprep.subr.bf16.mxu0 0
    %4005 = vmatpush2.bf16.msra.mxu0 0
    %4006 = vmatprep.subr.bf16.mxu0 0
    %4007 = vmatpush2.bf16.msra.mxu0 0
    %4008 = vmatprep.subr.bf16.mxu0 0
    %4009 = vmatpush2.bf16.msra.mxu0 0
    %4010 = vmatprep.subr.bf16.mxu0 0
    %4011 = vmatpush2.bf16.msra.mxu0 0
    %4012 = vmatprep.subr.bf16.mxu0 0
    %4013 = vmatpush2.bf16.msra.mxu0 0
    %4014 = vmatprep.subr.bf16.mxu0 0
    %4015 = vmatpush2.bf16.msra.mxu0 0
    %4016 = vmatprep.subr.bf16.mxu0 0
    %4017 = vmatpush2.bf16.msra.mxu0 0
    %4018 = vmatprep.subr.bf16.mxu0 0
    %4019 = vmatpush2.bf16.msra.mxu0 0
    %4020 = vmatprep.mubr.bf16.mxu0 0
    %4021 = vmatmul.mubr.bf16.gmra.mxu0 %v3938
    %v4022 = vpop.f32.mrf.mxu0
    %v4023 = vadd.f32 0.0, %v4022
    %v4024 = vpop.f32.mrf.mxu0
    %v4025 = vpop.f32.mrf.mxu0
    %v4026 = vadd.f32 0.0, %v4025
    %v4027 = vpop.f32.mrf.mxu0
    %4028 = vmatprep.mubr.bf16.mxu0 0
    %4029 = vmatmul.mubr.bf16.gmra.mxu0 %v3941
    %v4030 = vpop.f32.mrf.mxu0
    %v4031 = vadd.f32 0.0, %v4030
    %v4032 = vpop.f32.mrf.mxu0
    %v4033 = vpop.f32.mrf.mxu0
    %v4034 = vadd.f32 0.0, %v4033
    %v4035 = vpop.f32.mrf.mxu0
    %4036 = vmatprep.mubr.bf16.mxu0 0
    %4037 = vmatmul.mubr.bf16.gmra.mxu0 %v3944
    %v4038 = vpop.f32.mrf.mxu0
    %v4039 = vadd.f32 0.0, %v4038
    %v4040 = vpop.f32.mrf.mxu0
    %v4041 = vpop.f32.mrf.mxu0
    %v4042 = vadd.f32 0.0, %v4041
    %v4043 = vpop.f32.mrf.mxu0
    %4044 = vmatprep.mubr.bf16.mxu0 0
    %4045 = vmatmul.mubr.bf16.gmra.mxu0 %v3947
    %v4046 = vpop.f32.mrf.mxu0
    %v4047 = vadd.f32 0.0, %v4046
    %v4048 = vpop.f32.mrf.mxu0
    %v4049 = vpop.f32.mrf.mxu0
    %v4050 = vadd.f32 0.0, %v4049
    %v4051 = vpop.f32.mrf.mxu0
    %4052 = vmatprep.mubr.bf16.mxu0 0
    %4053 = vmatmul.mubr.bf16.gmra.mxu0 %v3950
    %v4054 = vpop.f32.mrf.mxu0
    %v4055 = vadd.f32 0.0, %v4054
    %v4056 = vpop.f32.mrf.mxu0
    %v4057 = vpop.f32.mrf.mxu0
    %v4058 = vadd.f32 0.0, %v4057
    %v4059 = vpop.f32.mrf.mxu0
    %4060 = vmatprep.mubr.bf16.mxu0 0
    %4061 = vmatmul.mubr.bf16.gmra.mxu0 %v3953
    %v4062 = vpop.f32.mrf.mxu0
    %v4063 = vadd.f32 0.0, %v4062
    %v4064 = vpop.f32.mrf.mxu0
    %v4065 = vpop.f32.mrf.mxu0
    %v4066 = vadd.f32 0.0, %v4065
    %v4067 = vpop.f32.mrf.mxu0
    %4068 = vmatprep.mubr.bf16.mxu0 0
    %4069 = vmatmul.mubr.bf16.gmra.mxu0 %v3956
    %v4070 = vpop.f32.mrf.mxu0
    %v4071 = vadd.f32 0.0, %v4070
    %v4072 = vpop.f32.mrf.mxu0
    %v4073 = vpop.f32.mrf.mxu0
    %v4074 = vadd.f32 0.0, %v4073
    %v4075 = vpop.f32.mrf.mxu0
    %4076 = vmatprep.mubr.bf16.mxu0 0
    %4077 = vmatmul.mubr.bf16.gmra.mxu0 %v3959
    %v4078 = vpop.f32.mrf.mxu0
    %v4079 = vadd.f32 0.0, %v4078
    %v4080 = vpop.f32.mrf.mxu0
    %v4081 = vpop.f32.mrf.mxu0
    %v4082 = vadd.f32 0.0, %v4081
    %v4083 = vpop.f32.mrf.mxu0
    %4084 = vmatprep.mubr.bf16.mxu0 0
    %4085 = vmatmul.mubr.bf16.gmra.mxu0 %v3962
    %v4086 = vpop.f32.mrf.mxu0
    %v4087 = vadd.f32 0.0, %v4086
    %v4088 = vpop.f32.mrf.mxu0
    %v4089 = vpop.f32.mrf.mxu0
    %v4090 = vadd.f32 0.0, %v4089
    %v4091 = vpop.f32.mrf.mxu0
    %4092 = vmatprep.mubr.bf16.mxu0 0
    %4093 = vmatmul.mubr.bf16.gmra.mxu0 %v3965
    %v4094 = vpop.f32.mrf.mxu0
    %v4095 = vadd.f32 0.0, %v4094
    %v4096 = vpop.f32.mrf.mxu0
    %v4097 = vpop.f32.mrf.mxu0
    %v4098 = vadd.f32 0.0, %v4097
    %v4099 = vpop.f32.mrf.mxu0
    %4100 = vmatprep.mubr.bf16.mxu0 0
    %4101 = vmatmul.mubr.bf16.gmra.mxu0 %v3968
    %v4102 = vpop.f32.mrf.mxu0
    %v4103 = vadd.f32 0.0, %v4102
    %v4104 = vpop.f32.mrf.mxu0
    %v4105 = vpop.f32.mrf.mxu0
    %v4106 = vadd.f32 0.0, %v4105
    %v4107 = vpop.f32.mrf.mxu0
    %4108 = vmatprep.mubr.bf16.mxu0 0
    %4109 = vmatmul.mubr.bf16.gmra.mxu0 %v3971
    %v4110 = vpop.f32.mrf.mxu0
    %v4111 = vadd.f32 0.0, %v4110
    %v4112 = vpop.f32.mrf.mxu0
    %v4113 = vpop.f32.mrf.mxu0
    %v4114 = vadd.f32 0.0, %v4113
    %v4115 = vpop.f32.mrf.mxu0
    %4116 = vmatprep.mubr.bf16.mxu0 0
    %4117 = vmatmul.mubr.bf16.gmra.mxu0 %v3974
    %v4118 = vpop.f32.mrf.mxu0
    %v4119 = vadd.f32 0.0, %v4118
    %v4120 = vpop.f32.mrf.mxu0
    %v4121 = vpop.f32.mrf.mxu0
    %v4122 = vadd.f32 0.0, %v4121
    %v4123 = vpop.f32.mrf.mxu0
    %4124 = vmatprep.mubr.bf16.mxu0 0
    %4125 = vmatmul.mubr.bf16.gmra.mxu0 %v3977
    %v4126 = vpop.f32.mrf.mxu0
    %v4127 = vadd.f32 0.0, %v4126
    %v4128 = vpop.f32.mrf.mxu0
    %v4129 = vpop.f32.mrf.mxu0
    %v4130 = vadd.f32 0.0, %v4129
    %v4131 = vpop.f32.mrf.mxu0
    %4132 = vmatprep.mubr.bf16.mxu0 0
    %4133 = vmatmul.mubr.bf16.gmra.mxu0 %v3980
    %v4134 = vpop.f32.mrf.mxu0
    %v4135 = vadd.f32 0.0, %v4134
    %v4136 = vpop.f32.mrf.mxu0
    %v4137 = vpop.f32.mrf.mxu0
    %v4138 = vadd.f32 0.0, %v4137
    %v4139 = vpop.f32.mrf.mxu0
    %4140 = vmatprep.mubr.bf16.mxu0 0
    %4141 = vmatmul.mubr.bf16.gmra.mxu0 %v3983
    %v4142 = vpop.f32.mrf.mxu0
    %v4143 = vadd.f32 0.0, %v4142
    %v4144 = vpop.f32.mrf.mxu0
    %v4145 = vpop.f32.mrf.mxu0
    %v4146 = vadd.f32 0.0, %v4145
    %v4147 = vpop.f32.mrf.mxu0
    %4148 = vdwg.mxu0
    %v4149 = vadd.f32 %v2893, %v4023
    %v4150 = vadd.f32 %v2896, %v4026
    %v4151 = vadd.f32 %v2901, %v4031
    %v4152 = vadd.f32 %v2904, %v4034
    %v4153 = vadd.f32 %v2909, %v4039
    %v4154 = vadd.f32 %v2912, %v4042
    %v4155 = vadd.f32 %v2917, %v4047
    %v4156 = vadd.f32 %v2920, %v4050
    %v4157 = vadd.f32 %v2925, %v4055
    %v4158 = vadd.f32 %v2928, %v4058
    %v4159 = vadd.f32 %v2933, %v4063
    %v4160 = vadd.f32 %v2936, %v4066
    %v4161 = vadd.f32 %v2941, %v4071
    %v4162 = vadd.f32 %v2944, %v4074
    %v4163 = vadd.f32 %v2949, %v4079
    %v4164 = vadd.f32 %v2952, %v4082
    %v4165 = vadd.f32 %v2957, %v4087
    %v4166 = vadd.f32 %v2960, %v4090
    %v4167 = vadd.f32 %v2965, %v4095
    %v4168 = vadd.f32 %v2968, %v4098
    %v4169 = vadd.f32 %v2973, %v4103
    %v4170 = vadd.f32 %v2976, %v4106
    %v4171 = vadd.f32 %v2981, %v4111
    %v4172 = vadd.f32 %v2984, %v4114
    %v4173 = vadd.f32 %v2989, %v4119
    %v4174 = vadd.f32 %v2992, %v4122
    %v4175 = vadd.f32 %v2997, %v4127
    %v4176 = vadd.f32 %v3000, %v4130
    %v4177 = vadd.f32 %v3005, %v4135
    %v4178 = vadd.f32 %v3008, %v4138
    %v4179 = vadd.f32 %v3013, %v4143
    %v4180 = vadd.f32 %v3016, %v4146
    %4181 = vrot.lane.b32.xlu0 %v743, 104
    %v4182 = vpop.permute.xlu0 %4181
    %4183 = vrot.lane.b32.xlu0 %v744, 104
    %v4184 = vpop.permute.xlu0 %4183
    %4185 = vrot.lane.b32.xlu0 %v745, 104
    %v4186 = vpop.permute.xlu0 %4185
    %4187 = vrot.lane.b32.xlu0 %v746, 104
    %v4188 = vpop.permute.xlu0 %4187
    %4189 = vrot.lane.b32.xlu0 %v747, 104
    %v4190 = vpop.permute.xlu0 %4189
    %4191 = vrot.lane.b32.xlu0 %v748, 104
    %v4192 = vpop.permute.xlu0 %4191
    %4193 = vrot.lane.b32.xlu0 %v749, 104
    %v4194 = vpop.permute.xlu0 %4193
    %4195 = vrot.lane.b32.xlu0 %v750, 104
    %v4196 = vpop.permute.xlu0 %4195
    %4197 = vrot.lane.b32.xlu0 %v743, 72
    %v4198 = vpop.permute.xlu0 %4197
    %4199 = vrot.lane.b32.xlu0 %v744, 72
    %v4200 = vpop.permute.xlu0 %4199
    %4201 = vrot.lane.b32.xlu0 %v745, 72
    %v4202 = vpop.permute.xlu0 %4201
    %4203 = vrot.lane.b32.xlu0 %v746, 72
    %v4204 = vpop.permute.xlu0 %4203
    %4205 = vrot.lane.b32.xlu0 %v747, 72
    %v4206 = vpop.permute.xlu0 %4205
    %4207 = vrot.lane.b32.xlu0 %v748, 72
    %v4208 = vpop.permute.xlu0 %4207
    %4209 = vrot.lane.b32.xlu0 %v749, 72
    %v4210 = vpop.permute.xlu0 %4209
    %4211 = vrot.lane.b32.xlu0 %v750, 72
    %v4212 = vpop.permute.xlu0 %4211
    %v4214 = vsel %vm790, %v4182, 0
    %v4217 = vsel %vm790, %v4184, 0
    %v4220 = vsel %vm790, %v4186, 0
    %v4223 = vsel %vm790, %v4188, 0
    %v4226 = vsel %vm790, %v4190, 0
    %v4229 = vsel %vm790, %v4192, 0
    %v4232 = vsel %vm790, %v4194, 0
    %v4235 = vsel %vm790, %v4196, 0
    %v4238 = vsel %vm790, %v4198, 0
    %v4241 = vsel %vm790, %v4200, 0
    %v4244 = vsel %vm790, %v4202, 0
    %v4247 = vsel %vm790, %v4204, 0
    %v4250 = vsel %vm790, %v4206, 0
    %v4253 = vsel %vm790, %v4208, 0
    %v4256 = vsel %vm790, %v4210, 0
    %v4259 = vsel %vm790, %v4212, 0
    %4261 = vmatprep.subr.bf16.mxu0 0
    %4262 = vmatpush1.bf16.xpose.msra.mxu0 %v4259
    %4263 = vmatprep.subr.bf16.mxu0 0
    %4264 = vmatpush1.bf16.xpose.msra.mxu0 %v4256
    %4265 = vmatprep.subr.bf16.mxu0 0
    %4266 = vmatpush1.bf16.xpose.msra.mxu0 %v4253
    %4267 = vmatprep.subr.bf16.mxu0 0
    %4268 = vmatpush1.bf16.xpose.msra.mxu0 %v4250
    %4269 = vmatprep.subr.bf16.mxu0 0
    %4270 = vmatpush1.bf16.xpose.msra.mxu0 %v4247
    %4271 = vmatprep.subr.bf16.mxu0 0
    %4272 = vmatpush1.bf16.xpose.msra.mxu0 %v4244
    %4273 = vmatprep.subr.bf16.mxu0 0
    %4274 = vmatpush1.bf16.xpose.msra.mxu0 %v4241
    %4275 = vmatprep.subr.bf16.mxu0 0
    %4276 = vmatpush1.bf16.xpose.msra.mxu0 %v4238
    %4277 = vmatprep.subr.bf16.mxu0 0
    %4278 = vmatpush2.bf16.xpose.msra.mxu0 0
    %4279 = vmatprep.subr.bf16.mxu0 0
    %4280 = vmatpush2.bf16.xpose.msra.mxu0 0
    %4281 = vmatprep.subr.bf16.mxu0 0
    %4282 = vmatpush2.bf16.xpose.msra.mxu0 0
    %4283 = vmatprep.subr.bf16.mxu0 0
    %4284 = vmatpush2.bf16.xpose.msra.mxu0 0
    %4285 = vmatprep.subr.bf16.mxu0 0
    %4286 = vmatpush2.bf16.xpose.msra.mxu0 0
    %4287 = vmatprep.subr.bf16.mxu0 0
    %4288 = vmatpush2.bf16.xpose.msra.mxu0 0
    %4289 = vmatprep.subr.bf16.mxu0 0
    %4290 = vmatpush2.bf16.xpose.msra.mxu0 0
    %4291 = vmatprep.subr.bf16.mxu0 0
    %4292 = vmatpush2.bf16.xpose.msra.mxu0 0
    %4293 = vmatprep.mubr.bf16.mxu0 0
    %4294 = vmatmul.mubr.bf16.gmra.mxu0 %v4214
    %v4295 = vpop.f32.mrf.mxu0
    %v4296 = vadd.f32 %v764, %v4295
    %v4297 = vpop.f32.mrf.mxu0
    %v4298 = vpop.f32.mrf.mxu0
    %v4299 = vadd.f32 %v764, %v4298
    %v4300 = vpop.f32.mrf.mxu0
    %4301 = vmatprep.mubr.bf16.mxu0 0
    %4302 = vmatmul.mubr.bf16.gmra.mxu0 %v4217
    %v4303 = vpop.f32.mrf.mxu0
    %v4304 = vadd.f32 %v764, %v4303
    %v4305 = vpop.f32.mrf.mxu0
    %v4306 = vpop.f32.mrf.mxu0
    %v4307 = vadd.f32 %v764, %v4306
    %v4308 = vpop.f32.mrf.mxu0
    %4309 = vmatprep.mubr.bf16.mxu0 0
    %4310 = vmatmul.mubr.bf16.gmra.mxu0 %v4220
    %v4311 = vpop.f32.mrf.mxu0
    %v4312 = vadd.f32 %v764, %v4311
    %v4313 = vpop.f32.mrf.mxu0
    %v4314 = vpop.f32.mrf.mxu0
    %v4315 = vadd.f32 %v764, %v4314
    %v4316 = vpop.f32.mrf.mxu0
    %4317 = vmatprep.mubr.bf16.mxu0 0
    %4318 = vmatmul.mubr.bf16.gmra.mxu0 %v4223
    %v4319 = vpop.f32.mrf.mxu0
    %v4320 = vadd.f32 %v764, %v4319
    %v4321 = vpop.f32.mrf.mxu0
    %v4322 = vpop.f32.mrf.mxu0
    %v4323 = vadd.f32 %v764, %v4322
    %v4324 = vpop.f32.mrf.mxu0
    %4325 = vmatprep.mubr.bf16.mxu0 0
    %4326 = vmatmul.mubr.bf16.gmra.mxu0 %v4226
    %v4327 = vpop.f32.mrf.mxu0
    %v4328 = vadd.f32 %v764, %v4327
    %v4329 = vpop.f32.mrf.mxu0
    %v4330 = vpop.f32.mrf.mxu0
    %v4331 = vadd.f32 %v764, %v4330
    %v4332 = vpop.f32.mrf.mxu0
    %4333 = vmatprep.mubr.bf16.mxu0 0
    %4334 = vmatmul.mubr.bf16.gmra.mxu0 %v4229
    %v4335 = vpop.f32.mrf.mxu0
    %v4336 = vadd.f32 %v764, %v4335
    %v4337 = vpop.f32.mrf.mxu0
    %v4338 = vpop.f32.mrf.mxu0
    %v4339 = vadd.f32 %v764, %v4338
    %v4340 = vpop.f32.mrf.mxu0
    %4341 = vmatprep.mubr.bf16.mxu0 0
    %4342 = vmatmul.mubr.bf16.gmra.mxu0 %v4232
    %v4343 = vpop.f32.mrf.mxu0
    %v4344 = vadd.f32 %v764, %v4343
    %v4345 = vpop.f32.mrf.mxu0
    %v4346 = vpop.f32.mrf.mxu0
    %v4347 = vadd.f32 %v764, %v4346
    %v4348 = vpop.f32.mrf.mxu0
    %4349 = vmatprep.mubr.bf16.mxu0 0
    %4350 = vmatmul.mubr.bf16.gmra.mxu0 %v4235
    %v4351 = vpop.f32.mrf.mxu0
    %v4352 = vadd.f32 %v764, %v4351
    %v4353 = vpop.f32.mrf.mxu0
    %v4354 = vpop.f32.mrf.mxu0
    %v4355 = vadd.f32 %v764, %v4354
    %v4356 = vpop.f32.mrf.mxu0
    %4357 = vdwg.mxu0
    %4358 = vmax.xlane.f32.xlu0 %v4296
    %v4359 = vpop.xlane.xlu0 %4358
    %4360 = vmax.xlane.f32.xlu0 %v4299
    %v4361 = vpop.xlane.xlu0 %4360
    %4362 = vmax.xlane.f32.xlu0 %v4304
    %v4363 = vpop.xlane.xlu0 %4362
    %4364 = vmax.xlane.f32.xlu0 %v4307
    %v4365 = vpop.xlane.xlu0 %4364
    %4366 = vmax.xlane.f32.xlu0 %v4312
    %v4367 = vpop.xlane.xlu0 %4366
    %4368 = vmax.xlane.f32.xlu0 %v4315
    %v4369 = vpop.xlane.xlu0 %4368
    %4370 = vmax.xlane.f32.xlu0 %v4320
    %v4371 = vpop.xlane.xlu0 %4370
    %4372 = vmax.xlane.f32.xlu0 %v4323
    %v4373 = vpop.xlane.xlu0 %4372
    %4374 = vmax.xlane.f32.xlu0 %v4328
    %v4375 = vpop.xlane.xlu0 %4374
    %4376 = vmax.xlane.f32.xlu0 %v4331
    %v4377 = vpop.xlane.xlu0 %4376
    %4378 = vmax.xlane.f32.xlu0 %v4336
    %v4379 = vpop.xlane.xlu0 %4378
    %4380 = vmax.xlane.f32.xlu0 %v4339
    %v4381 = vpop.xlane.xlu0 %4380
    %4382 = vmax.xlane.f32.xlu0 %v4344
    %v4383 = vpop.xlane.xlu0 %4382
    %4384 = vmax.xlane.f32.xlu0 %v4347
    %v4385 = vpop.xlane.xlu0 %4384
    %4386 = vmax.xlane.f32.xlu0 %v4352
    %v4387 = vpop.xlane.xlu0 %4386
    %4388 = vmax.xlane.f32.xlu0 %v4355
    %v4389 = vpop.xlane.xlu0 %4388
    %v4390 = vsub.f32 %v4296, %v4359
    %v4391 = vsub.f32 %v4299, %v4361
    %v4392 = vsub.f32 %v4304, %v4363
    %v4393 = vsub.f32 %v4307, %v4365
    %v4394 = vsub.f32 %v4312, %v4367
    %v4395 = vsub.f32 %v4315, %v4369
    %v4396 = vsub.f32 %v4320, %v4371
    %v4397 = vsub.f32 %v4323, %v4373
    %v4398 = vsub.f32 %v4328, %v4375
    %v4399 = vsub.f32 %v4331, %v4377
    %v4400 = vsub.f32 %v4336, %v4379
    %v4401 = vsub.f32 %v4339, %v4381
    %v4402 = vsub.f32 %v4344, %v4383
    %v4403 = vsub.f32 %v4347, %v4385
    %v4404 = vsub.f32 %v4352, %v4387
    %v4405 = vsub.f32 %v4355, %v4389
    %v4406 = vmul.f32 %v4390, 1.442695
    %v4407 = vpow.pop %v4406
    %v4408 = vmul.f32 %v4391, 1.442695
    %v4409 = vpow.pop %v4408
    %v4410 = vmul.f32 %v4392, 1.442695
    %v4411 = vpow.pop %v4410
    %v4412 = vmul.f32 %v4393, 1.442695
    %v4413 = vpow.pop %v4412
    %v4414 = vmul.f32 %v4394, 1.442695
    %v4415 = vpow.pop %v4414
    %v4416 = vmul.f32 %v4395, 1.442695
    %v4417 = vpow.pop %v4416
    %v4418 = vmul.f32 %v4396, 1.442695
    %v4419 = vpow.pop %v4418
    %v4420 = vmul.f32 %v4397, 1.442695
    %v4421 = vpow.pop %v4420
    %v4422 = vmul.f32 %v4398, 1.442695
    %v4423 = vpow.pop %v4422
    %v4424 = vmul.f32 %v4399, 1.442695
    %v4425 = vpow.pop %v4424
    %v4426 = vmul.f32 %v4400, 1.442695
    %v4427 = vpow.pop %v4426
    %v4428 = vmul.f32 %v4401, 1.442695
    %v4429 = vpow.pop %v4428
    %v4430 = vmul.f32 %v4402, 1.442695
    %v4431 = vpow.pop %v4430
    %v4432 = vmul.f32 %v4403, 1.442695
    %v4433 = vpow.pop %v4432
    %v4434 = vmul.f32 %v4404, 1.442695
    %v4435 = vpow.pop %v4434
    %v4436 = vmul.f32 %v4405, 1.442695
    %v4437 = vpow.pop %v4436
    %4438 = vadd.xlane.f32.xlu0 %v4407
    %v4439 = vpop.xlane.xlu0 %4438
    %4440 = vadd.xlane.f32.xlu0 %v4409
    %v4441 = vpop.xlane.xlu0 %4440
    %4442 = vadd.xlane.f32.xlu0 %v4411
    %v4443 = vpop.xlane.xlu0 %4442
    %4444 = vadd.xlane.f32.xlu0 %v4413
    %v4445 = vpop.xlane.xlu0 %4444
    %4446 = vadd.xlane.f32.xlu0 %v4415
    %v4447 = vpop.xlane.xlu0 %4446
    %4448 = vadd.xlane.f32.xlu0 %v4417
    %v4449 = vpop.xlane.xlu0 %4448
    %4450 = vadd.xlane.f32.xlu0 %v4419
    %v4451 = vpop.xlane.xlu0 %4450
    %4452 = vadd.xlane.f32.xlu0 %v4421
    %v4453 = vpop.xlane.xlu0 %4452
    %4454 = vadd.xlane.f32.xlu0 %v4423
    %v4455 = vpop.xlane.xlu0 %4454
    %4456 = vadd.xlane.f32.xlu0 %v4425
    %v4457 = vpop.xlane.xlu0 %4456
    %4458 = vadd.xlane.f32.xlu0 %v4427
    %v4459 = vpop.xlane.xlu0 %4458
    %4460 = vadd.xlane.f32.xlu0 %v4429
    %v4461 = vpop.xlane.xlu0 %4460
    %4462 = vadd.xlane.f32.xlu0 %v4431
    %v4463 = vpop.xlane.xlu0 %4462
    %4464 = vadd.xlane.f32.xlu0 %v4433
    %v4465 = vpop.xlane.xlu0 %4464
    %4466 = vadd.xlane.f32.xlu0 %v4435
    %v4467 = vpop.xlane.xlu0 %4466
    %4468 = vadd.xlane.f32.xlu0 %v4437
    %v4469 = vpop.xlane.xlu0 %4468
    %v4470 = vrcp.pop %v4439
    %v4471 = vrcp.pop %v4441
    %v4472 = vrcp.pop %v4443
    %v4473 = vrcp.pop %v4445
    %v4474 = vrcp.pop %v4447
    %v4475 = vrcp.pop %v4449
    %v4476 = vrcp.pop %v4451
    %v4477 = vrcp.pop %v4453
    %v4478 = vrcp.pop %v4455
    %v4479 = vrcp.pop %v4457
    %v4480 = vrcp.pop %v4459
    %v4481 = vrcp.pop %v4461
    %v4482 = vrcp.pop %v4463
    %v4483 = vrcp.pop %v4465
    %v4484 = vrcp.pop %v4467
    %v4485 = vrcp.pop %v4469
    %v4486 = vmul.f32 %v4407, %v4470
    %v4487 = vmul.f32 %v4409, %v4471
    %v4488 = vmul.f32 %v4411, %v4472
    %v4489 = vmul.f32 %v4413, %v4473
    %v4490 = vmul.f32 %v4415, %v4474
    %v4491 = vmul.f32 %v4417, %v4475
    %v4492 = vmul.f32 %v4419, %v4476
    %v4493 = vmul.f32 %v4421, %v4477
    %v4494 = vmul.f32 %v4423, %v4478
    %v4495 = vmul.f32 %v4425, %v4479
    %v4496 = vmul.f32 %v4427, %v4480
    %v4497 = vmul.f32 %v4429, %v4481
    %v4498 = vmul.f32 %v4431, %v4482
    %v4499 = vmul.f32 %v4433, %v4483
    %v4500 = vmul.f32 %v4435, %v4484
    %v4501 = vmul.f32 %v4437, %v4485
    %v4502 = vpack.c.bf16 %v4487, %v4486
    %v4503 = vpack.c.bf16 %v4489, %v4488
    %v4504 = vpack.c.bf16 %v4491, %v4490
    %v4505 = vpack.c.bf16 %v4493, %v4492
    %v4506 = vpack.c.bf16 %v4495, %v4494
    %v4507 = vpack.c.bf16 %v4497, %v4496
    %v4508 = vpack.c.bf16 %v4499, %v4498
    %v4509 = vpack.c.bf16 %v4501, %v4500
    %4510 = vrot.lane.b32.xlu0 %v743, 40
    %v4511 = vpop.permute.xlu0 %4510
    %4512 = vrot.lane.b32.xlu0 %v744, 40
    %v4513 = vpop.permute.xlu0 %4512
    %4514 = vrot.lane.b32.xlu0 %v745, 40
    %v4515 = vpop.permute.xlu0 %4514
    %4516 = vrot.lane.b32.xlu0 %v746, 40
    %v4517 = vpop.permute.xlu0 %4516
    %4518 = vrot.lane.b32.xlu0 %v747, 40
    %v4519 = vpop.permute.xlu0 %4518
    %4520 = vrot.lane.b32.xlu0 %v748, 40
    %v4521 = vpop.permute.xlu0 %4520
    %4522 = vrot.lane.b32.xlu0 %v749, 40
    %v4523 = vpop.permute.xlu0 %4522
    %4524 = vrot.lane.b32.xlu0 %v750, 40
    %v4525 = vpop.permute.xlu0 %4524
    %4534 = vmatprep.subr.bf16.mxu0 0
    %4535 = vmatpush1.bf16.msra.mxu0 %v4525
    %4536 = vmatprep.subr.bf16.mxu0 0
    %4537 = vmatpush1.bf16.msra.mxu0 %v4523
    %4538 = vmatprep.subr.bf16.mxu0 0
    %4539 = vmatpush1.bf16.msra.mxu0 %v4521
    %4540 = vmatprep.subr.bf16.mxu0 0
    %4541 = vmatpush1.bf16.msra.mxu0 %v4519
    %4542 = vmatprep.subr.bf16.mxu0 0
    %4543 = vmatpush1.bf16.msra.mxu0 %v4517
    %4544 = vmatprep.subr.bf16.mxu0 0
    %4545 = vmatpush1.bf16.msra.mxu0 %v4515
    %4546 = vmatprep.subr.bf16.mxu0 0
    %4547 = vmatpush1.bf16.msra.mxu0 %v4513
    %4548 = vmatprep.subr.bf16.mxu0 0
    %4549 = vmatpush1.bf16.msra.mxu0 %v4511
    %4550 = vmatprep.subr.bf16.mxu0 0
    %4551 = vmatpush2.bf16.msra.mxu0 0
    %4552 = vmatprep.subr.bf16.mxu0 0
    %4553 = vmatpush2.bf16.msra.mxu0 0
    %4554 = vmatprep.subr.bf16.mxu0 0
    %4555 = vmatpush2.bf16.msra.mxu0 0
    %4556 = vmatprep.subr.bf16.mxu0 0
    %4557 = vmatpush2.bf16.msra.mxu0 0
    %4558 = vmatprep.subr.bf16.mxu0 0
    %4559 = vmatpush2.bf16.msra.mxu0 0
    %4560 = vmatprep.subr.bf16.mxu0 0
    %4561 = vmatpush2.bf16.msra.mxu0 0
    %4562 = vmatprep.subr.bf16.mxu0 0
    %4563 = vmatpush2.bf16.msra.mxu0 0
    %4564 = vmatprep.subr.bf16.mxu0 0
    %4565 = vmatpush2.bf16.msra.mxu0 0
    %4566 = vmatprep.mubr.bf16.mxu0 0
    %4567 = vmatmul.mubr.bf16.gmra.mxu0 %v4502
    %v4568 = vpop.f32.mrf.mxu0
    %v4569 = vadd.f32 0.0, %v4568
    %v4570 = vpop.f32.mrf.mxu0
    %v4571 = vpop.f32.mrf.mxu0
    %v4572 = vadd.f32 0.0, %v4571
    %v4573 = vpop.f32.mrf.mxu0
    %4574 = vmatprep.mubr.bf16.mxu0 0
    %4575 = vmatmul.mubr.bf16.gmra.mxu0 %v4503
    %v4576 = vpop.f32.mrf.mxu0
    %v4577 = vadd.f32 0.0, %v4576
    %v4578 = vpop.f32.mrf.mxu0
    %v4579 = vpop.f32.mrf.mxu0
    %v4580 = vadd.f32 0.0, %v4579
    %v4581 = vpop.f32.mrf.mxu0
    %4582 = vmatprep.mubr.bf16.mxu0 0
    %4583 = vmatmul.mubr.bf16.gmra.mxu0 %v4504
    %v4584 = vpop.f32.mrf.mxu0
    %v4585 = vadd.f32 0.0, %v4584
    %v4586 = vpop.f32.mrf.mxu0
    %v4587 = vpop.f32.mrf.mxu0
    %v4588 = vadd.f32 0.0, %v4587
    %v4589 = vpop.f32.mrf.mxu0
    %4590 = vmatprep.mubr.bf16.mxu0 0
    %4591 = vmatmul.mubr.bf16.gmra.mxu0 %v4505
    %v4592 = vpop.f32.mrf.mxu0
    %v4593 = vadd.f32 0.0, %v4592
    %v4594 = vpop.f32.mrf.mxu0
    %v4595 = vpop.f32.mrf.mxu0
    %v4596 = vadd.f32 0.0, %v4595
    %v4597 = vpop.f32.mrf.mxu0
    %4598 = vmatprep.mubr.bf16.mxu0 0
    %4599 = vmatmul.mubr.bf16.gmra.mxu0 %v4506
    %v4600 = vpop.f32.mrf.mxu0
    %v4601 = vadd.f32 0.0, %v4600
    %v4602 = vpop.f32.mrf.mxu0
    %v4603 = vpop.f32.mrf.mxu0
    %v4604 = vadd.f32 0.0, %v4603
    %v4605 = vpop.f32.mrf.mxu0
    %4606 = vmatprep.mubr.bf16.mxu0 0
    %4607 = vmatmul.mubr.bf16.gmra.mxu0 %v4507
    %v4608 = vpop.f32.mrf.mxu0
    %v4609 = vadd.f32 0.0, %v4608
    %v4610 = vpop.f32.mrf.mxu0
    %v4611 = vpop.f32.mrf.mxu0
    %v4612 = vadd.f32 0.0, %v4611
    %v4613 = vpop.f32.mrf.mxu0
    %4614 = vmatprep.mubr.bf16.mxu0 0
    %4615 = vmatmul.mubr.bf16.gmra.mxu0 %v4508
    %v4616 = vpop.f32.mrf.mxu0
    %v4617 = vadd.f32 0.0, %v4616
    %v4618 = vpop.f32.mrf.mxu0
    %v4619 = vpop.f32.mrf.mxu0
    %v4620 = vadd.f32 0.0, %v4619
    %v4621 = vpop.f32.mrf.mxu0
    %4622 = vmatprep.mubr.bf16.mxu0 0
    %4623 = vmatmul.mubr.bf16.gmra.mxu0 %v4509
    %v4624 = vpop.f32.mrf.mxu0
    %v4625 = vadd.f32 0.0, %v4624
    %v4626 = vpop.f32.mrf.mxu0
    %v4627 = vpop.f32.mrf.mxu0
    %v4628 = vadd.f32 0.0, %v4627
    %v4629 = vpop.f32.mrf.mxu0
    %4630 = vdwg.mxu0
    %4631 = vrot.lane.b32.xlu0 %v751, 104
    %v4632 = vpop.permute.xlu0 %4631
    %4633 = vrot.lane.b32.xlu0 %v752, 104
    %v4634 = vpop.permute.xlu0 %4633
    %4635 = vrot.lane.b32.xlu0 %v753, 104
    %v4636 = vpop.permute.xlu0 %4635
    %4637 = vrot.lane.b32.xlu0 %v754, 104
    %v4638 = vpop.permute.xlu0 %4637
    %4639 = vrot.lane.b32.xlu0 %v755, 104
    %v4640 = vpop.permute.xlu0 %4639
    %4641 = vrot.lane.b32.xlu0 %v756, 104
    %v4642 = vpop.permute.xlu0 %4641
    %4643 = vrot.lane.b32.xlu0 %v757, 104
    %v4644 = vpop.permute.xlu0 %4643
    %4645 = vrot.lane.b32.xlu0 %v758, 104
    %v4646 = vpop.permute.xlu0 %4645
    %4647 = vrot.lane.b32.xlu0 %v751, 72
    %v4648 = vpop.permute.xlu0 %4647
    %4649 = vrot.lane.b32.xlu0 %v752, 72
    %v4650 = vpop.permute.xlu0 %4649
    %4651 = vrot.lane.b32.xlu0 %v753, 72
    %v4652 = vpop.permute.xlu0 %4651
    %4653 = vrot.lane.b32.xlu0 %v754, 72
    %v4654 = vpop.permute.xlu0 %4653
    %4655 = vrot.lane.b32.xlu0 %v755, 72
    %v4656 = vpop.permute.xlu0 %4655
    %4657 = vrot.lane.b32.xlu0 %v756, 72
    %v4658 = vpop.permute.xlu0 %4657
    %4659 = vrot.lane.b32.xlu0 %v757, 72
    %v4660 = vpop.permute.xlu0 %4659
    %4661 = vrot.lane.b32.xlu0 %v758, 72
    %v4662 = vpop.permute.xlu0 %4661
    %v4664 = vsel %vm790, %v4632, 0
    %v4667 = vsel %vm790, %v4634, 0
    %v4670 = vsel %vm790, %v4636, 0
    %v4673 = vsel %vm790, %v4638, 0
    %v4676 = vsel %vm790, %v4640, 0
    %v4679 = vsel %vm790, %v4642, 0
    %v4682 = vsel %vm790, %v4644, 0
    %v4685 = vsel %vm790, %v4646, 0
    %v4688 = vsel %vm790, %v4648, 0
    %v4691 = vsel %vm790, %v4650, 0
    %v4694 = vsel %vm790, %v4652, 0
    %v4697 = vsel %vm790, %v4654, 0
    %v4700 = vsel %vm790, %v4656, 0
    %v4703 = vsel %vm790, %v4658, 0
    %v4706 = vsel %vm790, %v4660, 0
    %v4709 = vsel %vm790, %v4662, 0
    %4711 = vmatprep.subr.bf16.mxu0 0
    %4712 = vmatpush1.bf16.xpose.msra.mxu0 %v4709
    %4713 = vmatprep.subr.bf16.mxu0 0
    %4714 = vmatpush1.bf16.xpose.msra.mxu0 %v4706
    %4715 = vmatprep.subr.bf16.mxu0 0
    %4716 = vmatpush1.bf16.xpose.msra.mxu0 %v4703
    %4717 = vmatprep.subr.bf16.mxu0 0
    %4718 = vmatpush1.bf16.xpose.msra.mxu0 %v4700
    %4719 = vmatprep.subr.bf16.mxu0 0
    %4720 = vmatpush1.bf16.xpose.msra.mxu0 %v4697
    %4721 = vmatprep.subr.bf16.mxu0 0
    %4722 = vmatpush1.bf16.xpose.msra.mxu0 %v4694
    %4723 = vmatprep.subr.bf16.mxu0 0
    %4724 = vmatpush1.bf16.xpose.msra.mxu0 %v4691
    %4725 = vmatprep.subr.bf16.mxu0 0
    %4726 = vmatpush1.bf16.xpose.msra.mxu0 %v4688
    %4727 = vmatprep.subr.bf16.mxu0 0
    %4728 = vmatpush2.bf16.xpose.msra.mxu0 0
    %4729 = vmatprep.subr.bf16.mxu0 0
    %4730 = vmatpush2.bf16.xpose.msra.mxu0 0
    %4731 = vmatprep.subr.bf16.mxu0 0
    %4732 = vmatpush2.bf16.xpose.msra.mxu0 0
    %4733 = vmatprep.subr.bf16.mxu0 0
    %4734 = vmatpush2.bf16.xpose.msra.mxu0 0
    %4735 = vmatprep.subr.bf16.mxu0 0
    %4736 = vmatpush2.bf16.xpose.msra.mxu0 0
    %4737 = vmatprep.subr.bf16.mxu0 0
    %4738 = vmatpush2.bf16.xpose.msra.mxu0 0
    %4739 = vmatprep.subr.bf16.mxu0 0
    %4740 = vmatpush2.bf16.xpose.msra.mxu0 0
    %4741 = vmatprep.subr.bf16.mxu0 0
    %4742 = vmatpush2.bf16.xpose.msra.mxu0 0
    %4743 = vmatprep.mubr.bf16.mxu0 0
    %4744 = vmatmul.mubr.bf16.gmra.mxu0 %v4664
    %v4745 = vpop.f32.mrf.mxu0
    %v4746 = vadd.f32 %v1215, %v4745
    %v4747 = vpop.f32.mrf.mxu0
    %v4748 = vpop.f32.mrf.mxu0
    %v4749 = vadd.f32 %v1215, %v4748
    %v4750 = vpop.f32.mrf.mxu0
    %4751 = vmatprep.mubr.bf16.mxu0 0
    %4752 = vmatmul.mubr.bf16.gmra.mxu0 %v4667
    %v4753 = vpop.f32.mrf.mxu0
    %v4754 = vadd.f32 %v1215, %v4753
    %v4755 = vpop.f32.mrf.mxu0
    %v4756 = vpop.f32.mrf.mxu0
    %v4757 = vadd.f32 %v1215, %v4756
    %v4758 = vpop.f32.mrf.mxu0
    %4759 = vmatprep.mubr.bf16.mxu0 0
    %4760 = vmatmul.mubr.bf16.gmra.mxu0 %v4670
    %v4761 = vpop.f32.mrf.mxu0
    %v4762 = vadd.f32 %v1215, %v4761
    %v4763 = vpop.f32.mrf.mxu0
    %v4764 = vpop.f32.mrf.mxu0
    %v4765 = vadd.f32 %v1215, %v4764
    %v4766 = vpop.f32.mrf.mxu0
    %4767 = vmatprep.mubr.bf16.mxu0 0
    %4768 = vmatmul.mubr.bf16.gmra.mxu0 %v4673
    %v4769 = vpop.f32.mrf.mxu0
    %v4770 = vadd.f32 %v1215, %v4769
    %v4771 = vpop.f32.mrf.mxu0
    %v4772 = vpop.f32.mrf.mxu0
    %v4773 = vadd.f32 %v1215, %v4772
    %v4774 = vpop.f32.mrf.mxu0
    %4775 = vmatprep.mubr.bf16.mxu0 0
    %4776 = vmatmul.mubr.bf16.gmra.mxu0 %v4676
    %v4777 = vpop.f32.mrf.mxu0
    %v4778 = vadd.f32 %v1215, %v4777
    %v4779 = vpop.f32.mrf.mxu0
    %v4780 = vpop.f32.mrf.mxu0
    %v4781 = vadd.f32 %v1215, %v4780
    %v4782 = vpop.f32.mrf.mxu0
    %4783 = vmatprep.mubr.bf16.mxu0 0
    %4784 = vmatmul.mubr.bf16.gmra.mxu0 %v4679
    %v4785 = vpop.f32.mrf.mxu0
    %v4786 = vadd.f32 %v1215, %v4785
    %v4787 = vpop.f32.mrf.mxu0
    %v4788 = vpop.f32.mrf.mxu0
    %v4789 = vadd.f32 %v1215, %v4788
    %v4790 = vpop.f32.mrf.mxu0
    %4791 = vmatprep.mubr.bf16.mxu0 0
    %4792 = vmatmul.mubr.bf16.gmra.mxu0 %v4682
    %v4793 = vpop.f32.mrf.mxu0
    %v4794 = vadd.f32 %v1215, %v4793
    %v4795 = vpop.f32.mrf.mxu0
    %v4796 = vpop.f32.mrf.mxu0
    %v4797 = vadd.f32 %v1215, %v4796
    %v4798 = vpop.f32.mrf.mxu0
    %4799 = vmatprep.mubr.bf16.mxu0 0
    %4800 = vmatmul.mubr.bf16.gmra.mxu0 %v4685
    %v4801 = vpop.f32.mrf.mxu0
    %v4802 = vadd.f32 %v1215, %v4801
    %v4803 = vpop.f32.mrf.mxu0
    %v4804 = vpop.f32.mrf.mxu0
    %v4805 = vadd.f32 %v1215, %v4804
    %v4806 = vpop.f32.mrf.mxu0
    %4807 = vdwg.mxu0
    %4808 = vmax.xlane.f32.xlu0 %v4746
    %v4809 = vpop.xlane.xlu0 %4808
    %4810 = vmax.xlane.f32.xlu0 %v4749
    %v4811 = vpop.xlane.xlu0 %4810
    %4812 = vmax.xlane.f32.xlu0 %v4754
    %v4813 = vpop.xlane.xlu0 %4812
    %4814 = vmax.xlane.f32.xlu0 %v4757
    %v4815 = vpop.xlane.xlu0 %4814
    %4816 = vmax.xlane.f32.xlu0 %v4762
    %v4817 = vpop.xlane.xlu0 %4816
    %4818 = vmax.xlane.f32.xlu0 %v4765
    %v4819 = vpop.xlane.xlu0 %4818
    %4820 = vmax.xlane.f32.xlu0 %v4770
    %v4821 = vpop.xlane.xlu0 %4820
    %4822 = vmax.xlane.f32.xlu0 %v4773
    %v4823 = vpop.xlane.xlu0 %4822
    %4824 = vmax.xlane.f32.xlu0 %v4778
    %v4825 = vpop.xlane.xlu0 %4824
    %4826 = vmax.xlane.f32.xlu0 %v4781
    %v4827 = vpop.xlane.xlu0 %4826
    %4828 = vmax.xlane.f32.xlu0 %v4786
    %v4829 = vpop.xlane.xlu0 %4828
    %4830 = vmax.xlane.f32.xlu0 %v4789
    %v4831 = vpop.xlane.xlu0 %4830
    %4832 = vmax.xlane.f32.xlu0 %v4794
    %v4833 = vpop.xlane.xlu0 %4832
    %4834 = vmax.xlane.f32.xlu0 %v4797
    %v4835 = vpop.xlane.xlu0 %4834
    %4836 = vmax.xlane.f32.xlu0 %v4802
    %v4837 = vpop.xlane.xlu0 %4836
    %4838 = vmax.xlane.f32.xlu0 %v4805
    %v4839 = vpop.xlane.xlu0 %4838
    %v4840 = vsub.f32 %v4746, %v4809
    %v4841 = vsub.f32 %v4749, %v4811
    %v4842 = vsub.f32 %v4754, %v4813
    %v4843 = vsub.f32 %v4757, %v4815
    %v4844 = vsub.f32 %v4762, %v4817
    %v4845 = vsub.f32 %v4765, %v4819
    %v4846 = vsub.f32 %v4770, %v4821
    %v4847 = vsub.f32 %v4773, %v4823
    %v4848 = vsub.f32 %v4778, %v4825
    %v4849 = vsub.f32 %v4781, %v4827
    %v4850 = vsub.f32 %v4786, %v4829
    %v4851 = vsub.f32 %v4789, %v4831
    %v4852 = vsub.f32 %v4794, %v4833
    %v4853 = vsub.f32 %v4797, %v4835
    %v4854 = vsub.f32 %v4802, %v4837
    %v4855 = vsub.f32 %v4805, %v4839
    %v4856 = vmul.f32 %v4840, 1.442695
    %v4857 = vpow.pop %v4856
    %v4858 = vmul.f32 %v4841, 1.442695
    %v4859 = vpow.pop %v4858
    %v4860 = vmul.f32 %v4842, 1.442695
    %v4861 = vpow.pop %v4860
    %v4862 = vmul.f32 %v4843, 1.442695
    %v4863 = vpow.pop %v4862
    %v4864 = vmul.f32 %v4844, 1.442695
    %v4865 = vpow.pop %v4864
    %v4866 = vmul.f32 %v4845, 1.442695
    %v4867 = vpow.pop %v4866
    %v4868 = vmul.f32 %v4846, 1.442695
    %v4869 = vpow.pop %v4868
    %v4870 = vmul.f32 %v4847, 1.442695
    %v4871 = vpow.pop %v4870
    %v4872 = vmul.f32 %v4848, 1.442695
    %v4873 = vpow.pop %v4872
    %v4874 = vmul.f32 %v4849, 1.442695
    %v4875 = vpow.pop %v4874
    %v4876 = vmul.f32 %v4850, 1.442695
    %v4877 = vpow.pop %v4876
    %v4878 = vmul.f32 %v4851, 1.442695
    %v4879 = vpow.pop %v4878
    %v4880 = vmul.f32 %v4852, 1.442695
    %v4881 = vpow.pop %v4880
    %v4882 = vmul.f32 %v4853, 1.442695
    %v4883 = vpow.pop %v4882
    %v4884 = vmul.f32 %v4854, 1.442695
    %v4885 = vpow.pop %v4884
    %v4886 = vmul.f32 %v4855, 1.442695
    %v4887 = vpow.pop %v4886
    %4888 = vadd.xlane.f32.xlu0 %v4857
    %v4889 = vpop.xlane.xlu0 %4888
    %4890 = vadd.xlane.f32.xlu0 %v4859
    %v4891 = vpop.xlane.xlu0 %4890
    %4892 = vadd.xlane.f32.xlu0 %v4861
    %v4893 = vpop.xlane.xlu0 %4892
    %4894 = vadd.xlane.f32.xlu0 %v4863
    %v4895 = vpop.xlane.xlu0 %4894
    %4896 = vadd.xlane.f32.xlu0 %v4865
    %v4897 = vpop.xlane.xlu0 %4896
    %4898 = vadd.xlane.f32.xlu0 %v4867
    %v4899 = vpop.xlane.xlu0 %4898
    %4900 = vadd.xlane.f32.xlu0 %v4869
    %v4901 = vpop.xlane.xlu0 %4900
    %4902 = vadd.xlane.f32.xlu0 %v4871
    %v4903 = vpop.xlane.xlu0 %4902
    %4904 = vadd.xlane.f32.xlu0 %v4873
    %v4905 = vpop.xlane.xlu0 %4904
    %4906 = vadd.xlane.f32.xlu0 %v4875
    %v4907 = vpop.xlane.xlu0 %4906
    %4908 = vadd.xlane.f32.xlu0 %v4877
    %v4909 = vpop.xlane.xlu0 %4908
    %4910 = vadd.xlane.f32.xlu0 %v4879
    %v4911 = vpop.xlane.xlu0 %4910
    %4912 = vadd.xlane.f32.xlu0 %v4881
    %v4913 = vpop.xlane.xlu0 %4912
    %4914 = vadd.xlane.f32.xlu0 %v4883
    %v4915 = vpop.xlane.xlu0 %4914
    %4916 = vadd.xlane.f32.xlu0 %v4885
    %v4917 = vpop.xlane.xlu0 %4916
    %4918 = vadd.xlane.f32.xlu0 %v4887
    %v4919 = vpop.xlane.xlu0 %4918
    %v4920 = vrcp.pop %v4889
    %v4921 = vrcp.pop %v4891
    %v4922 = vrcp.pop %v4893
    %v4923 = vrcp.pop %v4895
    %v4924 = vrcp.pop %v4897
    %v4925 = vrcp.pop %v4899
    %v4926 = vrcp.pop %v4901
    %v4927 = vrcp.pop %v4903
    %v4928 = vrcp.pop %v4905
    %v4929 = vrcp.pop %v4907
    %v4930 = vrcp.pop %v4909
    %v4931 = vrcp.pop %v4911
    %v4932 = vrcp.pop %v4913
    %v4933 = vrcp.pop %v4915
    %v4934 = vrcp.pop %v4917
    %v4935 = vrcp.pop %v4919
    %v4936 = vmul.f32 %v4857, %v4920
    %v4937 = vmul.f32 %v4859, %v4921
    %v4938 = vmul.f32 %v4861, %v4922
    %v4939 = vmul.f32 %v4863, %v4923
    %v4940 = vmul.f32 %v4865, %v4924
    %v4941 = vmul.f32 %v4867, %v4925
    %v4942 = vmul.f32 %v4869, %v4926
    %v4943 = vmul.f32 %v4871, %v4927
    %v4944 = vmul.f32 %v4873, %v4928
    %v4945 = vmul.f32 %v4875, %v4929
    %v4946 = vmul.f32 %v4877, %v4930
    %v4947 = vmul.f32 %v4879, %v4931
    %v4948 = vmul.f32 %v4881, %v4932
    %v4949 = vmul.f32 %v4883, %v4933
    %v4950 = vmul.f32 %v4885, %v4934
    %v4951 = vmul.f32 %v4887, %v4935
    %v4952 = vpack.c.bf16 %v4937, %v4936
    %v4953 = vpack.c.bf16 %v4939, %v4938
    %v4954 = vpack.c.bf16 %v4941, %v4940
    %v4955 = vpack.c.bf16 %v4943, %v4942
    %v4956 = vpack.c.bf16 %v4945, %v4944
    %v4957 = vpack.c.bf16 %v4947, %v4946
    %v4958 = vpack.c.bf16 %v4949, %v4948
    %v4959 = vpack.c.bf16 %v4951, %v4950
    %4960 = vrot.lane.b32.xlu0 %v751, 40
    %v4961 = vpop.permute.xlu0 %4960
    %4962 = vrot.lane.b32.xlu0 %v752, 40
    %v4963 = vpop.permute.xlu0 %4962
    %4964 = vrot.lane.b32.xlu0 %v753, 40
    %v4965 = vpop.permute.xlu0 %4964
    %4966 = vrot.lane.b32.xlu0 %v754, 40
    %v4967 = vpop.permute.xlu0 %4966
    %4968 = vrot.lane.b32.xlu0 %v755, 40
    %v4969 = vpop.permute.xlu0 %4968
    %4970 = vrot.lane.b32.xlu0 %v756, 40
    %v4971 = vpop.permute.xlu0 %4970
    %4972 = vrot.lane.b32.xlu0 %v757, 40
    %v4973 = vpop.permute.xlu0 %4972
    %4974 = vrot.lane.b32.xlu0 %v758, 40
    %v4975 = vpop.permute.xlu0 %4974
    %4984 = vmatprep.subr.bf16.mxu0 0
    %4985 = vmatpush1.bf16.msra.mxu0 %v4975
    %4986 = vmatprep.subr.bf16.mxu0 0
    %4987 = vmatpush1.bf16.msra.mxu0 %v4973
    %4988 = vmatprep.subr.bf16.mxu0 0
    %4989 = vmatpush1.bf16.msra.mxu0 %v4971
    %4990 = vmatprep.subr.bf16.mxu0 0
    %4991 = vmatpush1.bf16.msra.mxu0 %v4969
    %4992 = vmatprep.subr.bf16.mxu0 0
    %4993 = vmatpush1.bf16.msra.mxu0 %v4967
    %4994 = vmatprep.subr.bf16.mxu0 0
    %4995 = vmatpush1.bf16.msra.mxu0 %v4965
    %4996 = vmatprep.subr.bf16.mxu0 0
    %4997 = vmatpush1.bf16.msra.mxu0 %v4963
    %4998 = vmatprep.subr.bf16.mxu0 0
    %4999 = vmatpush1.bf16.msra.mxu0 %v4961
    %5000 = vmatprep.subr.bf16.mxu0 0
    %5001 = vmatpush2.bf16.msra.mxu0 0
    %5002 = vmatprep.subr.bf16.mxu0 0
    %5003 = vmatpush2.bf16.msra.mxu0 0
    %5004 = vmatprep.subr.bf16.mxu0 0
    %5005 = vmatpush2.bf16.msra.mxu0 0
    %5006 = vmatprep.subr.bf16.mxu0 0
    %5007 = vmatpush2.bf16.msra.mxu0 0
    %5008 = vmatprep.subr.bf16.mxu0 0
    %5009 = vmatpush2.bf16.msra.mxu0 0
    %5010 = vmatprep.subr.bf16.mxu0 0
    %5011 = vmatpush2.bf16.msra.mxu0 0
    %5012 = vmatprep.subr.bf16.mxu0 0
    %5013 = vmatpush2.bf16.msra.mxu0 0
    %5014 = vmatprep.subr.bf16.mxu0 0
    %5015 = vmatpush2.bf16.msra.mxu0 0
    %5016 = vmatprep.mubr.bf16.mxu0 0
    %5017 = vmatmul.mubr.bf16.gmra.mxu0 %v4952
    %v5018 = vpop.f32.mrf.mxu0
    %v5019 = vadd.f32 0.0, %v5018
    %v5020 = vpop.f32.mrf.mxu0
    %v5021 = vpop.f32.mrf.mxu0
    %v5022 = vadd.f32 0.0, %v5021
    %v5023 = vpop.f32.mrf.mxu0
    %5024 = vmatprep.mubr.bf16.mxu0 0
    %5025 = vmatmul.mubr.bf16.gmra.mxu0 %v4953
    %v5026 = vpop.f32.mrf.mxu0
    %v5027 = vadd.f32 0.0, %v5026
    %v5028 = vpop.f32.mrf.mxu0
    %v5029 = vpop.f32.mrf.mxu0
    %v5030 = vadd.f32 0.0, %v5029
    %v5031 = vpop.f32.mrf.mxu0
    %5032 = vmatprep.mubr.bf16.mxu0 0
    %5033 = vmatmul.mubr.bf16.gmra.mxu0 %v4954
    %v5034 = vpop.f32.mrf.mxu0
    %v5035 = vadd.f32 0.0, %v5034
    %v5036 = vpop.f32.mrf.mxu0
    %v5037 = vpop.f32.mrf.mxu0
    %v5038 = vadd.f32 0.0, %v5037
    %v5039 = vpop.f32.mrf.mxu0
    %5040 = vmatprep.mubr.bf16.mxu0 0
    %5041 = vmatmul.mubr.bf16.gmra.mxu0 %v4955
    %v5042 = vpop.f32.mrf.mxu0
    %v5043 = vadd.f32 0.0, %v5042
    %v5044 = vpop.f32.mrf.mxu0
    %v5045 = vpop.f32.mrf.mxu0
    %v5046 = vadd.f32 0.0, %v5045
    %v5047 = vpop.f32.mrf.mxu0
    %5048 = vmatprep.mubr.bf16.mxu0 0
    %5049 = vmatmul.mubr.bf16.gmra.mxu0 %v4956
    %v5050 = vpop.f32.mrf.mxu0
    %v5051 = vadd.f32 0.0, %v5050
    %v5052 = vpop.f32.mrf.mxu0
    %v5053 = vpop.f32.mrf.mxu0
    %v5054 = vadd.f32 0.0, %v5053
    %v5055 = vpop.f32.mrf.mxu0
    %5056 = vmatprep.mubr.bf16.mxu0 0
    %5057 = vmatmul.mubr.bf16.gmra.mxu0 %v4957
    %v5058 = vpop.f32.mrf.mxu0
    %v5059 = vadd.f32 0.0, %v5058
    %v5060 = vpop.f32.mrf.mxu0
    %v5061 = vpop.f32.mrf.mxu0
    %v5062 = vadd.f32 0.0, %v5061
    %v5063 = vpop.f32.mrf.mxu0
    %5064 = vmatprep.mubr.bf16.mxu0 0
    %5065 = vmatmul.mubr.bf16.gmra.mxu0 %v4958
    %v5066 = vpop.f32.mrf.mxu0
    %v5067 = vadd.f32 0.0, %v5066
    %v5068 = vpop.f32.mrf.mxu0
    %v5069 = vpop.f32.mrf.mxu0
    %v5070 = vadd.f32 0.0, %v5069
    %v5071 = vpop.f32.mrf.mxu0
    %5072 = vmatprep.mubr.bf16.mxu0 0
    %5073 = vmatmul.mubr.bf16.gmra.mxu0 %v4959
    %v5074 = vpop.f32.mrf.mxu0
    %v5075 = vadd.f32 0.0, %v5074
    %v5076 = vpop.f32.mrf.mxu0
    %v5077 = vpop.f32.mrf.mxu0
    %v5078 = vadd.f32 0.0, %v5077
    %v5079 = vpop.f32.mrf.mxu0
    %5080 = vdwg.mxu0
    %v5081 = vpack.c.bf16 %v4572, %v4569
    %v5082 = vpack.c.bf16 %v4580, %v4577
    %v5083 = vpack.c.bf16 %v4588, %v4585
    %v5084 = vpack.c.bf16 %v4596, %v4593
    %v5085 = vpack.c.bf16 %v4604, %v4601
    %v5086 = vpack.c.bf16 %v4612, %v4609
    %v5087 = vpack.c.bf16 %v4620, %v4617
    %v5088 = vpack.c.bf16 %v4628, %v4625
    %v5089 = vpack.c.bf16 %v5022, %v5019
    %v5090 = vpack.c.bf16 %v5030, %v5027
    %v5091 = vpack.c.bf16 %v5038, %v5035
    %v5092 = vpack.c.bf16 %v5046, %v5043
    %v5093 = vpack.c.bf16 %v5054, %v5051
    %v5094 = vpack.c.bf16 %v5062, %v5059
    %v5095 = vpack.c.bf16 %v5070, %v5067
    %v5096 = vpack.c.bf16 %v5078, %v5075
    %s5097 = scalar_lea.vmem %s6, 12
    %v5098 = vld [vmem:[%s5097] sm:$0xf]
    %v5100 = vsel %vm790, %v5081, 0
    %v5103 = vsel %vm790, %v5082, 0
    %v5106 = vsel %vm790, %v5083, 0
    %v5109 = vsel %vm790, %v5084, 0
    %v5112 = vsel %vm790, %v5085, 0
    %v5115 = vsel %vm790, %v5086, 0
    %v5118 = vsel %vm790, %v5087, 0
    %v5121 = vsel %vm790, %v5088, 0
    %v5124 = vsel %vm790, %v5089, 0
    %v5127 = vsel %vm790, %v5090, 0
    %v5130 = vsel %vm790, %v5091, 0
    %v5133 = vsel %vm790, %v5092, 0
    %v5136 = vsel %vm790, %v5093, 0
    %v5139 = vsel %vm790, %v5094, 0
    %v5142 = vsel %vm790, %v5095, 0
    %v5145 = vsel %vm790, %v5096, 0
    %v5148 = vsel %vm2642, %v5098, 0
    %5150 = vmatprep.subr.bf16.mxu0 0
    %5151 = vmatpush1.bf16.msra.mxu0 0
    %5152 = vmatprep.subr.bf16.mxu0 0
    %5153 = vmatpush1.bf16.msra.mxu0 0
    %5154 = vmatprep.subr.bf16.mxu0 0
    %5155 = vmatpush1.bf16.msra.mxu0 0
    %5156 = vmatprep.subr.bf16.mxu0 0
    %5157 = vmatpush1.bf16.msra.mxu0 0
    %5158 = vmatprep.subr.bf16.mxu0 0
    %5159 = vmatpush1.bf16.msra.mxu0 0
    %5160 = vmatprep.subr.bf16.mxu0 0
    %5161 = vmatpush1.bf16.msra.mxu0 0
    %5162 = vmatprep.subr.bf16.mxu0 0
    %5163 = vmatpush1.bf16.msra.mxu0 0
    %5164 = vmatprep.subr.bf16.mxu0 0
    %5165 = vmatpush1.bf16.msra.mxu0 %v5148
    %5166 = vmatprep.subr.bf16.mxu0 0
    %5167 = vmatpush2.bf16.msra.mxu0 0
    %5168 = vmatprep.subr.bf16.mxu0 0
    %5169 = vmatpush2.bf16.msra.mxu0 0
    %5170 = vmatprep.subr.bf16.mxu0 0
    %5171 = vmatpush2.bf16.msra.mxu0 0
    %5172 = vmatprep.subr.bf16.mxu0 0
    %5173 = vmatpush2.bf16.msra.mxu0 0
    %5174 = vmatprep.subr.bf16.mxu0 0
    %5175 = vmatpush2.bf16.msra.mxu0 0
    %5176 = vmatprep.subr.bf16.mxu0 0
    %5177 = vmatpush2.bf16.msra.mxu0 0
    %5178 = vmatprep.subr.bf16.mxu0 0
    %5179 = vmatpush2.bf16.msra.mxu0 0
    %5180 = vmatprep.subr.bf16.mxu0 0
    %5181 = vmatpush2.bf16.msra.mxu0 0
    %5182 = vmatprep.mubr.bf16.mxu0 0
    %5183 = vmatmul.mubr.bf16.gmra.mxu0 %v5100
    %v5184 = vpop.f32.mrf.mxu0
    %v5185 = vadd.f32 0.0, %v5184
    %v5186 = vpop.f32.mrf.mxu0
    %v5187 = vpop.f32.mrf.mxu0
    %v5188 = vadd.f32 0.0, %v5187
    %v5189 = vpop.f32.mrf.mxu0
    %5190 = vmatprep.mubr.bf16.mxu0 0
    %5191 = vmatmul.mubr.bf16.gmra.mxu0 %v5103
    %v5192 = vpop.f32.mrf.mxu0
    %v5193 = vadd.f32 0.0, %v5192
    %v5194 = vpop.f32.mrf.mxu0
    %v5195 = vpop.f32.mrf.mxu0
    %v5196 = vadd.f32 0.0, %v5195
    %v5197 = vpop.f32.mrf.mxu0
    %5198 = vmatprep.mubr.bf16.mxu0 0
    %5199 = vmatmul.mubr.bf16.gmra.mxu0 %v5106
    %v5200 = vpop.f32.mrf.mxu0
    %v5201 = vadd.f32 0.0, %v5200
    %v5202 = vpop.f32.mrf.mxu0
    %v5203 = vpop.f32.mrf.mxu0
    %v5204 = vadd.f32 0.0, %v5203
    %v5205 = vpop.f32.mrf.mxu0
    %5206 = vmatprep.mubr.bf16.mxu0 0
    %5207 = vmatmul.mubr.bf16.gmra.mxu0 %v5109
    %v5208 = vpop.f32.mrf.mxu0
    %v5209 = vadd.f32 0.0, %v5208
    %v5210 = vpop.f32.mrf.mxu0
    %v5211 = vpop.f32.mrf.mxu0
    %v5212 = vadd.f32 0.0, %v5211
    %v5213 = vpop.f32.mrf.mxu0
    %5214 = vmatprep.mubr.bf16.mxu0 0
    %5215 = vmatmul.mubr.bf16.gmra.mxu0 %v5112
    %v5216 = vpop.f32.mrf.mxu0
    %v5217 = vadd.f32 0.0, %v5216
    %v5218 = vpop.f32.mrf.mxu0
    %v5219 = vpop.f32.mrf.mxu0
    %v5220 = vadd.f32 0.0, %v5219
    %v5221 = vpop.f32.mrf.mxu0
    %5222 = vmatprep.mubr.bf16.mxu0 0
    %5223 = vmatmul.mubr.bf16.gmra.mxu0 %v5115
    %v5224 = vpop.f32.mrf.mxu0
    %v5225 = vadd.f32 0.0, %v5224
    %v5226 = vpop.f32.mrf.mxu0
    %v5227 = vpop.f32.mrf.mxu0
    %v5228 = vadd.f32 0.0, %v5227
    %v5229 = vpop.f32.mrf.mxu0
    %5230 = vmatprep.mubr.bf16.mxu0 0
    %5231 = vmatmul.mubr.bf16.gmra.mxu0 %v5118
    %v5232 = vpop.f32.mrf.mxu0
    %v5233 = vadd.f32 0.0, %v5232
    %v5234 = vpop.f32.mrf.mxu0
    %v5235 = vpop.f32.mrf.mxu0
    %v5236 = vadd.f32 0.0, %v5235
    %v5237 = vpop.f32.mrf.mxu0
    %5238 = vmatprep.mubr.bf16.mxu0 0
    %5239 = vmatmul.mubr.bf16.gmra.mxu0 %v5121
    %v5240 = vpop.f32.mrf.mxu0
    %v5241 = vadd.f32 0.0, %v5240
    %v5242 = vpop.f32.mrf.mxu0
    %v5243 = vpop.f32.mrf.mxu0
    %v5244 = vadd.f32 0.0, %v5243
    %v5245 = vpop.f32.mrf.mxu0
    %5246 = vmatprep.mubr.bf16.mxu0 0
    %5247 = vmatmul.mubr.bf16.gmra.mxu0 %v5124
    %v5248 = vpop.f32.mrf.mxu0
    %v5249 = vadd.f32 0.0, %v5248
    %v5250 = vpop.f32.mrf.mxu0
    %v5251 = vpop.f32.mrf.mxu0
    %v5252 = vadd.f32 0.0, %v5251
    %v5253 = vpop.f32.mrf.mxu0
    %5254 = vmatprep.mubr.bf16.mxu0 0
    %5255 = vmatmul.mubr.bf16.gmra.mxu0 %v5127
    %v5256 = vpop.f32.mrf.mxu0
    %v5257 = vadd.f32 0.0, %v5256
    %v5258 = vpop.f32.mrf.mxu0
    %v5259 = vpop.f32.mrf.mxu0
    %v5260 = vadd.f32 0.0, %v5259
    %v5261 = vpop.f32.mrf.mxu0
    %5262 = vmatprep.mubr.bf16.mxu0 0
    %5263 = vmatmul.mubr.bf16.gmra.mxu0 %v5130
    %v5264 = vpop.f32.mrf.mxu0
    %v5265 = vadd.f32 0.0, %v5264
    %v5266 = vpop.f32.mrf.mxu0
    %v5267 = vpop.f32.mrf.mxu0
    %v5268 = vadd.f32 0.0, %v5267
    %v5269 = vpop.f32.mrf.mxu0
    %5270 = vmatprep.mubr.bf16.mxu0 0
    %5271 = vmatmul.mubr.bf16.gmra.mxu0 %v5133
    %v5272 = vpop.f32.mrf.mxu0
    %v5273 = vadd.f32 0.0, %v5272
    %v5274 = vpop.f32.mrf.mxu0
    %v5275 = vpop.f32.mrf.mxu0
    %v5276 = vadd.f32 0.0, %v5275
    %v5277 = vpop.f32.mrf.mxu0
    %5278 = vmatprep.mubr.bf16.mxu0 0
    %5279 = vmatmul.mubr.bf16.gmra.mxu0 %v5136
    %v5280 = vpop.f32.mrf.mxu0
    %v5281 = vadd.f32 0.0, %v5280
    %v5282 = vpop.f32.mrf.mxu0
    %v5283 = vpop.f32.mrf.mxu0
    %v5284 = vadd.f32 0.0, %v5283
    %v5285 = vpop.f32.mrf.mxu0
    %5286 = vmatprep.mubr.bf16.mxu0 0
    %5287 = vmatmul.mubr.bf16.gmra.mxu0 %v5139
    %v5288 = vpop.f32.mrf.mxu0
    %v5289 = vadd.f32 0.0, %v5288
    %v5290 = vpop.f32.mrf.mxu0
    %v5291 = vpop.f32.mrf.mxu0
    %v5292 = vadd.f32 0.0, %v5291
    %v5293 = vpop.f32.mrf.mxu0
    %5294 = vmatprep.mubr.bf16.mxu0 0
    %5295 = vmatmul.mubr.bf16.gmra.mxu0 %v5142
    %v5296 = vpop.f32.mrf.mxu0
    %v5297 = vadd.f32 0.0, %v5296
    %v5298 = vpop.f32.mrf.mxu0
    %v5299 = vpop.f32.mrf.mxu0
    %v5300 = vadd.f32 0.0, %v5299
    %v5301 = vpop.f32.mrf.mxu0
    %5302 = vmatprep.mubr.bf16.mxu0 0
    %5303 = vmatmul.mubr.bf16.gmra.mxu0 %v5145
    %v5304 = vpop.f32.mrf.mxu0
    %v5305 = vadd.f32 0.0, %v5304
    %v5306 = vpop.f32.mrf.mxu0
    %v5307 = vpop.f32.mrf.mxu0
    %v5308 = vadd.f32 0.0, %v5307
    %v5309 = vpop.f32.mrf.mxu0
    %5310 = vdwg.mxu0
    %v5311 = vadd.f32 %v4149, %v5185
    %v5312 = vadd.f32 %v4150, %v5188
    %v5313 = vadd.f32 %v4151, %v5193
    %v5314 = vadd.f32 %v4152, %v5196
    %v5315 = vadd.f32 %v4153, %v5201
    %v5316 = vadd.f32 %v4154, %v5204
    %v5317 = vadd.f32 %v4155, %v5209
    %v5318 = vadd.f32 %v4156, %v5212
    %v5319 = vadd.f32 %v4157, %v5217
    %v5320 = vadd.f32 %v4158, %v5220
    %v5321 = vadd.f32 %v4159, %v5225
    %v5322 = vadd.f32 %v4160, %v5228
    %v5323 = vadd.f32 %v4161, %v5233
    %v5324 = vadd.f32 %v4162, %v5236
    %v5325 = vadd.f32 %v4163, %v5241
    %v5326 = vadd.f32 %v4164, %v5244
    %v5327 = vadd.f32 %v4165, %v5249
    %v5328 = vadd.f32 %v4166, %v5252
    %v5329 = vadd.f32 %v4167, %v5257
    %v5330 = vadd.f32 %v4168, %v5260
    %v5331 = vadd.f32 %v4169, %v5265
    %v5332 = vadd.f32 %v4170, %v5268
    %v5333 = vadd.f32 %v4171, %v5273
    %v5334 = vadd.f32 %v4172, %v5276
    %v5335 = vadd.f32 %v4173, %v5281
    %v5336 = vadd.f32 %v4174, %v5284
    %v5337 = vadd.f32 %v4175, %v5289
    %v5338 = vadd.f32 %v4176, %v5292
    %v5339 = vadd.f32 %v4177, %v5297
    %v5340 = vadd.f32 %v4178, %v5300
    %v5341 = vadd.f32 %v4179, %v5305
    %v5342 = vadd.f32 %v4180, %v5308
    %v5343 = vadd.f32 %v462, %v5311
    %v5344 = vadd.f32 %v463, %v5312
    %v5345 = vadd.f32 %v464, %v5313
    %v5346 = vadd.f32 %v465, %v5314
    %v5347 = vadd.f32 %v466, %v5315
    %v5348 = vadd.f32 %v467, %v5316
    %v5349 = vadd.f32 %v468, %v5317
    %v5350 = vadd.f32 %v469, %v5318
    %v5351 = vadd.f32 %v470, %v5319
    %v5352 = vadd.f32 %v471, %v5320
    %v5353 = vadd.f32 %v472, %v5321
    %v5354 = vadd.f32 %v473, %v5322
    %v5355 = vadd.f32 %v474, %v5323
    %v5356 = vadd.f32 %v475, %v5324
    %v5357 = vadd.f32 %v476, %v5325
    %v5358 = vadd.f32 %v477, %v5326
    %v5359 = vadd.f32 %v478, %v5327
    %v5360 = vadd.f32 %v479, %v5328
    %v5361 = vadd.f32 %v480, %v5329
    %v5362 = vadd.f32 %v481, %v5330
    %v5363 = vadd.f32 %v482, %v5331
    %v5364 = vadd.f32 %v483, %v5332
    %v5365 = vadd.f32 %v484, %v5333
    %v5366 = vadd.f32 %v485, %v5334
    %v5367 = vadd.f32 %v486, %v5335
    %v5368 = vadd.f32 %v487, %v5336
    %v5369 = vadd.f32 %v488, %v5337
    %v5370 = vadd.f32 %v489, %v5338
    %v5371 = vadd.f32 %v490, %v5339
    %v5372 = vadd.f32 %v491, %v5340
    %v5373 = vadd.f32 %v492, %v5341
    %v5374 = vadd.f32 %v493, %v5342
    %v5375 = vld [vmem:[%s7] sm:$0x1]
    %v5377 = vlaneseq
    %v5378 = vshrl.u32 %v5377, 7
    %v5379 = vsub.s32 0, %v5378
    %v5380 = vrot.slane %v5375, %v5379
    %v5382 = vadd.f32 %v5343, %v5380
    %v5383 = vadd.f32 %v5344, %v5380
    %v5384 = vadd.f32 %v5345, %v5380
    %v5385 = vadd.f32 %v5346, %v5380
    %v5386 = vadd.f32 %v5347, %v5380
    %v5387 = vadd.f32 %v5348, %v5380
    %v5388 = vadd.f32 %v5349, %v5380
    %v5389 = vadd.f32 %v5350, %v5380
    %v5390 = vadd.f32 %v5351, %v5380
    %v5391 = vadd.f32 %v5352, %v5380
    %v5392 = vadd.f32 %v5353, %v5380
    %v5393 = vadd.f32 %v5354, %v5380
    %v5394 = vadd.f32 %v5355, %v5380
    %v5395 = vadd.f32 %v5356, %v5380
    %v5396 = vadd.f32 %v5357, %v5380
    %v5397 = vadd.f32 %v5358, %v5380
    %v5398 = vadd.f32 %v5359, %v5380
    %v5399 = vadd.f32 %v5360, %v5380
    %v5400 = vadd.f32 %v5361, %v5380
    %v5401 = vadd.f32 %v5362, %v5380
    %v5402 = vadd.f32 %v5363, %v5380
    %v5403 = vadd.f32 %v5364, %v5380
    %v5404 = vadd.f32 %v5365, %v5380
    %v5405 = vadd.f32 %v5366, %v5380
    %v5406 = vadd.f32 %v5367, %v5380
    %v5407 = vadd.f32 %v5368, %v5380
    %v5408 = vadd.f32 %v5369, %v5380
    %v5409 = vadd.f32 %v5370, %v5380
    %v5410 = vadd.f32 %v5371, %v5380
    %v5411 = vadd.f32 %v5372, %v5380
    %v5412 = vadd.f32 %v5373, %v5380
    %v5413 = vadd.f32 %v5374, %v5380
    %v5414 = vld [vmem:[%s8] sm:$0x1]
    %v5415 = vld [vmem:[%s9] sm:$0x1]
    %v5416 = vsel %vm533, %v5382, 0.0
    %5417 = vadd.xlane.f32.xlu0 %v5416
    %v5418 = vpop.xlane.xlu0 %5417
    %v5419 = vsel %vm533, %v5383, 0.0
    %5420 = vadd.xlane.f32.xlu0 %v5419
    %v5421 = vpop.xlane.xlu0 %5420
    %v5422 = vsel %vm533, %v5384, 0.0
    %5423 = vadd.xlane.f32.xlu0 %v5422
    %v5424 = vpop.xlane.xlu0 %5423
    %v5425 = vsel %vm533, %v5385, 0.0
    %5426 = vadd.xlane.f32.xlu0 %v5425
    %v5427 = vpop.xlane.xlu0 %5426
    %v5428 = vsel %vm533, %v5386, 0.0
    %5429 = vadd.xlane.f32.xlu0 %v5428
    %v5430 = vpop.xlane.xlu0 %5429
    %v5431 = vsel %vm533, %v5387, 0.0
    %5432 = vadd.xlane.f32.xlu0 %v5431
    %v5433 = vpop.xlane.xlu0 %5432
    %v5434 = vsel %vm533, %v5388, 0.0
    %5435 = vadd.xlane.f32.xlu0 %v5434
    %v5436 = vpop.xlane.xlu0 %5435
    %v5437 = vsel %vm533, %v5389, 0.0
    %5438 = vadd.xlane.f32.xlu0 %v5437
    %v5439 = vpop.xlane.xlu0 %5438
    %v5440 = vsel %vm533, %v5390, 0.0
    %5441 = vadd.xlane.f32.xlu0 %v5440
    %v5442 = vpop.xlane.xlu0 %5441
    %v5443 = vsel %vm533, %v5391, 0.0
    %5444 = vadd.xlane.f32.xlu0 %v5443
    %v5445 = vpop.xlane.xlu0 %5444
    %v5446 = vsel %vm533, %v5392, 0.0
    %5447 = vadd.xlane.f32.xlu0 %v5446
    %v5448 = vpop.xlane.xlu0 %5447
    %v5449 = vsel %vm533, %v5393, 0.0
    %5450 = vadd.xlane.f32.xlu0 %v5449
    %v5451 = vpop.xlane.xlu0 %5450
    %v5452 = vsel %vm533, %v5394, 0.0
    %5453 = vadd.xlane.f32.xlu0 %v5452
    %v5454 = vpop.xlane.xlu0 %5453
    %v5455 = vsel %vm533, %v5395, 0.0
    %5456 = vadd.xlane.f32.xlu0 %v5455
    %v5457 = vpop.xlane.xlu0 %5456
    %v5458 = vsel %vm533, %v5396, 0.0
    %5459 = vadd.xlane.f32.xlu0 %v5458
    %v5460 = vpop.xlane.xlu0 %5459
    %v5461 = vsel %vm533, %v5397, 0.0
    %5462 = vadd.xlane.f32.xlu0 %v5461
    %v5463 = vpop.xlane.xlu0 %5462
    %v5464 = vsel %vm533, %v5398, 0.0
    %5465 = vadd.xlane.f32.xlu0 %v5464
    %v5466 = vpop.xlane.xlu0 %5465
    %v5467 = vsel %vm533, %v5399, 0.0
    %5468 = vadd.xlane.f32.xlu0 %v5467
    %v5469 = vpop.xlane.xlu0 %5468
    %v5470 = vsel %vm533, %v5400, 0.0
    %5471 = vadd.xlane.f32.xlu0 %v5470
    %v5472 = vpop.xlane.xlu0 %5471
    %v5473 = vsel %vm533, %v5401, 0.0
    %5474 = vadd.xlane.f32.xlu0 %v5473
    %v5475 = vpop.xlane.xlu0 %5474
    %v5476 = vsel %vm533, %v5402, 0.0
    %5477 = vadd.xlane.f32.xlu0 %v5476
    %v5478 = vpop.xlane.xlu0 %5477
    %v5479 = vsel %vm533, %v5403, 0.0
    %5480 = vadd.xlane.f32.xlu0 %v5479
    %v5481 = vpop.xlane.xlu0 %5480
    %v5482 = vsel %vm533, %v5404, 0.0
    %5483 = vadd.xlane.f32.xlu0 %v5482
    %v5484 = vpop.xlane.xlu0 %5483
    %v5485 = vsel %vm533, %v5405, 0.0
    %5486 = vadd.xlane.f32.xlu0 %v5485
    %v5487 = vpop.xlane.xlu0 %5486
    %v5488 = vsel %vm533, %v5406, 0.0
    %5489 = vadd.xlane.f32.xlu0 %v5488
    %v5490 = vpop.xlane.xlu0 %5489
    %v5491 = vsel %vm533, %v5407, 0.0
    %5492 = vadd.xlane.f32.xlu0 %v5491
    %v5493 = vpop.xlane.xlu0 %5492
    %v5494 = vsel %vm533, %v5408, 0.0
    %5495 = vadd.xlane.f32.xlu0 %v5494
    %v5496 = vpop.xlane.xlu0 %5495
    %v5497 = vsel %vm533, %v5409, 0.0
    %5498 = vadd.xlane.f32.xlu0 %v5497
    %v5499 = vpop.xlane.xlu0 %5498
    %v5500 = vsel %vm533, %v5410, 0.0
    %5501 = vadd.xlane.f32.xlu0 %v5500
    %v5502 = vpop.xlane.xlu0 %5501
    %v5503 = vsel %vm533, %v5411, 0.0
    %5504 = vadd.xlane.f32.xlu0 %v5503
    %v5505 = vpop.xlane.xlu0 %5504
    %v5506 = vsel %vm533, %v5412, 0.0
    %5507 = vadd.xlane.f32.xlu0 %v5506
    %v5508 = vpop.xlane.xlu0 %5507
    %v5509 = vsel %vm533, %v5413, 0.0
    %5510 = vadd.xlane.f32.xlu0 %v5509
    %v5511 = vpop.xlane.xlu0 %5510
    %v5512 = vrcp.pop 32.0
    %v5513 = vmul.f32 %v5418, %v5512
    %v5514 = vmul.f32 %v5421, %v5512
    %v5515 = vmul.f32 %v5424, %v5512
    %v5516 = vmul.f32 %v5427, %v5512
    %v5517 = vmul.f32 %v5430, %v5512
    %v5518 = vmul.f32 %v5433, %v5512
    %v5519 = vmul.f32 %v5436, %v5512
    %v5520 = vmul.f32 %v5439, %v5512
    %v5521 = vmul.f32 %v5442, %v5512
    %v5522 = vmul.f32 %v5445, %v5512
    %v5523 = vmul.f32 %v5448, %v5512
    %v5524 = vmul.f32 %v5451, %v5512
    %v5525 = vmul.f32 %v5454, %v5512
    %v5526 = vmul.f32 %v5457, %v5512
    %v5527 = vmul.f32 %v5460, %v5512
    %v5528 = vmul.f32 %v5463, %v5512
    %v5529 = vmul.f32 %v5466, %v5512
    %v5530 = vmul.f32 %v5469, %v5512
    %v5531 = vmul.f32 %v5472, %v5512
    %v5532 = vmul.f32 %v5475, %v5512
    %v5533 = vmul.f32 %v5478, %v5512
    %v5534 = vmul.f32 %v5481, %v5512
    %v5535 = vmul.f32 %v5484, %v5512
    %v5536 = vmul.f32 %v5487, %v5512
    %v5537 = vmul.f32 %v5490, %v5512
    %v5538 = vmul.f32 %v5493, %v5512
    %v5539 = vmul.f32 %v5496, %v5512
    %v5540 = vmul.f32 %v5499, %v5512
    %v5541 = vmul.f32 %v5502, %v5512
    %v5542 = vmul.f32 %v5505, %v5512
    %v5543 = vmul.f32 %v5508, %v5512
    %v5544 = vmul.f32 %v5511, %v5512
    %v5545 = vsub.f32 %v5382, %v5513
    %v5546 = vsub.f32 %v5383, %v5514
    %v5547 = vsub.f32 %v5384, %v5515
    %v5548 = vsub.f32 %v5385, %v5516
    %v5549 = vsub.f32 %v5386, %v5517
    %v5550 = vsub.f32 %v5387, %v5518
    %v5551 = vsub.f32 %v5388, %v5519
    %v5552 = vsub.f32 %v5389, %v5520
    %v5553 = vsub.f32 %v5390, %v5521
    %v5554 = vsub.f32 %v5391, %v5522
    %v5555 = vsub.f32 %v5392, %v5523
    %v5556 = vsub.f32 %v5393, %v5524
    %v5557 = vsub.f32 %v5394, %v5525
    %v5558 = vsub.f32 %v5395, %v5526
    %v5559 = vsub.f32 %v5396, %v5527
    %v5560 = vsub.f32 %v5397, %v5528
    %v5561 = vsub.f32 %v5398, %v5529
    %v5562 = vsub.f32 %v5399, %v5530
    %v5563 = vsub.f32 %v5400, %v5531
    %v5564 = vsub.f32 %v5401, %v5532
    %v5565 = vsub.f32 %v5402, %v5533
    %v5566 = vsub.f32 %v5403, %v5534
    %v5567 = vsub.f32 %v5404, %v5535
    %v5568 = vsub.f32 %v5405, %v5536
    %v5569 = vsub.f32 %v5406, %v5537
    %v5570 = vsub.f32 %v5407, %v5538
    %v5571 = vsub.f32 %v5408, %v5539
    %v5572 = vsub.f32 %v5409, %v5540
    %v5573 = vsub.f32 %v5410, %v5541
    %v5574 = vsub.f32 %v5411, %v5542
    %v5575 = vsub.f32 %v5412, %v5543
    %v5576 = vsub.f32 %v5413, %v5544
    %v5577 = vmul.f32 %v5545, %v5545
    %v5578 = vmul.f32 %v5546, %v5546
    %v5579 = vmul.f32 %v5547, %v5547
    %v5580 = vmul.f32 %v5548, %v5548
    %v5581 = vmul.f32 %v5549, %v5549
    %v5582 = vmul.f32 %v5550, %v5550
    %v5583 = vmul.f32 %v5551, %v5551
    %v5584 = vmul.f32 %v5552, %v5552
    %v5585 = vmul.f32 %v5553, %v5553
    %v5586 = vmul.f32 %v5554, %v5554
    %v5587 = vmul.f32 %v5555, %v5555
    %v5588 = vmul.f32 %v5556, %v5556
    %v5589 = vmul.f32 %v5557, %v5557
    %v5590 = vmul.f32 %v5558, %v5558
    %v5591 = vmul.f32 %v5559, %v5559
    %v5592 = vmul.f32 %v5560, %v5560
    %v5593 = vmul.f32 %v5561, %v5561
    %v5594 = vmul.f32 %v5562, %v5562
    %v5595 = vmul.f32 %v5563, %v5563
    %v5596 = vmul.f32 %v5564, %v5564
    %v5597 = vmul.f32 %v5565, %v5565
    %v5598 = vmul.f32 %v5566, %v5566
    %v5599 = vmul.f32 %v5567, %v5567
    %v5600 = vmul.f32 %v5568, %v5568
    %v5601 = vmul.f32 %v5569, %v5569
    %v5602 = vmul.f32 %v5570, %v5570
    %v5603 = vmul.f32 %v5571, %v5571
    %v5604 = vmul.f32 %v5572, %v5572
    %v5605 = vmul.f32 %v5573, %v5573
    %v5606 = vmul.f32 %v5574, %v5574
    %v5607 = vmul.f32 %v5575, %v5575
    %v5608 = vmul.f32 %v5576, %v5576
    %v5609 = vsel %vm533, %v5577, 0.0
    %5610 = vadd.xlane.f32.xlu0 %v5609
    %v5611 = vpop.xlane.xlu0 %5610
    %v5612 = vsel %vm533, %v5578, 0.0
    %5613 = vadd.xlane.f32.xlu0 %v5612
    %v5614 = vpop.xlane.xlu0 %5613
    %v5615 = vsel %vm533, %v5579, 0.0
    %5616 = vadd.xlane.f32.xlu0 %v5615
    %v5617 = vpop.xlane.xlu0 %5616
    %v5618 = vsel %vm533, %v5580, 0.0
    %5619 = vadd.xlane.f32.xlu0 %v5618
    %v5620 = vpop.xlane.xlu0 %5619
    %v5621 = vsel %vm533, %v5581, 0.0
    %5622 = vadd.xlane.f32.xlu0 %v5621
    %v5623 = vpop.xlane.xlu0 %5622
    %v5624 = vsel %vm533, %v5582, 0.0
    %5625 = vadd.xlane.f32.xlu0 %v5624
    %v5626 = vpop.xlane.xlu0 %5625
    %v5627 = vsel %vm533, %v5583, 0.0
    %5628 = vadd.xlane.f32.xlu0 %v5627
    %v5629 = vpop.xlane.xlu0 %5628
    %v5630 = vsel %vm533, %v5584, 0.0
    %5631 = vadd.xlane.f32.xlu0 %v5630
    %v5632 = vpop.xlane.xlu0 %5631
    %v5633 = vsel %vm533, %v5585, 0.0
    %5634 = vadd.xlane.f32.xlu0 %v5633
    %v5635 = vpop.xlane.xlu0 %5634
    %v5636 = vsel %vm533, %v5586, 0.0
    %5637 = vadd.xlane.f32.xlu0 %v5636
    %v5638 = vpop.xlane.xlu0 %5637
    %v5639 = vsel %vm533, %v5587, 0.0
    %5640 = vadd.xlane.f32.xlu0 %v5639
    %v5641 = vpop.xlane.xlu0 %5640
    %v5642 = vsel %vm533, %v5588, 0.0
    %5643 = vadd.xlane.f32.xlu0 %v5642
    %v5644 = vpop.xlane.xlu0 %5643
    %v5645 = vsel %vm533, %v5589, 0.0
    %5646 = vadd.xlane.f32.xlu0 %v5645
    %v5647 = vpop.xlane.xlu0 %5646
    %v5648 = vsel %vm533, %v5590, 0.0
    %5649 = vadd.xlane.f32.xlu0 %v5648
    %v5650 = vpop.xlane.xlu0 %5649
    %v5651 = vsel %vm533, %v5591, 0.0
    %5652 = vadd.xlane.f32.xlu0 %v5651
    %v5653 = vpop.xlane.xlu0 %5652
    %v5654 = vsel %vm533, %v5592, 0.0
    %5655 = vadd.xlane.f32.xlu0 %v5654
    %v5656 = vpop.xlane.xlu0 %5655
    %v5657 = vsel %vm533, %v5593, 0.0
    %5658 = vadd.xlane.f32.xlu0 %v5657
    %v5659 = vpop.xlane.xlu0 %5658
    %v5660 = vsel %vm533, %v5594, 0.0
    %5661 = vadd.xlane.f32.xlu0 %v5660
    %v5662 = vpop.xlane.xlu0 %5661
    %v5663 = vsel %vm533, %v5595, 0.0
    %5664 = vadd.xlane.f32.xlu0 %v5663
    %v5665 = vpop.xlane.xlu0 %5664
    %v5666 = vsel %vm533, %v5596, 0.0
    %5667 = vadd.xlane.f32.xlu0 %v5666
    %v5668 = vpop.xlane.xlu0 %5667
    %v5669 = vsel %vm533, %v5597, 0.0
    %5670 = vadd.xlane.f32.xlu0 %v5669
    %v5671 = vpop.xlane.xlu0 %5670
    %v5672 = vsel %vm533, %v5598, 0.0
    %5673 = vadd.xlane.f32.xlu0 %v5672
    %v5674 = vpop.xlane.xlu0 %5673
    %v5675 = vsel %vm533, %v5599, 0.0
    %5676 = vadd.xlane.f32.xlu0 %v5675
    %v5677 = vpop.xlane.xlu0 %5676
    %v5678 = vsel %vm533, %v5600, 0.0
    %5679 = vadd.xlane.f32.xlu0 %v5678
    %v5680 = vpop.xlane.xlu0 %5679
    %v5681 = vsel %vm533, %v5601, 0.0
    %5682 = vadd.xlane.f32.xlu0 %v5681
    %v5683 = vpop.xlane.xlu0 %5682
    %v5684 = vsel %vm533, %v5602, 0.0
    %5685 = vadd.xlane.f32.xlu0 %v5684
    %v5686 = vpop.xlane.xlu0 %5685
    %v5687 = vsel %vm533, %v5603, 0.0
    %5688 = vadd.xlane.f32.xlu0 %v5687
    %v5689 = vpop.xlane.xlu0 %5688
    %v5690 = vsel %vm533, %v5604, 0.0
    %5691 = vadd.xlane.f32.xlu0 %v5690
    %v5692 = vpop.xlane.xlu0 %5691
    %v5693 = vsel %vm533, %v5605, 0.0
    %5694 = vadd.xlane.f32.xlu0 %v5693
    %v5695 = vpop.xlane.xlu0 %5694
    %v5696 = vsel %vm533, %v5606, 0.0
    %5697 = vadd.xlane.f32.xlu0 %v5696
    %v5698 = vpop.xlane.xlu0 %5697
    %v5699 = vsel %vm533, %v5607, 0.0
    %5700 = vadd.xlane.f32.xlu0 %v5699
    %v5701 = vpop.xlane.xlu0 %5700
    %v5702 = vsel %vm533, %v5608, 0.0
    %5703 = vadd.xlane.f32.xlu0 %v5702
    %v5704 = vpop.xlane.xlu0 %5703
    %v5705 = vmul.f32 %v5611, %v5512
    %v5706 = vmul.f32 %v5614, %v5512
    %v5707 = vmul.f32 %v5617, %v5512
    %v5708 = vmul.f32 %v5620, %v5512
    %v5709 = vmul.f32 %v5623, %v5512
    %v5710 = vmul.f32 %v5626, %v5512
    %v5711 = vmul.f32 %v5629, %v5512
    %v5712 = vmul.f32 %v5632, %v5512
    %v5713 = vmul.f32 %v5635, %v5512
    %v5714 = vmul.f32 %v5638, %v5512
    %v5715 = vmul.f32 %v5641, %v5512
    %v5716 = vmul.f32 %v5644, %v5512
    %v5717 = vmul.f32 %v5647, %v5512
    %v5718 = vmul.f32 %v5650, %v5512
    %v5719 = vmul.f32 %v5653, %v5512
    %v5720 = vmul.f32 %v5656, %v5512
    %v5721 = vmul.f32 %v5659, %v5512
    %v5722 = vmul.f32 %v5662, %v5512
    %v5723 = vmul.f32 %v5665, %v5512
    %v5724 = vmul.f32 %v5668, %v5512
    %v5725 = vmul.f32 %v5671, %v5512
    %v5726 = vmul.f32 %v5674, %v5512
    %v5727 = vmul.f32 %v5677, %v5512
    %v5728 = vmul.f32 %v5680, %v5512
    %v5729 = vmul.f32 %v5683, %v5512
    %v5730 = vmul.f32 %v5686, %v5512
    %v5731 = vmul.f32 %v5689, %v5512
    %v5732 = vmul.f32 %v5692, %v5512
    %v5733 = vmul.f32 %v5695, %v5512
    %v5734 = vmul.f32 %v5698, %v5512
    %v5735 = vmul.f32 %v5701, %v5512
    %v5736 = vmul.f32 %v5704, %v5512
    %v5737 = vadd.f32 %v5705, 1e-05
    %v5738 = vadd.f32 %v5706, 1e-05
    %v5739 = vadd.f32 %v5707, 1e-05
    %v5740 = vadd.f32 %v5708, 1e-05
    %v5741 = vadd.f32 %v5709, 1e-05
    %v5742 = vadd.f32 %v5710, 1e-05
    %v5743 = vadd.f32 %v5711, 1e-05
    %v5744 = vadd.f32 %v5712, 1e-05
    %v5745 = vadd.f32 %v5713, 1e-05
    %v5746 = vadd.f32 %v5714, 1e-05
    %v5747 = vadd.f32 %v5715, 1e-05
    %v5748 = vadd.f32 %v5716, 1e-05
    %v5749 = vadd.f32 %v5717, 1e-05
    %v5750 = vadd.f32 %v5718, 1e-05
    %v5751 = vadd.f32 %v5719, 1e-05
    %v5752 = vadd.f32 %v5720, 1e-05
    %v5753 = vadd.f32 %v5721, 1e-05
    %v5754 = vadd.f32 %v5722, 1e-05
    %v5755 = vadd.f32 %v5723, 1e-05
    %v5756 = vadd.f32 %v5724, 1e-05
    %v5757 = vadd.f32 %v5725, 1e-05
    %v5758 = vadd.f32 %v5726, 1e-05
    %v5759 = vadd.f32 %v5727, 1e-05
    %v5760 = vadd.f32 %v5728, 1e-05
    %v5761 = vadd.f32 %v5729, 1e-05
    %v5762 = vadd.f32 %v5730, 1e-05
    %v5763 = vadd.f32 %v5731, 1e-05
    %v5764 = vadd.f32 %v5732, 1e-05
    %v5765 = vadd.f32 %v5733, 1e-05
    %v5766 = vadd.f32 %v5734, 1e-05
    %v5767 = vadd.f32 %v5735, 1e-05
    %v5768 = vadd.f32 %v5736, 1e-05
    %v5769 = vrsqrt.pop %v5737
    %v5770 = vrsqrt.pop %v5738
    %v5771 = vrsqrt.pop %v5739
    %v5772 = vrsqrt.pop %v5740
    %v5773 = vrsqrt.pop %v5741
    %v5774 = vrsqrt.pop %v5742
    %v5775 = vrsqrt.pop %v5743
    %v5776 = vrsqrt.pop %v5744
    %v5777 = vrsqrt.pop %v5745
    %v5778 = vrsqrt.pop %v5746
    %v5779 = vrsqrt.pop %v5747
    %v5780 = vrsqrt.pop %v5748
    %v5781 = vrsqrt.pop %v5749
    %v5782 = vrsqrt.pop %v5750
    %v5783 = vrsqrt.pop %v5751
    %v5784 = vrsqrt.pop %v5752
    %v5785 = vrsqrt.pop %v5753
    %v5786 = vrsqrt.pop %v5754
    %v5787 = vrsqrt.pop %v5755
    %v5788 = vrsqrt.pop %v5756
    %v5789 = vrsqrt.pop %v5757
    %v5790 = vrsqrt.pop %v5758
    %v5791 = vrsqrt.pop %v5759
    %v5792 = vrsqrt.pop %v5760
    %v5793 = vrsqrt.pop %v5761
    %v5794 = vrsqrt.pop %v5762
    %v5795 = vrsqrt.pop %v5763
    %v5796 = vrsqrt.pop %v5764
    %v5797 = vrsqrt.pop %v5765
    %v5798 = vrsqrt.pop %v5766
    %v5799 = vrsqrt.pop %v5767
    %v5800 = vrsqrt.pop %v5768
    %v5801 = vmul.f32 %v5545, %v5769
    %v5802 = vmul.f32 %v5546, %v5770
    %v5803 = vmul.f32 %v5547, %v5771
    %v5804 = vmul.f32 %v5548, %v5772
    %v5805 = vmul.f32 %v5549, %v5773
    %v5806 = vmul.f32 %v5550, %v5774
    %v5807 = vmul.f32 %v5551, %v5775
    %v5808 = vmul.f32 %v5552, %v5776
    %v5809 = vmul.f32 %v5553, %v5777
    %v5810 = vmul.f32 %v5554, %v5778
    %v5811 = vmul.f32 %v5555, %v5779
    %v5812 = vmul.f32 %v5556, %v5780
    %v5813 = vmul.f32 %v5557, %v5781
    %v5814 = vmul.f32 %v5558, %v5782
    %v5815 = vmul.f32 %v5559, %v5783
    %v5816 = vmul.f32 %v5560, %v5784
    %v5817 = vmul.f32 %v5561, %v5785
    %v5818 = vmul.f32 %v5562, %v5786
    %v5819 = vmul.f32 %v5563, %v5787
    %v5820 = vmul.f32 %v5564, %v5788
    %v5821 = vmul.f32 %v5565, %v5789
    %v5822 = vmul.f32 %v5566, %v5790
    %v5823 = vmul.f32 %v5567, %v5791
    %v5824 = vmul.f32 %v5568, %v5792
    %v5825 = vmul.f32 %v5569, %v5793
    %v5826 = vmul.f32 %v5570, %v5794
    %v5827 = vmul.f32 %v5571, %v5795
    %v5828 = vmul.f32 %v5572, %v5796
    %v5829 = vmul.f32 %v5573, %v5797
    %v5830 = vmul.f32 %v5574, %v5798
    %v5831 = vmul.f32 %v5575, %v5799
    %v5832 = vmul.f32 %v5576, %v5800
    %v5834 = vlaneseq
    %v5835 = vshrl.u32 %v5834, 7
    %v5836 = vsub.s32 0, %v5835
    %v5837 = vrot.slane %v5414, %v5836
    %v5839 = vmul.f32 %v5801, %v5837
    %v5840 = vmul.f32 %v5802, %v5837
    %v5841 = vmul.f32 %v5803, %v5837
    %v5842 = vmul.f32 %v5804, %v5837
    %v5843 = vmul.f32 %v5805, %v5837
    %v5844 = vmul.f32 %v5806, %v5837
    %v5845 = vmul.f32 %v5807, %v5837
    %v5846 = vmul.f32 %v5808, %v5837
    %v5847 = vmul.f32 %v5809, %v5837
    %v5848 = vmul.f32 %v5810, %v5837
    %v5849 = vmul.f32 %v5811, %v5837
    %v5850 = vmul.f32 %v5812, %v5837
    %v5851 = vmul.f32 %v5813, %v5837
    %v5852 = vmul.f32 %v5814, %v5837
    %v5853 = vmul.f32 %v5815, %v5837
    %v5854 = vmul.f32 %v5816, %v5837
    %v5855 = vmul.f32 %v5817, %v5837
    %v5856 = vmul.f32 %v5818, %v5837
    %v5857 = vmul.f32 %v5819, %v5837
    %v5858 = vmul.f32 %v5820, %v5837
    %v5859 = vmul.f32 %v5821, %v5837
    %v5860 = vmul.f32 %v5822, %v5837
    %v5861 = vmul.f32 %v5823, %v5837
    %v5862 = vmul.f32 %v5824, %v5837
    %v5863 = vmul.f32 %v5825, %v5837
    %v5864 = vmul.f32 %v5826, %v5837
    %v5865 = vmul.f32 %v5827, %v5837
    %v5866 = vmul.f32 %v5828, %v5837
    %v5867 = vmul.f32 %v5829, %v5837
    %v5868 = vmul.f32 %v5830, %v5837
    %v5869 = vmul.f32 %v5831, %v5837
    %v5870 = vmul.f32 %v5832, %v5837
    %v5872 = vlaneseq
    %v5873 = vshrl.u32 %v5872, 7
    %v5874 = vsub.s32 0, %v5873
    %v5875 = vrot.slane %v5415, %v5874
    %v5877 = vadd.f32 %v5839, %v5875
    %v5878 = vadd.f32 %v5840, %v5875
    %v5879 = vadd.f32 %v5841, %v5875
    %v5880 = vadd.f32 %v5842, %v5875
    %v5881 = vadd.f32 %v5843, %v5875
    %v5882 = vadd.f32 %v5844, %v5875
    %v5883 = vadd.f32 %v5845, %v5875
    %v5884 = vadd.f32 %v5846, %v5875
    %v5885 = vadd.f32 %v5847, %v5875
    %v5886 = vadd.f32 %v5848, %v5875
    %v5887 = vadd.f32 %v5849, %v5875
    %v5888 = vadd.f32 %v5850, %v5875
    %v5889 = vadd.f32 %v5851, %v5875
    %v5890 = vadd.f32 %v5852, %v5875
    %v5891 = vadd.f32 %v5853, %v5875
    %v5892 = vadd.f32 %v5854, %v5875
    %v5893 = vadd.f32 %v5855, %v5875
    %v5894 = vadd.f32 %v5856, %v5875
    %v5895 = vadd.f32 %v5857, %v5875
    %v5896 = vadd.f32 %v5858, %v5875
    %v5897 = vadd.f32 %v5859, %v5875
    %v5898 = vadd.f32 %v5860, %v5875
    %v5899 = vadd.f32 %v5861, %v5875
    %v5900 = vadd.f32 %v5862, %v5875
    %v5901 = vadd.f32 %v5863, %v5875
    %v5902 = vadd.f32 %v5864, %v5875
    %v5903 = vadd.f32 %v5865, %v5875
    %v5904 = vadd.f32 %v5866, %v5875
    %v5905 = vadd.f32 %v5867, %v5875
    %v5906 = vadd.f32 %v5868, %v5875
    %v5907 = vadd.f32 %v5869, %v5875
    %v5908 = vadd.f32 %v5870, %v5875
    %v5909 = vpack.c.bf16 %v5878, %v5877
    %v5910 = vpack.c.bf16 %v5880, %v5879
    %v5911 = vpack.c.bf16 %v5882, %v5881
    %v5912 = vpack.c.bf16 %v5884, %v5883
    %v5913 = vpack.c.bf16 %v5886, %v5885
    %v5914 = vpack.c.bf16 %v5888, %v5887
    %v5915 = vpack.c.bf16 %v5890, %v5889
    %v5916 = vpack.c.bf16 %v5892, %v5891
    %v5917 = vpack.c.bf16 %v5894, %v5893
    %v5918 = vpack.c.bf16 %v5896, %v5895
    %v5919 = vpack.c.bf16 %v5898, %v5897
    %v5920 = vpack.c.bf16 %v5900, %v5899
    %v5921 = vpack.c.bf16 %v5902, %v5901
    %v5922 = vpack.c.bf16 %v5904, %v5903
    %v5923 = vpack.c.bf16 %v5906, %v5905
    %v5924 = vpack.c.bf16 %v5908, %v5907
    %v5925 = vld [vmem:[%s10] sm:$0xf]
    %v5926 = vld [vmem:[%s10 + $0x4] sm:$0xf]
    %v5927 = vld [vmem:[%s10 + $0x8] sm:$0xf]
    %v5928 = vld [vmem:[%s10 + $0xc] sm:$0xf]
    %v5929 = vld [vmem:[%s11] sm:$0x1]
    %v5931 = vlaneseq
    %v5932 = vshrl.u32 %v5931, 7
    %v5933 = vsub.s32 0, %v5932
    %v5934 = vrot.slane %v5929, %v5933
    %v5940 = vunpack.c.l.b16 %v5925
    %v5941 = vunpack.c.l.b16 %v5926
    %v5942 = vunpack.c.l.b16 %v5927
    %v5943 = vunpack.c.l.b16 %v5928
    %v5944 = vpack.c.b16 %v5941, %v5940
    %v5945 = vpack.c.b16 %v5943, %v5942
    %v5949 = vsel %vm533, %v5909, 0
    %v5952 = vsel %vm533, %v5910, 0
    %v5955 = vsel %vm533, %v5911, 0
    %v5958 = vsel %vm533, %v5912, 0
    %v5961 = vsel %vm533, %v5913, 0
    %v5964 = vsel %vm533, %v5914, 0
    %v5967 = vsel %vm533, %v5915, 0
    %v5970 = vsel %vm533, %v5916, 0
    %v5973 = vsel %vm533, %v5917, 0
    %v5976 = vsel %vm533, %v5918, 0
    %v5979 = vsel %vm533, %v5919, 0
    %v5982 = vsel %vm533, %v5920, 0
    %v5985 = vsel %vm533, %v5921, 0
    %v5988 = vsel %vm533, %v5922, 0
    %v5991 = vsel %vm533, %v5923, 0
    %v5994 = vsel %vm533, %v5924, 0
    %5996 = vmatprep.subr.bf16.mxu0 0
    %5997 = vmatpush1.bf16.msra.mxu0 0
    %5998 = vmatprep.subr.bf16.mxu0 0
    %5999 = vmatpush1.bf16.msra.mxu0 0
    %6000 = vmatprep.subr.bf16.mxu0 0
    %6001 = vmatpush1.bf16.msra.mxu0 0
    %6002 = vmatprep.subr.bf16.mxu0 0
    %6003 = vmatpush1.bf16.msra.mxu0 0
    %6004 = vmatprep.subr.bf16.mxu0 0
    %6005 = vmatpush1.bf16.msra.mxu0 0
    %6006 = vmatprep.subr.bf16.mxu0 0
    %6007 = vmatpush1.bf16.msra.mxu0 0
    %6008 = vmatprep.subr.bf16.mxu0 0
    %6009 = vmatpush1.bf16.msra.mxu0 %v5945
    %6010 = vmatprep.subr.bf16.mxu0 0
    %6011 = vmatpush1.bf16.msra.mxu0 %v5944
    %6012 = vmatprep.subr.bf16.mxu0 0
    %6013 = vmatpush2.bf16.msra.mxu0 0
    %6014 = vmatprep.subr.bf16.mxu0 0
    %6015 = vmatpush2.bf16.msra.mxu0 0
    %6016 = vmatprep.subr.bf16.mxu0 0
    %6017 = vmatpush2.bf16.msra.mxu0 0
    %6018 = vmatprep.subr.bf16.mxu0 0
    %6019 = vmatpush2.bf16.msra.mxu0 0
    %6020 = vmatprep.subr.bf16.mxu0 0
    %6021 = vmatpush2.bf16.msra.mxu0 0
    %6022 = vmatprep.subr.bf16.mxu0 0
    %6023 = vmatpush2.bf16.msra.mxu0 0
    %6024 = vmatprep.subr.bf16.mxu0 0
    %6025 = vmatpush2.bf16.msra.mxu0 0
    %6026 = vmatprep.subr.bf16.mxu0 0
    %6027 = vmatpush2.bf16.msra.mxu0 0
    %6028 = vmatprep.mubr.bf16.mxu0 0
    %6029 = vmatmul.mubr.bf16.gmra.mxu0 %v5949
    %v6030 = vpop.f32.mrf.mxu0
    %v6031 = vadd.f32 %v5934, %v6030
    %v6032 = vpop.f32.mrf.mxu0
    %v6033 = vpop.f32.mrf.mxu0
    %v6034 = vadd.f32 %v5934, %v6033
    %v6035 = vpop.f32.mrf.mxu0
    %6036 = vmatprep.mubr.bf16.mxu0 0
    %6037 = vmatmul.mubr.bf16.gmra.mxu0 %v5952
    %v6038 = vpop.f32.mrf.mxu0
    %v6039 = vadd.f32 %v5934, %v6038
    %v6040 = vpop.f32.mrf.mxu0
    %v6041 = vpop.f32.mrf.mxu0
    %v6042 = vadd.f32 %v5934, %v6041
    %v6043 = vpop.f32.mrf.mxu0
    %6044 = vmatprep.mubr.bf16.mxu0 0
    %6045 = vmatmul.mubr.bf16.gmra.mxu0 %v5955
    %v6046 = vpop.f32.mrf.mxu0
    %v6047 = vadd.f32 %v5934, %v6046
    %v6048 = vpop.f32.mrf.mxu0
    %v6049 = vpop.f32.mrf.mxu0
    %v6050 = vadd.f32 %v5934, %v6049
    %v6051 = vpop.f32.mrf.mxu0
    %6052 = vmatprep.mubr.bf16.mxu0 0
    %6053 = vmatmul.mubr.bf16.gmra.mxu0 %v5958
    %v6054 = vpop.f32.mrf.mxu0
    %v6055 = vadd.f32 %v5934, %v6054
    %v6056 = vpop.f32.mrf.mxu0
    %v6057 = vpop.f32.mrf.mxu0
    %v6058 = vadd.f32 %v5934, %v6057
    %v6059 = vpop.f32.mrf.mxu0
    %6060 = vmatprep.mubr.bf16.mxu0 0
    %6061 = vmatmul.mubr.bf16.gmra.mxu0 %v5961
    %v6062 = vpop.f32.mrf.mxu0
    %v6063 = vadd.f32 %v5934, %v6062
    %v6064 = vpop.f32.mrf.mxu0
    %v6065 = vpop.f32.mrf.mxu0
    %v6066 = vadd.f32 %v5934, %v6065
    %v6067 = vpop.f32.mrf.mxu0
    %6068 = vmatprep.mubr.bf16.mxu0 0
    %6069 = vmatmul.mubr.bf16.gmra.mxu0 %v5964
    %v6070 = vpop.f32.mrf.mxu0
    %v6071 = vadd.f32 %v5934, %v6070
    %v6072 = vpop.f32.mrf.mxu0
    %v6073 = vpop.f32.mrf.mxu0
    %v6074 = vadd.f32 %v5934, %v6073
    %v6075 = vpop.f32.mrf.mxu0
    %6076 = vmatprep.mubr.bf16.mxu0 0
    %6077 = vmatmul.mubr.bf16.gmra.mxu0 %v5967
    %v6078 = vpop.f32.mrf.mxu0
    %v6079 = vadd.f32 %v5934, %v6078
    %v6080 = vpop.f32.mrf.mxu0
    %v6081 = vpop.f32.mrf.mxu0
    %v6082 = vadd.f32 %v5934, %v6081
    %v6083 = vpop.f32.mrf.mxu0
    %6084 = vmatprep.mubr.bf16.mxu0 0
    %6085 = vmatmul.mubr.bf16.gmra.mxu0 %v5970
    %v6086 = vpop.f32.mrf.mxu0
    %v6087 = vadd.f32 %v5934, %v6086
    %v6088 = vpop.f32.mrf.mxu0
    %v6089 = vpop.f32.mrf.mxu0
    %v6090 = vadd.f32 %v5934, %v6089
    %v6091 = vpop.f32.mrf.mxu0
    %6092 = vmatprep.mubr.bf16.mxu0 0
    %6093 = vmatmul.mubr.bf16.gmra.mxu0 %v5973
    %v6094 = vpop.f32.mrf.mxu0
    %v6095 = vadd.f32 %v5934, %v6094
    %v6096 = vpop.f32.mrf.mxu0
    %v6097 = vpop.f32.mrf.mxu0
    %v6098 = vadd.f32 %v5934, %v6097
    %v6099 = vpop.f32.mrf.mxu0
    %6100 = vmatprep.mubr.bf16.mxu0 0
    %6101 = vmatmul.mubr.bf16.gmra.mxu0 %v5976
    %v6102 = vpop.f32.mrf.mxu0
    %v6103 = vadd.f32 %v5934, %v6102
    %v6104 = vpop.f32.mrf.mxu0
    %v6105 = vpop.f32.mrf.mxu0
    %v6106 = vadd.f32 %v5934, %v6105
    %v6107 = vpop.f32.mrf.mxu0
    %6108 = vmatprep.mubr.bf16.mxu0 0
    %6109 = vmatmul.mubr.bf16.gmra.mxu0 %v5979
    %v6110 = vpop.f32.mrf.mxu0
    %v6111 = vadd.f32 %v5934, %v6110
    %v6112 = vpop.f32.mrf.mxu0
    %v6113 = vpop.f32.mrf.mxu0
    %v6114 = vadd.f32 %v5934, %v6113
    %v6115 = vpop.f32.mrf.mxu0
    %6116 = vmatprep.mubr.bf16.mxu0 0
    %6117 = vmatmul.mubr.bf16.gmra.mxu0 %v5982
    %v6118 = vpop.f32.mrf.mxu0
    %v6119 = vadd.f32 %v5934, %v6118
    %v6120 = vpop.f32.mrf.mxu0
    %v6121 = vpop.f32.mrf.mxu0
    %v6122 = vadd.f32 %v5934, %v6121
    %v6123 = vpop.f32.mrf.mxu0
    %6124 = vmatprep.mubr.bf16.mxu0 0
    %6125 = vmatmul.mubr.bf16.gmra.mxu0 %v5985
    %v6126 = vpop.f32.mrf.mxu0
    %v6127 = vadd.f32 %v5934, %v6126
    %v6128 = vpop.f32.mrf.mxu0
    %v6129 = vpop.f32.mrf.mxu0
    %v6130 = vadd.f32 %v5934, %v6129
    %v6131 = vpop.f32.mrf.mxu0
    %6132 = vmatprep.mubr.bf16.mxu0 0
    %6133 = vmatmul.mubr.bf16.gmra.mxu0 %v5988
    %v6134 = vpop.f32.mrf.mxu0
    %v6135 = vadd.f32 %v5934, %v6134
    %v6136 = vpop.f32.mrf.mxu0
    %v6137 = vpop.f32.mrf.mxu0
    %v6138 = vadd.f32 %v5934, %v6137
    %v6139 = vpop.f32.mrf.mxu0
    %6140 = vmatprep.mubr.bf16.mxu0 0
    %6141 = vmatmul.mubr.bf16.gmra.mxu0 %v5991
    %v6142 = vpop.f32.mrf.mxu0
    %v6143 = vadd.f32 %v5934, %v6142
    %v6144 = vpop.f32.mrf.mxu0
    %v6145 = vpop.f32.mrf.mxu0
    %v6146 = vadd.f32 %v5934, %v6145
    %v6147 = vpop.f32.mrf.mxu0
    %6148 = vmatprep.mubr.bf16.mxu0 0
    %6149 = vmatmul.mubr.bf16.gmra.mxu0 %v5994
    %v6150 = vpop.f32.mrf.mxu0
    %v6151 = vadd.f32 %v5934, %v6150
    %v6152 = vpop.f32.mrf.mxu0
    %v6153 = vpop.f32.mrf.mxu0
    %v6154 = vadd.f32 %v5934, %v6153
    %v6155 = vpop.f32.mrf.mxu0
    %6156 = vdwg.mxu0
    %v6157 = vmax.f32 %v6031, 0.0
    %v6158 = vmax.f32 %v6034, 0.0
    %v6159 = vmax.f32 %v6039, 0.0
    %v6160 = vmax.f32 %v6042, 0.0
    %v6161 = vmax.f32 %v6047, 0.0
    %v6162 = vmax.f32 %v6050, 0.0
    %v6163 = vmax.f32 %v6055, 0.0
    %v6164 = vmax.f32 %v6058, 0.0
    %v6165 = vmax.f32 %v6063, 0.0
    %v6166 = vmax.f32 %v6066, 0.0
    %v6167 = vmax.f32 %v6071, 0.0
    %v6168 = vmax.f32 %v6074, 0.0
    %v6169 = vmax.f32 %v6079, 0.0
    %v6170 = vmax.f32 %v6082, 0.0
    %v6171 = vmax.f32 %v6087, 0.0
    %v6172 = vmax.f32 %v6090, 0.0
    %v6173 = vmax.f32 %v6095, 0.0
    %v6174 = vmax.f32 %v6098, 0.0
    %v6175 = vmax.f32 %v6103, 0.0
    %v6176 = vmax.f32 %v6106, 0.0
    %v6177 = vmax.f32 %v6111, 0.0
    %v6178 = vmax.f32 %v6114, 0.0
    %v6179 = vmax.f32 %v6119, 0.0
    %v6180 = vmax.f32 %v6122, 0.0
    %v6181 = vmax.f32 %v6127, 0.0
    %v6182 = vmax.f32 %v6130, 0.0
    %v6183 = vmax.f32 %v6135, 0.0
    %v6184 = vmax.f32 %v6138, 0.0
    %v6185 = vmax.f32 %v6143, 0.0
    %v6186 = vmax.f32 %v6146, 0.0
    %v6187 = vmax.f32 %v6151, 0.0
    %v6188 = vmax.f32 %v6154, 0.0
    %v6189 = vpack.c.bf16 %v6158, %v6157
    %v6190 = vpack.c.bf16 %v6160, %v6159
    %v6191 = vpack.c.bf16 %v6162, %v6161
    %v6192 = vpack.c.bf16 %v6164, %v6163
    %v6193 = vpack.c.bf16 %v6166, %v6165
    %v6194 = vpack.c.bf16 %v6168, %v6167
    %v6195 = vpack.c.bf16 %v6170, %v6169
    %v6196 = vpack.c.bf16 %v6172, %v6171
    %v6197 = vpack.c.bf16 %v6174, %v6173
    %v6198 = vpack.c.bf16 %v6176, %v6175
    %v6199 = vpack.c.bf16 %v6178, %v6177
    %v6200 = vpack.c.bf16 %v6180, %v6179
    %v6201 = vpack.c.bf16 %v6182, %v6181
    %v6202 = vpack.c.bf16 %v6184, %v6183
    %v6203 = vpack.c.bf16 %v6186, %v6185
    %v6204 = vpack.c.bf16 %v6188, %v6187
    %v6205 = vld [vmem:[%s12] sm:$0xf]
    %v6206 = vld [vmem:[%s12 + $0x4] sm:$0xf]
    %v6207 = vld [vmem:[%s12 + $0x8] sm:$0xf]
    %v6208 = vld [vmem:[%s12 + $0xc] sm:$0xf]
    %v6209 = vld [vmem:[%s12 + $0x10] sm:$0xf]
    %v6210 = vld [vmem:[%s12 + $0x14] sm:$0xf]
    %v6211 = vld [vmem:[%s12 + $0x18] sm:$0xf]
    %v6212 = vld [vmem:[%s12 + $0x1c] sm:$0xf]
    %v6213 = vld [vmem:[%s13] sm:$0x1]
    %v6215 = vlaneseq
    %v6216 = vshrl.u32 %v6215, 7
    %v6217 = vsub.s32 0, %v6216
    %v6218 = vrot.slane %v6213, %v6217
    %v6228 = vunpack.c.l.b16 %v6205
    %v6229 = vunpack.c.l.b16 %v6206
    %v6230 = vunpack.c.l.b16 %v6207
    %v6231 = vunpack.c.l.b16 %v6208
    %v6232 = vunpack.c.l.b16 %v6209
    %v6233 = vunpack.c.l.b16 %v6210
    %v6234 = vunpack.c.l.b16 %v6211
    %v6235 = vunpack.c.l.b16 %v6212
    %v6236 = vpack.c.b16 %v6229, %v6228
    %v6237 = vpack.c.b16 %v6231, %v6230
    %v6238 = vpack.c.b16 %v6233, %v6232
    %v6239 = vpack.c.b16 %v6235, %v6234
    %vm6244 = vcmask 523264
    %v6246 = vsel %vm6244, %v6189, 0
    %v6249 = vsel %vm6244, %v6190, 0
    %v6252 = vsel %vm6244, %v6191, 0
    %v6255 = vsel %vm6244, %v6192, 0
    %v6258 = vsel %vm6244, %v6193, 0
    %v6261 = vsel %vm6244, %v6194, 0
    %v6264 = vsel %vm6244, %v6195, 0
    %v6267 = vsel %vm6244, %v6196, 0
    %v6270 = vsel %vm6244, %v6197, 0
    %v6273 = vsel %vm6244, %v6198, 0
    %v6276 = vsel %vm6244, %v6199, 0
    %v6279 = vsel %vm6244, %v6200, 0
    %v6282 = vsel %vm6244, %v6201, 0
    %v6285 = vsel %vm6244, %v6202, 0
    %v6288 = vsel %vm6244, %v6203, 0
    %v6291 = vsel %vm6244, %v6204, 0
    %6293 = vmatprep.subr.bf16.mxu0 0
    %6294 = vmatpush1.bf16.msra.mxu0 0
    %6295 = vmatprep.subr.bf16.mxu0 0
    %6296 = vmatpush1.bf16.msra.mxu0 0
    %6297 = vmatprep.subr.bf16.mxu0 0
    %6298 = vmatpush1.bf16.msra.mxu0 0
    %6299 = vmatprep.subr.bf16.mxu0 0
    %6300 = vmatpush1.bf16.msra.mxu0 0
    %6301 = vmatprep.subr.bf16.mxu0 0
    %6302 = vmatpush1.bf16.msra.mxu0 %v6239
    %6303 = vmatprep.subr.bf16.mxu0 0
    %6304 = vmatpush1.bf16.msra.mxu0 %v6238
    %6305 = vmatprep.subr.bf16.mxu0 0
    %6306 = vmatpush1.bf16.msra.mxu0 %v6237
    %6307 = vmatprep.subr.bf16.mxu0 0
    %6308 = vmatpush1.bf16.msra.mxu0 %v6236
    %6309 = vmatprep.subr.bf16.mxu0 0
    %6310 = vmatpush2.bf16.msra.mxu0 0
    %6311 = vmatprep.subr.bf16.mxu0 0
    %6312 = vmatpush2.bf16.msra.mxu0 0
    %6313 = vmatprep.subr.bf16.mxu0 0
    %6314 = vmatpush2.bf16.msra.mxu0 0
    %6315 = vmatprep.subr.bf16.mxu0 0
    %6316 = vmatpush2.bf16.msra.mxu0 0
    %6317 = vmatprep.subr.bf16.mxu0 0
    %6318 = vmatpush2.bf16.msra.mxu0 0
    %6319 = vmatprep.subr.bf16.mxu0 0
    %6320 = vmatpush2.bf16.msra.mxu0 0
    %6321 = vmatprep.subr.bf16.mxu0 0
    %6322 = vmatpush2.bf16.msra.mxu0 0
    %6323 = vmatprep.subr.bf16.mxu0 0
    %6324 = vmatpush2.bf16.msra.mxu0 0
    %6325 = vmatprep.mubr.bf16.mxu0 0
    %6326 = vmatmul.mubr.bf16.gmra.mxu0 %v6246
    %v6327 = vpop.f32.mrf.mxu0
    %v6328 = vadd.f32 %v6218, %v6327
    %v6329 = vpop.f32.mrf.mxu0
    %v6330 = vpop.f32.mrf.mxu0
    %v6331 = vadd.f32 %v6218, %v6330
    %v6332 = vpop.f32.mrf.mxu0
    %6333 = vmatprep.mubr.bf16.mxu0 0
    %6334 = vmatmul.mubr.bf16.gmra.mxu0 %v6249
    %v6335 = vpop.f32.mrf.mxu0
    %v6336 = vadd.f32 %v6218, %v6335
    %v6337 = vpop.f32.mrf.mxu0
    %v6338 = vpop.f32.mrf.mxu0
    %v6339 = vadd.f32 %v6218, %v6338
    %v6340 = vpop.f32.mrf.mxu0
    %6341 = vmatprep.mubr.bf16.mxu0 0
    %6342 = vmatmul.mubr.bf16.gmra.mxu0 %v6252
    %v6343 = vpop.f32.mrf.mxu0
    %v6344 = vadd.f32 %v6218, %v6343
    %v6345 = vpop.f32.mrf.mxu0
    %v6346 = vpop.f32.mrf.mxu0
    %v6347 = vadd.f32 %v6218, %v6346
    %v6348 = vpop.f32.mrf.mxu0
    %6349 = vmatprep.mubr.bf16.mxu0 0
    %6350 = vmatmul.mubr.bf16.gmra.mxu0 %v6255
    %v6351 = vpop.f32.mrf.mxu0
    %v6352 = vadd.f32 %v6218, %v6351
    %v6353 = vpop.f32.mrf.mxu0
    %v6354 = vpop.f32.mrf.mxu0
    %v6355 = vadd.f32 %v6218, %v6354
    %v6356 = vpop.f32.mrf.mxu0
    %6357 = vmatprep.mubr.bf16.mxu0 0
    %6358 = vmatmul.mubr.bf16.gmra.mxu0 %v6258
    %v6359 = vpop.f32.mrf.mxu0
    %v6360 = vadd.f32 %v6218, %v6359
    %v6361 = vpop.f32.mrf.mxu0
    %v6362 = vpop.f32.mrf.mxu0
    %v6363 = vadd.f32 %v6218, %v6362
    %v6364 = vpop.f32.mrf.mxu0
    %6365 = vmatprep.mubr.bf16.mxu0 0
    %6366 = vmatmul.mubr.bf16.gmra.mxu0 %v6261
    %v6367 = vpop.f32.mrf.mxu0
    %v6368 = vadd.f32 %v6218, %v6367
    %v6369 = vpop.f32.mrf.mxu0
    %v6370 = vpop.f32.mrf.mxu0
    %v6371 = vadd.f32 %v6218, %v6370
    %v6372 = vpop.f32.mrf.mxu0
    %6373 = vmatprep.mubr.bf16.mxu0 0
    %6374 = vmatmul.mubr.bf16.gmra.mxu0 %v6264
    %v6375 = vpop.f32.mrf.mxu0
    %v6376 = vadd.f32 %v6218, %v6375
    %v6377 = vpop.f32.mrf.mxu0
    %v6378 = vpop.f32.mrf.mxu0
    %v6379 = vadd.f32 %v6218, %v6378
    %v6380 = vpop.f32.mrf.mxu0
    %6381 = vmatprep.mubr.bf16.mxu0 0
    %6382 = vmatmul.mubr.bf16.gmra.mxu0 %v6267
    %v6383 = vpop.f32.mrf.mxu0
    %v6384 = vadd.f32 %v6218, %v6383
    %v6385 = vpop.f32.mrf.mxu0
    %v6386 = vpop.f32.mrf.mxu0
    %v6387 = vadd.f32 %v6218, %v6386
    %v6388 = vpop.f32.mrf.mxu0
    %6389 = vmatprep.mubr.bf16.mxu0 0
    %6390 = vmatmul.mubr.bf16.gmra.mxu0 %v6270
    %v6391 = vpop.f32.mrf.mxu0
    %v6392 = vadd.f32 %v6218, %v6391
    %v6393 = vpop.f32.mrf.mxu0
    %v6394 = vpop.f32.mrf.mxu0
    %v6395 = vadd.f32 %v6218, %v6394
    %v6396 = vpop.f32.mrf.mxu0
    %6397 = vmatprep.mubr.bf16.mxu0 0
    %6398 = vmatmul.mubr.bf16.gmra.mxu0 %v6273
    %v6399 = vpop.f32.mrf.mxu0
    %v6400 = vadd.f32 %v6218, %v6399
    %v6401 = vpop.f32.mrf.mxu0
    %v6402 = vpop.f32.mrf.mxu0
    %v6403 = vadd.f32 %v6218, %v6402
    %v6404 = vpop.f32.mrf.mxu0
    %6405 = vmatprep.mubr.bf16.mxu0 0
    %6406 = vmatmul.mubr.bf16.gmra.mxu0 %v6276
    %v6407 = vpop.f32.mrf.mxu0
    %v6408 = vadd.f32 %v6218, %v6407
    %v6409 = vpop.f32.mrf.mxu0
    %v6410 = vpop.f32.mrf.mxu0
    %v6411 = vadd.f32 %v6218, %v6410
    %v6412 = vpop.f32.mrf.mxu0
    %6413 = vmatprep.mubr.bf16.mxu0 0
    %6414 = vmatmul.mubr.bf16.gmra.mxu0 %v6279
    %v6415 = vpop.f32.mrf.mxu0
    %v6416 = vadd.f32 %v6218, %v6415
    %v6417 = vpop.f32.mrf.mxu0
    %v6418 = vpop.f32.mrf.mxu0
    %v6419 = vadd.f32 %v6218, %v6418
    %v6420 = vpop.f32.mrf.mxu0
    %6421 = vmatprep.mubr.bf16.mxu0 0
    %6422 = vmatmul.mubr.bf16.gmra.mxu0 %v6282
    %v6423 = vpop.f32.mrf.mxu0
    %v6424 = vadd.f32 %v6218, %v6423
    %v6425 = vpop.f32.mrf.mxu0
    %v6426 = vpop.f32.mrf.mxu0
    %v6427 = vadd.f32 %v6218, %v6426
    %v6428 = vpop.f32.mrf.mxu0
    %6429 = vmatprep.mubr.bf16.mxu0 0
    %6430 = vmatmul.mubr.bf16.gmra.mxu0 %v6285
    %v6431 = vpop.f32.mrf.mxu0
    %v6432 = vadd.f32 %v6218, %v6431
    %v6433 = vpop.f32.mrf.mxu0
    %v6434 = vpop.f32.mrf.mxu0
    %v6435 = vadd.f32 %v6218, %v6434
    %v6436 = vpop.f32.mrf.mxu0
    %6437 = vmatprep.mubr.bf16.mxu0 0
    %6438 = vmatmul.mubr.bf16.gmra.mxu0 %v6288
    %v6439 = vpop.f32.mrf.mxu0
    %v6440 = vadd.f32 %v6218, %v6439
    %v6441 = vpop.f32.mrf.mxu0
    %v6442 = vpop.f32.mrf.mxu0
    %v6443 = vadd.f32 %v6218, %v6442
    %v6444 = vpop.f32.mrf.mxu0
    %6445 = vmatprep.mubr.bf16.mxu0 0
    %6446 = vmatmul.mubr.bf16.gmra.mxu0 %v6291
    %v6447 = vpop.f32.mrf.mxu0
    %v6448 = vadd.f32 %v6218, %v6447
    %v6449 = vpop.f32.mrf.mxu0
    %v6450 = vpop.f32.mrf.mxu0
    %v6451 = vadd.f32 %v6218, %v6450
    %v6452 = vpop.f32.mrf.mxu0
    %6453 = vdwg.mxu0
    %v6454 = vadd.f32 %v5877, %v6328
    %v6455 = vadd.f32 %v5878, %v6331
    %v6456 = vadd.f32 %v5879, %v6336
    %v6457 = vadd.f32 %v5880, %v6339
    %v6458 = vadd.f32 %v5881, %v6344
    %v6459 = vadd.f32 %v5882, %v6347
    %v6460 = vadd.f32 %v5883, %v6352
    %v6461 = vadd.f32 %v5884, %v6355
    %v6462 = vadd.f32 %v5885, %v6360
    %v6463 = vadd.f32 %v5886, %v6363
    %v6464 = vadd.f32 %v5887, %v6368
    %v6465 = vadd.f32 %v5888, %v6371
    %v6466 = vadd.f32 %v5889, %v6376
    %v6467 = vadd.f32 %v5890, %v6379
    %v6468 = vadd.f32 %v5891, %v6384
    %v6469 = vadd.f32 %v5892, %v6387
    %v6470 = vadd.f32 %v5893, %v6392
    %v6471 = vadd.f32 %v5894, %v6395
    %v6472 = vadd.f32 %v5895, %v6400
    %v6473 = vadd.f32 %v5896, %v6403
    %v6474 = vadd.f32 %v5897, %v6408
    %v6475 = vadd.f32 %v5898, %v6411
    %v6476 = vadd.f32 %v5899, %v6416
    %v6477 = vadd.f32 %v5900, %v6419
    %v6478 = vadd.f32 %v5901, %v6424
    %v6479 = vadd.f32 %v5902, %v6427
    %v6480 = vadd.f32 %v5903, %v6432
    %v6481 = vadd.f32 %v5904, %v6435
    %v6482 = vadd.f32 %v5905, %v6440
    %v6483 = vadd.f32 %v5906, %v6443
    %v6484 = vadd.f32 %v5907, %v6448
    %v6485 = vadd.f32 %v5908, %v6451
    %v6486 = vld [vmem:[%s14] sm:$0x1]
    %v6487 = vld [vmem:[%s15] sm:$0x1]
    %v6488 = vsel %vm533, %v6454, 0.0
    %6489 = vadd.xlane.f32.xlu0 %v6488
    %v6490 = vpop.xlane.xlu0 %6489
    %v6491 = vsel %vm533, %v6455, 0.0
    %6492 = vadd.xlane.f32.xlu0 %v6491
    %v6493 = vpop.xlane.xlu0 %6492
    %v6494 = vsel %vm533, %v6456, 0.0
    %6495 = vadd.xlane.f32.xlu0 %v6494
    %v6496 = vpop.xlane.xlu0 %6495
    %v6497 = vsel %vm533, %v6457, 0.0
    %6498 = vadd.xlane.f32.xlu0 %v6497
    %v6499 = vpop.xlane.xlu0 %6498
    %v6500 = vsel %vm533, %v6458, 0.0
    %6501 = vadd.xlane.f32.xlu0 %v6500
    %v6502 = vpop.xlane.xlu0 %6501
    %v6503 = vsel %vm533, %v6459, 0.0
    %6504 = vadd.xlane.f32.xlu0 %v6503
    %v6505 = vpop.xlane.xlu0 %6504
    %v6506 = vsel %vm533, %v6460, 0.0
    %6507 = vadd.xlane.f32.xlu0 %v6506
    %v6508 = vpop.xlane.xlu0 %6507
    %v6509 = vsel %vm533, %v6461, 0.0
    %6510 = vadd.xlane.f32.xlu0 %v6509
    %v6511 = vpop.xlane.xlu0 %6510
    %v6512 = vsel %vm533, %v6462, 0.0
    %6513 = vadd.xlane.f32.xlu0 %v6512
    %v6514 = vpop.xlane.xlu0 %6513
    %v6515 = vsel %vm533, %v6463, 0.0
    %6516 = vadd.xlane.f32.xlu0 %v6515
    %v6517 = vpop.xlane.xlu0 %6516
    %v6518 = vsel %vm533, %v6464, 0.0
    %6519 = vadd.xlane.f32.xlu0 %v6518
    %v6520 = vpop.xlane.xlu0 %6519
    %v6521 = vsel %vm533, %v6465, 0.0
    %6522 = vadd.xlane.f32.xlu0 %v6521
    %v6523 = vpop.xlane.xlu0 %6522
    %v6524 = vsel %vm533, %v6466, 0.0
    %6525 = vadd.xlane.f32.xlu0 %v6524
    %v6526 = vpop.xlane.xlu0 %6525
    %v6527 = vsel %vm533, %v6467, 0.0
    %6528 = vadd.xlane.f32.xlu0 %v6527
    %v6529 = vpop.xlane.xlu0 %6528
    %v6530 = vsel %vm533, %v6468, 0.0
    %6531 = vadd.xlane.f32.xlu0 %v6530
    %v6532 = vpop.xlane.xlu0 %6531
    %v6533 = vsel %vm533, %v6469, 0.0
    %6534 = vadd.xlane.f32.xlu0 %v6533
    %v6535 = vpop.xlane.xlu0 %6534
    %v6536 = vsel %vm533, %v6470, 0.0
    %6537 = vadd.xlane.f32.xlu0 %v6536
    %v6538 = vpop.xlane.xlu0 %6537
    %v6539 = vsel %vm533, %v6471, 0.0
    %6540 = vadd.xlane.f32.xlu0 %v6539
    %v6541 = vpop.xlane.xlu0 %6540
    %v6542 = vsel %vm533, %v6472, 0.0
    %6543 = vadd.xlane.f32.xlu0 %v6542
    %v6544 = vpop.xlane.xlu0 %6543
    %v6545 = vsel %vm533, %v6473, 0.0
    %6546 = vadd.xlane.f32.xlu0 %v6545
    %v6547 = vpop.xlane.xlu0 %6546
    %v6548 = vsel %vm533, %v6474, 0.0
    %6549 = vadd.xlane.f32.xlu0 %v6548
    %v6550 = vpop.xlane.xlu0 %6549
    %v6551 = vsel %vm533, %v6475, 0.0
    %6552 = vadd.xlane.f32.xlu0 %v6551
    %v6553 = vpop.xlane.xlu0 %6552
    %v6554 = vsel %vm533, %v6476, 0.0
    %6555 = vadd.xlane.f32.xlu0 %v6554
    %v6556 = vpop.xlane.xlu0 %6555
    %v6557 = vsel %vm533, %v6477, 0.0
    %6558 = vadd.xlane.f32.xlu0 %v6557
    %v6559 = vpop.xlane.xlu0 %6558
    %v6560 = vsel %vm533, %v6478, 0.0
    %6561 = vadd.xlane.f32.xlu0 %v6560
    %v6562 = vpop.xlane.xlu0 %6561
    %v6563 = vsel %vm533, %v6479, 0.0
    %6564 = vadd.xlane.f32.xlu0 %v6563
    %v6565 = vpop.xlane.xlu0 %6564
    %v6566 = vsel %vm533, %v6480, 0.0
    %6567 = vadd.xlane.f32.xlu0 %v6566
    %v6568 = vpop.xlane.xlu0 %6567
    %v6569 = vsel %vm533, %v6481, 0.0
    %6570 = vadd.xlane.f32.xlu0 %v6569
    %v6571 = vpop.xlane.xlu0 %6570
    %v6572 = vsel %vm533, %v6482, 0.0
    %6573 = vadd.xlane.f32.xlu0 %v6572
    %v6574 = vpop.xlane.xlu0 %6573
    %v6575 = vsel %vm533, %v6483, 0.0
    %6576 = vadd.xlane.f32.xlu0 %v6575
    %v6577 = vpop.xlane.xlu0 %6576
    %v6578 = vsel %vm533, %v6484, 0.0
    %6579 = vadd.xlane.f32.xlu0 %v6578
    %v6580 = vpop.xlane.xlu0 %6579
    %v6581 = vsel %vm533, %v6485, 0.0
    %6582 = vadd.xlane.f32.xlu0 %v6581
    %v6583 = vpop.xlane.xlu0 %6582
    %v6584 = vmul.f32 %v6490, %v5512
    %v6585 = vmul.f32 %v6493, %v5512
    %v6586 = vmul.f32 %v6496, %v5512
    %v6587 = vmul.f32 %v6499, %v5512
    %v6588 = vmul.f32 %v6502, %v5512
    %v6589 = vmul.f32 %v6505, %v5512
    %v6590 = vmul.f32 %v6508, %v5512
    %v6591 = vmul.f32 %v6511, %v5512
    %v6592 = vmul.f32 %v6514, %v5512
    %v6593 = vmul.f32 %v6517, %v5512
    %v6594 = vmul.f32 %v6520, %v5512
    %v6595 = vmul.f32 %v6523, %v5512
    %v6596 = vmul.f32 %v6526, %v5512
    %v6597 = vmul.f32 %v6529, %v5512
    %v6598 = vmul.f32 %v6532, %v5512
    %v6599 = vmul.f32 %v6535, %v5512
    %v6600 = vmul.f32 %v6538, %v5512
    %v6601 = vmul.f32 %v6541, %v5512
    %v6602 = vmul.f32 %v6544, %v5512
    %v6603 = vmul.f32 %v6547, %v5512
    %v6604 = vmul.f32 %v6550, %v5512
    %v6605 = vmul.f32 %v6553, %v5512
    %v6606 = vmul.f32 %v6556, %v5512
    %v6607 = vmul.f32 %v6559, %v5512
    %v6608 = vmul.f32 %v6562, %v5512
    %v6609 = vmul.f32 %v6565, %v5512
    %v6610 = vmul.f32 %v6568, %v5512
    %v6611 = vmul.f32 %v6571, %v5512
    %v6612 = vmul.f32 %v6574, %v5512
    %v6613 = vmul.f32 %v6577, %v5512
    %v6614 = vmul.f32 %v6580, %v5512
    %v6615 = vmul.f32 %v6583, %v5512
    %v6616 = vsub.f32 %v6454, %v6584
    %v6617 = vsub.f32 %v6455, %v6585
    %v6618 = vsub.f32 %v6456, %v6586
    %v6619 = vsub.f32 %v6457, %v6587
    %v6620 = vsub.f32 %v6458, %v6588
    %v6621 = vsub.f32 %v6459, %v6589
    %v6622 = vsub.f32 %v6460, %v6590
    %v6623 = vsub.f32 %v6461, %v6591
    %v6624 = vsub.f32 %v6462, %v6592
    %v6625 = vsub.f32 %v6463, %v6593
    %v6626 = vsub.f32 %v6464, %v6594
    %v6627 = vsub.f32 %v6465, %v6595
    %v6628 = vsub.f32 %v6466, %v6596
    %v6629 = vsub.f32 %v6467, %v6597
    %v6630 = vsub.f32 %v6468, %v6598
    %v6631 = vsub.f32 %v6469, %v6599
    %v6632 = vsub.f32 %v6470, %v6600
    %v6633 = vsub.f32 %v6471, %v6601
    %v6634 = vsub.f32 %v6472, %v6602
    %v6635 = vsub.f32 %v6473, %v6603
    %v6636 = vsub.f32 %v6474, %v6604
    %v6637 = vsub.f32 %v6475, %v6605
    %v6638 = vsub.f32 %v6476, %v6606
    %v6639 = vsub.f32 %v6477, %v6607
    %v6640 = vsub.f32 %v6478, %v6608
    %v6641 = vsub.f32 %v6479, %v6609
    %v6642 = vsub.f32 %v6480, %v6610
    %v6643 = vsub.f32 %v6481, %v6611
    %v6644 = vsub.f32 %v6482, %v6612
    %v6645 = vsub.f32 %v6483, %v6613
    %v6646 = vsub.f32 %v6484, %v6614
    %v6647 = vsub.f32 %v6485, %v6615
    %v6648 = vmul.f32 %v6616, %v6616
    %v6649 = vmul.f32 %v6617, %v6617
    %v6650 = vmul.f32 %v6618, %v6618
    %v6651 = vmul.f32 %v6619, %v6619
    %v6652 = vmul.f32 %v6620, %v6620
    %v6653 = vmul.f32 %v6621, %v6621
    %v6654 = vmul.f32 %v6622, %v6622
    %v6655 = vmul.f32 %v6623, %v6623
    %v6656 = vmul.f32 %v6624, %v6624
    %v6657 = vmul.f32 %v6625, %v6625
    %v6658 = vmul.f32 %v6626, %v6626
    %v6659 = vmul.f32 %v6627, %v6627
    %v6660 = vmul.f32 %v6628, %v6628
    %v6661 = vmul.f32 %v6629, %v6629
    %v6662 = vmul.f32 %v6630, %v6630
    %v6663 = vmul.f32 %v6631, %v6631
    %v6664 = vmul.f32 %v6632, %v6632
    %v6665 = vmul.f32 %v6633, %v6633
    %v6666 = vmul.f32 %v6634, %v6634
    %v6667 = vmul.f32 %v6635, %v6635
    %v6668 = vmul.f32 %v6636, %v6636
    %v6669 = vmul.f32 %v6637, %v6637
    %v6670 = vmul.f32 %v6638, %v6638
    %v6671 = vmul.f32 %v6639, %v6639
    %v6672 = vmul.f32 %v6640, %v6640
    %v6673 = vmul.f32 %v6641, %v6641
    %v6674 = vmul.f32 %v6642, %v6642
    %v6675 = vmul.f32 %v6643, %v6643
    %v6676 = vmul.f32 %v6644, %v6644
    %v6677 = vmul.f32 %v6645, %v6645
    %v6678 = vmul.f32 %v6646, %v6646
    %v6679 = vmul.f32 %v6647, %v6647
    %v6680 = vsel %vm533, %v6648, 0.0
    %6681 = vadd.xlane.f32.xlu0 %v6680
    %v6682 = vpop.xlane.xlu0 %6681
    %v6683 = vsel %vm533, %v6649, 0.0
    %6684 = vadd.xlane.f32.xlu0 %v6683
    %v6685 = vpop.xlane.xlu0 %6684
    %v6686 = vsel %vm533, %v6650, 0.0
    %6687 = vadd.xlane.f32.xlu0 %v6686
    %v6688 = vpop.xlane.xlu0 %6687
    %v6689 = vsel %vm533, %v6651, 0.0
    %6690 = vadd.xlane.f32.xlu0 %v6689
    %v6691 = vpop.xlane.xlu0 %6690
    %v6692 = vsel %vm533, %v6652, 0.0
    %6693 = vadd.xlane.f32.xlu0 %v6692
    %v6694 = vpop.xlane.xlu0 %6693
    %v6695 = vsel %vm533, %v6653, 0.0
    %6696 = vadd.xlane.f32.xlu0 %v6695
    %v6697 = vpop.xlane.xlu0 %6696
    %v6698 = vsel %vm533, %v6654, 0.0
    %6699 = vadd.xlane.f32.xlu0 %v6698
    %v6700 = vpop.xlane.xlu0 %6699
    %v6701 = vsel %vm533, %v6655, 0.0
    %6702 = vadd.xlane.f32.xlu0 %v6701
    %v6703 = vpop.xlane.xlu0 %6702
    %v6704 = vsel %vm533, %v6656, 0.0
    %6705 = vadd.xlane.f32.xlu0 %v6704
    %v6706 = vpop.xlane.xlu0 %6705
    %v6707 = vsel %vm533, %v6657, 0.0
    %6708 = vadd.xlane.f32.xlu0 %v6707
    %v6709 = vpop.xlane.xlu0 %6708
    %v6710 = vsel %vm533, %v6658, 0.0
    %6711 = vadd.xlane.f32.xlu0 %v6710
    %v6712 = vpop.xlane.xlu0 %6711
    %v6713 = vsel %vm533, %v6659, 0.0
    %6714 = vadd.xlane.f32.xlu0 %v6713
    %v6715 = vpop.xlane.xlu0 %6714
    %v6716 = vsel %vm533, %v6660, 0.0
    %6717 = vadd.xlane.f32.xlu0 %v6716
    %v6718 = vpop.xlane.xlu0 %6717
    %v6719 = vsel %vm533, %v6661, 0.0
    %6720 = vadd.xlane.f32.xlu0 %v6719
    %v6721 = vpop.xlane.xlu0 %6720
    %v6722 = vsel %vm533, %v6662, 0.0
    %6723 = vadd.xlane.f32.xlu0 %v6722
    %v6724 = vpop.xlane.xlu0 %6723
    %v6725 = vsel %vm533, %v6663, 0.0
    %6726 = vadd.xlane.f32.xlu0 %v6725
    %v6727 = vpop.xlane.xlu0 %6726
    %v6728 = vsel %vm533, %v6664, 0.0
    %6729 = vadd.xlane.f32.xlu0 %v6728
    %v6730 = vpop.xlane.xlu0 %6729
    %v6731 = vsel %vm533, %v6665, 0.0
    %6732 = vadd.xlane.f32.xlu0 %v6731
    %v6733 = vpop.xlane.xlu0 %6732
    %v6734 = vsel %vm533, %v6666, 0.0
    %6735 = vadd.xlane.f32.xlu0 %v6734
    %v6736 = vpop.xlane.xlu0 %6735
    %v6737 = vsel %vm533, %v6667, 0.0
    %6738 = vadd.xlane.f32.xlu0 %v6737
    %v6739 = vpop.xlane.xlu0 %6738
    %v6740 = vsel %vm533, %v6668, 0.0
    %6741 = vadd.xlane.f32.xlu0 %v6740
    %v6742 = vpop.xlane.xlu0 %6741
    %v6743 = vsel %vm533, %v6669, 0.0
    %6744 = vadd.xlane.f32.xlu0 %v6743
    %v6745 = vpop.xlane.xlu0 %6744
    %v6746 = vsel %vm533, %v6670, 0.0
    %6747 = vadd.xlane.f32.xlu0 %v6746
    %v6748 = vpop.xlane.xlu0 %6747
    %v6749 = vsel %vm533, %v6671, 0.0
    %6750 = vadd.xlane.f32.xlu0 %v6749
    %v6751 = vpop.xlane.xlu0 %6750
    %v6752 = vsel %vm533, %v6672, 0.0
    %6753 = vadd.xlane.f32.xlu0 %v6752
    %v6754 = vpop.xlane.xlu0 %6753
    %v6755 = vsel %vm533, %v6673, 0.0
    %6756 = vadd.xlane.f32.xlu0 %v6755
    %v6757 = vpop.xlane.xlu0 %6756
    %v6758 = vsel %vm533, %v6674, 0.0
    %6759 = vadd.xlane.f32.xlu0 %v6758
    %v6760 = vpop.xlane.xlu0 %6759
    %v6761 = vsel %vm533, %v6675, 0.0
    %6762 = vadd.xlane.f32.xlu0 %v6761
    %v6763 = vpop.xlane.xlu0 %6762
    %v6764 = vsel %vm533, %v6676, 0.0
    %6765 = vadd.xlane.f32.xlu0 %v6764
    %v6766 = vpop.xlane.xlu0 %6765
    %v6767 = vsel %vm533, %v6677, 0.0
    %6768 = vadd.xlane.f32.xlu0 %v6767
    %v6769 = vpop.xlane.xlu0 %6768
    %v6770 = vsel %vm533, %v6678, 0.0
    %6771 = vadd.xlane.f32.xlu0 %v6770
    %v6772 = vpop.xlane.xlu0 %6771
    %v6773 = vsel %vm533, %v6679, 0.0
    %6774 = vadd.xlane.f32.xlu0 %v6773
    %v6775 = vpop.xlane.xlu0 %6774
    %v6776 = vmul.f32 %v6682, %v5512
    %v6777 = vmul.f32 %v6685, %v5512
    %v6778 = vmul.f32 %v6688, %v5512
    %v6779 = vmul.f32 %v6691, %v5512
    %v6780 = vmul.f32 %v6694, %v5512
    %v6781 = vmul.f32 %v6697, %v5512
    %v6782 = vmul.f32 %v6700, %v5512
    %v6783 = vmul.f32 %v6703, %v5512
    %v6784 = vmul.f32 %v6706, %v5512
    %v6785 = vmul.f32 %v6709, %v5512
    %v6786 = vmul.f32 %v6712, %v5512
    %v6787 = vmul.f32 %v6715, %v5512
    %v6788 = vmul.f32 %v6718, %v5512
    %v6789 = vmul.f32 %v6721, %v5512
    %v6790 = vmul.f32 %v6724, %v5512
    %v6791 = vmul.f32 %v6727, %v5512
    %v6792 = vmul.f32 %v6730, %v5512
    %v6793 = vmul.f32 %v6733, %v5512
    %v6794 = vmul.f32 %v6736, %v5512
    %v6795 = vmul.f32 %v6739, %v5512
    %v6796 = vmul.f32 %v6742, %v5512
    %v6797 = vmul.f32 %v6745, %v5512
    %v6798 = vmul.f32 %v6748, %v5512
    %v6799 = vmul.f32 %v6751, %v5512
    %v6800 = vmul.f32 %v6754, %v5512
    %v6801 = vmul.f32 %v6757, %v5512
    %v6802 = vmul.f32 %v6760, %v5512
    %v6803 = vmul.f32 %v6763, %v5512
    %v6804 = vmul.f32 %v6766, %v5512
    %v6805 = vmul.f32 %v6769, %v5512
    %v6806 = vmul.f32 %v6772, %v5512
    %v6807 = vmul.f32 %v6775, %v5512
    %v6808 = vadd.f32 %v6776, 1e-05
    %v6809 = vadd.f32 %v6777, 1e-05
    %v6810 = vadd.f32 %v6778, 1e-05
    %v6811 = vadd.f32 %v6779, 1e-05
    %v6812 = vadd.f32 %v6780, 1e-05
    %v6813 = vadd.f32 %v6781, 1e-05
    %v6814 = vadd.f32 %v6782, 1e-05
    %v6815 = vadd.f32 %v6783, 1e-05
    %v6816 = vadd.f32 %v6784, 1e-05
    %v6817 = vadd.f32 %v6785, 1e-05
    %v6818 = vadd.f32 %v6786, 1e-05
    %v6819 = vadd.f32 %v6787, 1e-05
    %v6820 = vadd.f32 %v6788, 1e-05
    %v6821 = vadd.f32 %v6789, 1e-05
    %v6822 = vadd.f32 %v6790, 1e-05
    %v6823 = vadd.f32 %v6791, 1e-05
    %v6824 = vadd.f32 %v6792, 1e-05
    %v6825 = vadd.f32 %v6793, 1e-05
    %v6826 = vadd.f32 %v6794, 1e-05
    %v6827 = vadd.f32 %v6795, 1e-05
    %v6828 = vadd.f32 %v6796, 1e-05
    %v6829 = vadd.f32 %v6797, 1e-05
    %v6830 = vadd.f32 %v6798, 1e-05
    %v6831 = vadd.f32 %v6799, 1e-05
    %v6832 = vadd.f32 %v6800, 1e-05
    %v6833 = vadd.f32 %v6801, 1e-05
    %v6834 = vadd.f32 %v6802, 1e-05
    %v6835 = vadd.f32 %v6803, 1e-05
    %v6836 = vadd.f32 %v6804, 1e-05
    %v6837 = vadd.f32 %v6805, 1e-05
    %v6838 = vadd.f32 %v6806, 1e-05
    %v6839 = vadd.f32 %v6807, 1e-05
    %v6840 = vrsqrt.pop %v6808
    %v6841 = vrsqrt.pop %v6809
    %v6842 = vrsqrt.pop %v6810
    %v6843 = vrsqrt.pop %v6811
    %v6844 = vrsqrt.pop %v6812
    %v6845 = vrsqrt.pop %v6813
    %v6846 = vrsqrt.pop %v6814
    %v6847 = vrsqrt.pop %v6815
    %v6848 = vrsqrt.pop %v6816
    %v6849 = vrsqrt.pop %v6817
    %v6850 = vrsqrt.pop %v6818
    %v6851 = vrsqrt.pop %v6819
    %v6852 = vrsqrt.pop %v6820
    %v6853 = vrsqrt.pop %v6821
    %v6854 = vrsqrt.pop %v6822
    %v6855 = vrsqrt.pop %v6823
    %v6856 = vrsqrt.pop %v6824
    %v6857 = vrsqrt.pop %v6825
    %v6858 = vrsqrt.pop %v6826
    %v6859 = vrsqrt.pop %v6827
    %v6860 = vrsqrt.pop %v6828
    %v6861 = vrsqrt.pop %v6829
    %v6862 = vrsqrt.pop %v6830
    %v6863 = vrsqrt.pop %v6831
    %v6864 = vrsqrt.pop %v6832
    %v6865 = vrsqrt.pop %v6833
    %v6866 = vrsqrt.pop %v6834
    %v6867 = vrsqrt.pop %v6835
    %v6868 = vrsqrt.pop %v6836
    %v6869 = vrsqrt.pop %v6837
    %v6870 = vrsqrt.pop %v6838
    %v6871 = vrsqrt.pop %v6839
    %v6872 = vmul.f32 %v6616, %v6840
    %v6873 = vmul.f32 %v6617, %v6841
    %v6874 = vmul.f32 %v6618, %v6842
    %v6875 = vmul.f32 %v6619, %v6843
    %v6876 = vmul.f32 %v6620, %v6844
    %v6877 = vmul.f32 %v6621, %v6845
    %v6878 = vmul.f32 %v6622, %v6846
    %v6879 = vmul.f32 %v6623, %v6847
    %v6880 = vmul.f32 %v6624, %v6848
    %v6881 = vmul.f32 %v6625, %v6849
    %v6882 = vmul.f32 %v6626, %v6850
    %v6883 = vmul.f32 %v6627, %v6851
    %v6884 = vmul.f32 %v6628, %v6852
    %v6885 = vmul.f32 %v6629, %v6853
    %v6886 = vmul.f32 %v6630, %v6854
    %v6887 = vmul.f32 %v6631, %v6855
    %v6888 = vmul.f32 %v6632, %v6856
    %v6889 = vmul.f32 %v6633, %v6857
    %v6890 = vmul.f32 %v6634, %v6858
    %v6891 = vmul.f32 %v6635, %v6859
    %v6892 = vmul.f32 %v6636, %v6860
    %v6893 = vmul.f32 %v6637, %v6861
    %v6894 = vmul.f32 %v6638, %v6862
    %v6895 = vmul.f32 %v6639, %v6863
    %v6896 = vmul.f32 %v6640, %v6864
    %v6897 = vmul.f32 %v6641, %v6865
    %v6898 = vmul.f32 %v6642, %v6866
    %v6899 = vmul.f32 %v6643, %v6867
    %v6900 = vmul.f32 %v6644, %v6868
    %v6901 = vmul.f32 %v6645, %v6869
    %v6902 = vmul.f32 %v6646, %v6870
    %v6903 = vmul.f32 %v6647, %v6871
    %v6905 = vlaneseq
    %v6906 = vshrl.u32 %v6905, 7
    %v6907 = vsub.s32 0, %v6906
    %v6908 = vrot.slane %v6486, %v6907
    %v6910 = vmul.f32 %v6872, %v6908
    %v6911 = vmul.f32 %v6873, %v6908
    %v6912 = vmul.f32 %v6874, %v6908
    %v6913 = vmul.f32 %v6875, %v6908
    %v6914 = vmul.f32 %v6876, %v6908
    %v6915 = vmul.f32 %v6877, %v6908
    %v6916 = vmul.f32 %v6878, %v6908
    %v6917 = vmul.f32 %v6879, %v6908
    %v6918 = vmul.f32 %v6880, %v6908
    %v6919 = vmul.f32 %v6881, %v6908
    %v6920 = vmul.f32 %v6882, %v6908
    %v6921 = vmul.f32 %v6883, %v6908
    %v6922 = vmul.f32 %v6884, %v6908
    %v6923 = vmul.f32 %v6885, %v6908
    %v6924 = vmul.f32 %v6886, %v6908
    %v6925 = vmul.f32 %v6887, %v6908
    %v6926 = vmul.f32 %v6888, %v6908
    %v6927 = vmul.f32 %v6889, %v6908
    %v6928 = vmul.f32 %v6890, %v6908
    %v6929 = vmul.f32 %v6891, %v6908
    %v6930 = vmul.f32 %v6892, %v6908
    %v6931 = vmul.f32 %v6893, %v6908
    %v6932 = vmul.f32 %v6894, %v6908
    %v6933 = vmul.f32 %v6895, %v6908
    %v6934 = vmul.f32 %v6896, %v6908
    %v6935 = vmul.f32 %v6897, %v6908
    %v6936 = vmul.f32 %v6898, %v6908
    %v6937 = vmul.f32 %v6899, %v6908
    %v6938 = vmul.f32 %v6900, %v6908
    %v6939 = vmul.f32 %v6901, %v6908
    %v6940 = vmul.f32 %v6902, %v6908
    %v6941 = vmul.f32 %v6903, %v6908
    %v6943 = vlaneseq
    %v6944 = vshrl.u32 %v6943, 7
    %v6945 = vsub.s32 0, %v6944
    %v6946 = vrot.slane %v6487, %v6945
    %v6948 = vadd.f32 %v6910, %v6946
    %v6949 = vadd.f32 %v6911, %v6946
    %v6950 = vadd.f32 %v6912, %v6946
    %v6951 = vadd.f32 %v6913, %v6946
    %v6952 = vadd.f32 %v6914, %v6946
    %v6953 = vadd.f32 %v6915, %v6946
    %v6954 = vadd.f32 %v6916, %v6946
    %v6955 = vadd.f32 %v6917, %v6946
    %v6956 = vadd.f32 %v6918, %v6946
    %v6957 = vadd.f32 %v6919, %v6946
    %v6958 = vadd.f32 %v6920, %v6946
    %v6959 = vadd.f32 %v6921, %v6946
    %v6960 = vadd.f32 %v6922, %v6946
    %v6961 = vadd.f32 %v6923, %v6946
    %v6962 = vadd.f32 %v6924, %v6946
    %v6963 = vadd.f32 %v6925, %v6946
    %v6964 = vadd.f32 %v6926, %v6946
    %v6965 = vadd.f32 %v6927, %v6946
    %v6966 = vadd.f32 %v6928, %v6946
    %v6967 = vadd.f32 %v6929, %v6946
    %v6968 = vadd.f32 %v6930, %v6946
    %v6969 = vadd.f32 %v6931, %v6946
    %v6970 = vadd.f32 %v6932, %v6946
    %v6971 = vadd.f32 %v6933, %v6946
    %v6972 = vadd.f32 %v6934, %v6946
    %v6973 = vadd.f32 %v6935, %v6946
    %v6974 = vadd.f32 %v6936, %v6946
    %v6975 = vadd.f32 %v6937, %v6946
    %v6976 = vadd.f32 %v6938, %v6946
    %v6977 = vadd.f32 %v6939, %v6946
    %v6978 = vadd.f32 %v6940, %v6946
    %v6979 = vadd.f32 %v6941, %v6946
    %v6980 = vpack.c.bf16 %v6949, %v6948
    %v6981 = vpack.c.bf16 %v6951, %v6950
    %v6982 = vpack.c.bf16 %v6953, %v6952
    %v6983 = vpack.c.bf16 %v6955, %v6954
    %v6984 = vpack.c.bf16 %v6957, %v6956
    %v6985 = vpack.c.bf16 %v6959, %v6958
    %v6986 = vpack.c.bf16 %v6961, %v6960
    %v6987 = vpack.c.bf16 %v6963, %v6962
    %v6988 = vpack.c.bf16 %v6965, %v6964
    %v6989 = vpack.c.bf16 %v6967, %v6966
    %v6990 = vpack.c.bf16 %v6969, %v6968
    %v6991 = vpack.c.bf16 %v6971, %v6970
    %v6992 = vpack.c.bf16 %v6973, %v6972
    %v6993 = vpack.c.bf16 %v6975, %v6974
    %v6994 = vpack.c.bf16 %v6977, %v6976
    %v6995 = vpack.c.bf16 %v6979, %v6978
    %v6997 = vrot.slane %v6964, 7
    %vm6999 = vcmask 1040384
    %v7000 = vsel %vm6999, %v6948, %v6997
    %v7001 = vpack.c.bf16 %v7000, %v7000
    %s7002 = scalar_lea.vmem %s4, 16
    %v7003 = vld [vmem:[%s7002] sm:$0xf]
    %v7004 = vld [vmem:[%s7002 + $0x4] sm:$0xf]
    %v7005 = vld [vmem:[%s7002 + $0x8] sm:$0xf]
    %v7006 = vld [vmem:[%s7002 + $0xc] sm:$0xf]
    %s7007 = scalar_lea.vmem %s5, 1
    %v7008 = vld [vmem:[%s7007] sm:$0x1]
    %v7010 = vlaneseq
    %v7011 = vshrl.u32 %v7010, 7
    %v7012 = vsub.s32 0, %v7011
    %v7013 = vrot.slane %v7008, %v7012
    %v7019 = vunpack.c.l.b16 %v7003
    %v7020 = vunpack.c.l.b16 %v7004
    %v7021 = vunpack.c.l.b16 %v7005
    %v7022 = vunpack.c.l.b16 %v7006
    %v7023 = vpack.c.b16 %v7020, %v7019
    %v7024 = vpack.c.b16 %v7022, %v7021
    %v7028 = vsel %vm533, %v7001, 0
    %7030 = vmatprep.subr.bf16.mxu0 0
    %7031 = vmatpush1.bf16.msra.mxu0 0
    %7032 = vmatprep.subr.bf16.mxu0 0
    %7033 = vmatpush1.bf16.msra.mxu0 0
    %7034 = vmatprep.subr.bf16.mxu0 0
    %7035 = vmatpush1.bf16.msra.mxu0 0
    %7036 = vmatprep.subr.bf16.mxu0 0
    %7037 = vmatpush1.bf16.msra.mxu0 0
    %7038 = vmatprep.subr.bf16.mxu0 0
    %7039 = vmatpush1.bf16.msra.mxu0 0
    %7040 = vmatprep.subr.bf16.mxu0 0
    %7041 = vmatpush1.bf16.msra.mxu0 0
    %7042 = vmatprep.subr.bf16.mxu0 0
    %7043 = vmatpush1.bf16.msra.mxu0 %v7024
    %7044 = vmatprep.subr.bf16.mxu0 0
    %7045 = vmatpush1.bf16.msra.mxu0 %v7023
    %7046 = vmatprep.subr.bf16.mxu0 0
    %7047 = vmatpush2.bf16.msra.mxu0 0
    %7048 = vmatprep.subr.bf16.mxu0 0
    %7049 = vmatpush2.bf16.msra.mxu0 0
    %7050 = vmatprep.subr.bf16.mxu0 0
    %7051 = vmatpush2.bf16.msra.mxu0 0
    %7052 = vmatprep.subr.bf16.mxu0 0
    %7053 = vmatpush2.bf16.msra.mxu0 0
    %7054 = vmatprep.subr.bf16.mxu0 0
    %7055 = vmatpush2.bf16.msra.mxu0 0
    %7056 = vmatprep.subr.bf16.mxu0 0
    %7057 = vmatpush2.bf16.msra.mxu0 0
    %7058 = vmatprep.subr.bf16.mxu0 0
    %7059 = vmatpush2.bf16.msra.mxu0 0
    %7060 = vmatprep.subr.bf16.mxu0 0
    %7061 = vmatpush2.bf16.msra.mxu0 0
    %7062 = vmatprep.mubr.bf16.mxu0 0
    %7063 = vmatmul.mubr.bf16.gmra.mxu0 %v7028
    %v7064 = vpop.f32.mrf.mxu0
    %v7065 = vadd.f32 %v7013, %v7064
    %v7066 = vpop.f32.mrf.mxu0
    %v7067 = vpop.f32.mrf.mxu0
    %v7068 = vpop.f32.mrf.mxu0
    %7069 = vdwg.mxu0
    %v7070 = vpack.c.bf16 %v7065, %v7065
    %7071 = vrot.lane.b32.xlu0 %v7023, 96
    %v7072 = vpop.permute.xlu0 %7071
    %7073 = vrot.lane.b32.xlu0 %v7024, 96
    %v7074 = vpop.permute.xlu0 %7073
    %7077 = vrot.lane.b32.xlu0 %v7013, 96
    %v7078 = vpop.permute.xlu0 %7077
    %v7081 = vsel %vm533, %v6980, 0
    %v7084 = vsel %vm533, %v6981, 0
    %v7087 = vsel %vm533, %v6982, 0
    %v7090 = vsel %vm533, %v6983, 0
    %v7093 = vsel %vm533, %v6984, 0
    %v7096 = vsel %vm533, %v6985, 0
    %v7099 = vsel %vm533, %v6986, 0
    %v7102 = vsel %vm533, %v6987, 0
    %v7105 = vsel %vm533, %v6988, 0
    %v7108 = vsel %vm533, %v6989, 0
    %v7111 = vsel %vm533, %v6990, 0
    %v7114 = vsel %vm533, %v6991, 0
    %v7117 = vsel %vm533, %v6992, 0
    %v7120 = vsel %vm533, %v6993, 0
    %v7123 = vsel %vm533, %v6994, 0
    %v7126 = vsel %vm533, %v6995, 0
    %7128 = vmatprep.subr.bf16.mxu0 0
    %7129 = vmatpush1.bf16.msra.mxu0 0
    %7130 = vmatprep.subr.bf16.mxu0 0
    %7131 = vmatpush1.bf16.msra.mxu0 0
    %7132 = vmatprep.subr.bf16.mxu0 0
    %7133 = vmatpush1.bf16.msra.mxu0 0
    %7134 = vmatprep.subr.bf16.mxu0 0
    %7135 = vmatpush1.bf16.msra.mxu0 0
    %7136 = vmatprep.subr.bf16.mxu0 0
    %7137 = vmatpush1.bf16.msra.mxu0 0
    %7138 = vmatprep.subr.bf16.mxu0 0
    %7139 = vmatpush1.bf16.msra.mxu0 0
    %7140 = vmatprep.subr.bf16.mxu0 0
    %7141 = vmatpush1.bf16.msra.mxu0 %v7074
    %7142 = vmatprep.subr.bf16.mxu0 0
    %7143 = vmatpush1.bf16.msra.mxu0 %v7072
    %7144 = vmatprep.subr.bf16.mxu0 0
    %7145 = vmatpush2.bf16.msra.mxu0 0
    %7146 = vmatprep.subr.bf16.mxu0 0
    %7147 = vmatpush2.bf16.msra.mxu0 0
    %7148 = vmatprep.subr.bf16.mxu0 0
    %7149 = vmatpush2.bf16.msra.mxu0 0
    %7150 = vmatprep.subr.bf16.mxu0 0
    %7151 = vmatpush2.bf16.msra.mxu0 0
    %7152 = vmatprep.subr.bf16.mxu0 0
    %7153 = vmatpush2.bf16.msra.mxu0 0
    %7154 = vmatprep.subr.bf16.mxu0 0
    %7155 = vmatpush2.bf16.msra.mxu0 0
    %7156 = vmatprep.subr.bf16.mxu0 0
    %7157 = vmatpush2.bf16.msra.mxu0 0
    %7158 = vmatprep.subr.bf16.mxu0 0
    %7159 = vmatpush2.bf16.msra.mxu0 0
    %7160 = vmatprep.mubr.bf16.mxu0 0
    %7161 = vmatmul.mubr.bf16.gmra.mxu0 %v7081
    %v7162 = vpop.f32.mrf.mxu0
    %v7163 = vadd.f32 %v7078, %v7162
    %v7164 = vpop.f32.mrf.mxu0
    %v7165 = vpop.f32.mrf.mxu0
    %v7166 = vadd.f32 %v7078, %v7165
    %v7167 = vpop.f32.mrf.mxu0
    %7168 = vmatprep.mubr.bf16.mxu0 0
    %7169 = vmatmul.mubr.bf16.gmra.mxu0 %v7084
    %v7170 = vpop.f32.mrf.mxu0
    %v7171 = vadd.f32 %v7078, %v7170
    %v7172 = vpop.f32.mrf.mxu0
    %v7173 = vpop.f32.mrf.mxu0
    %v7174 = vadd.f32 %v7078, %v7173
    %v7175 = vpop.f32.mrf.mxu0
    %7176 = vmatprep.mubr.bf16.mxu0 0
    %7177 = vmatmul.mubr.bf16.gmra.mxu0 %v7087
    %v7178 = vpop.f32.mrf.mxu0
    %v7179 = vadd.f32 %v7078, %v7178
    %v7180 = vpop.f32.mrf.mxu0
    %v7181 = vpop.f32.mrf.mxu0
    %v7182 = vadd.f32 %v7078, %v7181
    %v7183 = vpop.f32.mrf.mxu0
    %7184 = vmatprep.mubr.bf16.mxu0 0
    %7185 = vmatmul.mubr.bf16.gmra.mxu0 %v7090
    %v7186 = vpop.f32.mrf.mxu0
    %v7187 = vadd.f32 %v7078, %v7186
    %v7188 = vpop.f32.mrf.mxu0
    %v7189 = vpop.f32.mrf.mxu0
    %v7190 = vadd.f32 %v7078, %v7189
    %v7191 = vpop.f32.mrf.mxu0
    %7192 = vmatprep.mubr.bf16.mxu0 0
    %7193 = vmatmul.mubr.bf16.gmra.mxu0 %v7093
    %v7194 = vpop.f32.mrf.mxu0
    %v7195 = vadd.f32 %v7078, %v7194
    %v7196 = vpop.f32.mrf.mxu0
    %v7197 = vpop.f32.mrf.mxu0
    %v7198 = vadd.f32 %v7078, %v7197
    %v7199 = vpop.f32.mrf.mxu0
    %7200 = vmatprep.mubr.bf16.mxu0 0
    %7201 = vmatmul.mubr.bf16.gmra.mxu0 %v7096
    %v7202 = vpop.f32.mrf.mxu0
    %v7203 = vadd.f32 %v7078, %v7202
    %v7204 = vpop.f32.mrf.mxu0
    %v7205 = vpop.f32.mrf.mxu0
    %v7206 = vadd.f32 %v7078, %v7205
    %v7207 = vpop.f32.mrf.mxu0
    %7208 = vmatprep.mubr.bf16.mxu0 0
    %7209 = vmatmul.mubr.bf16.gmra.mxu0 %v7099
    %v7210 = vpop.f32.mrf.mxu0
    %v7211 = vadd.f32 %v7078, %v7210
    %v7212 = vpop.f32.mrf.mxu0
    %v7213 = vpop.f32.mrf.mxu0
    %v7214 = vadd.f32 %v7078, %v7213
    %v7215 = vpop.f32.mrf.mxu0
    %7216 = vmatprep.mubr.bf16.mxu0 0
    %7217 = vmatmul.mubr.bf16.gmra.mxu0 %v7102
    %v7218 = vpop.f32.mrf.mxu0
    %v7219 = vadd.f32 %v7078, %v7218
    %v7220 = vpop.f32.mrf.mxu0
    %v7221 = vpop.f32.mrf.mxu0
    %v7222 = vadd.f32 %v7078, %v7221
    %v7223 = vpop.f32.mrf.mxu0
    %7224 = vmatprep.mubr.bf16.mxu0 0
    %7225 = vmatmul.mubr.bf16.gmra.mxu0 %v7105
    %v7226 = vpop.f32.mrf.mxu0
    %v7227 = vadd.f32 %v7078, %v7226
    %v7228 = vpop.f32.mrf.mxu0
    %v7229 = vpop.f32.mrf.mxu0
    %v7230 = vadd.f32 %v7078, %v7229
    %v7231 = vpop.f32.mrf.mxu0
    %7232 = vmatprep.mubr.bf16.mxu0 0
    %7233 = vmatmul.mubr.bf16.gmra.mxu0 %v7108
    %v7234 = vpop.f32.mrf.mxu0
    %v7235 = vadd.f32 %v7078, %v7234
    %v7236 = vpop.f32.mrf.mxu0
    %v7237 = vpop.f32.mrf.mxu0
    %v7238 = vadd.f32 %v7078, %v7237
    %v7239 = vpop.f32.mrf.mxu0
    %7240 = vmatprep.mubr.bf16.mxu0 0
    %7241 = vmatmul.mubr.bf16.gmra.mxu0 %v7111
    %v7242 = vpop.f32.mrf.mxu0
    %v7243 = vadd.f32 %v7078, %v7242
    %v7244 = vpop.f32.mrf.mxu0
    %v7245 = vpop.f32.mrf.mxu0
    %v7246 = vadd.f32 %v7078, %v7245
    %v7247 = vpop.f32.mrf.mxu0
    %7248 = vmatprep.mubr.bf16.mxu0 0
    %7249 = vmatmul.mubr.bf16.gmra.mxu0 %v7114
    %v7250 = vpop.f32.mrf.mxu0
    %v7251 = vadd.f32 %v7078, %v7250
    %v7252 = vpop.f32.mrf.mxu0
    %v7253 = vpop.f32.mrf.mxu0
    %v7254 = vadd.f32 %v7078, %v7253
    %v7255 = vpop.f32.mrf.mxu0
    %7256 = vmatprep.mubr.bf16.mxu0 0
    %7257 = vmatmul.mubr.bf16.gmra.mxu0 %v7117
    %v7258 = vpop.f32.mrf.mxu0
    %v7259 = vadd.f32 %v7078, %v7258
    %v7260 = vpop.f32.mrf.mxu0
    %v7261 = vpop.f32.mrf.mxu0
    %v7262 = vadd.f32 %v7078, %v7261
    %v7263 = vpop.f32.mrf.mxu0
    %7264 = vmatprep.mubr.bf16.mxu0 0
    %7265 = vmatmul.mubr.bf16.gmra.mxu0 %v7120
    %v7266 = vpop.f32.mrf.mxu0
    %v7267 = vadd.f32 %v7078, %v7266
    %v7268 = vpop.f32.mrf.mxu0
    %v7269 = vpop.f32.mrf.mxu0
    %v7270 = vadd.f32 %v7078, %v7269
    %v7271 = vpop.f32.mrf.mxu0
    %7272 = vmatprep.mubr.bf16.mxu0 0
    %7273 = vmatmul.mubr.bf16.gmra.mxu0 %v7123
    %v7274 = vpop.f32.mrf.mxu0
    %v7275 = vadd.f32 %v7078, %v7274
    %v7276 = vpop.f32.mrf.mxu0
    %v7277 = vpop.f32.mrf.mxu0
    %v7278 = vadd.f32 %v7078, %v7277
    %v7279 = vpop.f32.mrf.mxu0
    %7280 = vmatprep.mubr.bf16.mxu0 0
    %7281 = vmatmul.mubr.bf16.gmra.mxu0 %v7126
    %v7282 = vpop.f32.mrf.mxu0
    %v7283 = vadd.f32 %v7078, %v7282
    %v7284 = vpop.f32.mrf.mxu0
    %v7285 = vpop.f32.mrf.mxu0
    %v7286 = vadd.f32 %v7078, %v7285
    %v7287 = vpop.f32.mrf.mxu0
    %7288 = vdwg.mxu0
    %v7289 = vpack.c.bf16 %v7166, %v7163
    %v7290 = vpack.c.bf16 %v7174, %v7171
    %v7291 = vpack.c.bf16 %v7182, %v7179
    %v7292 = vpack.c.bf16 %v7190, %v7187
    %v7293 = vpack.c.bf16 %v7198, %v7195
    %v7294 = vpack.c.bf16 %v7206, %v7203
    %v7295 = vpack.c.bf16 %v7214, %v7211
    %v7296 = vpack.c.bf16 %v7222, %v7219
    %v7297 = vpack.c.bf16 %v7230, %v7227
    %v7298 = vpack.c.bf16 %v7238, %v7235
    %v7299 = vpack.c.bf16 %v7246, %v7243
    %v7300 = vpack.c.bf16 %v7254, %v7251
    %v7301 = vpack.c.bf16 %v7262, %v7259
    %v7302 = vpack.c.bf16 %v7270, %v7267
    %v7303 = vpack.c.bf16 %v7278, %v7275
    %v7304 = vpack.c.bf16 %v7286, %v7283
    %v7306 = vsel %vm790, %v7070, 0
    %v7309 = vsel %vm790, %v7289, 0
    %v7312 = vsel %vm790, %v7290, 0
    %v7315 = vsel %vm790, %v7291, 0
    %v7318 = vsel %vm790, %v7292, 0
    %v7321 = vsel %vm790, %v7293, 0
    %v7324 = vsel %vm790, %v7294, 0
    %v7327 = vsel %vm790, %v7295, 0
    %v7330 = vsel %vm790, %v7296, 0
    %7332 = vmatprep.subr.bf16.mxu0 0
    %7333 = vmatpush1.bf16.xpose.msra.mxu0 %v7330
    %7334 = vmatprep.subr.bf16.mxu0 0
    %7335 = vmatpush1.bf16.xpose.msra.mxu0 %v7327
    %7336 = vmatprep.subr.bf16.mxu0 0
    %7337 = vmatpush1.bf16.xpose.msra.mxu0 %v7324
    %7338 = vmatprep.subr.bf16.mxu0 0
    %7339 = vmatpush1.bf16.xpose.msra.mxu0 %v7321
    %7340 = vmatprep.subr.bf16.mxu0 0
    %7341 = vmatpush1.bf16.xpose.msra.mxu0 %v7318
    %7342 = vmatprep.subr.bf16.mxu0 0
    %7343 = vmatpush1.bf16.xpose.msra.mxu0 %v7315
    %7344 = vmatprep.subr.bf16.mxu0 0
    %7345 = vmatpush1.bf16.xpose.msra.mxu0 %v7312
    %7346 = vmatprep.subr.bf16.mxu0 0
    %7347 = vmatpush1.bf16.xpose.msra.mxu0 %v7309
    %7348 = vmatprep.subr.bf16.mxu0 0
    %7349 = vmatpush2.bf16.xpose.msra.mxu0 0
    %7350 = vmatprep.subr.bf16.mxu0 0
    %7351 = vmatpush2.bf16.xpose.msra.mxu0 0
    %7352 = vmatprep.subr.bf16.mxu0 0
    %7353 = vmatpush2.bf16.xpose.msra.mxu0 0
    %7354 = vmatprep.subr.bf16.mxu0 0
    %7355 = vmatpush2.bf16.xpose.msra.mxu0 0
    %7356 = vmatprep.subr.bf16.mxu0 0
    %7357 = vmatpush2.bf16.xpose.msra.mxu0 0
    %7358 = vmatprep.subr.bf16.mxu0 0
    %7359 = vmatpush2.bf16.xpose.msra.mxu0 0
    %7360 = vmatprep.subr.bf16.mxu0 0
    %7361 = vmatpush2.bf16.xpose.msra.mxu0 0
    %7362 = vmatprep.subr.bf16.mxu0 0
    %7363 = vmatpush2.bf16.xpose.msra.mxu0 0
    %7364 = vmatprep.mubr.bf16.mxu0 0
    %7365 = vmatmul.mubr.bf16.gmra.mxu0 %v7306
    %v7366 = vpop.f32.mrf.mxu0
    %v7367 = vadd.f32 %v759, %v7366
    %v7368 = vpop.f32.mrf.mxu0
    %v7369 = vpop.f32.mrf.mxu0
    %v7370 = vpop.f32.mrf.mxu0
    %7371 = vdwg.mxu0
    %v7372 = vsel %vm6999, %v7367, -inf
    %7373 = vmax.xlane.f32.xlu0 %v7372
    %v7374 = vpop.xlane.xlu0 %7373
    %v7375 = vsub.f32 %v7367, %v7374
    %v7376 = vmul.f32 %v7375, 1.442695
    %v7377 = vpow.pop %v7376
    %v7378 = vsel %vm6999, %v7377, 0.0
    %7379 = vadd.xlane.f32.xlu0 %v7378
    %v7380 = vpop.xlane.xlu0 %7379
    %v7381 = vrcp.pop %v7380
    %v7382 = vmul.f32 %v7377, %v7381
    %v7383 = vpack.c.bf16 %v7382, %v7382
    %7392 = vrot.lane.b32.xlu0 %v7289, 96
    %v7393 = vpop.permute.xlu0 %7392
    %7394 = vrot.lane.b32.xlu0 %v7290, 96
    %v7395 = vpop.permute.xlu0 %7394
    %7396 = vrot.lane.b32.xlu0 %v7291, 96
    %v7397 = vpop.permute.xlu0 %7396
    %7398 = vrot.lane.b32.xlu0 %v7292, 96
    %v7399 = vpop.permute.xlu0 %7398
    %7400 = vrot.lane.b32.xlu0 %v7293, 96
    %v7401 = vpop.permute.xlu0 %7400
    %7402 = vrot.lane.b32.xlu0 %v7294, 96
    %v7403 = vpop.permute.xlu0 %7402
    %7404 = vrot.lane.b32.xlu0 %v7295, 96
    %v7405 = vpop.permute.xlu0 %7404
    %7406 = vrot.lane.b32.xlu0 %v7296, 96
    %v7407 = vpop.permute.xlu0 %7406
    %7416 = vmatprep.subr.bf16.mxu0 0
    %7417 = vmatpush1.bf16.msra.mxu0 %v7407
    %7418 = vmatprep.subr.bf16.mxu0 0
    %7419 = vmatpush1.bf16.msra.mxu0 %v7405
    %7420 = vmatprep.subr.bf16.mxu0 0
    %7421 = vmatpush1.bf16.msra.mxu0 %v7403
    %7422 = vmatprep.subr.bf16.mxu0 0
    %7423 = vmatpush1.bf16.msra.mxu0 %v7401
    %7424 = vmatprep.subr.bf16.mxu0 0
    %7425 = vmatpush1.bf16.msra.mxu0 %v7399
    %7426 = vmatprep.subr.bf16.mxu0 0
    %7427 = vmatpush1.bf16.msra.mxu0 %v7397
    %7428 = vmatprep.subr.bf16.mxu0 0
    %7429 = vmatpush1.bf16.msra.mxu0 %v7395
    %7430 = vmatprep.subr.bf16.mxu0 0
    %7431 = vmatpush1.bf16.msra.mxu0 %v7393
    %7432 = vmatprep.subr.bf16.mxu0 0
    %7433 = vmatpush2.bf16.msra.mxu0 0
    %7434 = vmatprep.subr.bf16.mxu0 0
    %7435 = vmatpush2.bf16.msra.mxu0 0
    %7436 = vmatprep.subr.bf16.mxu0 0
    %7437 = vmatpush2.bf16.msra.mxu0 0
    %7438 = vmatprep.subr.bf16.mxu0 0
    %7439 = vmatpush2.bf16.msra.mxu0 0
    %7440 = vmatprep.subr.bf16.mxu0 0
    %7441 = vmatpush2.bf16.msra.mxu0 0
    %7442 = vmatprep.subr.bf16.mxu0 0
    %7443 = vmatpush2.bf16.msra.mxu0 0
    %7444 = vmatprep.subr.bf16.mxu0 0
    %7445 = vmatpush2.bf16.msra.mxu0 0
    %7446 = vmatprep.subr.bf16.mxu0 0
    %7447 = vmatpush2.bf16.msra.mxu0 0
    %7448 = vmatprep.mubr.bf16.mxu0 0
    %7449 = vmatmul.mubr.bf16.gmra.mxu0 %v7383
    %v7450 = vpop.f32.mrf.mxu0
    %v7451 = vadd.f32 0.0, %v7450
    %v7452 = vpop.f32.mrf.mxu0
    %v7453 = vpop.f32.mrf.mxu0
    %v7454 = vpop.f32.mrf.mxu0
    %7455 = vdwg.mxu0
    %v7456 = vshrl.u32 %v7070, 16
    %v7459 = vsel %vm790, %v7456, 0
    %v7462 = vsel %vm790, %v7297, 0
    %v7465 = vsel %vm790, %v7298, 0
    %v7468 = vsel %vm790, %v7299, 0
    %v7471 = vsel %vm790, %v7300, 0
    %v7474 = vsel %vm790, %v7301, 0
    %v7477 = vsel %vm790, %v7302, 0
    %v7480 = vsel %vm790, %v7303, 0
    %v7483 = vsel %vm790, %v7304, 0
    %7485 = vmatprep.subr.bf16.mxu0 0
    %7486 = vmatpush1.bf16.xpose.msra.mxu0 %v7483
    %7487 = vmatprep.subr.bf16.mxu0 0
    %7488 = vmatpush1.bf16.xpose.msra.mxu0 %v7480
    %7489 = vmatprep.subr.bf16.mxu0 0
    %7490 = vmatpush1.bf16.xpose.msra.mxu0 %v7477
    %7491 = vmatprep.subr.bf16.mxu0 0
    %7492 = vmatpush1.bf16.xpose.msra.mxu0 %v7474
    %7493 = vmatprep.subr.bf16.mxu0 0
    %7494 = vmatpush1.bf16.xpose.msra.mxu0 %v7471
    %7495 = vmatprep.subr.bf16.mxu0 0
    %7496 = vmatpush1.bf16.xpose.msra.mxu0 %v7468
    %7497 = vmatprep.subr.bf16.mxu0 0
    %7498 = vmatpush1.bf16.xpose.msra.mxu0 %v7465
    %7499 = vmatprep.subr.bf16.mxu0 0
    %7500 = vmatpush1.bf16.xpose.msra.mxu0 %v7462
    %7501 = vmatprep.subr.bf16.mxu0 0
    %7502 = vmatpush2.bf16.xpose.msra.mxu0 0
    %7503 = vmatprep.subr.bf16.mxu0 0
    %7504 = vmatpush2.bf16.xpose.msra.mxu0 0
    %7505 = vmatprep.subr.bf16.mxu0 0
    %7506 = vmatpush2.bf16.xpose.msra.mxu0 0
    %7507 = vmatprep.subr.bf16.mxu0 0
    %7508 = vmatpush2.bf16.xpose.msra.mxu0 0
    %7509 = vmatprep.subr.bf16.mxu0 0
    %7510 = vmatpush2.bf16.xpose.msra.mxu0 0
    %7511 = vmatprep.subr.bf16.mxu0 0
    %7512 = vmatpush2.bf16.xpose.msra.mxu0 0
    %7513 = vmatprep.subr.bf16.mxu0 0
    %7514 = vmatpush2.bf16.xpose.msra.mxu0 0
    %7515 = vmatprep.subr.bf16.mxu0 0
    %7516 = vmatpush2.bf16.xpose.msra.mxu0 0
    %7517 = vmatprep.mubr.bf16.mxu0 0
    %7518 = vmatmul.mubr.bf16.gmra.mxu0 %v7459
    %v7519 = vpop.f32.mrf.mxu0
    %v7520 = vadd.f32 %v1210, %v7519
    %v7521 = vpop.f32.mrf.mxu0
    %v7522 = vpop.f32.mrf.mxu0
    %v7523 = vpop.f32.mrf.mxu0
    %7524 = vdwg.mxu0
    %v7525 = vsel %vm6999, %v7520, -inf
    %7526 = vmax.xlane.f32.xlu0 %v7525
    %v7527 = vpop.xlane.xlu0 %7526
    %v7528 = vsub.f32 %v7520, %v7527
    %v7529 = vmul.f32 %v7528, 1.442695
    %v7530 = vpow.pop %v7529
    %v7531 = vsel %vm6999, %v7530, 0.0
    %7532 = vadd.xlane.f32.xlu0 %v7531
    %v7533 = vpop.xlane.xlu0 %7532
    %v7534 = vrcp.pop %v7533
    %v7535 = vmul.f32 %v7530, %v7534
    %v7536 = vpack.c.bf16 %v7535, %v7535
    %7545 = vrot.lane.b32.xlu0 %v7297, 96
    %v7546 = vpop.permute.xlu0 %7545
    %7547 = vrot.lane.b32.xlu0 %v7298, 96
    %v7548 = vpop.permute.xlu0 %7547
    %7549 = vrot.lane.b32.xlu0 %v7299, 96
    %v7550 = vpop.permute.xlu0 %7549
    %7551 = vrot.lane.b32.xlu0 %v7300, 96
    %v7552 = vpop.permute.xlu0 %7551
    %7553 = vrot.lane.b32.xlu0 %v7301, 96
    %v7554 = vpop.permute.xlu0 %7553
    %7555 = vrot.lane.b32.xlu0 %v7302, 96
    %v7556 = vpop.permute.xlu0 %7555
    %7557 = vrot.lane.b32.xlu0 %v7303, 96
    %v7558 = vpop.permute.xlu0 %7557
    %7559 = vrot.lane.b32.xlu0 %v7304, 96
    %v7560 = vpop.permute.xlu0 %7559
    %7569 = vmatprep.subr.bf16.mxu0 0
    %7570 = vmatpush1.bf16.msra.mxu0 %v7560
    %7571 = vmatprep.subr.bf16.mxu0 0
    %7572 = vmatpush1.bf16.msra.mxu0 %v7558
    %7573 = vmatprep.subr.bf16.mxu0 0
    %7574 = vmatpush1.bf16.msra.mxu0 %v7556
    %7575 = vmatprep.subr.bf16.mxu0 0
    %7576 = vmatpush1.bf16.msra.mxu0 %v7554
    %7577 = vmatprep.subr.bf16.mxu0 0
    %7578 = vmatpush1.bf16.msra.mxu0 %v7552
    %7579 = vmatprep.subr.bf16.mxu0 0
    %7580 = vmatpush1.bf16.msra.mxu0 %v7550
    %7581 = vmatprep.subr.bf16.mxu0 0
    %7582 = vmatpush1.bf16.msra.mxu0 %v7548
    %7583 = vmatprep.subr.bf16.mxu0 0
    %7584 = vmatpush1.bf16.msra.mxu0 %v7546
    %7585 = vmatprep.subr.bf16.mxu0 0
    %7586 = vmatpush2.bf16.msra.mxu0 0
    %7587 = vmatprep.subr.bf16.mxu0 0
    %7588 = vmatpush2.bf16.msra.mxu0 0
    %7589 = vmatprep.subr.bf16.mxu0 0
    %7590 = vmatpush2.bf16.msra.mxu0 0
    %7591 = vmatprep.subr.bf16.mxu0 0
    %7592 = vmatpush2.bf16.msra.mxu0 0
    %7593 = vmatprep.subr.bf16.mxu0 0
    %7594 = vmatpush2.bf16.msra.mxu0 0
    %7595 = vmatprep.subr.bf16.mxu0 0
    %7596 = vmatpush2.bf16.msra.mxu0 0
    %7597 = vmatprep.subr.bf16.mxu0 0
    %7598 = vmatpush2.bf16.msra.mxu0 0
    %7599 = vmatprep.subr.bf16.mxu0 0
    %7600 = vmatpush2.bf16.msra.mxu0 0
    %7601 = vmatprep.mubr.bf16.mxu0 0
    %7602 = vmatmul.mubr.bf16.gmra.mxu0 %v7536
    %v7603 = vpop.f32.mrf.mxu0
    %v7604 = vadd.f32 0.0, %v7603
    %v7605 = vpop.f32.mrf.mxu0
    %v7606 = vpop.f32.mrf.mxu0
    %v7607 = vpop.f32.mrf.mxu0
    %7608 = vdwg.mxu0
    %v7610 = vrot.slane %v7604, 7
    %v7612 = vsel %vm6999, %v7451, %v7610
    %v7613 = vpack.c.bf16 %v7612, %v7612
    %s7614 = scalar_lea.vmem %s6, 16
    %v7615 = vld [vmem:[%s7614] sm:$0xf]
    %7617 = vrot.lane.b32.xlu0 %v7070, 120
    %v7618 = vpop.permute.xlu0 %7617
    %7619 = vrot.lane.b32.xlu0 %v7289, 120
    %v7620 = vpop.permute.xlu0 %7619
    %7621 = vrot.lane.b32.xlu0 %v7290, 120
    %v7622 = vpop.permute.xlu0 %7621
    %7623 = vrot.lane.b32.xlu0 %v7291, 120
    %v7624 = vpop.permute.xlu0 %7623
    %7625 = vrot.lane.b32.xlu0 %v7292, 120
    %v7626 = vpop.permute.xlu0 %7625
    %7627 = vrot.lane.b32.xlu0 %v7293, 120
    %v7628 = vpop.permute.xlu0 %7627
    %7629 = vrot.lane.b32.xlu0 %v7294, 120
    %v7630 = vpop.permute.xlu0 %7629
    %7631 = vrot.lane.b32.xlu0 %v7295, 120
    %v7632 = vpop.permute.xlu0 %7631
    %7633 = vrot.lane.b32.xlu0 %v7296, 120
    %v7634 = vpop.permute.xlu0 %7633
    %v7636 = vsel %vm790, %v7618, 0
    %v7639 = vsel %vm790, %v7620, 0
    %v7642 = vsel %vm790, %v7622, 0
    %v7645 = vsel %vm790, %v7624, 0
    %v7648 = vsel %vm790, %v7626, 0
    %v7651 = vsel %vm790, %v7628, 0
    %v7654 = vsel %vm790, %v7630, 0
    %v7657 = vsel %vm790, %v7632, 0
    %v7660 = vsel %vm790, %v7634, 0
    %7662 = vmatprep.subr.bf16.mxu0 0
    %7663 = vmatpush1.bf16.xpose.msra.mxu0 %v7660
    %7664 = vmatprep.subr.bf16.mxu0 0
    %7665 = vmatpush1.bf16.xpose.msra.mxu0 %v7657
    %7666 = vmatprep.subr.bf16.mxu0 0
    %7667 = vmatpush1.bf16.xpose.msra.mxu0 %v7654
    %7668 = vmatprep.subr.bf16.mxu0 0
    %7669 = vmatpush1.bf16.xpose.msra.mxu0 %v7651
    %7670 = vmatprep.subr.bf16.mxu0 0
    %7671 = vmatpush1.bf16.xpose.msra.mxu0 %v7648
    %7672 = vmatprep.subr.bf16.mxu0 0
    %7673 = vmatpush1.bf16.xpose.msra.mxu0 %v7645
    %7674 = vmatprep.subr.bf16.mxu0 0
    %7675 = vmatpush1.bf16.xpose.msra.mxu0 %v7642
    %7676 = vmatprep.subr.bf16.mxu0 0
    %7677 = vmatpush1.bf16.xpose.msra.mxu0 %v7639
    %7678 = vmatprep.subr.bf16.mxu0 0
    %7679 = vmatpush2.bf16.xpose.msra.mxu0 0
    %7680 = vmatprep.subr.bf16.mxu0 0
    %7681 = vmatpush2.bf16.xpose.msra.mxu0 0
    %7682 = vmatprep.subr.bf16.mxu0 0
    %7683 = vmatpush2.bf16.xpose.msra.mxu0 0
    %7684 = vmatprep.subr.bf16.mxu0 0
    %7685 = vmatpush2.bf16.xpose.msra.mxu0 0
    %7686 = vmatprep.subr.bf16.mxu0 0
    %7687 = vmatpush2.bf16.xpose.msra.mxu0 0
    %7688 = vmatprep.subr.bf16.mxu0 0
    %7689 = vmatpush2.bf16.xpose.msra.mxu0 0
    %7690 = vmatprep.subr.bf16.mxu0 0
    %7691 = vmatpush2.bf16.xpose.msra.mxu0 0
    %7692 = vmatprep.subr.bf16.mxu0 0
    %7693 = vmatpush2.bf16.xpose.msra.mxu0 0
    %7694 = vmatprep.mubr.bf16.mxu0 0
    %7695 = vmatmul.mubr.bf16.gmra.mxu0 %v7636
    %v7696 = vpop.f32.mrf.mxu0
    %v7697 = vadd.f32 %v759, %v7696
    %v7698 = vpop.f32.mrf.mxu0
    %v7699 = vpop.f32.mrf.mxu0
    %v7700 = vpop.f32.mrf.mxu0
    %7701 = vdwg.mxu0
    %v7702 = vsel %vm6999, %v7697, -inf
    %7703 = vmax.xlane.f32.xlu0 %v7702
    %v7704 = vpop.xlane.xlu0 %7703
    %v7705 = vsub.f32 %v7697, %v7704
    %v7706 = vmul.f32 %v7705, 1.442695
    %v7707 = vpow.pop %v7706
    %v7708 = vsel %vm6999, %v7707, 0.0
    %7709 = vadd.xlane.f32.xlu0 %v7708
    %v7710 = vpop.xlane.xlu0 %7709
    %v7711 = vrcp.pop %v7710
    %v7712 = vmul.f32 %v7707, %v7711
    %v7713 = vpack.c.bf16 %v7712, %v7712
    %7714 = vrot.lane.b32.xlu0 %v7289, 88
    %v7715 = vpop.permute.xlu0 %7714
    %7716 = vrot.lane.b32.xlu0 %v7290, 88
    %v7717 = vpop.permute.xlu0 %7716
    %7718 = vrot.lane.b32.xlu0 %v7291, 88
    %v7719 = vpop.permute.xlu0 %7718
    %7720 = vrot.lane.b32.xlu0 %v7292, 88
    %v7721 = vpop.permute.xlu0 %7720
    %7722 = vrot.lane.b32.xlu0 %v7293, 88
    %v7723 = vpop.permute.xlu0 %7722
    %7724 = vrot.lane.b32.xlu0 %v7294, 88
    %v7725 = vpop.permute.xlu0 %7724
    %7726 = vrot.lane.b32.xlu0 %v7295, 88
    %v7727 = vpop.permute.xlu0 %7726
    %7728 = vrot.lane.b32.xlu0 %v7296, 88
    %v7729 = vpop.permute.xlu0 %7728
    %7738 = vmatprep.subr.bf16.mxu0 0
    %7739 = vmatpush1.bf16.msra.mxu0 %v7729
    %7740 = vmatprep.subr.bf16.mxu0 0
    %7741 = vmatpush1.bf16.msra.mxu0 %v7727
    %7742 = vmatprep.subr.bf16.mxu0 0
    %7743 = vmatpush1.bf16.msra.mxu0 %v7725
    %7744 = vmatprep.subr.bf16.mxu0 0
    %7745 = vmatpush1.bf16.msra.mxu0 %v7723
    %7746 = vmatprep.subr.bf16.mxu0 0
    %7747 = vmatpush1.bf16.msra.mxu0 %v7721
    %7748 = vmatprep.subr.bf16.mxu0 0
    %7749 = vmatpush1.bf16.msra.mxu0 %v7719
    %7750 = vmatprep.subr.bf16.mxu0 0
    %7751 = vmatpush1.bf16.msra.mxu0 %v7717
    %7752 = vmatprep.subr.bf16.mxu0 0
    %7753 = vmatpush1.bf16.msra.mxu0 %v7715
    %7754 = vmatprep.subr.bf16.mxu0 0
    %7755 = vmatpush2.bf16.msra.mxu0 0
    %7756 = vmatprep.subr.bf16.mxu0 0
    %7757 = vmatpush2.bf16.msra.mxu0 0
    %7758 = vmatprep.subr.bf16.mxu0 0
    %7759 = vmatpush2.bf16.msra.mxu0 0
    %7760 = vmatprep.subr.bf16.mxu0 0
    %7761 = vmatpush2.bf16.msra.mxu0 0
    %7762 = vmatprep.subr.bf16.mxu0 0
    %7763 = vmatpush2.bf16.msra.mxu0 0
    %7764 = vmatprep.subr.bf16.mxu0 0
    %7765 = vmatpush2.bf16.msra.mxu0 0
    %7766 = vmatprep.subr.bf16.mxu0 0
    %7767 = vmatpush2.bf16.msra.mxu0 0
    %7768 = vmatprep.subr.bf16.mxu0 0
    %7769 = vmatpush2.bf16.msra.mxu0 0
    %7770 = vmatprep.mubr.bf16.mxu0 0
    %7771 = vmatmul.mubr.bf16.gmra.mxu0 %v7713
    %v7772 = vpop.f32.mrf.mxu0
    %v7773 = vadd.f32 0.0, %v7772
    %v7774 = vpop.f32.mrf.mxu0
    %v7775 = vpop.f32.mrf.mxu0
    %v7776 = vpop.f32.mrf.mxu0
    %7777 = vdwg.mxu0
    %7778 = vrot.lane.b32.xlu0 %v7456, 120
    %v7779 = vpop.permute.xlu0 %7778
    %7780 = vrot.lane.b32.xlu0 %v7297, 120
    %v7781 = vpop.permute.xlu0 %7780
    %7782 = vrot.lane.b32.xlu0 %v7298, 120
    %v7783 = vpop.permute.xlu0 %7782
    %7784 = vrot.lane.b32.xlu0 %v7299, 120
    %v7785 = vpop.permute.xlu0 %7784
    %7786 = vrot.lane.b32.xlu0 %v7300, 120
    %v7787 = vpop.permute.xlu0 %7786
    %7788 = vrot.lane.b32.xlu0 %v7301, 120
    %v7789 = vpop.permute.xlu0 %7788
    %7790 = vrot.lane.b32.xlu0 %v7302, 120
    %v7791 = vpop.permute.xlu0 %7790
    %7792 = vrot.lane.b32.xlu0 %v7303, 120
    %v7793 = vpop.permute.xlu0 %7792
    %7794 = vrot.lane.b32.xlu0 %v7304, 120
    %v7795 = vpop.permute.xlu0 %7794
    %v7797 = vsel %vm790, %v7779, 0
    %v7800 = vsel %vm790, %v7781, 0
    %v7803 = vsel %vm790, %v7783, 0
    %v7806 = vsel %vm790, %v7785, 0
    %v7809 = vsel %vm790, %v7787, 0
    %v7812 = vsel %vm790, %v7789, 0
    %v7815 = vsel %vm790, %v7791, 0
    %v7818 = vsel %vm790, %v7793, 0
    %v7821 = vsel %vm790, %v7795, 0
    %7823 = vmatprep.subr.bf16.mxu0 0
    %7824 = vmatpush1.bf16.xpose.msra.mxu0 %v7821
    %7825 = vmatprep.subr.bf16.mxu0 0
    %7826 = vmatpush1.bf16.xpose.msra.mxu0 %v7818
    %7827 = vmatprep.subr.bf16.mxu0 0
    %7828 = vmatpush1.bf16.xpose.msra.mxu0 %v7815
    %7829 = vmatprep.subr.bf16.mxu0 0
    %7830 = vmatpush1.bf16.xpose.msra.mxu0 %v7812
    %7831 = vmatprep.subr.bf16.mxu0 0
    %7832 = vmatpush1.bf16.xpose.msra.mxu0 %v7809
    %7833 = vmatprep.subr.bf16.mxu0 0
    %7834 = vmatpush1.bf16.xpose.msra.mxu0 %v7806
    %7835 = vmatprep.subr.bf16.mxu0 0
    %7836 = vmatpush1.bf16.xpose.msra.mxu0 %v7803
    %7837 = vmatprep.subr.bf16.mxu0 0
    %7838 = vmatpush1.bf16.xpose.msra.mxu0 %v7800
    %7839 = vmatprep.subr.bf16.mxu0 0
    %7840 = vmatpush2.bf16.xpose.msra.mxu0 0
    %7841 = vmatprep.subr.bf16.mxu0 0
    %7842 = vmatpush2.bf16.xpose.msra.mxu0 0
    %7843 = vmatprep.subr.bf16.mxu0 0
    %7844 = vmatpush2.bf16.xpose.msra.mxu0 0
    %7845 = vmatprep.subr.bf16.mxu0 0
    %7846 = vmatpush2.bf16.xpose.msra.mxu0 0
    %7847 = vmatprep.subr.bf16.mxu0 0
    %7848 = vmatpush2.bf16.xpose.msra.mxu0 0
    %7849 = vmatprep.subr.bf16.mxu0 0
    %7850 = vmatpush2.bf16.xpose.msra.mxu0 0
    %7851 = vmatprep.subr.bf16.mxu0 0
    %7852 = vmatpush2.bf16.xpose.msra.mxu0 0
    %7853 = vmatprep.subr.bf16.mxu0 0
    %7854 = vmatpush2.bf16.xpose.msra.mxu0 0
    %7855 = vmatprep.mubr.bf16.mxu0 0
    %7856 = vmatmul.mubr.bf16.gmra.mxu0 %v7797
    %v7857 = vpop.f32.mrf.mxu0
    %v7858 = vadd.f32 %v1210, %v7857
    %v7859 = vpop.f32.mrf.mxu0
    %v7860 = vpop.f32.mrf.mxu0
    %v7861 = vpop.f32.mrf.mxu0
    %7862 = vdwg.mxu0
    %v7863 = vsel %vm6999, %v7858, -inf
    %7864 = vmax.xlane.f32.xlu0 %v7863
    %v7865 = vpop.xlane.xlu0 %7864
    %v7866 = vsub.f32 %v7858, %v7865
    %v7867 = vmul.f32 %v7866, 1.442695
    %v7868 = vpow.pop %v7867
    %v7869 = vsel %vm6999, %v7868, 0.0
    %7870 = vadd.xlane.f32.xlu0 %v7869
    %v7871 = vpop.xlane.xlu0 %7870
    %v7872 = vrcp.pop %v7871
    %v7873 = vmul.f32 %v7868, %v7872
    %v7874 = vpack.c.bf16 %v7873, %v7873
    %7875 = vrot.lane.b32.xlu0 %v7297, 88
    %v7876 = vpop.permute.xlu0 %7875
    %7877 = vrot.lane.b32.xlu0 %v7298, 88
    %v7878 = vpop.permute.xlu0 %7877
    %7879 = vrot.lane.b32.xlu0 %v7299, 88
    %v7880 = vpop.permute.xlu0 %7879
    %7881 = vrot.lane.b32.xlu0 %v7300, 88
    %v7882 = vpop.permute.xlu0 %7881
    %7883 = vrot.lane.b32.xlu0 %v7301, 88
    %v7884 = vpop.permute.xlu0 %7883
    %7885 = vrot.lane.b32.xlu0 %v7302, 88
    %v7886 = vpop.permute.xlu0 %7885
    %7887 = vrot.lane.b32.xlu0 %v7303, 88
    %v7888 = vpop.permute.xlu0 %7887
    %7889 = vrot.lane.b32.xlu0 %v7304, 88
    %v7890 = vpop.permute.xlu0 %7889
    %7899 = vmatprep.subr.bf16.mxu0 0
    %7900 = vmatpush1.bf16.msra.mxu0 %v7890
    %7901 = vmatprep.subr.bf16.mxu0 0
    %7902 = vmatpush1.bf16.msra.mxu0 %v7888
    %7903 = vmatprep.subr.bf16.mxu0 0
    %7904 = vmatpush1.bf16.msra.mxu0 %v7886
    %7905 = vmatprep.subr.bf16.mxu0 0
    %7906 = vmatpush1.bf16.msra.mxu0 %v7884
    %7907 = vmatprep.subr.bf16.mxu0 0
    %7908 = vmatpush1.bf16.msra.mxu0 %v7882
    %7909 = vmatprep.subr.bf16.mxu0 0
    %7910 = vmatpush1.bf16.msra.mxu0 %v7880
    %7911 = vmatprep.subr.bf16.mxu0 0
    %7912 = vmatpush1.bf16.msra.mxu0 %v7878
    %7913 = vmatprep.subr.bf16.mxu0 0
    %7914 = vmatpush1.bf16.msra.mxu0 %v7876
    %7915 = vmatprep.subr.bf16.mxu0 0
    %7916 = vmatpush2.bf16.msra.mxu0 0
    %7917 = vmatprep.subr.bf16.mxu0 0
    %7918 = vmatpush2.bf16.msra.mxu0 0
    %7919 = vmatprep.subr.bf16.mxu0 0
    %7920 = vmatpush2.bf16.msra.mxu0 0
    %7921 = vmatprep.subr.bf16.mxu0 0
    %7922 = vmatpush2.bf16.msra.mxu0 0
    %7923 = vmatprep.subr.bf16.mxu0 0
    %7924 = vmatpush2.bf16.msra.mxu0 0
    %7925 = vmatprep.subr.bf16.mxu0 0
    %7926 = vmatpush2.bf16.msra.mxu0 0
    %7927 = vmatprep.subr.bf16.mxu0 0
    %7928 = vmatpush2.bf16.msra.mxu0 0
    %7929 = vmatprep.subr.bf16.mxu0 0
    %7930 = vmatpush2.bf16.msra.mxu0 0
    %7931 = vmatprep.mubr.bf16.mxu0 0
    %7932 = vmatmul.mubr.bf16.gmra.mxu0 %v7874
    %v7933 = vpop.f32.mrf.mxu0
    %v7934 = vadd.f32 0.0, %v7933
    %v7935 = vpop.f32.mrf.mxu0
    %v7936 = vpop.f32.mrf.mxu0
    %v7937 = vpop.f32.mrf.mxu0
    %7938 = vdwg.mxu0
    %v7940 = vrot.slane %v7934, 7
    %v7942 = vsel %vm6999, %v7773, %v7940
    %v7943 = vpack.c.bf16 %v7942, %v7942
    %s7944 = scalar_lea.vmem %s6, 20
    %v7945 = vld [vmem:[%s7944] sm:$0xf]
    %v7947 = vsel %vm790, %v7943, 0
    %v7950 = vsel %vm2642, %v7945, 0
    %7952 = vmatprep.subr.bf16.mxu0 0
    %7953 = vmatpush1.bf16.msra.mxu0 0
    %7954 = vmatprep.subr.bf16.mxu0 0
    %7955 = vmatpush1.bf16.msra.mxu0 0
    %7956 = vmatprep.subr.bf16.mxu0 0
    %7957 = vmatpush1.bf16.msra.mxu0 0
    %7958 = vmatprep.subr.bf16.mxu0 0
    %7959 = vmatpush1.bf16.msra.mxu0 0
    %7960 = vmatprep.subr.bf16.mxu0 0
    %7961 = vmatpush1.bf16.msra.mxu0 0
    %7962 = vmatprep.subr.bf16.mxu0 0
    %7963 = vmatpush1.bf16.msra.mxu0 0
    %7964 = vmatprep.subr.bf16.mxu0 0
    %7965 = vmatpush1.bf16.msra.mxu0 0
    %7966 = vmatprep.subr.bf16.mxu0 0
    %7967 = vmatpush1.bf16.msra.mxu0 %v7950
    %7968 = vmatprep.subr.bf16.mxu0 0
    %7969 = vmatpush2.bf16.msra.mxu0 0
    %7970 = vmatprep.subr.bf16.mxu0 0
    %7971 = vmatpush2.bf16.msra.mxu0 0
    %7972 = vmatprep.subr.bf16.mxu0 0
    %7973 = vmatpush2.bf16.msra.mxu0 0
    %7974 = vmatprep.subr.bf16.mxu0 0
    %7975 = vmatpush2.bf16.msra.mxu0 0
    %7976 = vmatprep.subr.bf16.mxu0 0
    %7977 = vmatpush2.bf16.msra.mxu0 0
    %7978 = vmatprep.subr.bf16.mxu0 0
    %7979 = vmatpush2.bf16.msra.mxu0 0
    %7980 = vmatprep.subr.bf16.mxu0 0
    %7981 = vmatpush2.bf16.msra.mxu0 0
    %7982 = vmatprep.subr.bf16.mxu0 0
    %7983 = vmatpush2.bf16.msra.mxu0 0
    %7984 = vmatprep.mubr.bf16.mxu0 0
    %7985 = vmatmul.mubr.bf16.gmra.mxu0 %v7947
    %v7986 = vpop.f32.mrf.mxu0
    %v7987 = vadd.f32 0.0, %v7986
    %v7988 = vpop.f32.mrf.mxu0
    %v7989 = vpop.f32.mrf.mxu0
    %v7990 = vpop.f32.mrf.mxu0
    %7991 = vdwg.mxu0
    %v7993 = vsel %vm790, %v7613, 0
    %v7996 = vsel %vm2642, %v7615, 0
    %7998 = vmatprep.subr.bf16.mxu0 0
    %7999 = vmatpush1.bf16.msra.mxu0 0
    %8000 = vmatprep.subr.bf16.mxu0 0
    %8001 = vmatpush1.bf16.msra.mxu0 0
    %8002 = vmatprep.subr.bf16.mxu0 0
    %8003 = vmatpush1.bf16.msra.mxu0 0
    %8004 = vmatprep.subr.bf16.mxu0 0
    %8005 = vmatpush1.bf16.msra.mxu0 0
    %8006 = vmatprep.subr.bf16.mxu0 0
    %8007 = vmatpush1.bf16.msra.mxu0 0
    %8008 = vmatprep.subr.bf16.mxu0 0
    %8009 = vmatpush1.bf16.msra.mxu0 0
    %8010 = vmatprep.subr.bf16.mxu0 0
    %8011 = vmatpush1.bf16.msra.mxu0 0
    %8012 = vmatprep.subr.bf16.mxu0 0
    %8013 = vmatpush1.bf16.msra.mxu0 %v7996
    %8014 = vmatprep.subr.bf16.mxu0 0
    %8015 = vmatpush2.bf16.msra.mxu0 0
    %8016 = vmatprep.subr.bf16.mxu0 0
    %8017 = vmatpush2.bf16.msra.mxu0 0
    %8018 = vmatprep.subr.bf16.mxu0 0
    %8019 = vmatpush2.bf16.msra.mxu0 0
    %8020 = vmatprep.subr.bf16.mxu0 0
    %8021 = vmatpush2.bf16.msra.mxu0 0
    %8022 = vmatprep.subr.bf16.mxu0 0
    %8023 = vmatpush2.bf16.msra.mxu0 0
    %8024 = vmatprep.subr.bf16.mxu0 0
    %8025 = vmatpush2.bf16.msra.mxu0 0
    %8026 = vmatprep.subr.bf16.mxu0 0
    %8027 = vmatpush2.bf16.msra.mxu0 0
    %8028 = vmatprep.subr.bf16.mxu0 0
    %8029 = vmatpush2.bf16.msra.mxu0 0
    %8030 = vmatprep.mubr.bf16.mxu0 0
    %8031 = vmatmul.mubr.bf16.gmra.mxu0 %v7993
    %v8032 = vpop.f32.mrf.mxu0
    %v8033 = vadd.f32 %v7987, %v8032
    %v8034 = vpop.f32.mrf.mxu0
    %v8035 = vpop.f32.mrf.mxu0
    %v8036 = vpop.f32.mrf.mxu0
    %8037 = vdwg.mxu0
    %8038 = vrot.lane.b32.xlu0 %v7070, 112
    %v8039 = vpop.permute.xlu0 %8038
    %8040 = vrot.lane.b32.xlu0 %v7289, 112
    %v8041 = vpop.permute.xlu0 %8040
    %8042 = vrot.lane.b32.xlu0 %v7290, 112
    %v8043 = vpop.permute.xlu0 %8042
    %8044 = vrot.lane.b32.xlu0 %v7291, 112
    %v8045 = vpop.permute.xlu0 %8044
    %8046 = vrot.lane.b32.xlu0 %v7292, 112
    %v8047 = vpop.permute.xlu0 %8046
    %8048 = vrot.lane.b32.xlu0 %v7293, 112
    %v8049 = vpop.permute.xlu0 %8048
    %8050 = vrot.lane.b32.xlu0 %v7294, 112
    %v8051 = vpop.permute.xlu0 %8050
    %8052 = vrot.lane.b32.xlu0 %v7295, 112
    %v8053 = vpop.permute.xlu0 %8052
    %8054 = vrot.lane.b32.xlu0 %v7296, 112
    %v8055 = vpop.permute.xlu0 %8054
    %v8057 = vsel %vm790, %v8039, 0
    %v8060 = vsel %vm790, %v8041, 0
    %v8063 = vsel %vm790, %v8043, 0
    %v8066 = vsel %vm790, %v8045, 0
    %v8069 = vsel %vm790, %v8047, 0
    %v8072 = vsel %vm790, %v8049, 0
    %v8075 = vsel %vm790, %v8051, 0
    %v8078 = vsel %vm790, %v8053, 0
    %v8081 = vsel %vm790, %v8055, 0
    %8083 = vmatprep.subr.bf16.mxu0 0
    %8084 = vmatpush1.bf16.xpose.msra.mxu0 %v8081
    %8085 = vmatprep.subr.bf16.mxu0 0
    %8086 = vmatpush1.bf16.xpose.msra.mxu0 %v8078
    %8087 = vmatprep.subr.bf16.mxu0 0
    %8088 = vmatpush1.bf16.xpose.msra.mxu0 %v8075
    %8089 = vmatprep.subr.bf16.mxu0 0
    %8090 = vmatpush1.bf16.xpose.msra.mxu0 %v8072
    %8091 = vmatprep.subr.bf16.mxu0 0
    %8092 = vmatpush1.bf16.xpose.msra.mxu0 %v8069
    %8093 = vmatprep.subr.bf16.mxu0 0
    %8094 = vmatpush1.bf16.xpose.msra.mxu0 %v8066
    %8095 = vmatprep.subr.bf16.mxu0 0
    %8096 = vmatpush1.bf16.xpose.msra.mxu0 %v8063
    %8097 = vmatprep.subr.bf16.mxu0 0
    %8098 = vmatpush1.bf16.xpose.msra.mxu0 %v8060
    %8099 = vmatprep.subr.bf16.mxu0 0
    %8100 = vmatpush2.bf16.xpose.msra.mxu0 0
    %8101 = vmatprep.subr.bf16.mxu0 0
    %8102 = vmatpush2.bf16.xpose.msra.mxu0 0
    %8103 = vmatprep.subr.bf16.mxu0 0
    %8104 = vmatpush2.bf16.xpose.msra.mxu0 0
    %8105 = vmatprep.subr.bf16.mxu0 0
    %8106 = vmatpush2.bf16.xpose.msra.mxu0 0
    %8107 = vmatprep.subr.bf16.mxu0 0
    %8108 = vmatpush2.bf16.xpose.msra.mxu0 0
    %8109 = vmatprep.subr.bf16.mxu0 0
    %8110 = vmatpush2.bf16.xpose.msra.mxu0 0
    %8111 = vmatprep.subr.bf16.mxu0 0
    %8112 = vmatpush2.bf16.xpose.msra.mxu0 0
    %8113 = vmatprep.subr.bf16.mxu0 0
    %8114 = vmatpush2.bf16.xpose.msra.mxu0 0
    %8115 = vmatprep.mubr.bf16.mxu0 0
    %8116 = vmatmul.mubr.bf16.gmra.mxu0 %v8057
    %v8117 = vpop.f32.mrf.mxu0
    %v8118 = vadd.f32 %v759, %v8117
    %v8119 = vpop.f32.mrf.mxu0
    %v8120 = vpop.f32.mrf.mxu0
    %v8121 = vpop.f32.mrf.mxu0
    %8122 = vdwg.mxu0
    %v8123 = vsel %vm6999, %v8118, -inf
    %8124 = vmax.xlane.f32.xlu0 %v8123
    %v8125 = vpop.xlane.xlu0 %8124
    %v8126 = vsub.f32 %v8118, %v8125
    %v8127 = vmul.f32 %v8126, 1.442695
    %v8128 = vpow.pop %v8127
    %v8129 = vsel %vm6999, %v8128, 0.0
    %8130 = vadd.xlane.f32.xlu0 %v8129
    %v8131 = vpop.xlane.xlu0 %8130
    %v8132 = vrcp.pop %v8131
    %v8133 = vmul.f32 %v8128, %v8132
    %v8134 = vpack.c.bf16 %v8133, %v8133
    %8135 = vrot.lane.b32.xlu0 %v7289, 80
    %v8136 = vpop.permute.xlu0 %8135
    %8137 = vrot.lane.b32.xlu0 %v7290, 80
    %v8138 = vpop.permute.xlu0 %8137
    %8139 = vrot.lane.b32.xlu0 %v7291, 80
    %v8140 = vpop.permute.xlu0 %8139
    %8141 = vrot.lane.b32.xlu0 %v7292, 80
    %v8142 = vpop.permute.xlu0 %8141
    %8143 = vrot.lane.b32.xlu0 %v7293, 80
    %v8144 = vpop.permute.xlu0 %8143
    %8145 = vrot.lane.b32.xlu0 %v7294, 80
    %v8146 = vpop.permute.xlu0 %8145
    %8147 = vrot.lane.b32.xlu0 %v7295, 80
    %v8148 = vpop.permute.xlu0 %8147
    %8149 = vrot.lane.b32.xlu0 %v7296, 80
    %v8150 = vpop.permute.xlu0 %8149
    %8159 = vmatprep.subr.bf16.mxu0 0
    %8160 = vmatpush1.bf16.msra.mxu0 %v8150
    %8161 = vmatprep.subr.bf16.mxu0 0
    %8162 = vmatpush1.bf16.msra.mxu0 %v8148
    %8163 = vmatprep.subr.bf16.mxu0 0
    %8164 = vmatpush1.bf16.msra.mxu0 %v8146
    %8165 = vmatprep.subr.bf16.mxu0 0
    %8166 = vmatpush1.bf16.msra.mxu0 %v8144
    %8167 = vmatprep.subr.bf16.mxu0 0
    %8168 = vmatpush1.bf16.msra.mxu0 %v8142
    %8169 = vmatprep.subr.bf16.mxu0 0
    %8170 = vmatpush1.bf16.msra.mxu0 %v8140
    %8171 = vmatprep.subr.bf16.mxu0 0
    %8172 = vmatpush1.bf16.msra.mxu0 %v8138
    %8173 = vmatprep.subr.bf16.mxu0 0
    %8174 = vmatpush1.bf16.msra.mxu0 %v8136
    %8175 = vmatprep.subr.bf16.mxu0 0
    %8176 = vmatpush2.bf16.msra.mxu0 0
    %8177 = vmatprep.subr.bf16.mxu0 0
    %8178 = vmatpush2.bf16.msra.mxu0 0
    %8179 = vmatprep.subr.bf16.mxu0 0
    %8180 = vmatpush2.bf16.msra.mxu0 0
    %8181 = vmatprep.subr.bf16.mxu0 0
    %8182 = vmatpush2.bf16.msra.mxu0 0
    %8183 = vmatprep.subr.bf16.mxu0 0
    %8184 = vmatpush2.bf16.msra.mxu0 0
    %8185 = vmatprep.subr.bf16.mxu0 0
    %8186 = vmatpush2.bf16.msra.mxu0 0
    %8187 = vmatprep.subr.bf16.mxu0 0
    %8188 = vmatpush2.bf16.msra.mxu0 0
    %8189 = vmatprep.subr.bf16.mxu0 0
    %8190 = vmatpush2.bf16.msra.mxu0 0
    %8191 = vmatprep.mubr.bf16.mxu0 0
    %8192 = vmatmul.mubr.bf16.gmra.mxu0 %v8134
    %v8193 = vpop.f32.mrf.mxu0
    %v8194 = vadd.f32 0.0, %v8193
    %v8195 = vpop.f32.mrf.mxu0
    %v8196 = vpop.f32.mrf.mxu0
    %v8197 = vpop.f32.mrf.mxu0
    %8198 = vdwg.mxu0
    %8199 = vrot.lane.b32.xlu0 %v7456, 112
    %v8200 = vpop.permute.xlu0 %8199
    %8201 = vrot.lane.b32.xlu0 %v7297, 112
    %v8202 = vpop.permute.xlu0 %8201
    %8203 = vrot.lane.b32.xlu0 %v7298, 112
    %v8204 = vpop.permute.xlu0 %8203
    %8205 = vrot.lane.b32.xlu0 %v7299, 112
    %v8206 = vpop.permute.xlu0 %8205
    %8207 = vrot.lane.b32.xlu0 %v7300, 112
    %v8208 = vpop.permute.xlu0 %8207
    %8209 = vrot.lane.b32.xlu0 %v7301, 112
    %v8210 = vpop.permute.xlu0 %8209
    %8211 = vrot.lane.b32.xlu0 %v7302, 112
    %v8212 = vpop.permute.xlu0 %8211
    %8213 = vrot.lane.b32.xlu0 %v7303, 112
    %v8214 = vpop.permute.xlu0 %8213
    %8215 = vrot.lane.b32.xlu0 %v7304, 112
    %v8216 = vpop.permute.xlu0 %8215
    %v8218 = vsel %vm790, %v8200, 0
    %v8221 = vsel %vm790, %v8202, 0
    %v8224 = vsel %vm790, %v8204, 0
    %v8227 = vsel %vm790, %v8206, 0
    %v8230 = vsel %vm790, %v8208, 0
    %v8233 = vsel %vm790, %v8210, 0
    %v8236 = vsel %vm790, %v8212, 0
    %v8239 = vsel %vm790, %v8214, 0
    %v8242 = vsel %vm790, %v8216, 0
    %8244 = vmatprep.subr.bf16.mxu0 0
    %8245 = vmatpush1.bf16.xpose.msra.mxu0 %v8242
    %8246 = vmatprep.subr.bf16.mxu0 0
    %8247 = vmatpush1.bf16.xpose.msra.mxu0 %v8239
    %8248 = vmatprep.subr.bf16.mxu0 0
    %8249 = vmatpush1.bf16.xpose.msra.mxu0 %v8236
    %8250 = vmatprep.subr.bf16.mxu0 0
    %8251 = vmatpush1.bf16.xpose.msra.mxu0 %v8233
    %8252 = vmatprep.subr.bf16.mxu0 0
    %8253 = vmatpush1.bf16.xpose.msra.mxu0 %v8230
    %8254 = vmatprep.subr.bf16.mxu0 0
    %8255 = vmatpush1.bf16.xpose.msra.mxu0 %v8227
    %8256 = vmatprep.subr.bf16.mxu0 0
    %8257 = vmatpush1.bf16.xpose.msra.mxu0 %v8224
    %8258 = vmatprep.subr.bf16.mxu0 0
    %8259 = vmatpush1.bf16.xpose.msra.mxu0 %v8221
    %8260 = vmatprep.subr.bf16.mxu0 0
    %8261 = vmatpush2.bf16.xpose.msra.mxu0 0
    %8262 = vmatprep.subr.bf16.mxu0 0
    %8263 = vmatpush2.bf16.xpose.msra.mxu0 0
    %8264 = vmatprep.subr.bf16.mxu0 0
    %8265 = vmatpush2.bf16.xpose.msra.mxu0 0
    %8266 = vmatprep.subr.bf16.mxu0 0
    %8267 = vmatpush2.bf16.xpose.msra.mxu0 0
    %8268 = vmatprep.subr.bf16.mxu0 0
    %8269 = vmatpush2.bf16.xpose.msra.mxu0 0
    %8270 = vmatprep.subr.bf16.mxu0 0
    %8271 = vmatpush2.bf16.xpose.msra.mxu0 0
    %8272 = vmatprep.subr.bf16.mxu0 0
    %8273 = vmatpush2.bf16.xpose.msra.mxu0 0
    %8274 = vmatprep.subr.bf16.mxu0 0
    %8275 = vmatpush2.bf16.xpose.msra.mxu0 0
    %8276 = vmatprep.mubr.bf16.mxu0 0
    %8277 = vmatmul.mubr.bf16.gmra.mxu0 %v8218
    %v8278 = vpop.f32.mrf.mxu0
    %v8279 = vadd.f32 %v1210, %v8278
    %v8280 = vpop.f32.mrf.mxu0
    %v8281 = vpop.f32.mrf.mxu0
    %v8282 = vpop.f32.mrf.mxu0
    %8283 = vdwg.mxu0
    %v8284 = vsel %vm6999, %v8279, -inf
    %8285 = vmax.xlane.f32.xlu0 %v8284
    %v8286 = vpop.xlane.xlu0 %8285
    %v8287 = vsub.f32 %v8279, %v8286
    %v8288 = vmul.f32 %v8287, 1.442695
    %v8289 = vpow.pop %v8288
    %v8290 = vsel %vm6999, %v8289, 0.0
    %8291 = vadd.xlane.f32.xlu0 %v8290
    %v8292 = vpop.xlane.xlu0 %8291
    %v8293 = vrcp.pop %v8292
    %v8294 = vmul.f32 %v8289, %v8293
    %v8295 = vpack.c.bf16 %v8294, %v8294
    %8296 = vrot.lane.b32.xlu0 %v7297, 80
    %v8297 = vpop.permute.xlu0 %8296
    %8298 = vrot.lane.b32.xlu0 %v7298, 80
    %v8299 = vpop.permute.xlu0 %8298
    %8300 = vrot.lane.b32.xlu0 %v7299, 80
    %v8301 = vpop.permute.xlu0 %8300
    %8302 = vrot.lane.b32.xlu0 %v7300, 80
    %v8303 = vpop.permute.xlu0 %8302
    %8304 = vrot.lane.b32.xlu0 %v7301, 80
    %v8305 = vpop.permute.xlu0 %8304
    %8306 = vrot.lane.b32.xlu0 %v7302, 80
    %v8307 = vpop.permute.xlu0 %8306
    %8308 = vrot.lane.b32.xlu0 %v7303, 80
    %v8309 = vpop.permute.xlu0 %8308
    %8310 = vrot.lane.b32.xlu0 %v7304, 80
    %v8311 = vpop.permute.xlu0 %8310
    %8320 = vmatprep.subr.bf16.mxu0 0
    %8321 = vmatpush1.bf16.msra.mxu0 %v8311
    %8322 = vmatprep.subr.bf16.mxu0 0
    %8323 = vmatpush1.bf16.msra.mxu0 %v8309
    %8324 = vmatprep.subr.bf16.mxu0 0
    %8325 = vmatpush1.bf16.msra.mxu0 %v8307
    %8326 = vmatprep.subr.bf16.mxu0 0
    %8327 = vmatpush1.bf16.msra.mxu0 %v8305
    %8328 = vmatprep.subr.bf16.mxu0 0
    %8329 = vmatpush1.bf16.msra.mxu0 %v8303
    %8330 = vmatprep.subr.bf16.mxu0 0
    %8331 = vmatpush1.bf16.msra.mxu0 %v8301
    %8332 = vmatprep.subr.bf16.mxu0 0
    %8333 = vmatpush1.bf16.msra.mxu0 %v8299
    %8334 = vmatprep.subr.bf16.mxu0 0
    %8335 = vmatpush1.bf16.msra.mxu0 %v8297
    %8336 = vmatprep.subr.bf16.mxu0 0
    %8337 = vmatpush2.bf16.msra.mxu0 0
    %8338 = vmatprep.subr.bf16.mxu0 0
    %8339 = vmatpush2.bf16.msra.mxu0 0
    %8340 = vmatprep.subr.bf16.mxu0 0
    %8341 = vmatpush2.bf16.msra.mxu0 0
    %8342 = vmatprep.subr.bf16.mxu0 0
    %8343 = vmatpush2.bf16.msra.mxu0 0
    %8344 = vmatprep.subr.bf16.mxu0 0
    %8345 = vmatpush2.bf16.msra.mxu0 0
    %8346 = vmatprep.subr.bf16.mxu0 0
    %8347 = vmatpush2.bf16.msra.mxu0 0
    %8348 = vmatprep.subr.bf16.mxu0 0
    %8349 = vmatpush2.bf16.msra.mxu0 0
    %8350 = vmatprep.subr.bf16.mxu0 0
    %8351 = vmatpush2.bf16.msra.mxu0 0
    %8352 = vmatprep.mubr.bf16.mxu0 0
    %8353 = vmatmul.mubr.bf16.gmra.mxu0 %v8295
    %v8354 = vpop.f32.mrf.mxu0
    %v8355 = vadd.f32 0.0, %v8354
    %v8356 = vpop.f32.mrf.mxu0
    %v8357 = vpop.f32.mrf.mxu0
    %v8358 = vpop.f32.mrf.mxu0
    %8359 = vdwg.mxu0
    %v8361 = vrot.slane %v8355, 7
    %v8363 = vsel %vm6999, %v8194, %v8361
    %v8364 = vpack.c.bf16 %v8363, %v8363
    %s8365 = scalar_lea.vmem %s6, 24
    %v8366 = vld [vmem:[%s8365] sm:$0xf]
    %v8368 = vsel %vm790, %v8364, 0
    %v8371 = vsel %vm2642, %v8366, 0
    %8373 = vmatprep.subr.bf16.mxu0 0
    %8374 = vmatpush1.bf16.msra.mxu0 0
    %8375 = vmatprep.subr.bf16.mxu0 0
    %8376 = vmatpush1.bf16.msra.mxu0 0
    %8377 = vmatprep.subr.bf16.mxu0 0
    %8378 = vmatpush1.bf16.msra.mxu0 0
    %8379 = vmatprep.subr.bf16.mxu0 0
    %8380 = vmatpush1.bf16.msra.mxu0 0
    %8381 = vmatprep.subr.bf16.mxu0 0
    %8382 = vmatpush1.bf16.msra.mxu0 0
    %8383 = vmatprep.subr.bf16.mxu0 0
    %8384 = vmatpush1.bf16.msra.mxu0 0
    %8385 = vmatprep.subr.bf16.mxu0 0
    %8386 = vmatpush1.bf16.msra.mxu0 0
    %8387 = vmatprep.subr.bf16.mxu0 0
    %8388 = vmatpush1.bf16.msra.mxu0 %v8371
    %8389 = vmatprep.subr.bf16.mxu0 0
    %8390 = vmatpush2.bf16.msra.mxu0 0
    %8391 = vmatprep.subr.bf16.mxu0 0
    %8392 = vmatpush2.bf16.msra.mxu0 0
    %8393 = vmatprep.subr.bf16.mxu0 0
    %8394 = vmatpush2.bf16.msra.mxu0 0
    %8395 = vmatprep.subr.bf16.mxu0 0
    %8396 = vmatpush2.bf16.msra.mxu0 0
    %8397 = vmatprep.subr.bf16.mxu0 0
    %8398 = vmatpush2.bf16.msra.mxu0 0
    %8399 = vmatprep.subr.bf16.mxu0 0
    %8400 = vmatpush2.bf16.msra.mxu0 0
    %8401 = vmatprep.subr.bf16.mxu0 0
    %8402 = vmatpush2.bf16.msra.mxu0 0
    %8403 = vmatprep.subr.bf16.mxu0 0
    %8404 = vmatpush2.bf16.msra.mxu0 0
    %8405 = vmatprep.mubr.bf16.mxu0 0
    %8406 = vmatmul.mubr.bf16.gmra.mxu0 %v8368
    %v8407 = vpop.f32.mrf.mxu0
    %v8408 = vadd.f32 0.0, %v8407
    %v8409 = vpop.f32.mrf.mxu0
    %v8410 = vpop.f32.mrf.mxu0
    %v8411 = vpop.f32.mrf.mxu0
    %8412 = vdwg.mxu0
    %v8413 = vadd.f32 %v8033, %v8408
    %8414 = vrot.lane.b32.xlu0 %v7070, 104
    %v8415 = vpop.permute.xlu0 %8414
    %8416 = vrot.lane.b32.xlu0 %v7289, 104
    %v8417 = vpop.permute.xlu0 %8416
    %8418 = vrot.lane.b32.xlu0 %v7290, 104
    %v8419 = vpop.permute.xlu0 %8418
    %8420 = vrot.lane.b32.xlu0 %v7291, 104
    %v8421 = vpop.permute.xlu0 %8420
    %8422 = vrot.lane.b32.xlu0 %v7292, 104
    %v8423 = vpop.permute.xlu0 %8422
    %8424 = vrot.lane.b32.xlu0 %v7293, 104
    %v8425 = vpop.permute.xlu0 %8424
    %8426 = vrot.lane.b32.xlu0 %v7294, 104
    %v8427 = vpop.permute.xlu0 %8426
    %8428 = vrot.lane.b32.xlu0 %v7295, 104
    %v8429 = vpop.permute.xlu0 %8428
    %8430 = vrot.lane.b32.xlu0 %v7296, 104
    %v8431 = vpop.permute.xlu0 %8430
    %v8433 = vsel %vm790, %v8415, 0
    %v8436 = vsel %vm790, %v8417, 0
    %v8439 = vsel %vm790, %v8419, 0
    %v8442 = vsel %vm790, %v8421, 0
    %v8445 = vsel %vm790, %v8423, 0
    %v8448 = vsel %vm790, %v8425, 0
    %v8451 = vsel %vm790, %v8427, 0
    %v8454 = vsel %vm790, %v8429, 0
    %v8457 = vsel %vm790, %v8431, 0
    %8459 = vmatprep.subr.bf16.mxu0 0
    %8460 = vmatpush1.bf16.xpose.msra.mxu0 %v8457
    %8461 = vmatprep.subr.bf16.mxu0 0
    %8462 = vmatpush1.bf16.xpose.msra.mxu0 %v8454
    %8463 = vmatprep.subr.bf16.mxu0 0
    %8464 = vmatpush1.bf16.xpose.msra.mxu0 %v8451
    %8465 = vmatprep.subr.bf16.mxu0 0
    %8466 = vmatpush1.bf16.xpose.msra.mxu0 %v8448
    %8467 = vmatprep.subr.bf16.mxu0 0
    %8468 = vmatpush1.bf16.xpose.msra.mxu0 %v8445
    %8469 = vmatprep.subr.bf16.mxu0 0
    %8470 = vmatpush1.bf16.xpose.msra.mxu0 %v8442
    %8471 = vmatprep.subr.bf16.mxu0 0
    %8472 = vmatpush1.bf16.xpose.msra.mxu0 %v8439
    %8473 = vmatprep.subr.bf16.mxu0 0
    %8474 = vmatpush1.bf16.xpose.msra.mxu0 %v8436
    %8475 = vmatprep.subr.bf16.mxu0 0
    %8476 = vmatpush2.bf16.xpose.msra.mxu0 0
    %8477 = vmatprep.subr.bf16.mxu0 0
    %8478 = vmatpush2.bf16.xpose.msra.mxu0 0
    %8479 = vmatprep.subr.bf16.mxu0 0
    %8480 = vmatpush2.bf16.xpose.msra.mxu0 0
    %8481 = vmatprep.subr.bf16.mxu0 0
    %8482 = vmatpush2.bf16.xpose.msra.mxu0 0
    %8483 = vmatprep.subr.bf16.mxu0 0
    %8484 = vmatpush2.bf16.xpose.msra.mxu0 0
    %8485 = vmatprep.subr.bf16.mxu0 0
    %8486 = vmatpush2.bf16.xpose.msra.mxu0 0
    %8487 = vmatprep.subr.bf16.mxu0 0
    %8488 = vmatpush2.bf16.xpose.msra.mxu0 0
    %8489 = vmatprep.subr.bf16.mxu0 0
    %8490 = vmatpush2.bf16.xpose.msra.mxu0 0
    %8491 = vmatprep.mubr.bf16.mxu0 0
    %8492 = vmatmul.mubr.bf16.gmra.mxu0 %v8433
    %v8493 = vpop.f32.mrf.mxu0
    %v8494 = vadd.f32 %v759, %v8493
    %v8495 = vpop.f32.mrf.mxu0
    %v8496 = vpop.f32.mrf.mxu0
    %v8497 = vpop.f32.mrf.mxu0
    %8498 = vdwg.mxu0
    %v8499 = vsel %vm6999, %v8494, -inf
    %8500 = vmax.xlane.f32.xlu0 %v8499
    %v8501 = vpop.xlane.xlu0 %8500
    %v8502 = vsub.f32 %v8494, %v8501
    %v8503 = vmul.f32 %v8502, 1.442695
    %v8504 = vpow.pop %v8503
    %v8505 = vsel %vm6999, %v8504, 0.0
    %8506 = vadd.xlane.f32.xlu0 %v8505
    %v8507 = vpop.xlane.xlu0 %8506
    %v8508 = vrcp.pop %v8507
    %v8509 = vmul.f32 %v8504, %v8508
    %v8510 = vpack.c.bf16 %v8509, %v8509
    %8511 = vrot.lane.b32.xlu0 %v7289, 72
    %v8512 = vpop.permute.xlu0 %8511
    %8513 = vrot.lane.b32.xlu0 %v7290, 72
    %v8514 = vpop.permute.xlu0 %8513
    %8515 = vrot.lane.b32.xlu0 %v7291, 72
    %v8516 = vpop.permute.xlu0 %8515
    %8517 = vrot.lane.b32.xlu0 %v7292, 72
    %v8518 = vpop.permute.xlu0 %8517
    %8519 = vrot.lane.b32.xlu0 %v7293, 72
    %v8520 = vpop.permute.xlu0 %8519
    %8521 = vrot.lane.b32.xlu0 %v7294, 72
    %v8522 = vpop.permute.xlu0 %8521
    %8523 = vrot.lane.b32.xlu0 %v7295, 72
    %v8524 = vpop.permute.xlu0 %8523
    %8525 = vrot.lane.b32.xlu0 %v7296, 72
    %v8526 = vpop.permute.xlu0 %8525
    %8535 = vmatprep.subr.bf16.mxu0 0
    %8536 = vmatpush1.bf16.msra.mxu0 %v8526
    %8537 = vmatprep.subr.bf16.mxu0 0
    %8538 = vmatpush1.bf16.msra.mxu0 %v8524
    %8539 = vmatprep.subr.bf16.mxu0 0
    %8540 = vmatpush1.bf16.msra.mxu0 %v8522
    %8541 = vmatprep.subr.bf16.mxu0 0
    %8542 = vmatpush1.bf16.msra.mxu0 %v8520
    %8543 = vmatprep.subr.bf16.mxu0 0
    %8544 = vmatpush1.bf16.msra.mxu0 %v8518
    %8545 = vmatprep.subr.bf16.mxu0 0
    %8546 = vmatpush1.bf16.msra.mxu0 %v8516
    %8547 = vmatprep.subr.bf16.mxu0 0
    %8548 = vmatpush1.bf16.msra.mxu0 %v8514
    %8549 = vmatprep.subr.bf16.mxu0 0
    %8550 = vmatpush1.bf16.msra.mxu0 %v8512
    %8551 = vmatprep.subr.bf16.mxu0 0
    %8552 = vmatpush2.bf16.msra.mxu0 0
    %8553 = vmatprep.subr.bf16.mxu0 0
    %8554 = vmatpush2.bf16.msra.mxu0 0
    %8555 = vmatprep.subr.bf16.mxu0 0
    %8556 = vmatpush2.bf16.msra.mxu0 0
    %8557 = vmatprep.subr.bf16.mxu0 0
    %8558 = vmatpush2.bf16.msra.mxu0 0
    %8559 = vmatprep.subr.bf16.mxu0 0
    %8560 = vmatpush2.bf16.msra.mxu0 0
    %8561 = vmatprep.subr.bf16.mxu0 0
    %8562 = vmatpush2.bf16.msra.mxu0 0
    %8563 = vmatprep.subr.bf16.mxu0 0
    %8564 = vmatpush2.bf16.msra.mxu0 0
    %8565 = vmatprep.subr.bf16.mxu0 0
    %8566 = vmatpush2.bf16.msra.mxu0 0
    %8567 = vmatprep.mubr.bf16.mxu0 0
    %8568 = vmatmul.mubr.bf16.gmra.mxu0 %v8510
    %v8569 = vpop.f32.mrf.mxu0
    %v8570 = vadd.f32 0.0, %v8569
    %v8571 = vpop.f32.mrf.mxu0
    %v8572 = vpop.f32.mrf.mxu0
    %v8573 = vpop.f32.mrf.mxu0
    %8574 = vdwg.mxu0
    %8575 = vrot.lane.b32.xlu0 %v7456, 104
    %v8576 = vpop.permute.xlu0 %8575
    %8577 = vrot.lane.b32.xlu0 %v7297, 104
    %v8578 = vpop.permute.xlu0 %8577
    %8579 = vrot.lane.b32.xlu0 %v7298, 104
    %v8580 = vpop.permute.xlu0 %8579
    %8581 = vrot.lane.b32.xlu0 %v7299, 104
    %v8582 = vpop.permute.xlu0 %8581
    %8583 = vrot.lane.b32.xlu0 %v7300, 104
    %v8584 = vpop.permute.xlu0 %8583
    %8585 = vrot.lane.b32.xlu0 %v7301, 104
    %v8586 = vpop.permute.xlu0 %8585
    %8587 = vrot.lane.b32.xlu0 %v7302, 104
    %v8588 = vpop.permute.xlu0 %8587
    %8589 = vrot.lane.b32.xlu0 %v7303, 104
    %v8590 = vpop.permute.xlu0 %8589
    %8591 = vrot.lane.b32.xlu0 %v7304, 104
    %v8592 = vpop.permute.xlu0 %8591
    %v8594 = vsel %vm790, %v8576, 0
    %v8597 = vsel %vm790, %v8578, 0
    %v8600 = vsel %vm790, %v8580, 0
    %v8603 = vsel %vm790, %v8582, 0
    %v8606 = vsel %vm790, %v8584, 0
    %v8609 = vsel %vm790, %v8586, 0
    %v8612 = vsel %vm790, %v8588, 0
    %v8615 = vsel %vm790, %v8590, 0
    %v8618 = vsel %vm790, %v8592, 0
    %8620 = vmatprep.subr.bf16.mxu0 0
    %8621 = vmatpush1.bf16.xpose.msra.mxu0 %v8618
    %8622 = vmatprep.subr.bf16.mxu0 0
    %8623 = vmatpush1.bf16.xpose.msra.mxu0 %v8615
    %8624 = vmatprep.subr.bf16.mxu0 0
    %8625 = vmatpush1.bf16.xpose.msra.mxu0 %v8612
    %8626 = vmatprep.subr.bf16.mxu0 0
    %8627 = vmatpush1.bf16.xpose.msra.mxu0 %v8609
    %8628 = vmatprep.subr.bf16.mxu0 0
    %8629 = vmatpush1.bf16.xpose.msra.mxu0 %v8606
    %8630 = vmatprep.subr.bf16.mxu0 0
    %8631 = vmatpush1.bf16.xpose.msra.mxu0 %v8603
    %8632 = vmatprep.subr.bf16.mxu0 0
    %8633 = vmatpush1.bf16.xpose.msra.mxu0 %v8600
    %8634 = vmatprep.subr.bf16.mxu0 0
    %8635 = vmatpush1.bf16.xpose.msra.mxu0 %v8597
    %8636 = vmatprep.subr.bf16.mxu0 0
    %8637 = vmatpush2.bf16.xpose.msra.mxu0 0
    %8638 = vmatprep.subr.bf16.mxu0 0
    %8639 = vmatpush2.bf16.xpose.msra.mxu0 0
    %8640 = vmatprep.subr.bf16.mxu0 0
    %8641 = vmatpush2.bf16.xpose.msra.mxu0 0
    %8642 = vmatprep.subr.bf16.mxu0 0
    %8643 = vmatpush2.bf16.xpose.msra.mxu0 0
    %8644 = vmatprep.subr.bf16.mxu0 0
    %8645 = vmatpush2.bf16.xpose.msra.mxu0 0
    %8646 = vmatprep.subr.bf16.mxu0 0
    %8647 = vmatpush2.bf16.xpose.msra.mxu0 0
    %8648 = vmatprep.subr.bf16.mxu0 0
    %8649 = vmatpush2.bf16.xpose.msra.mxu0 0
    %8650 = vmatprep.subr.bf16.mxu0 0
    %8651 = vmatpush2.bf16.xpose.msra.mxu0 0
    %8652 = vmatprep.mubr.bf16.mxu0 0
    %8653 = vmatmul.mubr.bf16.gmra.mxu0 %v8594
    %v8654 = vpop.f32.mrf.mxu0
    %v8655 = vadd.f32 %v1210, %v8654
    %v8656 = vpop.f32.mrf.mxu0
    %v8657 = vpop.f32.mrf.mxu0
    %v8658 = vpop.f32.mrf.mxu0
    %8659 = vdwg.mxu0
    %v8660 = vsel %vm6999, %v8655, -inf
    %8661 = vmax.xlane.f32.xlu0 %v8660
    %v8662 = vpop.xlane.xlu0 %8661
    %v8663 = vsub.f32 %v8655, %v8662
    %v8664 = vmul.f32 %v8663, 1.442695
    %v8665 = vpow.pop %v8664
    %v8666 = vsel %vm6999, %v8665, 0.0
    %8667 = vadd.xlane.f32.xlu0 %v8666
    %v8668 = vpop.xlane.xlu0 %8667
    %v8669 = vrcp.pop %v8668
    %v8670 = vmul.f32 %v8665, %v8669
    %v8671 = vpack.c.bf16 %v8670, %v8670
    %8672 = vrot.lane.b32.xlu0 %v7297, 72
    %v8673 = vpop.permute.xlu0 %8672
    %8674 = vrot.lane.b32.xlu0 %v7298, 72
    %v8675 = vpop.permute.xlu0 %8674
    %8676 = vrot.lane.b32.xlu0 %v7299, 72
    %v8677 = vpop.permute.xlu0 %8676
    %8678 = vrot.lane.b32.xlu0 %v7300, 72
    %v8679 = vpop.permute.xlu0 %8678
    %8680 = vrot.lane.b32.xlu0 %v7301, 72
    %v8681 = vpop.permute.xlu0 %8680
    %8682 = vrot.lane.b32.xlu0 %v7302, 72
    %v8683 = vpop.permute.xlu0 %8682
    %8684 = vrot.lane.b32.xlu0 %v7303, 72
    %v8685 = vpop.permute.xlu0 %8684
    %8686 = vrot.lane.b32.xlu0 %v7304, 72
    %v8687 = vpop.permute.xlu0 %8686
    %8696 = vmatprep.subr.bf16.mxu0 0
    %8697 = vmatpush1.bf16.msra.mxu0 %v8687
    %8698 = vmatprep.subr.bf16.mxu0 0
    %8699 = vmatpush1.bf16.msra.mxu0 %v8685
    %8700 = vmatprep.subr.bf16.mxu0 0
    %8701 = vmatpush1.bf16.msra.mxu0 %v8683
    %8702 = vmatprep.subr.bf16.mxu0 0
    %8703 = vmatpush1.bf16.msra.mxu0 %v8681
    %8704 = vmatprep.subr.bf16.mxu0 0
    %8705 = vmatpush1.bf16.msra.mxu0 %v8679
    %8706 = vmatprep.subr.bf16.mxu0 0
    %8707 = vmatpush1.bf16.msra.mxu0 %v8677
    %8708 = vmatprep.subr.bf16.mxu0 0
    %8709 = vmatpush1.bf16.msra.mxu0 %v8675
    %8710 = vmatprep.subr.bf16.mxu0 0
    %8711 = vmatpush1.bf16.msra.mxu0 %v8673
    %8712 = vmatprep.subr.bf16.mxu0 0
    %8713 = vmatpush2.bf16.msra.mxu0 0
    %8714 = vmatprep.subr.bf16.mxu0 0
    %8715 = vmatpush2.bf16.msra.mxu0 0
    %8716 = vmatprep.subr.bf16.mxu0 0
    %8717 = vmatpush2.bf16.msra.mxu0 0
    %8718 = vmatprep.subr.bf16.mxu0 0
    %8719 = vmatpush2.bf16.msra.mxu0 0
    %8720 = vmatprep.subr.bf16.mxu0 0
    %8721 = vmatpush2.bf16.msra.mxu0 0
    %8722 = vmatprep.subr.bf16.mxu0 0
    %8723 = vmatpush2.bf16.msra.mxu0 0
    %8724 = vmatprep.subr.bf16.mxu0 0
    %8725 = vmatpush2.bf16.msra.mxu0 0
    %8726 = vmatprep.subr.bf16.mxu0 0
    %8727 = vmatpush2.bf16.msra.mxu0 0
    %8728 = vmatprep.mubr.bf16.mxu0 0
    %8729 = vmatmul.mubr.bf16.gmra.mxu0 %v8671
    %v8730 = vpop.f32.mrf.mxu0
    %v8731 = vadd.f32 0.0, %v8730
    %v8732 = vpop.f32.mrf.mxu0
    %v8733 = vpop.f32.mrf.mxu0
    %v8734 = vpop.f32.mrf.mxu0
    %8735 = vdwg.mxu0
    %v8737 = vrot.slane %v8731, 7
    %v8739 = vsel %vm6999, %v8570, %v8737
    %v8740 = vpack.c.bf16 %v8739, %v8739
    %s8741 = scalar_lea.vmem %s6, 28
    %v8742 = vld [vmem:[%s8741] sm:$0xf]
    %v8744 = vsel %vm790, %v8740, 0
    %v8747 = vsel %vm2642, %v8742, 0
    %8749 = vmatprep.subr.bf16.mxu0 0
    %8750 = vmatpush1.bf16.msra.mxu0 0
    %8751 = vmatprep.subr.bf16.mxu0 0
    %8752 = vmatpush1.bf16.msra.mxu0 0
    %8753 = vmatprep.subr.bf16.mxu0 0
    %8754 = vmatpush1.bf16.msra.mxu0 0
    %8755 = vmatprep.subr.bf16.mxu0 0
    %8756 = vmatpush1.bf16.msra.mxu0 0
    %8757 = vmatprep.subr.bf16.mxu0 0
    %8758 = vmatpush1.bf16.msra.mxu0 0
    %8759 = vmatprep.subr.bf16.mxu0 0
    %8760 = vmatpush1.bf16.msra.mxu0 0
    %8761 = vmatprep.subr.bf16.mxu0 0
    %8762 = vmatpush1.bf16.msra.mxu0 0
    %8763 = vmatprep.subr.bf16.mxu0 0
    %8764 = vmatpush1.bf16.msra.mxu0 %v8747
    %8765 = vmatprep.subr.bf16.mxu0 0
    %8766 = vmatpush2.bf16.msra.mxu0 0
    %8767 = vmatprep.subr.bf16.mxu0 0
    %8768 = vmatpush2.bf16.msra.mxu0 0
    %8769 = vmatprep.subr.bf16.mxu0 0
    %8770 = vmatpush2.bf16.msra.mxu0 0
    %8771 = vmatprep.subr.bf16.mxu0 0
    %8772 = vmatpush2.bf16.msra.mxu0 0
    %8773 = vmatprep.subr.bf16.mxu0 0
    %8774 = vmatpush2.bf16.msra.mxu0 0
    %8775 = vmatprep.subr.bf16.mxu0 0
    %8776 = vmatpush2.bf16.msra.mxu0 0
    %8777 = vmatprep.subr.bf16.mxu0 0
    %8778 = vmatpush2.bf16.msra.mxu0 0
    %8779 = vmatprep.subr.bf16.mxu0 0
    %8780 = vmatpush2.bf16.msra.mxu0 0
    %8781 = vmatprep.mubr.bf16.mxu0 0
    %8782 = vmatmul.mubr.bf16.gmra.mxu0 %v8744
    %v8783 = vpop.f32.mrf.mxu0
    %v8784 = vadd.f32 0.0, %v8783
    %v8785 = vpop.f32.mrf.mxu0
    %v8786 = vpop.f32.mrf.mxu0
    %v8787 = vpop.f32.mrf.mxu0
    %8788 = vdwg.mxu0
    %v8789 = vadd.f32 %v8413, %v8784
    %v8790 = vadd.f32 %v7000, %v8789
    %s8791 = scalar_lea.vmem %s7, 1
    %v8792 = vld [vmem:[%s8791] sm:$0x1]
    %v8794 = vlaneseq
    %v8795 = vshrl.u32 %v8794, 7
    %v8796 = vsub.s32 0, %v8795
    %v8797 = vrot.slane %v8792, %v8796
    %v8799 = vadd.f32 %v8790, %v8797
    %s8800 = scalar_lea.vmem %s8, 1
    %v8801 = vld [vmem:[%s8800] sm:$0x1]
    %s8802 = scalar_lea.vmem %s9, 1
    %v8803 = vld [vmem:[%s8802] sm:$0x1]
    %vm8804 = vcmask 254976
    %v8805 = vsel %vm8804, %v8799, 0.0
    %8806 = vadd.xlane.f32.xlu0 %v8805
    %v8807 = vpop.xlane.xlu0 %8806
    %v8808 = vmul.f32 %v8807, %v5512
    %v8809 = vsub.f32 %v8799, %v8808
    %v8810 = vmul.f32 %v8809, %v8809
    %v8811 = vsel %vm8804, %v8810, 0.0
    %8812 = vadd.xlane.f32.xlu0 %v8811
    %v8813 = vpop.xlane.xlu0 %8812
    %v8814 = vmul.f32 %v8813, %v5512
    %v8815 = vadd.f32 %v8814, 1e-05
    %v8816 = vrsqrt.pop %v8815
    %v8817 = vmul.f32 %v8809, %v8816
    %v8819 = vlaneseq
    %v8820 = vshrl.u32 %v8819, 7
    %v8821 = vsub.s32 0, %v8820
    %v8822 = vrot.slane %v8801, %v8821
    %v8824 = vmul.f32 %v8817, %v8822
    %v8826 = vlaneseq
    %v8827 = vshrl.u32 %v8826, 7
    %v8828 = vsub.s32 0, %v8827
    %v8829 = vrot.slane %v8803, %v8828
    %v8831 = vadd.f32 %v8824, %v8829
    %v8832 = vpack.c.bf16 %v8831, %v8831
    %s8833 = scalar_lea.vmem %s10, 16
    %v8834 = vld [vmem:[%s8833] sm:$0xf]
    %v8835 = vld [vmem:[%s8833 + $0x4] sm:$0xf]
    %v8836 = vld [vmem:[%s8833 + $0x8] sm:$0xf]
    %v8837 = vld [vmem:[%s8833 + $0xc] sm:$0xf]
    %s8838 = scalar_lea.vmem %s11, 1
    %v8839 = vld [vmem:[%s8838] sm:$0x1]
    %v8841 = vlaneseq
    %v8842 = vshrl.u32 %v8841, 7
    %v8843 = vsub.s32 0, %v8842
    %v8844 = vrot.slane %v8839, %v8843
    %v8850 = vunpack.c.l.b16 %v8834
    %v8851 = vunpack.c.l.b16 %v8835
    %v8852 = vunpack.c.l.b16 %v8836
    %v8853 = vunpack.c.l.b16 %v8837
    %v8854 = vpack.c.b16 %v8851, %v8850
    %v8855 = vpack.c.b16 %v8853, %v8852
    %v8859 = vsel %vm533, %v8832, 0
    %8861 = vmatprep.subr.bf16.mxu0 0
    %8862 = vmatpush1.bf16.msra.mxu0 0
    %8863 = vmatprep.subr.bf16.mxu0 0
    %8864 = vmatpush1.bf16.msra.mxu0 0
    %8865 = vmatprep.subr.bf16.mxu0 0
    %8866 = vmatpush1.bf16.msra.mxu0 0
    %8867 = vmatprep.subr.bf16.mxu0 0
    %8868 = vmatpush1.bf16.msra.mxu0 0
    %8869 = vmatprep.subr.bf16.mxu0 0
    %8870 = vmatpush1.bf16.msra.mxu0 0
    %8871 = vmatprep.subr.bf16.mxu0 0
    %8872 = vmatpush1.bf16.msra.mxu0 0
    %8873 = vmatprep.subr.bf16.mxu0 0
    %8874 = vmatpush1.bf16.msra.mxu0 %v8855
    %8875 = vmatprep.subr.bf16.mxu0 0
    %8876 = vmatpush1.bf16.msra.mxu0 %v8854
    %8877 = vmatprep.subr.bf16.mxu0 0
    %8878 = vmatpush2.bf16.msra.mxu0 0
    %8879 = vmatprep.subr.bf16.mxu0 0
    %8880 = vmatpush2.bf16.msra.mxu0 0
    %8881 = vmatprep.subr.bf16.mxu0 0
    %8882 = vmatpush2.bf16.msra.mxu0 0
    %8883 = vmatprep.subr.bf16.mxu0 0
    %8884 = vmatpush2.bf16.msra.mxu0 0
    %8885 = vmatprep.subr.bf16.mxu0 0
    %8886 = vmatpush2.bf16.msra.mxu0 0
    %8887 = vmatprep.subr.bf16.mxu0 0
    %8888 = vmatpush2.bf16.msra.mxu0 0
    %8889 = vmatprep.subr.bf16.mxu0 0
    %8890 = vmatpush2.bf16.msra.mxu0 0
    %8891 = vmatprep.subr.bf16.mxu0 0
    %8892 = vmatpush2.bf16.msra.mxu0 0
    %8893 = vmatprep.mubr.bf16.mxu0 0
    %8894 = vmatmul.mubr.bf16.gmra.mxu0 %v8859
    %v8895 = vpop.f32.mrf.mxu0
    %v8896 = vadd.f32 %v8844, %v8895
    %v8897 = vpop.f32.mrf.mxu0
    %v8898 = vpop.f32.mrf.mxu0
    %v8899 = vpop.f32.mrf.mxu0
    %8900 = vdwg.mxu0
    %v8901 = vmax.f32 %v8896, 0.0
    %v8902 = vpack.c.bf16 %v8901, %v8901
    %s8903 = scalar_lea.vmem %s12, 32
    %v8904 = vld [vmem:[%s8903] sm:$0xf]
    %v8905 = vld [vmem:[%s8903 + $0x4] sm:$0xf]
    %v8906 = vld [vmem:[%s8903 + $0x8] sm:$0xf]
    %v8907 = vld [vmem:[%s8903 + $0xc] sm:$0xf]
    %v8908 = vld [vmem:[%s8903 + $0x10] sm:$0xf]
    %v8909 = vld [vmem:[%s8903 + $0x14] sm:$0xf]
    %v8910 = vld [vmem:[%s8903 + $0x18] sm:$0xf]
    %v8911 = vld [vmem:[%s8903 + $0x1c] sm:$0xf]
    %s8912 = scalar_lea.vmem %s13, 1
    %v8913 = vld [vmem:[%s8912] sm:$0x1]
    %v8915 = vlaneseq
    %v8916 = vshrl.u32 %v8915, 7
    %v8917 = vsub.s32 0, %v8916
    %v8918 = vrot.slane %v8913, %v8917
    %v8928 = vunpack.c.l.b16 %v8904
    %v8929 = vunpack.c.l.b16 %v8905
    %v8930 = vunpack.c.l.b16 %v8906
    %v8931 = vunpack.c.l.b16 %v8907
    %v8932 = vunpack.c.l.b16 %v8908
    %v8933 = vunpack.c.l.b16 %v8909
    %v8934 = vunpack.c.l.b16 %v8910
    %v8935 = vunpack.c.l.b16 %v8911
    %v8936 = vpack.c.b16 %v8929, %v8928
    %v8937 = vpack.c.b16 %v8931, %v8930
    %v8938 = vpack.c.b16 %v8933, %v8932
    %v8939 = vpack.c.b16 %v8935, %v8934
    %v8945 = vsel %vm6244, %v8902, 0
    %8947 = vmatprep.subr.bf16.mxu0 0
    %8948 = vmatpush1.bf16.msra.mxu0 0
    %8949 = vmatprep.subr.bf16.mxu0 0
    %8950 = vmatpush1.bf16.msra.mxu0 0
    %8951 = vmatprep.subr.bf16.mxu0 0
    %8952 = vmatpush1.bf16.msra.mxu0 0
    %8953 = vmatprep.subr.bf16.mxu0 0
    %8954 = vmatpush1.bf16.msra.mxu0 0
    %8955 = vmatprep.subr.bf16.mxu0 0
    %8956 = vmatpush1.bf16.msra.mxu0 %v8939
    %8957 = vmatprep.subr.bf16.mxu0 0
    %8958 = vmatpush1.bf16.msra.mxu0 %v8938
    %8959 = vmatprep.subr.bf16.mxu0 0
    %8960 = vmatpush1.bf16.msra.mxu0 %v8937
    %8961 = vmatprep.subr.bf16.mxu0 0
    %8962 = vmatpush1.bf16.msra.mxu0 %v8936
    %8963 = vmatprep.subr.bf16.mxu0 0
    %8964 = vmatpush2.bf16.msra.mxu0 0
    %8965 = vmatprep.subr.bf16.mxu0 0
    %8966 = vmatpush2.bf16.msra.mxu0 0
    %8967 = vmatprep.subr.bf16.mxu0 0
    %8968 = vmatpush2.bf16.msra.mxu0 0
    %8969 = vmatprep.subr.bf16.mxu0 0
    %8970 = vmatpush2.bf16.msra.mxu0 0
    %8971 = vmatprep.subr.bf16.mxu0 0
    %8972 = vmatpush2.bf16.msra.mxu0 0
    %8973 = vmatprep.subr.bf16.mxu0 0
    %8974 = vmatpush2.bf16.msra.mxu0 0
    %8975 = vmatprep.subr.bf16.mxu0 0
    %8976 = vmatpush2.bf16.msra.mxu0 0
    %8977 = vmatprep.subr.bf16.mxu0 0
    %8978 = vmatpush2.bf16.msra.mxu0 0
    %8979 = vmatprep.mubr.bf16.mxu0 0
    %8980 = vmatmul.mubr.bf16.gmra.mxu0 %v8945
    %v8981 = vpop.f32.mrf.mxu0
    %v8982 = vadd.f32 %v8918, %v8981
    %v8983 = vpop.f32.mrf.mxu0
    %v8984 = vpop.f32.mrf.mxu0
    %v8985 = vpop.f32.mrf.mxu0
    %8986 = vdwg.mxu0
    %v8987 = vadd.f32 %v8831, %v8982
    %s8988 = scalar_lea.vmem %s14, 1
    %v8989 = vld [vmem:[%s8988] sm:$0x1]
    %s8990 = scalar_lea.vmem %s15, 1
    %v8991 = vld [vmem:[%s8990] sm:$0x1]
    %v8992 = vsel %vm8804, %v8987, 0.0
    %8993 = vadd.xlane.f32.xlu0 %v8992
    %v8994 = vpop.xlane.xlu0 %8993
    %v8995 = vmul.f32 %v8994, %v5512
    %v8996 = vsub.f32 %v8987, %v8995
    %v8997 = vmul.f32 %v8996, %v8996
    %v8998 = vsel %vm8804, %v8997, 0.0
    %8999 = vadd.xlane.f32.xlu0 %v8998
    %v9000 = vpop.xlane.xlu0 %8999
    %v9001 = vmul.f32 %v9000, %v5512
    %v9002 = vadd.f32 %v9001, 1e-05
    %v9003 = vrsqrt.pop %v9002
    %v9004 = vmul.f32 %v8996, %v9003
    %v9006 = vlaneseq
    %v9007 = vshrl.u32 %v9006, 7
    %v9008 = vsub.s32 0, %v9007
    %v9009 = vrot.slane %v8989, %v9008
    %v9011 = vmul.f32 %v9004, %v9009
    %v9013 = vlaneseq
    %v9014 = vshrl.u32 %v9013, 7
    %v9015 = vsub.s32 0, %v9014
    %v9016 = vrot.slane %v8991, %v9015
    %v9018 = vadd.f32 %v9011, %v9016
    %9019 = vst.msk [vmem:[#allocation2] sm:$0x3] %vm8804, %v9018
    // Predicated region
    $region66: #{trans_encoder_forward.1} parent=1 // pred_check
      _
    $region67: #{trans_encoder_forward.1} parent=1 // pred_check_branch
      %9021 = sbr.rel (0) target = $region69
    $region68: #{trans_encoder_forward.1} parent=1 // pred_region
      %s9023 = ssub.s32 32, 32
      %9024 = vsyncadd [#allocation3], %s9023
      %s9026 = sshll.u32 [#allocation2], 4
      %s9027 = int_to_ptr.vmem [resolvable:$true] %s9026
      %9029 = dma.vmem_to_hbm [thread:$0]  %s9027, 32, %s16, [#allocation3]
    $region69: #{trans_encoder_forward.1} parent=1 // pred_fallthru
      _
    // Predicated region
    $region70: #{trans_encoder_forward.1} parent=1 // pred_check
      _
    $region71: #{trans_encoder_forward.1} parent=1 // pred_check_branch
      %9031 = sbr.rel (0) target = $region73
    $region72: #{trans_encoder_forward.1} parent=1 // pred_region
      %9032 = dma.done [#allocation3], 32
    $region73: #{trans_encoder_forward.1} parent=1 // pred_fallthru
      _
    %9033 = vsyncpa [#allocation3], 1

</llo_original>
